<compile_context>
chip_gen: v6e
topology: v6e:2x2x1
jax: 0.10.0
libtpu: 0.0.40
codegen_flags: <defaults>
</compile_context>

<pallas_src>
import functools

import jax
import jax.numpy as jnp
from jax.experimental import pallas as pl
from jax.experimental.pallas import tpu as pltpu

LAYERS_COUNT = 4
GN_EPS = 1e-5
NUM_GROUPS = 32
N_CLS, N_CEN, N_LOC = 2, 1, 4
N_HEAD = N_CLS + N_CEN + N_LOC   # 7 real head channels
N_HEAD_PAD = 128                 # pad fused-head N to a full lane width


# ----------------------------------------------------------------------------
# Kernel
# ----------------------------------------------------------------------------
def car_fused_kernel(x_ref, mask_ref, w_br_ref, b_br_ref, g_ref, bt_ref,
                     mf_ref, mb_ref, w_hd_ref, b_hd_ref, out_ref, ext_ref,
                     *, H, W, margin):
    """Fused CarSubnet forward for one batch element.

    x_ref    : (1, Hp*Wp, C)   zero-padded NHWC input, flattened spatial (f32)
    mask_ref : (Hp*Wp, 1)      1.0 at interior spatial rows, 0.0 at halo rows
    w_br_ref : (9*C, C)        branch conv weight, im2col layout (bf16)
    b_br_ref : (1, C)          branch conv bias (f32)
    g_ref    : (1, C)          GroupNorm gamma (f32)
    bt_ref   : (1, C)          GroupNorm beta  (f32)
    mf_ref   : (C, G)          channel -> group one-hot membership (f32)
    mb_ref   : (G, C)          group -> channel one-hot broadcast  (f32)
    w_hd_ref : (9*C, 128)      fused head weight [cls|cen|loc|0-pad] (bf16)
    b_hd_ref : (1, 128)        fused head bias, zero in padded cols (f32)
    out_ref  : (1, Hp*Wp, 128) fused head output over the padded grid
    ext_ref  : (2*margin + Hp*Wp, C)  VMEM scratch: zero-margined activation
    """
    Hp, Wp = H + 2, W + 2
    HpWp = Hp * Wp
    C = w_br_ref.shape[1]
    G = mf_ref.shape[1]
    n_per_group = float(H * W * (C // G))

    # Zero the margins once, then drop the (already halo-zeroed) input into the
    # activation region.  The margins + halo rows stay zero for all layers.
    ext_ref[...] = jnp.zeros_like(ext_ref)
    ext_ref[margin:margin + HpWp, :] = x_ref[0]

    mask = mask_ref[...]            # (HpWp, 1)
    w_br = w_br_ref[...]            # (9C, C) bf16, resident for all 4 layers
    b_br = b_br_ref[...]            # (1, C)
    gamma, beta = g_ref[...], bt_ref[...]
    mf, mb = mf_ref[...], mb_ref[...]

    def im2col():
        # Tap (dy, dx) over the padded output grid is a pure sublane-shifted
        # slice of the extended activation buffer; no reshapes needed.
        cols = []
        for dy in range(3):
            for dx in range(3):
                s = (dy - 1) * Wp + (dx - 1)
                start = margin + s
                cols.append(ext_ref[start:start + HpWp, :].astype(jnp.bfloat16))
        return jnp.concatenate(cols, axis=1)        # (HpWp, 9C) bf16

    # ---- shared branch: 4 x (conv3x3 -> GroupNorm(32) -> ReLU), all in VMEM --
    for _ in range(LAYERS_COUNT):
        slab = im2col()
        acc = jnp.dot(slab, w_br, preferred_element_type=jnp.float32) + b_br
        acc = acc * mask                            # zero the halo rows

        # GroupNorm: two-pass (centered) stats via one-hot group matmuls.
        ssum = jnp.sum(acc, axis=0, keepdims=True)                       # (1,C)
        g_mean = jnp.dot(ssum, mf, preferred_element_type=jnp.float32) / n_per_group
        mean_c = jnp.dot(g_mean, mb, preferred_element_type=jnp.float32)
        centered = (acc - mean_c) * mask            # halo rows -> 0 again
        sq = jnp.sum(centered * centered, axis=0, keepdims=True)         # (1,C)
        g_var = jnp.dot(sq, mf, preferred_element_type=jnp.float32) / n_per_group
        var_c = jnp.dot(g_var, mb, preferred_element_type=jnp.float32)

        y = centered * jax.lax.rsqrt(var_c + GN_EPS) * gamma + beta
        y = jnp.maximum(y, 0.0) * mask              # ReLU, keep halo at zero
        ext_ref[margin:margin + HpWp, :] = y

    # ---- fused heads: one K=9C, N=128 matmul; exp() only on loc columns -----
    slab = im2col()
    res = jnp.dot(slab, w_hd_ref[...], preferred_element_type=jnp.float32)
    res = res + b_hd_ref[...]
    col = jax.lax.broadcasted_iota(jnp.int32, res.shape, 1)
    is_loc = jnp.logical_and(col >= N_CLS + N_CEN, col < N_HEAD)
    res = jnp.where(is_loc, jnp.exp(res), res)
    out_ref[0] = res


# ----------------------------------------------------------------------------
# Wrapper
# ----------------------------------------------------------------------------
def car_subnet_forward(x_nchw, params):
    """Pallas implementation of CarSubnet.forward.

    x_nchw: (B, C, H, W) float32 -> (cls_pred, cen_pred, loc_pred) in NCHW:
            (B, 2, H, W), (B, 1, H, W), (B, 4, H, W).
    """
    x = jnp.transpose(x_nchw, (0, 2, 3, 1)).astype(jnp.float32)   # NHWC
    B, H, W, C = x.shape
    Hp, Wp = H + 2, W + 2
    HpWp = Hp * Wp
    G = params["mfwd"].shape[1]
    margin = ((Wp + 1 + 7) // 8) * 8   # >= Wp+1, sublane-aligned

    # Zero-pad the spatial dims once in XLA and flatten to the padded grid.
    xpad = jnp.pad(x, ((0, 0), (1, 1), (1, 1), (0, 0))).reshape(B, HpWp, C)

    # Interior-row mask over the padded spatial grid.
    ii = jnp.arange(Hp)[:, None]
    jj = jnp.arange(Wp)[None, :]
    valid = (ii >= 1) & (ii <= H) & (jj >= 1) & (jj <= W)
    mask = valid.reshape(HpWp, 1).astype(jnp.float32)

    kernel = functools.partial(car_fused_kernel, H=H, W=W, margin=margin)

    out = pl.pallas_call(
        kernel,
        out_shape=jax.ShapeDtypeStruct((B, HpWp, N_HEAD_PAD), jnp.float32),
        grid_spec=pltpu.PrefetchScalarGridSpec(
            num_scalar_prefetch=0,
            grid=(B,),
            in_specs=[
                pl.BlockSpec((1, HpWp, C), lambda b: (b, 0, 0)),
                pl.BlockSpec((HpWp, 1), lambda b: (0, 0)),
                pl.BlockSpec((9 * C, C), lambda b: (0, 0)),
                pl.BlockSpec((1, C), lambda b: (0, 0)),
                pl.BlockSpec((1, C), lambda b: (0, 0)),
                pl.BlockSpec((1, C), lambda b: (0, 0)),
                pl.BlockSpec((C, G), lambda b: (0, 0)),
                pl.BlockSpec((G, C), lambda b: (0, 0)),
                pl.BlockSpec((9 * C, N_HEAD_PAD), lambda b: (0, 0)),
                pl.BlockSpec((1, N_HEAD_PAD), lambda b: (0, 0)),
            ],
            out_specs=pl.BlockSpec((1, HpWp, N_HEAD_PAD), lambda b: (b, 0, 0)),
            scratch_shapes=[pltpu.VMEM((2 * margin + HpWp, C), jnp.float32)],
        ),
        compiler_params=pltpu.CompilerParams(
            dimension_semantics=("parallel",)),
    )(xpad, mask, params["w_br"], params["b_br"], params["gamma"],
      params["beta"], params["mfwd"], params["mbwd"],
      params["w_heads"], params["b_heads"])

    # Drop halo rows / padded lanes and return NCHW heads.
    out = out.reshape(B, Hp, Wp, N_HEAD_PAD)[:, 1:H + 1, 1:W + 1, :N_HEAD]
    to_nchw = lambda t: jnp.transpose(t, (0, 3, 1, 2))
    cls_p = to_nchw(out[..., :N_CLS])
    cen_p = to_nchw(out[..., N_CLS:N_CLS + N_CEN])
    loc_p = to_nchw(out[..., N_CLS + N_CEN:N_HEAD])
    return cls_p, cen_p, loc_p


# ----------------------------------------------------------------------------
# Pure-JAX reference (f32 math, same bf16-stored weights) for verification.
# ----------------------------------------------------------------------------
def car_subnet_reference(x_nchw, params):
    x = jnp.transpose(x_nchw, (0, 2, 3, 1)).astype(jnp.float32)
    G = params["mfwd"].shape[1]
    w_br = params["w_br"].astype(jnp.float32)
    b_br = params["b_br"].reshape(-1)
    gamma = params["gamma"].reshape(-1)
    beta = params["beta"].reshape(-1)
    w_hd = params["w_heads"].astype(jnp.float32)
    b_hd = params["b_heads"].reshape(-1)

    def conv3x3(a, w9, b):
        Bx, Hx, Wx, Cx = a.shape
        ap = jnp.pad(a, ((0, 0), (1, 1), (1, 1), (0, 0)))
        cols = [ap[:, dy:dy + Hx, dx:dx + Wx, :]
                for dy in range(3) for dx in range(3)]
        slab = jnp.concatenate(cols, axis=-1).reshape(Bx, Hx * Wx, 9 * Cx)
        return (slab @ w9 + b).reshape(Bx, Hx, Wx, -1)

    def group_norm(a):
        Bx, Hx, Wx, Cx = a.shape
        ag = a.reshape(Bx, Hx * Wx, G, Cx // G)
        mean = ag.mean(axis=(1, 3), keepdims=True)
        var = jnp.mean((ag - mean) ** 2, axis=(1, 3), keepdims=True)
        y = (ag - mean) * jax.lax.rsqrt(var + GN_EPS)
        return y.reshape(Bx, Hx, Wx, Cx) * gamma + beta

    h = x
    for _ in range(LAYERS_COUNT):
        h = jnp.maximum(group_norm(conv3x3(h, w_br, b_br)), 0.0)
    heads = conv3x3(h, w_hd, b_hd)
    to_nchw = lambda t: jnp.transpose(t, (0, 3, 1, 2))
    cls_p = to_nchw(heads[..., :N_CLS])
    cen_p = to_nchw(heads[..., N_CLS:N_CLS + N_CEN])
    loc_p = to_nchw(jnp.exp(heads[..., N_CLS + N_CEN:N_HEAD]))
    return cls_p, cen_p, loc_p


# ----------------------------------------------------------------------------
# Deterministic parameter construction (synthetic weights, no checkpoint load)
# ----------------------------------------------------------------------------
def make_params(key, in_channels, num_groups=NUM_GROUPS):
    C, G = in_channels, num_groups
    assert C % G == 0, "GroupNorm(32, C) requires C % 32 == 0"
    ks = jax.random.split(key, 10)

    # Shared branch conv (used 4x in both branches) + shared GroupNorm.
    # im2col tap layout: w[k, cin, cout] == torch_w[cout, cin, k//3, k%3].
    w_br = 0.05 * jax.random.normal(ks[0], (9, C, C), jnp.float32)
    b_br = 0.01 * jax.random.normal(ks[1], (C,), jnp.float32)
    gamma = 1.0 + 0.01 * jax.random.normal(ks[2], (C,), jnp.float32)
    beta = 0.01 * jax.random.normal(ks[3], (C,), jnp.float32)
    # Output heads.
    w_cls = 0.05 * jax.random.normal(ks[4], (9, C, N_CLS), jnp.float32)
    b_cls = 0.01 * jax.random.normal(ks[5], (N_CLS,), jnp.float32)
    w_cen = 0.05 * jax.random.normal(ks[6], (9, C, N_CEN), jnp.float32)
    b_cen = 0.01 * jax.random.normal(ks[7], (N_CEN,), jnp.float32)
    w_loc = 0.05 * jax.random.normal(ks[8], (9, C, N_LOC), jnp.float32)
    b_loc = 0.01 * jax.random.normal(ks[9], (N_LOC,), jnp.float32)

    # Fused, lane-padded head weight/bias: cols = [cls(2) | cen(1) | loc(4) | 0].
    w_heads = jnp.concatenate([w_cls, w_cen, w_loc], axis=2)        # (9, C, 7)
    w_heads = jnp.pad(w_heads, ((0, 0), (0, 0), (0, N_HEAD_PAD - N_HEAD)))
    b_heads = jnp.concatenate([b_cls, b_cen, b_loc], axis=0)        # (7,)
    b_heads = jnp.pad(b_heads, (0, N_HEAD_PAD - N_HEAD))

    # GroupNorm channel <-> group one-hot membership matrices.
    group_ids = jnp.arange(C) // (C // G)
    mfwd = (group_ids[:, None] == jnp.arange(G)[None, :]).astype(jnp.float32)

    return {
        "w_br": w_br.reshape(9 * C, C).astype(jnp.bfloat16),
        "b_br": b_br.reshape(1, C),
        "gamma": gamma.reshape(1, C),
        "beta": beta.reshape(1, C),
        "w_heads": w_heads.reshape(9 * C, N_HEAD_PAD).astype(jnp.bfloat16),
        "b_heads": b_heads.reshape(1, N_HEAD_PAD),
        "mfwd": mfwd,            # (C, G)
        "mbwd": mfwd.T,          # (G, C)
    }


if __name__ == "__main__":
    # Small shapes consistent with the module: batch=2, in_channels=64
    # (must be divisible by 32 for GroupNorm(32, C)), spatial 8x8.
    B, C, H, W = 2, 64, 8, 8
    key = jax.random.PRNGKey(0)
    k_params, k_x = jax.random.split(key)
    params = make_params(k_params, in_channels=C)
    x = jax.random.normal(k_x, (B, C, H, W), jnp.float32)   # NCHW, like PyTorch

    fwd = jax.jit(lambda xx: car_subnet_forward(xx, params))
    cls_pred, cen_pred, loc_pred = fwd(x)
    jax.block_until_ready((cls_pred, cen_pred, loc_pred))

    assert cls_pred.shape == (B, 2, H, W)
    assert cen_pred.shape == (B, 1, H, W)
    assert loc_pred.shape == (B, 4, H, W)
    assert bool(jnp.all(jnp.isfinite(cls_pred)))
    assert bool(jnp.all(jnp.isfinite(cen_pred)))
    assert bool(jnp.all(jnp.isfinite(loc_pred)))
    assert bool(jnp.all(loc_pred > 0.0))   # exp() output is strictly positive

    # Verify against a pure-JAX f32 reference (kernel uses bf16 MXU operands,
    # so tolerances are bf16-level).
    cls_r, cen_r, loc_r = jax.jit(lambda xx: car_subnet_reference(xx, params))(x)
    assert bool(jnp.allclose(cls_pred, cls_r, rtol=1e-1, atol=1e-1))
    assert bool(jnp.allclose(cen_pred, cen_r, rtol=1e-1, atol=1e-1))
    assert bool(jnp.allclose(loc_pred, loc_r, rtol=1e-1, atol=1e-1))

    print("KERNEL_OK")
</pallas_src>

<mosaic_0001>
module attributes {stable_mosaic.version = 11 : i64} {
  func.func @car_fused_kernel(%arg0: i32, %arg1: memref<1x100x64xf32, #tpu.memory_space<vmem>>, %arg2: memref<100x1xf32, #tpu.memory_space<vmem>>, %arg3: memref<576x64xbf16, #tpu.memory_space<vmem>>, %arg4: memref<1x64xf32, #tpu.memory_space<vmem>>, %arg5: memref<1x64xf32, #tpu.memory_space<vmem>>, %arg6: memref<1x64xf32, #tpu.memory_space<vmem>>, %arg7: memref<64x32xf32, #tpu.memory_space<vmem>>, %arg8: memref<32x64xf32, #tpu.memory_space<vmem>>, %arg9: memref<576x128xbf16, #tpu.memory_space<vmem>>, %arg10: memref<1x128xf32, #tpu.memory_space<vmem>>, %arg11: memref<1x100x128xf32, #tpu.memory_space<vmem>>, %arg12: memref<132x64xf32, #tpu.memory_space<vmem>>) attributes {dimension_semantics = [#tpu.dimension_semantics<parallel>], iteration_bounds = array<i64: 2>, scalar_prefetch = 0 : i64, scratch_operands = 1 : i64, tpu.core_type = #tpu.core_type<tc>, window_params = [{transform_indices = @transform_0, window_bounds = array<i64: 1, 100, 64>}, {pipeline_mode = #tpu.pipeline_mode<synchronous>, transform_indices = @transform_1, window_bounds = array<i64: 100, 1>}, {pipeline_mode = #tpu.pipeline_mode<synchronous>, transform_indices = @transform_2, window_bounds = array<i64: 576, 64>}, {pipeline_mode = #tpu.pipeline_mode<synchronous>, transform_indices = @transform_3, window_bounds = array<i64: 1, 64>}, {pipeline_mode = #tpu.pipeline_mode<synchronous>, transform_indices = @transform_4, window_bounds = array<i64: 1, 64>}, {pipeline_mode = #tpu.pipeline_mode<synchronous>, transform_indices = @transform_5, window_bounds = array<i64: 1, 64>}, {pipeline_mode = #tpu.pipeline_mode<synchronous>, transform_indices = @transform_6, window_bounds = array<i64: 64, 32>}, {pipeline_mode = #tpu.pipeline_mode<synchronous>, transform_indices = @transform_7, window_bounds = array<i64: 32, 64>}, {pipeline_mode = #tpu.pipeline_mode<synchronous>, transform_indices = @transform_8, window_bounds = array<i64: 576, 128>}, {pipeline_mode = #tpu.pipeline_mode<synchronous>, transform_indices = @transform_9, window_bounds = array<i64: 1, 128>}, {transform_indices = @transform_10, window_bounds = array<i64: 1, 100, 128>}]} {
    %cst = arith.constant 0.000000e+00 : f32
    %0 = vector.broadcast %cst : f32 to vector<132x64xf32>
    %c0 = arith.constant 0 : index
    %c0_0 = arith.constant 0 : index
    %1 = vector.load %arg12[%c0, %c0_0] : memref<132x64xf32, #tpu.memory_space<vmem>>, vector<132x64xf32>
    tpu.vector_store %arg12[%c0, %c0_0], %0 {strides = array<i32>} : memref<132x64xf32, #tpu.memory_space<vmem>>, vector<132x64xf32>,
    %c0_1 = arith.constant 0 : index
    %c0_2 = arith.constant 0 : index
    %c0_3 = arith.constant 0 : index
    %2 = vector.load %arg1[%c0_1, %c0_2, %c0_3] : memref<1x100x64xf32, #tpu.memory_space<vmem>>, vector<1x100x64xf32>
    %3 = vector.shape_cast %2 : vector<1x100x64xf32> to vector<100x64xf32>
    %c16 = arith.constant 16 : index
    %c0_4 = arith.constant 0 : index
    %4 = vector.load %arg12[%c16, %c0_4] : memref<132x64xf32, #tpu.memory_space<vmem>>, vector<100x64xf32>
    tpu.vector_store %arg12[%c16, %c0_4], %3 {strides = array<i32>} : memref<132x64xf32, #tpu.memory_space<vmem>>, vector<100x64xf32>,
    %c0_5 = arith.constant 0 : index
    %c0_6 = arith.constant 0 : index
    %5 = vector.load %arg2[%c0_5, %c0_6] : memref<100x1xf32, #tpu.memory_space<vmem>>, vector<100x1xf32>
    %c0_7 = arith.constant 0 : index
    %c0_8 = arith.constant 0 : index
    %6 = vector.load %arg3[%c0_7, %c0_8] : memref<576x64xbf16, #tpu.memory_space<vmem>>, vector<576x64xbf16>
    %c0_9 = arith.constant 0 : index
    %c0_10 = arith.constant 0 : index
    %7 = vector.load %arg4[%c0_9, %c0_10] : memref<1x64xf32, #tpu.memory_space<vmem>>, vector<1x64xf32>
    %c0_11 = arith.constant 0 : index
    %c0_12 = arith.constant 0 : index
    %8 = vector.load %arg5[%c0_11, %c0_12] : memref<1x64xf32, #tpu.memory_space<vmem>>, vector<1x64xf32>
    %c0_13 = arith.constant 0 : index
    %c0_14 = arith.constant 0 : index
    %9 = vector.load %arg6[%c0_13, %c0_14] : memref<1x64xf32, #tpu.memory_space<vmem>>, vector<1x64xf32>
    %c0_15 = arith.constant 0 : index
    %c0_16 = arith.constant 0 : index
    %10 = vector.load %arg7[%c0_15, %c0_16] : memref<64x32xf32, #tpu.memory_space<vmem>>, vector<64x32xf32>
    %c0_17 = arith.constant 0 : index
    %c0_18 = arith.constant 0 : index
    %11 = vector.load %arg8[%c0_17, %c0_18] : memref<32x64xf32, #tpu.memory_space<vmem>>, vector<32x64xf32>
    %c5 = arith.constant 5 : index
    %c0_19 = arith.constant 0 : index
    %12 = vector.load %arg12[%c5, %c0_19] : memref<132x64xf32, #tpu.memory_space<vmem>>, vector<100x64xf32>
    %13 = arith.truncf %12 : vector<100x64xf32> to vector<100x64xbf16>
    %c6 = arith.constant 6 : index
    %c0_20 = arith.constant 0 : index
    %14 = vector.load %arg12[%c6, %c0_20] : memref<132x64xf32, #tpu.memory_space<vmem>>, vector<100x64xf32>
    %15 = arith.truncf %14 : vector<100x64xf32> to vector<100x64xbf16>
    %c7 = arith.constant 7 : index
    %c0_21 = arith.constant 0 : index
    %16 = vector.load %arg12[%c7, %c0_21] : memref<132x64xf32, #tpu.memory_space<vmem>>, vector<100x64xf32>
    %17 = arith.truncf %16 : vector<100x64xf32> to vector<100x64xbf16>
    %c15 = arith.constant 15 : index
    %c0_22 = arith.constant 0 : index
    %18 = vector.load %arg12[%c15, %c0_22] : memref<132x64xf32, #tpu.memory_space<vmem>>, vector<100x64xf32>
    %19 = arith.truncf %18 : vector<100x64xf32> to vector<100x64xbf16>
    %c16_23 = arith.constant 16 : index
    %c0_24 = arith.constant 0 : index
    %20 = vector.load %arg12[%c16_23, %c0_24] : memref<132x64xf32, #tpu.memory_space<vmem>>, vector<100x64xf32>
    %21 = arith.truncf %20 : vector<100x64xf32> to vector<100x64xbf16>
    %c17 = arith.constant 17 : index
    %c0_25 = arith.constant 0 : index
    %22 = vector.load %arg12[%c17, %c0_25] : memref<132x64xf32, #tpu.memory_space<vmem>>, vector<100x64xf32>
    %23 = arith.truncf %22 : vector<100x64xf32> to vector<100x64xbf16>
    %c25 = arith.constant 25 : index
    %c0_26 = arith.constant 0 : index
    %24 = vector.load %arg12[%c25, %c0_26] : memref<132x64xf32, #tpu.memory_space<vmem>>, vector<100x64xf32>
    %25 = arith.truncf %24 : vector<100x64xf32> to vector<100x64xbf16>
    %c26 = arith.constant 26 : index
    %c0_27 = arith.constant 0 : index
    %26 = vector.load %arg12[%c26, %c0_27] : memref<132x64xf32, #tpu.memory_space<vmem>>, vector<100x64xf32>
    %27 = arith.truncf %26 : vector<100x64xf32> to vector<100x64xbf16>
    %c27 = arith.constant 27 : index
    %c0_28 = arith.constant 0 : index
    %28 = vector.load %arg12[%c27, %c0_28] : memref<132x64xf32, #tpu.memory_space<vmem>>, vector<100x64xf32>
    %29 = arith.truncf %28 : vector<100x64xf32> to vector<100x64xbf16>
    %30 = tpu.concatenate %13, %15, %17, %19, %21, %23, %25, %27, %29 in 1 : vector<100x64xbf16>, vector<100x64xbf16>, vector<100x64xbf16>, vector<100x64xbf16>, vector<100x64xbf16>, vector<100x64xbf16>, vector<100x64xbf16>, vector<100x64xbf16>, vector<100x64xbf16> -> vector<100x576xbf16>
    %cst_29 = arith.constant dense<0.000000e+00> : vector<100x64xf32>
    %31 = tpu.matmul %30, %6, %cst_29 {dimension_numbers = #tpu.dot_dimension_numbers<[1], [0], [0], [1], [0, 0, 1, 1], [], []>} : vector<100x576xbf16>, vector<576x64xbf16>, vector<100x64xf32> -> vector<100x64xf32>
    %32 = vector.broadcast %7 : vector<1x64xf32> to vector<100x64xf32>
    %33 = arith.addf %31, %32 : vector<100x64xf32>
    %34 = vector.broadcast %5 : vector<100x1xf32> to vector<100x64xf32>
    %35 = arith.mulf %33, %34 : vector<100x64xf32>
    %cst_30 = arith.constant dense<0.000000e+00> : vector<64xf32>
    %36 = vector.multi_reduction <add>, %35, %cst_30 [0] : vector<100x64xf32> to vector<64xf32>
    %37 = vector.shape_cast %36 : vector<64xf32> to vector<1x64xf32>
    %cst_31 = arith.constant dense<0.000000e+00> : vector<1x32xf32>
    %38 = tpu.matmul %37, %10, %cst_31 {dimension_numbers = #tpu.dot_dimension_numbers<[1], [0], [0], [1], [0, 0, 1, 1], [], []>} : vector<1x64xf32>, vector<64x32xf32>, vector<1x32xf32> -> vector<1x32xf32>
    %cst_32 = arith.constant 1.280000e+02 : f32
    %39 = vector.broadcast %cst_32 : f32 to vector<1x32xf32>
    %40 = arith.divf %38, %39 : vector<1x32xf32>
    %cst_33 = arith.constant dense<0.000000e+00> : vector<1x64xf32>
    %41 = tpu.matmul %40, %11, %cst_33 {dimension_numbers = #tpu.dot_dimension_numbers<[1], [0], [0], [1], [0, 0, 1, 1], [], []>} : vector<1x32xf32>, vector<32x64xf32>, vector<1x64xf32> -> vector<1x64xf32>
    %42 = vector.broadcast %41 : vector<1x64xf32> to vector<100x64xf32>
    %43 = arith.subf %35, %42 : vector<100x64xf32>
    %44 = vector.broadcast %5 : vector<100x1xf32> to vector<100x64xf32>
    %45 = arith.mulf %43, %44 : vector<100x64xf32>
    %46 = arith.mulf %45, %45 : vector<100x64xf32>
    %cst_34 = arith.constant dense<0.000000e+00> : vector<64xf32>
    %47 = vector.multi_reduction <add>, %46, %cst_34 [0] : vector<100x64xf32> to vector<64xf32>
    %48 = vector.shape_cast %47 : vector<64xf32> to vector<1x64xf32>
    %cst_35 = arith.constant dense<0.000000e+00> : vector<1x32xf32>
    %49 = tpu.matmul %48, %10, %cst_35 {dimension_numbers = #tpu.dot_dimension_numbers<[1], [0], [0], [1], [0, 0, 1, 1], [], []>} : vector<1x64xf32>, vector<64x32xf32>, vector<1x32xf32> -> vector<1x32xf32>
    %cst_36 = arith.constant 1.280000e+02 : f32
    %50 = vector.broadcast %cst_36 : f32 to vector<1x32xf32>
    %51 = arith.divf %49, %50 : vector<1x32xf32>
    %cst_37 = arith.constant dense<0.000000e+00> : vector<1x64xf32>
    %52 = tpu.matmul %51, %11, %cst_37 {dimension_numbers = #tpu.dot_dimension_numbers<[1], [0], [0], [1], [0, 0, 1, 1], [], []>} : vector<1x32xf32>, vector<32x64xf32>, vector<1x64xf32> -> vector<1x64xf32>
    %cst_38 = arith.constant 9.99999974E-6 : f32
    %53 = vector.broadcast %cst_38 : f32 to vector<1x64xf32>
    %54 = arith.addf %52, %53 : vector<1x64xf32>
    %55 = math.rsqrt %54 : vector<1x64xf32>
    %56 = vector.broadcast %55 : vector<1x64xf32> to vector<100x64xf32>
    %57 = arith.mulf %45, %56 : vector<100x64xf32>
    %58 = vector.broadcast %8 : vector<1x64xf32> to vector<100x64xf32>
    %59 = arith.mulf %57, %58 : vector<100x64xf32>
    %60 = vector.broadcast %9 : vector<1x64xf32> to vector<100x64xf32>
    %61 = arith.addf %59, %60 : vector<100x64xf32>
    %cst_39 = arith.constant 0.000000e+00 : f32
    %62 = vector.broadcast %cst_39 : f32 to vector<100x64xf32>
    %63 = arith.maximumf %61, %62 : vector<100x64xf32>
    %64 = vector.broadcast %5 : vector<100x1xf32> to vector<100x64xf32>
    %65 = arith.mulf %63, %64 : vector<100x64xf32>
    %c16_40 = arith.constant 16 : index
    %c0_41 = arith.constant 0 : index
    %66 = vector.load %arg12[%c16_40, %c0_41] : memref<132x64xf32, #tpu.memory_space<vmem>>, vector<100x64xf32>
    tpu.vector_store %arg12[%c16_40, %c0_41], %65 {strides = array<i32>} : memref<132x64xf32, #tpu.memory_space<vmem>>, vector<100x64xf32>,
    %c5_42 = arith.constant 5 : index
    %c0_43 = arith.constant 0 : index
    %67 = vector.load %arg12[%c5_42, %c0_43] : memref<132x64xf32, #tpu.memory_space<vmem>>, vector<100x64xf32>
    %68 = arith.truncf %67 : vector<100x64xf32> to vector<100x64xbf16>
    %c6_44 = arith.constant 6 : index
    %c0_45 = arith.constant 0 : index
    %69 = vector.load %arg12[%c6_44, %c0_45] : memref<132x64xf32, #tpu.memory_space<vmem>>, vector<100x64xf32>
    %70 = arith.truncf %69 : vector<100x64xf32> to vector<100x64xbf16>
    %c7_46 = arith.constant 7 : index
    %c0_47 = arith.constant 0 : index
    %71 = vector.load %arg12[%c7_46, %c0_47] : memref<132x64xf32, #tpu.memory_space<vmem>>, vector<100x64xf32>
    %72 = arith.truncf %71 : vector<100x64xf32> to vector<100x64xbf16>
    %c15_48 = arith.constant 15 : index
    %c0_49 = arith.constant 0 : index
    %73 = vector.load %arg12[%c15_48, %c0_49] : memref<132x64xf32, #tpu.memory_space<vmem>>, vector<100x64xf32>
    %74 = arith.truncf %73 : vector<100x64xf32> to vector<100x64xbf16>
    %c16_50 = arith.constant 16 : index
    %c0_51 = arith.constant 0 : index
    %75 = vector.load %arg12[%c16_50, %c0_51] : memref<132x64xf32, #tpu.memory_space<vmem>>, vector<100x64xf32>
    %76 = arith.truncf %75 : vector<100x64xf32> to vector<100x64xbf16>
    %c17_52 = arith.constant 17 : index
    %c0_53 = arith.constant 0 : index
    %77 = vector.load %arg12[%c17_52, %c0_53] : memref<132x64xf32, #tpu.memory_space<vmem>>, vector<100x64xf32>
    %78 = arith.truncf %77 : vector<100x64xf32> to vector<100x64xbf16>
    %c25_54 = arith.constant 25 : index
    %c0_55 = arith.constant 0 : index
    %79 = vector.load %arg12[%c25_54, %c0_55] : memref<132x64xf32, #tpu.memory_space<vmem>>, vector<100x64xf32>
    %80 = arith.truncf %79 : vector<100x64xf32> to vector<100x64xbf16>
    %c26_56 = arith.constant 26 : index
    %c0_57 = arith.constant 0 : index
    %81 = vector.load %arg12[%c26_56, %c0_57] : memref<132x64xf32, #tpu.memory_space<vmem>>, vector<100x64xf32>
    %82 = arith.truncf %81 : vector<100x64xf32> to vector<100x64xbf16>
    %c27_58 = arith.constant 27 : index
    %c0_59 = arith.constant 0 : index
    %83 = vector.load %arg12[%c27_58, %c0_59] : memref<132x64xf32, #tpu.memory_space<vmem>>, vector<100x64xf32>
    %84 = arith.truncf %83 : vector<100x64xf32> to vector<100x64xbf16>
    %85 = tpu.concatenate %68, %70, %72, %74, %76, %78, %80, %82, %84 in 1 : vector<100x64xbf16>, vector<100x64xbf16>, vector<100x64xbf16>, vector<100x64xbf16>, vector<100x64xbf16>, vector<100x64xbf16>, vector<100x64xbf16>, vector<100x64xbf16>, vector<100x64xbf16> -> vector<100x576xbf16>
    %cst_60 = arith.constant dense<0.000000e+00> : vector<100x64xf32>
    %86 = tpu.matmul %85, %6, %cst_60 {dimension_numbers = #tpu.dot_dimension_numbers<[1], [0], [0], [1], [0, 0, 1, 1], [], []>} : vector<100x576xbf16>, vector<576x64xbf16>, vector<100x64xf32> -> vector<100x64xf32>
    %87 = vector.broadcast %7 : vector<1x64xf32> to vector<100x64xf32>
    %88 = arith.addf %86, %87 : vector<100x64xf32>
    %89 = vector.broadcast %5 : vector<100x1xf32> to vector<100x64xf32>
    %90 = arith.mulf %88, %89 : vector<100x64xf32>
    %cst_61 = arith.constant dense<0.000000e+00> : vector<64xf32>
    %91 = vector.multi_reduction <add>, %90, %cst_61 [0] : vector<100x64xf32> to vector<64xf32>
    %92 = vector.shape_cast %91 : vector<64xf32> to vector<1x64xf32>
    %cst_62 = arith.constant dense<0.000000e+00> : vector<1x32xf32>
    %93 = tpu.matmul %92, %10, %cst_62 {dimension_numbers = #tpu.dot_dimension_numbers<[1], [0], [0], [1], [0, 0, 1, 1], [], []>} : vector<1x64xf32>, vector<64x32xf32>, vector<1x32xf32> -> vector<1x32xf32>
    %cst_63 = arith.constant 1.280000e+02 : f32
    %94 = vector.broadcast %cst_63 : f32 to vector<1x32xf32>
    %95 = arith.divf %93, %94 : vector<1x32xf32>
    %cst_64 = arith.constant dense<0.000000e+00> : vector<1x64xf32>
    %96 = tpu.matmul %95, %11, %cst_64 {dimension_numbers = #tpu.dot_dimension_numbers<[1], [0], [0], [1], [0, 0, 1, 1], [], []>} : vector<1x32xf32>, vector<32x64xf32>, vector<1x64xf32> -> vector<1x64xf32>
    %97 = vector.broadcast %96 : vector<1x64xf32> to vector<100x64xf32>
    %98 = arith.subf %90, %97 : vector<100x64xf32>
    %99 = vector.broadcast %5 : vector<100x1xf32> to vector<100x64xf32>
    %100 = arith.mulf %98, %99 : vector<100x64xf32>
    %101 = arith.mulf %100, %100 : vector<100x64xf32>
    %cst_65 = arith.constant dense<0.000000e+00> : vector<64xf32>
    %102 = vector.multi_reduction <add>, %101, %cst_65 [0] : vector<100x64xf32> to vector<64xf32>
    %103 = vector.shape_cast %102 : vector<64xf32> to vector<1x64xf32>
    %cst_66 = arith.constant dense<0.000000e+00> : vector<1x32xf32>
    %104 = tpu.matmul %103, %10, %cst_66 {dimension_numbers = #tpu.dot_dimension_numbers<[1], [0], [0], [1], [0, 0, 1, 1], [], []>} : vector<1x64xf32>, vector<64x32xf32>, vector<1x32xf32> -> vector<1x32xf32>
    %cst_67 = arith.constant 1.280000e+02 : f32
    %105 = vector.broadcast %cst_67 : f32 to vector<1x32xf32>
    %106 = arith.divf %104, %105 : vector<1x32xf32>
    %cst_68 = arith.constant dense<0.000000e+00> : vector<1x64xf32>
    %107 = tpu.matmul %106, %11, %cst_68 {dimension_numbers = #tpu.dot_dimension_numbers<[1], [0], [0], [1], [0, 0, 1, 1], [], []>} : vector<1x32xf32>, vector<32x64xf32>, vector<1x64xf32> -> vector<1x64xf32>
    %cst_69 = arith.constant 9.99999974E-6 : f32
    %108 = vector.broadcast %cst_69 : f32 to vector<1x64xf32>
    %109 = arith.addf %107, %108 : vector<1x64xf32>
    %110 = math.rsqrt %109 : vector<1x64xf32>
    %111 = vector.broadcast %110 : vector<1x64xf32> to vector<100x64xf32>
    %112 = arith.mulf %100, %111 : vector<100x64xf32>
    %113 = vector.broadcast %8 : vector<1x64xf32> to vector<100x64xf32>
    %114 = arith.mulf %112, %113 : vector<100x64xf32>
    %115 = vector.broadcast %9 : vector<1x64xf32> to vector<100x64xf32>
    %116 = arith.addf %114, %115 : vector<100x64xf32>
    %cst_70 = arith.constant 0.000000e+00 : f32
    %117 = vector.broadcast %cst_70 : f32 to vector<100x64xf32>
    %118 = arith.maximumf %116, %117 : vector<100x64xf32>
    %119 = vector.broadcast %5 : vector<100x1xf32> to vector<100x64xf32>
    %120 = arith.mulf %118, %119 : vector<100x64xf32>
    %c16_71 = arith.constant 16 : index
    %c0_72 = arith.constant 0 : index
    %121 = vector.load %arg12[%c16_71, %c0_72] : memref<132x64xf32, #tpu.memory_space<vmem>>, vector<100x64xf32>
    tpu.vector_store %arg12[%c16_71, %c0_72], %120 {strides = array<i32>} : memref<132x64xf32, #tpu.memory_space<vmem>>, vector<100x64xf32>,
    %c5_73 = arith.constant 5 : index
    %c0_74 = arith.constant 0 : index
    %122 = vector.load %arg12[%c5_73, %c0_74] : memref<132x64xf32, #tpu.memory_space<vmem>>, vector<100x64xf32>
    %123 = arith.truncf %122 : vector<100x64xf32> to vector<100x64xbf16>
    %c6_75 = arith.constant 6 : index
    %c0_76 = arith.constant 0 : index
    %124 = vector.load %arg12[%c6_75, %c0_76] : memref<132x64xf32, #tpu.memory_space<vmem>>, vector<100x64xf32>
    %125 = arith.truncf %124 : vector<100x64xf32> to vector<100x64xbf16>
    %c7_77 = arith.constant 7 : index
    %c0_78 = arith.constant 0 : index
    %126 = vector.load %arg12[%c7_77, %c0_78] : memref<132x64xf32, #tpu.memory_space<vmem>>, vector<100x64xf32>
    %127 = arith.truncf %126 : vector<100x64xf32> to vector<100x64xbf16>
    %c15_79 = arith.constant 15 : index
    %c0_80 = arith.constant 0 : index
    %128 = vector.load %arg12[%c15_79, %c0_80] : memref<132x64xf32, #tpu.memory_space<vmem>>, vector<100x64xf32>
    %129 = arith.truncf %128 : vector<100x64xf32> to vector<100x64xbf16>
    %c16_81 = arith.constant 16 : index
    %c0_82 = arith.constant 0 : index
    %130 = vector.load %arg12[%c16_81, %c0_82] : memref<132x64xf32, #tpu.memory_space<vmem>>, vector<100x64xf32>
    %131 = arith.truncf %130 : vector<100x64xf32> to vector<100x64xbf16>
    %c17_83 = arith.constant 17 : index
    %c0_84 = arith.constant 0 : index
    %132 = vector.load %arg12[%c17_83, %c0_84] : memref<132x64xf32, #tpu.memory_space<vmem>>, vector<100x64xf32>
    %133 = arith.truncf %132 : vector<100x64xf32> to vector<100x64xbf16>
    %c25_85 = arith.constant 25 : index
    %c0_86 = arith.constant 0 : index
    %134 = vector.load %arg12[%c25_85, %c0_86] : memref<132x64xf32, #tpu.memory_space<vmem>>, vector<100x64xf32>
    %135 = arith.truncf %134 : vector<100x64xf32> to vector<100x64xbf16>
    %c26_87 = arith.constant 26 : index
    %c0_88 = arith.constant 0 : index
    %136 = vector.load %arg12[%c26_87, %c0_88] : memref<132x64xf32, #tpu.memory_space<vmem>>, vector<100x64xf32>
    %137 = arith.truncf %136 : vector<100x64xf32> to vector<100x64xbf16>
    %c27_89 = arith.constant 27 : index
    %c0_90 = arith.constant 0 : index
    %138 = vector.load %arg12[%c27_89, %c0_90] : memref<132x64xf32, #tpu.memory_space<vmem>>, vector<100x64xf32>
    %139 = arith.truncf %138 : vector<100x64xf32> to vector<100x64xbf16>
    %140 = tpu.concatenate %123, %125, %127, %129, %131, %133, %135, %137, %139 in 1 : vector<100x64xbf16>, vector<100x64xbf16>, vector<100x64xbf16>, vector<100x64xbf16>, vector<100x64xbf16>, vector<100x64xbf16>, vector<100x64xbf16>, vector<100x64xbf16>, vector<100x64xbf16> -> vector<100x576xbf16>
    %cst_91 = arith.constant dense<0.000000e+00> : vector<100x64xf32>
    %141 = tpu.matmul %140, %6, %cst_91 {dimension_numbers = #tpu.dot_dimension_numbers<[1], [0], [0], [1], [0, 0, 1, 1], [], []>} : vector<100x576xbf16>, vector<576x64xbf16>, vector<100x64xf32> -> vector<100x64xf32>
    %142 = vector.broadcast %7 : vector<1x64xf32> to vector<100x64xf32>
    %143 = arith.addf %141, %142 : vector<100x64xf32>
    %144 = vector.broadcast %5 : vector<100x1xf32> to vector<100x64xf32>
    %145 = arith.mulf %143, %144 : vector<100x64xf32>
    %cst_92 = arith.constant dense<0.000000e+00> : vector<64xf32>
    %146 = vector.multi_reduction <add>, %145, %cst_92 [0] : vector<100x64xf32> to vector<64xf32>
    %147 = vector.shape_cast %146 : vector<64xf32> to vector<1x64xf32>
    %cst_93 = arith.constant dense<0.000000e+00> : vector<1x32xf32>
    %148 = tpu.matmul %147, %10, %cst_93 {dimension_numbers = #tpu.dot_dimension_numbers<[1], [0], [0], [1], [0, 0, 1, 1], [], []>} : vector<1x64xf32>, vector<64x32xf32>, vector<1x32xf32> -> vector<1x32xf32>
    %cst_94 = arith.constant 1.280000e+02 : f32
    %149 = vector.broadcast %cst_94 : f32 to vector<1x32xf32>
    %150 = arith.divf %148, %149 : vector<1x32xf32>
    %cst_95 = arith.constant dense<0.000000e+00> : vector<1x64xf32>
    %151 = tpu.matmul %150, %11, %cst_95 {dimension_numbers = #tpu.dot_dimension_numbers<[1], [0], [0], [1], [0, 0, 1, 1], [], []>} : vector<1x32xf32>, vector<32x64xf32>, vector<1x64xf32> -> vector<1x64xf32>
    %152 = vector.broadcast %151 : vector<1x64xf32> to vector<100x64xf32>
    %153 = arith.subf %145, %152 : vector<100x64xf32>
    %154 = vector.broadcast %5 : vector<100x1xf32> to vector<100x64xf32>
    %155 = arith.mulf %153, %154 : vector<100x64xf32>
    %156 = arith.mulf %155, %155 : vector<100x64xf32>
    %cst_96 = arith.constant dense<0.000000e+00> : vector<64xf32>
    %157 = vector.multi_reduction <add>, %156, %cst_96 [0] : vector<100x64xf32> to vector<64xf32>
    %158 = vector.shape_cast %157 : vector<64xf32> to vector<1x64xf32>
    %cst_97 = arith.constant dense<0.000000e+00> : vector<1x32xf32>
    %159 = tpu.matmul %158, %10, %cst_97 {dimension_numbers = #tpu.dot_dimension_numbers<[1], [0], [0], [1], [0, 0, 1, 1], [], []>} : vector<1x64xf32>, vector<64x32xf32>, vector<1x32xf32> -> vector<1x32xf32>
    %cst_98 = arith.constant 1.280000e+02 : f32
    %160 = vector.broadcast %cst_98 : f32 to vector<1x32xf32>
    %161 = arith.divf %159, %160 : vector<1x32xf32>
    %cst_99 = arith.constant dense<0.000000e+00> : vector<1x64xf32>
    %162 = tpu.matmul %161, %11, %cst_99 {dimension_numbers = #tpu.dot_dimension_numbers<[1], [0], [0], [1], [0, 0, 1, 1], [], []>} : vector<1x32xf32>, vector<32x64xf32>, vector<1x64xf32> -> vector<1x64xf32>
    %cst_100 = arith.constant 9.99999974E-6 : f32
    %163 = vector.broadcast %cst_100 : f32 to vector<1x64xf32>
    %164 = arith.addf %162, %163 : vector<1x64xf32>
    %165 = math.rsqrt %164 : vector<1x64xf32>
    %166 = vector.broadcast %165 : vector<1x64xf32> to vector<100x64xf32>
    %167 = arith.mulf %155, %166 : vector<100x64xf32>
    %168 = vector.broadcast %8 : vector<1x64xf32> to vector<100x64xf32>
    %169 = arith.mulf %167, %168 : vector<100x64xf32>
    %170 = vector.broadcast %9 : vector<1x64xf32> to vector<100x64xf32>
    %171 = arith.addf %169, %170 : vector<100x64xf32>
    %cst_101 = arith.constant 0.000000e+00 : f32
    %172 = vector.broadcast %cst_101 : f32 to vector<100x64xf32>
    %173 = arith.maximumf %171, %172 : vector<100x64xf32>
    %174 = vector.broadcast %5 : vector<100x1xf32> to vector<100x64xf32>
    %175 = arith.mulf %173, %174 : vector<100x64xf32>
    %c16_102 = arith.constant 16 : index
    %c0_103 = arith.constant 0 : index
    %176 = vector.load %arg12[%c16_102, %c0_103] : memref<132x64xf32, #tpu.memory_space<vmem>>, vector<100x64xf32>
    tpu.vector_store %arg12[%c16_102, %c0_103], %175 {strides = array<i32>} : memref<132x64xf32, #tpu.memory_space<vmem>>, vector<100x64xf32>,
    %c5_104 = arith.constant 5 : index
    %c0_105 = arith.constant 0 : index
    %177 = vector.load %arg12[%c5_104, %c0_105] : memref<132x64xf32, #tpu.memory_space<vmem>>, vector<100x64xf32>
    %178 = arith.truncf %177 : vector<100x64xf32> to vector<100x64xbf16>
    %c6_106 = arith.constant 6 : index
    %c0_107 = arith.constant 0 : index
    %179 = vector.load %arg12[%c6_106, %c0_107] : memref<132x64xf32, #tpu.memory_space<vmem>>, vector<100x64xf32>
    %180 = arith.truncf %179 : vector<100x64xf32> to vector<100x64xbf16>
    %c7_108 = arith.constant 7 : index
    %c0_109 = arith.constant 0 : index
    %181 = vector.load %arg12[%c7_108, %c0_109] : memref<132x64xf32, #tpu.memory_space<vmem>>, vector<100x64xf32>
    %182 = arith.truncf %181 : vector<100x64xf32> to vector<100x64xbf16>
    %c15_110 = arith.constant 15 : index
    %c0_111 = arith.constant 0 : index
    %183 = vector.load %arg12[%c15_110, %c0_111] : memref<132x64xf32, #tpu.memory_space<vmem>>, vector<100x64xf32>
    %184 = arith.truncf %183 : vector<100x64xf32> to vector<100x64xbf16>
    %c16_112 = arith.constant 16 : index
    %c0_113 = arith.constant 0 : index
    %185 = vector.load %arg12[%c16_112, %c0_113] : memref<132x64xf32, #tpu.memory_space<vmem>>, vector<100x64xf32>
    %186 = arith.truncf %185 : vector<100x64xf32> to vector<100x64xbf16>
    %c17_114 = arith.constant 17 : index
    %c0_115 = arith.constant 0 : index
    %187 = vector.load %arg12[%c17_114, %c0_115] : memref<132x64xf32, #tpu.memory_space<vmem>>, vector<100x64xf32>
    %188 = arith.truncf %187 : vector<100x64xf32> to vector<100x64xbf16>
    %c25_116 = arith.constant 25 : index
    %c0_117 = arith.constant 0 : index
    %189 = vector.load %arg12[%c25_116, %c0_117] : memref<132x64xf32, #tpu.memory_space<vmem>>, vector<100x64xf32>
    %190 = arith.truncf %189 : vector<100x64xf32> to vector<100x64xbf16>
    %c26_118 = arith.constant 26 : index
    %c0_119 = arith.constant 0 : index
    %191 = vector.load %arg12[%c26_118, %c0_119] : memref<132x64xf32, #tpu.memory_space<vmem>>, vector<100x64xf32>
    %192 = arith.truncf %191 : vector<100x64xf32> to vector<100x64xbf16>
    %c27_120 = arith.constant 27 : index
    %c0_121 = arith.constant 0 : index
    %193 = vector.load %arg12[%c27_120, %c0_121] : memref<132x64xf32, #tpu.memory_space<vmem>>, vector<100x64xf32>
    %194 = arith.truncf %193 : vector<100x64xf32> to vector<100x64xbf16>
    %195 = tpu.concatenate %178, %180, %182, %184, %186, %188, %190, %192, %194 in 1 : vector<100x64xbf16>, vector<100x64xbf16>, vector<100x64xbf16>, vector<100x64xbf16>, vector<100x64xbf16>, vector<100x64xbf16>, vector<100x64xbf16>, vector<100x64xbf16>, vector<100x64xbf16> -> vector<100x576xbf16>
    %cst_122 = arith.constant dense<0.000000e+00> : vector<100x64xf32>
    %196 = tpu.matmul %195, %6, %cst_122 {dimension_numbers = #tpu.dot_dimension_numbers<[1], [0], [0], [1], [0, 0, 1, 1], [], []>} : vector<100x576xbf16>, vector<576x64xbf16>, vector<100x64xf32> -> vector<100x64xf32>
    %197 = vector.broadcast %7 : vector<1x64xf32> to vector<100x64xf32>
    %198 = arith.addf %196, %197 : vector<100x64xf32>
    %199 = vector.broadcast %5 : vector<100x1xf32> to vector<100x64xf32>
    %200 = arith.mulf %198, %199 : vector<100x64xf32>
    %cst_123 = arith.constant dense<0.000000e+00> : vector<64xf32>
    %201 = vector.multi_reduction <add>, %200, %cst_123 [0] : vector<100x64xf32> to vector<64xf32>
    %202 = vector.shape_cast %201 : vector<64xf32> to vector<1x64xf32>
    %cst_124 = arith.constant dense<0.000000e+00> : vector<1x32xf32>
    %203 = tpu.matmul %202, %10, %cst_124 {dimension_numbers = #tpu.dot_dimension_numbers<[1], [0], [0], [1], [0, 0, 1, 1], [], []>} : vector<1x64xf32>, vector<64x32xf32>, vector<1x32xf32> -> vector<1x32xf32>
    %cst_125 = arith.constant 1.280000e+02 : f32
    %204 = vector.broadcast %cst_125 : f32 to vector<1x32xf32>
    %205 = arith.divf %203, %204 : vector<1x32xf32>
    %cst_126 = arith.constant dense<0.000000e+00> : vector<1x64xf32>
    %206 = tpu.matmul %205, %11, %cst_126 {dimension_numbers = #tpu.dot_dimension_numbers<[1], [0], [0], [1], [0, 0, 1, 1], [], []>} : vector<1x32xf32>, vector<32x64xf32>, vector<1x64xf32> -> vector<1x64xf32>
    %207 = vector.broadcast %206 : vector<1x64xf32> to vector<100x64xf32>
    %208 = arith.subf %200, %207 : vector<100x64xf32>
    %209 = vector.broadcast %5 : vector<100x1xf32> to vector<100x64xf32>
    %210 = arith.mulf %208, %209 : vector<100x64xf32>
    %211 = arith.mulf %210, %210 : vector<100x64xf32>
    %cst_127 = arith.constant dense<0.000000e+00> : vector<64xf32>
    %212 = vector.multi_reduction <add>, %211, %cst_127 [0] : vector<100x64xf32> to vector<64xf32>
    %213 = vector.shape_cast %212 : vector<64xf32> to vector<1x64xf32>
    %cst_128 = arith.constant dense<0.000000e+00> : vector<1x32xf32>
    %214 = tpu.matmul %213, %10, %cst_128 {dimension_numbers = #tpu.dot_dimension_numbers<[1], [0], [0], [1], [0, 0, 1, 1], [], []>} : vector<1x64xf32>, vector<64x32xf32>, vector<1x32xf32> -> vector<1x32xf32>
    %cst_129 = arith.constant 1.280000e+02 : f32
    %215 = vector.broadcast %cst_129 : f32 to vector<1x32xf32>
    %216 = arith.divf %214, %215 : vector<1x32xf32>
    %cst_130 = arith.constant dense<0.000000e+00> : vector<1x64xf32>
    %217 = tpu.matmul %216, %11, %cst_130 {dimension_numbers = #tpu.dot_dimension_numbers<[1], [0], [0], [1], [0, 0, 1, 1], [], []>} : vector<1x32xf32>, vector<32x64xf32>, vector<1x64xf32> -> vector<1x64xf32>
    %cst_131 = arith.constant 9.99999974E-6 : f32
    %218 = vector.broadcast %cst_131 : f32 to vector<1x64xf32>
    %219 = arith.addf %217, %218 : vector<1x64xf32>
    %220 = math.rsqrt %219 : vector<1x64xf32>
    %221 = vector.broadcast %220 : vector<1x64xf32> to vector<100x64xf32>
    %222 = arith.mulf %210, %221 : vector<100x64xf32>
    %223 = vector.broadcast %8 : vector<1x64xf32> to vector<100x64xf32>
    %224 = arith.mulf %222, %223 : vector<100x64xf32>
    %225 = vector.broadcast %9 : vector<1x64xf32> to vector<100x64xf32>
    %226 = arith.addf %224, %225 : vector<100x64xf32>
    %cst_132 = arith.constant 0.000000e+00 : f32
    %227 = vector.broadcast %cst_132 : f32 to vector<100x64xf32>
    %228 = arith.maximumf %226, %227 : vector<100x64xf32>
    %229 = vector.broadcast %5 : vector<100x1xf32> to vector<100x64xf32>
    %230 = arith.mulf %228, %229 : vector<100x64xf32>
    %c16_133 = arith.constant 16 : index
    %c0_134 = arith.constant 0 : index
    %231 = vector.load %arg12[%c16_133, %c0_134] : memref<132x64xf32, #tpu.memory_space<vmem>>, vector<100x64xf32>
    tpu.vector_store %arg12[%c16_133, %c0_134], %230 {strides = array<i32>} : memref<132x64xf32, #tpu.memory_space<vmem>>, vector<100x64xf32>,
    %c5_135 = arith.constant 5 : index
    %c0_136 = arith.constant 0 : index
    %232 = vector.load %arg12[%c5_135, %c0_136] : memref<132x64xf32, #tpu.memory_space<vmem>>, vector<100x64xf32>
    %233 = arith.truncf %232 : vector<100x64xf32> to vector<100x64xbf16>
    %c6_137 = arith.constant 6 : index
    %c0_138 = arith.constant 0 : index
    %234 = vector.load %arg12[%c6_137, %c0_138] : memref<132x64xf32, #tpu.memory_space<vmem>>, vector<100x64xf32>
    %235 = arith.truncf %234 : vector<100x64xf32> to vector<100x64xbf16>
    %c7_139 = arith.constant 7 : index
    %c0_140 = arith.constant 0 : index
    %236 = vector.load %arg12[%c7_139, %c0_140] : memref<132x64xf32, #tpu.memory_space<vmem>>, vector<100x64xf32>
    %237 = arith.truncf %236 : vector<100x64xf32> to vector<100x64xbf16>
    %c15_141 = arith.constant 15 : index
    %c0_142 = arith.constant 0 : index
    %238 = vector.load %arg12[%c15_141, %c0_142] : memref<132x64xf32, #tpu.memory_space<vmem>>, vector<100x64xf32>
    %239 = arith.truncf %238 : vector<100x64xf32> to vector<100x64xbf16>
    %c16_143 = arith.constant 16 : index
    %c0_144 = arith.constant 0 : index
    %240 = vector.load %arg12[%c16_143, %c0_144] : memref<132x64xf32, #tpu.memory_space<vmem>>, vector<100x64xf32>
    %241 = arith.truncf %240 : vector<100x64xf32> to vector<100x64xbf16>
    %c17_145 = arith.constant 17 : index
    %c0_146 = arith.constant 0 : index
    %242 = vector.load %arg12[%c17_145, %c0_146] : memref<132x64xf32, #tpu.memory_space<vmem>>, vector<100x64xf32>
    %243 = arith.truncf %242 : vector<100x64xf32> to vector<100x64xbf16>
    %c25_147 = arith.constant 25 : index
    %c0_148 = arith.constant 0 : index
    %244 = vector.load %arg12[%c25_147, %c0_148] : memref<132x64xf32, #tpu.memory_space<vmem>>, vector<100x64xf32>
    %245 = arith.truncf %244 : vector<100x64xf32> to vector<100x64xbf16>
    %c26_149 = arith.constant 26 : index
    %c0_150 = arith.constant 0 : index
    %246 = vector.load %arg12[%c26_149, %c0_150] : memref<132x64xf32, #tpu.memory_space<vmem>>, vector<100x64xf32>
    %247 = arith.truncf %246 : vector<100x64xf32> to vector<100x64xbf16>
    %c27_151 = arith.constant 27 : index
    %c0_152 = arith.constant 0 : index
    %248 = vector.load %arg12[%c27_151, %c0_152] : memref<132x64xf32, #tpu.memory_space<vmem>>, vector<100x64xf32>
    %249 = arith.truncf %248 : vector<100x64xf32> to vector<100x64xbf16>
    %250 = tpu.concatenate %233, %235, %237, %239, %241, %243, %245, %247, %249 in 1 : vector<100x64xbf16>, vector<100x64xbf16>, vector<100x64xbf16>, vector<100x64xbf16>, vector<100x64xbf16>, vector<100x64xbf16>, vector<100x64xbf16>, vector<100x64xbf16>, vector<100x64xbf16> -> vector<100x576xbf16>
    %c0_153 = arith.constant 0 : index
    %c0_154 = arith.constant 0 : index
    %251 = vector.load %arg9[%c0_153, %c0_154] : memref<576x128xbf16, #tpu.memory_space<vmem>>, vector<576x128xbf16>
    %cst_155 = arith.constant dense<0.000000e+00> : vector<100x128xf32>
    %252 = tpu.matmul %250, %251, %cst_155 {dimension_numbers = #tpu.dot_dimension_numbers<[1], [0], [0], [1], [0, 0, 1, 1], [], []>} : vector<100x576xbf16>, vector<576x128xbf16>, vector<100x128xf32> -> vector<100x128xf32>
    %c0_156 = arith.constant 0 : index
    %c0_157 = arith.constant 0 : index
    %253 = vector.load %arg10[%c0_156, %c0_157] : memref<1x128xf32, #tpu.memory_space<vmem>>, vector<1x128xf32>
    %254 = vector.broadcast %253 : vector<1x128xf32> to vector<100x128xf32>
    %255 = arith.addf %252, %254 : vector<100x128xf32>
    %256 = tpu.iota {dimensions = array<i32: 1>} : vector<100x128xi32>
    %c3_i32 = arith.constant 3 : i32
    %257 = vector.broadcast %c3_i32 : i32 to vector<100x128xi32>
    %258 = arith.cmpi sge, %256, %257 : vector<100x128xi32>
    %c7_i32 = arith.constant 7 : i32
    %259 = vector.broadcast %c7_i32 : i32 to vector<100x128xi32>
    %260 = arith.cmpi slt, %256, %259 : vector<100x128xi32>
    %261 = arith.andi %258, %260 : vector<100x128xi1>
    %262 = math.exp %255 : vector<100x128xf32>
    %263 = arith.select %261, %262, %255 : vector<100x128xi1>, vector<100x128xf32>
    %c0_158 = arith.constant 0 : index
    %c0_159 = arith.constant 0 : index
    %c0_160 = arith.constant 0 : index
    %264 = vector.load %arg11[%c0_158, %c0_159, %c0_160] : memref<1x100x128xf32, #tpu.memory_space<vmem>>, vector<1x100x128xf32>
    %265 = vector.shape_cast %264 : vector<1x100x128xf32> to vector<100x128xf32>
    %266 = vector.shape_cast %263 : vector<100x128xf32> to vector<1x100x128xf32>
    tpu.vector_store %arg11[%c0_158, %c0_159, %c0_160], %266 {strides = array<i32>} : memref<1x100x128xf32, #tpu.memory_space<vmem>>, vector<1x100x128xf32>,
    return
  }
  func.func @transform_0(%arg0: i32) -> (i32, i32, i32) {
    %c0_i32 = arith.constant 0 : i32
    %c0_i32_0 = arith.constant 0 : i32
    %c0_i32_1 = arith.constant 0 : i32
    return %arg0, %c0_i32, %c0_i32_0 : i32, i32, i32
  }
  func.func @transform_1(%arg0: i32) -> (i32, i32) {
    %c0_i32 = arith.constant 0 : i32
    %c0_i32_0 = arith.constant 0 : i32
    %c0_i32_1 = arith.constant 0 : i32
    return %c0_i32, %c0_i32_0 : i32, i32
  }
  func.func @transform_2(%arg0: i32) -> (i32, i32) {
    %c0_i32 = arith.constant 0 : i32
    %c0_i32_0 = arith.constant 0 : i32
    %c0_i32_1 = arith.constant 0 : i32
    return %c0_i32, %c0_i32_0 : i32, i32
  }
  func.func @transform_3(%arg0: i32) -> (i32, i32) {
    %c0_i32 = arith.constant 0 : i32
    %c0_i32_0 = arith.constant 0 : i32
    %c0_i32_1 = arith.constant 0 : i32
    return %c0_i32, %c0_i32_0 : i32, i32
  }
  func.func @transform_4(%arg0: i32) -> (i32, i32) {
    %c0_i32 = arith.constant 0 : i32
    %c0_i32_0 = arith.constant 0 : i32
    %c0_i32_1 = arith.constant 0 : i32
    return %c0_i32, %c0_i32_0 : i32, i32
  }
  func.func @transform_5(%arg0: i32) -> (i32, i32) {
    %c0_i32 = arith.constant 0 : i32
    %c0_i32_0 = arith.constant 0 : i32
    %c0_i32_1 = arith.constant 0 : i32
    return %c0_i32, %c0_i32_0 : i32, i32
  }
  func.func @transform_6(%arg0: i32) -> (i32, i32) {
    %c0_i32 = arith.constant 0 : i32
    %c0_i32_0 = arith.constant 0 : i32
    %c0_i32_1 = arith.constant 0 : i32
    return %c0_i32, %c0_i32_0 : i32, i32
  }
  func.func @transform_7(%arg0: i32) -> (i32, i32) {
    %c0_i32 = arith.constant 0 : i32
    %c0_i32_0 = arith.constant 0 : i32
    %c0_i32_1 = arith.constant 0 : i32
    return %c0_i32, %c0_i32_0 : i32, i32
  }
  func.func @transform_8(%arg0: i32) -> (i32, i32) {
    %c0_i32 = arith.constant 0 : i32
    %c0_i32_0 = arith.constant 0 : i32
    %c0_i32_1 = arith.constant 0 : i32
    return %c0_i32, %c0_i32_0 : i32, i32
  }
  func.func @transform_9(%arg0: i32) -> (i32, i32) {
    %c0_i32 = arith.constant 0 : i32
    %c0_i32_0 = arith.constant 0 : i32
    %c0_i32_1 = arith.constant 0 : i32
    return %c0_i32, %c0_i32_0 : i32, i32
  }
  func.func @transform_10(%arg0: i32) -> (i32, i32, i32) {
    %c0_i32 = arith.constant 0 : i32
    %c0_i32_0 = arith.constant 0 : i32
    %c0_i32_1 = arith.constant 0 : i32
    return %arg0, %c0_i32, %c0_i32_0 : i32, i32, i32
  }
}

</mosaic_0001>

<llo_original>
// kernel: _lambda_.1
$region0: #{_lambda_.1}
  #allocation0 [shape = 'u32[]', space=smem, size = 0x4, offset = 0x4, fixed_abs, tag = 'smem constant byte address 0x4 - core index']
  #allocation1 [shape = 'u32[144,128]{1,0:T(1,128)}', space=vmem, size = 0x12000, scoped, tag = 'internal scratch']
  #allocation2 [shape = 'f32[132,64]{1,0:T(8,128)}', space=vmem, size = 0x11000, scoped, tag = 'scratch operand']
  %s0 = inlined_call_operand.vmem [shape: f32[2,100,64], index: 0, kind: input, shape index: {}]
  %s1 = inlined_call_operand.vmem [shape: f32[100,1], index: 1, kind: input, shape index: {}]
  %s2 = inlined_call_operand.vmem [shape: bf16[576,64], index: 2, kind: input, shape index: {}]
  %s3 = inlined_call_operand.vmem [shape: f32[1,64], index: 3, kind: input, shape index: {}]
  %s4 = inlined_call_operand.vmem [shape: f32[1,64], index: 4, kind: input, shape index: {}]
  %s5 = inlined_call_operand.vmem [shape: f32[1,64], index: 5, kind: input, shape index: {}]
  %s6 = inlined_call_operand.vmem [shape: f32[64,32], index: 6, kind: input, shape index: {}]
  %s7 = inlined_call_operand.vmem [shape: f32[32,64], index: 7, kind: input, shape index: {}]
  %s8 = inlined_call_operand.vmem [shape: bf16[576,128], index: 8, kind: input, shape index: {}]
  %s9 = inlined_call_operand.vmem [shape: f32[1,128], index: 9, kind: input, shape index: {}]
  %s10 = inlined_call_operand.vmem [shape: f32[2,100,128], index: 10, kind: output, shape index: {}]
  %s11 = sld [smem:[#allocation0]]
  $region73: #{_lambda_.1} parent=0
    _
  %s13 = ssub.s32 1, %s11
  %s14 = scalar_select 0, %s13, %s11
  loop: start=0, step=1, limit=4
  $region2: #{_lambda_.1} parent=0 // loop_pre_header
    _
  $region3: #{_lambda_.1} parent=0 // loop_header
    %s16 = sphi 0, %s20
    %p17 = scmp.ge.s32.totalorder %s16, 4
    %s26 = sphi 0, %s28
    %s29 = sphi 0, %s26
    %s30 = sphi 0, %s29
    %s46 = sphi 0, %s30
    %s50 = sphi 0, %s50
    %s52 = sphi 0, %s50
    %s53 = sphi 0, %s52
    %s67 = sphi 0, %s53
    %s71 = sphi 0, %s71
    %s73 = sphi 0, %s71
    %s74 = sphi 0, %s73
    %s88 = sphi 0, %s74
    %s92 = sphi 0, %s92
    %s94 = sphi 0, %s92
    %s95 = sphi 0, %s94
    %s109 = sphi 0, %s95
    %s113 = sphi 0, %s113
    %s115 = sphi 0, %s113
    %s116 = sphi 0, %s115
    %s130 = sphi 0, %s116
    %s134 = sphi 0, %s134
    %s136 = sphi 0, %s134
    %s137 = sphi 0, %s136
    %s151 = sphi 0, %s137
    %s155 = sphi 0, %s155
    %s157 = sphi 0, %s155
    %s158 = sphi 0, %s157
    %s172 = sphi 0, %s158
    %s176 = sphi 0, %s176
    %s178 = sphi 0, %s176
    %s179 = sphi 0, %s178
    %s193 = sphi 0, %s179
    %s197 = sphi 0, %s197
    %s199 = sphi 0, %s197
    %s200 = sphi 0, %s199
    %s214 = sphi 0, %s200
    %s218 = sphi 0, %s218
    %s220 = sphi 0, %s218
    %s221 = sphi 0, %s220
    %s235 = sphi 0, %s221
    %s241 = sphi 0, %s243
    %s244 = sphi 0, %s241
    %s245 = sphi 0, %s244
    %s261 = sphi 0, %s245
  $region4: #{_lambda_.1} parent=0 // loop_header_branch
    %19 = sbr.rel (%p17) target = $region8
  $region5: #{_lambda_.1} parent=0 // loop_body
    %s21 = ssub.s32 %s16, 1
    %s22 = ssub.s32 %s16, 2
    %s23 = sadd.s32 %s16, 1
    %s24 = ssub.s32 %s16, %s23
    %p25 = scmp.eq.s32.totalorder %s24, 0
    %s27 = sadd.s32 %s26, 1
    %s28 = scalar_select %p25, %s26, %s27
    %p31 = pneg %p25
    %p32 = scmp.eq.s32.totalorder %s16, 1
    %p33 = por %p31, %p32
    %p34 = scmp.ne.s32.totalorder %s26, %s29
    %p35 = scmp.eq.s32.totalorder %s16, 0
    %p36 = por %p34, %p35
    %p37 = scmp.ne.s32.totalorder %s26, %s29
    %p38 = scmp.eq.s32.totalorder %s21, 1
    %p39 = por %p37, %p38
    %p40 = scmp.ne.s32.totalorder %s29, %s30
    %p41 = scmp.eq.s32.totalorder %s21, 0
    %p42 = por %p40, %p41
    %p43 = scmp.ne.s32.totalorder %s29, %s30
    %p44 = scmp.eq.s32.totalorder %s22, 1
    %p45 = por %p43, %p44
    %p47 = scmp.ne.s32.totalorder %s30, %s46
    %p48 = scmp.eq.s32.totalorder %s22, 0
    %p49 = por %p47, %p48
    %s51 = sadd.s32 %s50, 1
    %p54 = scmp.eq.s32.totalorder %s16, 1
    %p55 = scmp.ne.s32.totalorder %s50, %s52
    %p56 = scmp.eq.s32.totalorder %s16, 0
    %p57 = por %p55, %p56
    %p58 = scmp.ne.s32.totalorder %s50, %s52
    %p59 = scmp.eq.s32.totalorder %s21, 1
    %p60 = por %p58, %p59
    %p61 = scmp.ne.s32.totalorder %s52, %s53
    %p62 = scmp.eq.s32.totalorder %s21, 0
    %p63 = por %p61, %p62
    %p64 = scmp.ne.s32.totalorder %s52, %s53
    %p65 = scmp.eq.s32.totalorder %s22, 1
    %p66 = por %p64, %p65
    %p68 = scmp.ne.s32.totalorder %s53, %s67
    %p69 = scmp.eq.s32.totalorder %s22, 0
    %p70 = por %p68, %p69
    %s72 = sadd.s32 %s71, 1
    %p75 = scmp.eq.s32.totalorder %s16, 1
    %p76 = scmp.ne.s32.totalorder %s71, %s73
    %p77 = scmp.eq.s32.totalorder %s16, 0
    %p78 = por %p76, %p77
    %p79 = scmp.ne.s32.totalorder %s71, %s73
    %p80 = scmp.eq.s32.totalorder %s21, 1
    %p81 = por %p79, %p80
    %p82 = scmp.ne.s32.totalorder %s73, %s74
    %p83 = scmp.eq.s32.totalorder %s21, 0
    %p84 = por %p82, %p83
    %p85 = scmp.ne.s32.totalorder %s73, %s74
    %p86 = scmp.eq.s32.totalorder %s22, 1
    %p87 = por %p85, %p86
    %p89 = scmp.ne.s32.totalorder %s74, %s88
    %p90 = scmp.eq.s32.totalorder %s22, 0
    %p91 = por %p89, %p90
    %s93 = sadd.s32 %s92, 1
    %p96 = scmp.eq.s32.totalorder %s16, 1
    %p97 = scmp.ne.s32.totalorder %s92, %s94
    %p98 = scmp.eq.s32.totalorder %s16, 0
    %p99 = por %p97, %p98
    %p100 = scmp.ne.s32.totalorder %s92, %s94
    %p101 = scmp.eq.s32.totalorder %s21, 1
    %p102 = por %p100, %p101
    %p103 = scmp.ne.s32.totalorder %s94, %s95
    %p104 = scmp.eq.s32.totalorder %s21, 0
    %p105 = por %p103, %p104
    %p106 = scmp.ne.s32.totalorder %s94, %s95
    %p107 = scmp.eq.s32.totalorder %s22, 1
    %p108 = por %p106, %p107
    %p110 = scmp.ne.s32.totalorder %s95, %s109
    %p111 = scmp.eq.s32.totalorder %s22, 0
    %p112 = por %p110, %p111
    %s114 = sadd.s32 %s113, 1
    %p117 = scmp.eq.s32.totalorder %s16, 1
    %p118 = scmp.ne.s32.totalorder %s113, %s115
    %p119 = scmp.eq.s32.totalorder %s16, 0
    %p120 = por %p118, %p119
    %p121 = scmp.ne.s32.totalorder %s113, %s115
    %p122 = scmp.eq.s32.totalorder %s21, 1
    %p123 = por %p121, %p122
    %p124 = scmp.ne.s32.totalorder %s115, %s116
    %p125 = scmp.eq.s32.totalorder %s21, 0
    %p126 = por %p124, %p125
    %p127 = scmp.ne.s32.totalorder %s115, %s116
    %p128 = scmp.eq.s32.totalorder %s22, 1
    %p129 = por %p127, %p128
    %p131 = scmp.ne.s32.totalorder %s116, %s130
    %p132 = scmp.eq.s32.totalorder %s22, 0
    %p133 = por %p131, %p132
    %s135 = sadd.s32 %s134, 1
    %p138 = scmp.eq.s32.totalorder %s16, 1
    %p139 = scmp.ne.s32.totalorder %s134, %s136
    %p140 = scmp.eq.s32.totalorder %s16, 0
    %p141 = por %p139, %p140
    %p142 = scmp.ne.s32.totalorder %s134, %s136
    %p143 = scmp.eq.s32.totalorder %s21, 1
    %p144 = por %p142, %p143
    %p145 = scmp.ne.s32.totalorder %s136, %s137
    %p146 = scmp.eq.s32.totalorder %s21, 0
    %p147 = por %p145, %p146
    %p148 = scmp.ne.s32.totalorder %s136, %s137
    %p149 = scmp.eq.s32.totalorder %s22, 1
    %p150 = por %p148, %p149
    %p152 = scmp.ne.s32.totalorder %s137, %s151
    %p153 = scmp.eq.s32.totalorder %s22, 0
    %p154 = por %p152, %p153
    %s156 = sadd.s32 %s155, 1
    %p159 = scmp.eq.s32.totalorder %s16, 1
    %p160 = scmp.ne.s32.totalorder %s155, %s157
    %p161 = scmp.eq.s32.totalorder %s16, 0
    %p162 = por %p160, %p161
    %p163 = scmp.ne.s32.totalorder %s155, %s157
    %p164 = scmp.eq.s32.totalorder %s21, 1
    %p165 = por %p163, %p164
    %p166 = scmp.ne.s32.totalorder %s157, %s158
    %p167 = scmp.eq.s32.totalorder %s21, 0
    %p168 = por %p166, %p167
    %p169 = scmp.ne.s32.totalorder %s157, %s158
    %p170 = scmp.eq.s32.totalorder %s22, 1
    %p171 = por %p169, %p170
    %p173 = scmp.ne.s32.totalorder %s158, %s172
    %p174 = scmp.eq.s32.totalorder %s22, 0
    %p175 = por %p173, %p174
    %s177 = sadd.s32 %s176, 1
    %p180 = scmp.eq.s32.totalorder %s16, 1
    %p181 = scmp.ne.s32.totalorder %s176, %s178
    %p182 = scmp.eq.s32.totalorder %s16, 0
    %p183 = por %p181, %p182
    %p184 = scmp.ne.s32.totalorder %s176, %s178
    %p185 = scmp.eq.s32.totalorder %s21, 1
    %p186 = por %p184, %p185
    %p187 = scmp.ne.s32.totalorder %s178, %s179
    %p188 = scmp.eq.s32.totalorder %s21, 0
    %p189 = por %p187, %p188
    %p190 = scmp.ne.s32.totalorder %s178, %s179
    %p191 = scmp.eq.s32.totalorder %s22, 1
    %p192 = por %p190, %p191
    %p194 = scmp.ne.s32.totalorder %s179, %s193
    %p195 = scmp.eq.s32.totalorder %s22, 0
    %p196 = por %p194, %p195
    %s198 = sadd.s32 %s197, 1
    %p201 = scmp.eq.s32.totalorder %s16, 1
    %p202 = scmp.ne.s32.totalorder %s197, %s199
    %p203 = scmp.eq.s32.totalorder %s16, 0
    %p204 = por %p202, %p203
    %p205 = scmp.ne.s32.totalorder %s197, %s199
    %p206 = scmp.eq.s32.totalorder %s21, 1
    %p207 = por %p205, %p206
    %p208 = scmp.ne.s32.totalorder %s199, %s200
    %p209 = scmp.eq.s32.totalorder %s21, 0
    %p210 = por %p208, %p209
    %p211 = scmp.ne.s32.totalorder %s199, %s200
    %p212 = scmp.eq.s32.totalorder %s22, 1
    %p213 = por %p211, %p212
    %p215 = scmp.ne.s32.totalorder %s200, %s214
    %p216 = scmp.eq.s32.totalorder %s22, 0
    %p217 = por %p215, %p216
    %s219 = sadd.s32 %s218, 1
    %p222 = scmp.eq.s32.totalorder %s16, 1
    %p223 = scmp.ne.s32.totalorder %s218, %s220
    %p224 = scmp.eq.s32.totalorder %s16, 0
    %p225 = por %p223, %p224
    %p226 = scmp.ne.s32.totalorder %s218, %s220
    %p227 = scmp.eq.s32.totalorder %s21, 1
    %p228 = por %p226, %p227
    %p229 = scmp.ne.s32.totalorder %s220, %s221
    %p230 = scmp.eq.s32.totalorder %s21, 0
    %p231 = por %p229, %p230
    %p232 = scmp.ne.s32.totalorder %s220, %s221
    %p233 = scmp.eq.s32.totalorder %s22, 1
    %p234 = por %p232, %p233
    %p236 = scmp.ne.s32.totalorder %s221, %s235
    %p237 = scmp.eq.s32.totalorder %s22, 0
    %p238 = por %p236, %p237
    %s239 = ssub.s32 %s16, %s23
    %p240 = scmp.eq.s32.totalorder %s239, 0
    %s242 = sadd.s32 %s241, 1
    %s243 = scalar_select %p240, %s241, %s242
    %p246 = pneg %p240
    %p247 = scmp.eq.s32.totalorder %s16, 1
    %p248 = por %p246, %p247
    %p249 = scmp.ne.s32.totalorder %s241, %s244
    %p250 = scmp.eq.s32.totalorder %s16, 0
    %p251 = por %p249, %p250
    %p252 = scmp.ne.s32.totalorder %s241, %s244
    %p253 = scmp.eq.s32.totalorder %s21, 1
    %p254 = por %p252, %p253
    %p255 = scmp.ne.s32.totalorder %s244, %s245
    %p256 = scmp.eq.s32.totalorder %s21, 0
    %p257 = por %p255, %p256
    %p258 = scmp.ne.s32.totalorder %s244, %s245
    %p259 = scmp.eq.s32.totalorder %s22, 1
    %p260 = por %p258, %p259
    %p262 = scmp.ne.s32.totalorder %s245, %s261
    %p263 = scmp.eq.s32.totalorder %s22, 0
    %p264 = por %p262, %p263
    %p265 = scmp.le.s32.totalorder 1, %s16
    %p266 = scmp.lt.s32.totalorder %s16, 3
    %p267 = pnand %p265, %p266
    %p268 = pneg %p267
    // Predicated region
    $region9: #{_lambda_.1} parent=5 // pred_check
      _
    $region10: #{_lambda_.1} parent=5 // pred_check_branch
      %270 = sbr.rel (%p267) target = $region12
    $region11: #{_lambda_.1} parent=5 // pred_region
      %s271 = ssub.s32 %s16, 1
      // Predicated region
      $region13: #{_lambda_.1} parent=11 // pred_check
        %p272 = pneg %p63
      $region14: #{_lambda_.1} parent=11 // pred_check_branch
        %274 = sbr.rel (%p272) target = $region16
      $region15: #{_lambda_.1} parent=11 // pred_region
        _
      $region16: #{_lambda_.1} parent=11 // pred_fallthru
        _
      // Predicated region
      $region17: #{_lambda_.1} parent=11 // pred_check
        %p275 = pneg %p84
      $region18: #{_lambda_.1} parent=11 // pred_check_branch
        %277 = sbr.rel (%p275) target = $region20
      $region19: #{_lambda_.1} parent=11 // pred_region
        _
      $region20: #{_lambda_.1} parent=11 // pred_fallthru
        _
      // Predicated region
      $region21: #{_lambda_.1} parent=11 // pred_check
        %p278 = pneg %p105
      $region22: #{_lambda_.1} parent=11 // pred_check_branch
        %280 = sbr.rel (%p278) target = $region24
      $region23: #{_lambda_.1} parent=11 // pred_region
        _
      $region24: #{_lambda_.1} parent=11 // pred_fallthru
        _
      // Predicated region
      $region25: #{_lambda_.1} parent=11 // pred_check
        %p281 = pneg %p126
      $region26: #{_lambda_.1} parent=11 // pred_check_branch
        %283 = sbr.rel (%p281) target = $region28
      $region27: #{_lambda_.1} parent=11 // pred_region
        _
      $region28: #{_lambda_.1} parent=11 // pred_fallthru
        _
      // Predicated region
      $region29: #{_lambda_.1} parent=11 // pred_check
        %p284 = pneg %p147
      $region30: #{_lambda_.1} parent=11 // pred_check_branch
        %286 = sbr.rel (%p284) target = $region32
      $region31: #{_lambda_.1} parent=11 // pred_region
        _
      $region32: #{_lambda_.1} parent=11 // pred_fallthru
        _
      // Predicated region
      $region33: #{_lambda_.1} parent=11 // pred_check
        %p287 = pneg %p168
      $region34: #{_lambda_.1} parent=11 // pred_check_branch
        %289 = sbr.rel (%p287) target = $region36
      $region35: #{_lambda_.1} parent=11 // pred_region
        _
      $region36: #{_lambda_.1} parent=11 // pred_fallthru
        _
      // Predicated region
      $region37: #{_lambda_.1} parent=11 // pred_check
        %p290 = pneg %p189
      $region38: #{_lambda_.1} parent=11 // pred_check_branch
        %292 = sbr.rel (%p290) target = $region40
      $region39: #{_lambda_.1} parent=11 // pred_region
        _
      $region40: #{_lambda_.1} parent=11 // pred_fallthru
        _
      // Predicated region
      $region41: #{_lambda_.1} parent=11 // pred_check
        %p293 = pneg %p210
      $region42: #{_lambda_.1} parent=11 // pred_check_branch
        %295 = sbr.rel (%p293) target = $region44
      $region43: #{_lambda_.1} parent=11 // pred_region
        _
      $region44: #{_lambda_.1} parent=11 // pred_fallthru
        _
      // Predicated region
      $region45: #{_lambda_.1} parent=11 // pred_check
        %p296 = pneg %p231
      $region46: #{_lambda_.1} parent=11 // pred_check_branch
        %298 = sbr.rel (%p296) target = $region48
      $region47: #{_lambda_.1} parent=11 // pred_region
        _
      $region48: #{_lambda_.1} parent=11 // pred_fallthru
        _
    $region12: #{_lambda_.1} parent=5 // pred_fallthru
      _
    %p299 = scmp.lt.s32.totalorder %s16, 2
    // Predicated region
    $region49: #{_lambda_.1} parent=5 // pred_check
      %p300 = pneg %p299
    $region50: #{_lambda_.1} parent=5 // pred_check_branch
      %302 = sbr.rel (%p300) target = $region52
    $region51: #{_lambda_.1} parent=5 // pred_region
      // Predicated region
      $region53: #{_lambda_.1} parent=51 // pred_check
        %p303 = pneg %p36
      $region54: #{_lambda_.1} parent=51 // pred_check_branch
        %305 = sbr.rel (%p303) target = $region56
      $region55: #{_lambda_.1} parent=51 // pred_region
        %p306 = scmp.lt.s32.totalorder %s16, 1
        %s307 = scalar_select %p306, %s16, 1
        %s308 = smul.addr %s307, 13
        %s309 = smul.addr %s308, 8
        %s310 = scalar_lea.vmem %s0, %s309
      $region56: #{_lambda_.1} parent=51 // pred_fallthru
        _
    $region52: #{_lambda_.1} parent=5 // pred_fallthru
      _
    %p311 = scmp.le.s32.totalorder 1, %s16
    %p312 = scmp.lt.s32.totalorder %s16, 3
    %p313 = pnand %p311, %p312
    %p314 = pneg %p313
    // Predicated region
    $region57: #{_lambda_.1} parent=5 // pred_check
      _
    $region58: #{_lambda_.1} parent=5 // pred_check_branch
      %316 = sbr.rel (%p313) target = $region60
    $region59: #{_lambda_.1} parent=5 // pred_region
      %s317 = ssub.s32 %s16, 1
      %p318 = scmp.lt.s32.totalorder %s21, 1
      %s319 = scalar_select %p318, %s21, 1
      %s320 = smul.addr %s319, 13
      %s321 = smul.addr %s320, 8
      %s322 = scalar_lea.vmem %s0, %s321
      %p323 = pneg %p42
      %p324 = pneg %p39
      %p325 = pneg %p63
      %p326 = pneg %p60
      %p327 = pneg %p84
      %p328 = pneg %p81
      %p329 = pneg %p105
      %p330 = pneg %p102
      %p331 = pneg %p126
      %p332 = pneg %p123
      %p333 = pneg %p147
      %p334 = pneg %p144
      %p335 = pneg %p168
      %p336 = pneg %p165
      %p337 = pneg %p189
      %p338 = pneg %p186
      %p339 = pneg %p210
      %p340 = pneg %p207
      %p341 = pneg %p231
      %p342 = pneg %p228
      %p343 = pneg %p257
      %p344 = pneg %p254
      %p345 = scmp.lt.s32.totalorder %s21, 1
      %s346 = scalar_select %p345, %s21, 1
      %s347 = smul.addr %s346, 13
      %s348 = smul.addr %s347, 8
      %s349 = scalar_lea.vmem %s10, %s348
      %p350 = scmp.lt.s32.totalorder %s21, 1
      %s351 = scalar_select %p350, %s21, 1
      %s352 = smul.addr %s351, 13
      %s353 = smul.addr %s352, 8
      %s354 = scalar_lea.vmem %s0, %s353
      %p355 = scmp.lt.s32.totalorder %s21, 1
      %s356 = scalar_select %p355, %s21, 1
      %s357 = smul.addr %s356, 13
      %s358 = smul.addr %s357, 8
      %s359 = scalar_lea.vmem %s10, %s358
      %vm361 = vcmask 523264
      %362 = vst.msk [vmem:[#allocation2] sm:$0xff] %vm361, 0.0
      %363 = vst.msk [vmem:[#allocation2 + $0x8] sm:$0xff] %vm361, 0.0
      %364 = vst.msk [vmem:[#allocation2 + $0x10] sm:$0xff] %vm361, 0.0
      %365 = vst.msk [vmem:[#allocation2 + $0x18] sm:$0xff] %vm361, 0.0
      %366 = vst.msk [vmem:[#allocation2 + $0x20] sm:$0xff] %vm361, 0.0
      %367 = vst.msk [vmem:[#allocation2 + $0x28] sm:$0xff] %vm361, 0.0
      %368 = vst.msk [vmem:[#allocation2 + $0x30] sm:$0xff] %vm361, 0.0
      %369 = vst.msk [vmem:[#allocation2 + $0x38] sm:$0xff] %vm361, 0.0
      %370 = vst.msk [vmem:[#allocation2 + $0x40] sm:$0xff] %vm361, 0.0
      %371 = vst.msk [vmem:[#allocation2 + $0x48] sm:$0xff] %vm361, 0.0
      %372 = vst.msk [vmem:[#allocation2 + $0x50] sm:$0xff] %vm361, 0.0
      %373 = vst.msk [vmem:[#allocation2 + $0x58] sm:$0xff] %vm361, 0.0
      %374 = vst.msk [vmem:[#allocation2 + $0x60] sm:$0xff] %vm361, 0.0
      %375 = vst.msk [vmem:[#allocation2 + $0x68] sm:$0xff] %vm361, 0.0
      %376 = vst.msk [vmem:[#allocation2 + $0x70] sm:$0xff] %vm361, 0.0
      %377 = vst.msk [vmem:[#allocation2 + $0x78] sm:$0xff] %vm361, 0.0
      %vm378 = vcmask 519168
      %379 = vst.msk [vmem:[#allocation2 + $0x80] sm:$0xf] %vm378, 0.0
      %v380 = vld [vmem:[%s354] sm:$0xff]
      %v381 = vld [vmem:[%s354 + $0x8] sm:$0xff]
      %v382 = vld [vmem:[%s354 + $0x10] sm:$0xff]
      %v383 = vld [vmem:[%s354 + $0x18] sm:$0xff]
      %v384 = vld [vmem:[%s354 + $0x20] sm:$0xff]
      %v385 = vld [vmem:[%s354 + $0x28] sm:$0xff]
      %v386 = vld [vmem:[%s354 + $0x30] sm:$0xff]
      %v387 = vld [vmem:[%s354 + $0x38] sm:$0xff]
      %v388 = vld [vmem:[%s354 + $0x40] sm:$0xff]
      %v389 = vld [vmem:[%s354 + $0x48] sm:$0xff]
      %v390 = vld [vmem:[%s354 + $0x50] sm:$0xff]
      %v391 = vld [vmem:[%s354 + $0x58] sm:$0xff]
      %v392 = vld [vmem:[%s354 + $0x60] sm:$0xf]
      %393 = vst.msk [vmem:[#allocation2 + $0x10] sm:$0xff] %vm361, %v380
      %394 = vst.msk [vmem:[#allocation2 + $0x18] sm:$0xff] %vm361, %v381
      %395 = vst.msk [vmem:[#allocation2 + $0x20] sm:$0xff] %vm361, %v382
      %396 = vst.msk [vmem:[#allocation2 + $0x28] sm:$0xff] %vm361, %v383
      %397 = vst.msk [vmem:[#allocation2 + $0x30] sm:$0xff] %vm361, %v384
      %398 = vst.msk [vmem:[#allocation2 + $0x38] sm:$0xff] %vm361, %v385
      %399 = vst.msk [vmem:[#allocation2 + $0x40] sm:$0xff] %vm361, %v386
      %400 = vst.msk [vmem:[#allocation2 + $0x48] sm:$0xff] %vm361, %v387
      %401 = vst.msk [vmem:[#allocation2 + $0x50] sm:$0xff] %vm361, %v388
      %402 = vst.msk [vmem:[#allocation2 + $0x58] sm:$0xff] %vm361, %v389
      %403 = vst.msk [vmem:[#allocation2 + $0x60] sm:$0xff] %vm361, %v390
      %404 = vst.msk [vmem:[#allocation2 + $0x68] sm:$0xff] %vm361, %v391
      %405 = vst.msk [vmem:[#allocation2 + $0x70] sm:$0xf] %vm378, %v392
      %v406 = vld [vmem:[%s1] sm:$0xff]
      %v407 = vld [vmem:[%s1 + $0x8] sm:$0xff]
      %v408 = vld [vmem:[%s1 + $0x10] sm:$0xff]
      %v409 = vld [vmem:[%s1 + $0x18] sm:$0xff]
      %v410 = vld [vmem:[%s1 + $0x20] sm:$0xff]
      %v411 = vld [vmem:[%s1 + $0x28] sm:$0xff]
      %v412 = vld [vmem:[%s1 + $0x30] sm:$0xff]
      %v413 = vld [vmem:[%s1 + $0x38] sm:$0xff]
      %v414 = vld [vmem:[%s1 + $0x40] sm:$0xff]
      %v415 = vld [vmem:[%s1 + $0x48] sm:$0xff]
      %v416 = vld [vmem:[%s1 + $0x50] sm:$0xff]
      %v417 = vld [vmem:[%s1 + $0x58] sm:$0xff]
      %v418 = vld [vmem:[%s1 + $0x60] sm:$0xf]
      %v419 = vld [vmem:[%s2] sm:$0xf]
      %v420 = vld [vmem:[%s2 + $0x4] sm:$0xf]
      %v421 = vld [vmem:[%s2 + $0x8] sm:$0xf]
      %v422 = vld [vmem:[%s2 + $0xc] sm:$0xf]
      %v423 = vld [vmem:[%s2 + $0x10] sm:$0xf]
      %v424 = vld [vmem:[%s2 + $0x14] sm:$0xf]
      %v425 = vld [vmem:[%s2 + $0x18] sm:$0xf]
      %v426 = vld [vmem:[%s2 + $0x1c] sm:$0xf]
      %v427 = vld [vmem:[%s2 + $0x20] sm:$0xf]
      %v428 = vld [vmem:[%s2 + $0x24] sm:$0xf]
      %v429 = vld [vmem:[%s2 + $0x28] sm:$0xf]
      %v430 = vld [vmem:[%s2 + $0x2c] sm:$0xf]
      %v431 = vld [vmem:[%s2 + $0x30] sm:$0xf]
      %v432 = vld [vmem:[%s2 + $0x34] sm:$0xf]
      %v433 = vld [vmem:[%s2 + $0x38] sm:$0xf]
      %v434 = vld [vmem:[%s2 + $0x3c] sm:$0xf]
      %v435 = vld [vmem:[%s2 + $0x40] sm:$0xf]
      %v436 = vld [vmem:[%s2 + $0x44] sm:$0xf]
      %v437 = vld [vmem:[%s2 + $0x48] sm:$0xf]
      %v438 = vld [vmem:[%s2 + $0x4c] sm:$0xf]
      %v439 = vld [vmem:[%s2 + $0x50] sm:$0xf]
      %v440 = vld [vmem:[%s2 + $0x54] sm:$0xf]
      %v441 = vld [vmem:[%s2 + $0x58] sm:$0xf]
      %v442 = vld [vmem:[%s2 + $0x5c] sm:$0xf]
      %v443 = vld [vmem:[%s2 + $0x60] sm:$0xf]
      %v444 = vld [vmem:[%s2 + $0x64] sm:$0xf]
      %v445 = vld [vmem:[%s2 + $0x68] sm:$0xf]
      %v446 = vld [vmem:[%s2 + $0x6c] sm:$0xf]
      %v447 = vld [vmem:[%s2 + $0x70] sm:$0xf]
      %v448 = vld [vmem:[%s2 + $0x74] sm:$0xf]
      %v449 = vld [vmem:[%s2 + $0x78] sm:$0xf]
      %v450 = vld [vmem:[%s2 + $0x7c] sm:$0xf]
      %v451 = vld [vmem:[%s2 + $0x80] sm:$0xf]
      %v452 = vld [vmem:[%s2 + $0x84] sm:$0xf]
      %v453 = vld [vmem:[%s2 + $0x88] sm:$0xf]
      %v454 = vld [vmem:[%s2 + $0x8c] sm:$0xf]
      %v455 = vld [vmem:[%s2 + $0x90] sm:$0xf]
      %v456 = vld [vmem:[%s2 + $0x94] sm:$0xf]
      %v457 = vld [vmem:[%s2 + $0x98] sm:$0xf]
      %v458 = vld [vmem:[%s2 + $0x9c] sm:$0xf]
      %v459 = vld [vmem:[%s2 + $0xa0] sm:$0xf]
      %v460 = vld [vmem:[%s2 + $0xa4] sm:$0xf]
      %v461 = vld [vmem:[%s2 + $0xa8] sm:$0xf]
      %v462 = vld [vmem:[%s2 + $0xac] sm:$0xf]
      %v463 = vld [vmem:[%s2 + $0xb0] sm:$0xf]
      %v464 = vld [vmem:[%s2 + $0xb4] sm:$0xf]
      %v465 = vld [vmem:[%s2 + $0xb8] sm:$0xf]
      %v466 = vld [vmem:[%s2 + $0xbc] sm:$0xf]
      %v467 = vld [vmem:[%s2 + $0xc0] sm:$0xf]
      %v468 = vld [vmem:[%s2 + $0xc4] sm:$0xf]
      %v469 = vld [vmem:[%s2 + $0xc8] sm:$0xf]
      %v470 = vld [vmem:[%s2 + $0xcc] sm:$0xf]
      %v471 = vld [vmem:[%s2 + $0xd0] sm:$0xf]
      %v472 = vld [vmem:[%s2 + $0xd4] sm:$0xf]
      %v473 = vld [vmem:[%s2 + $0xd8] sm:$0xf]
      %v474 = vld [vmem:[%s2 + $0xdc] sm:$0xf]
      %v475 = vld [vmem:[%s2 + $0xe0] sm:$0xf]
      %v476 = vld [vmem:[%s2 + $0xe4] sm:$0xf]
      %v477 = vld [vmem:[%s2 + $0xe8] sm:$0xf]
      %v478 = vld [vmem:[%s2 + $0xec] sm:$0xf]
      %v479 = vld [vmem:[%s2 + $0xf0] sm:$0xf]
      %v480 = vld [vmem:[%s2 + $0xf4] sm:$0xf]
      %v481 = vld [vmem:[%s2 + $0xf8] sm:$0xf]
      %v482 = vld [vmem:[%s2 + $0xfc] sm:$0xf]
      %v483 = vld [vmem:[%s2 + $0x100] sm:$0xf]
      %v484 = vld [vmem:[%s2 + $0x104] sm:$0xf]
      %v485 = vld [vmem:[%s2 + $0x108] sm:$0xf]
      %v486 = vld [vmem:[%s2 + $0x10c] sm:$0xf]
      %v487 = vld [vmem:[%s2 + $0x110] sm:$0xf]
      %v488 = vld [vmem:[%s2 + $0x114] sm:$0xf]
      %v489 = vld [vmem:[%s2 + $0x118] sm:$0xf]
      %v490 = vld [vmem:[%s2 + $0x11c] sm:$0xf]
      %v491 = vld [vmem:[%s3] sm:$0x1]
      %v492 = vld [vmem:[%s4] sm:$0x1]
      %v493 = vld [vmem:[%s5] sm:$0x1]
      %v494 = vld [vmem:[%s6] sm:$0xff]
      %v495 = vld [vmem:[%s6 + $0x8] sm:$0xff]
      %v496 = vld [vmem:[%s6 + $0x10] sm:$0xff]
      %v497 = vld [vmem:[%s6 + $0x18] sm:$0xff]
      %v498 = vld [vmem:[%s6 + $0x20] sm:$0xff]
      %v499 = vld [vmem:[%s6 + $0x28] sm:$0xff]
      %v500 = vld [vmem:[%s6 + $0x30] sm:$0xff]
      %v501 = vld [vmem:[%s6 + $0x38] sm:$0xff]
      %v502 = vld [vmem:[%s7] sm:$0xff]
      %v503 = vld [vmem:[%s7 + $0x8] sm:$0xff]
      %v504 = vld [vmem:[%s7 + $0x10] sm:$0xff]
      %v505 = vld [vmem:[%s7 + $0x18] sm:$0xff]
      %v506 = vld [vmem:[#allocation2 + $0x5] sm:$0xff]
      %v507 = vld [vmem:[#allocation2 + $0xd] sm:$0xff]
      %v508 = vld [vmem:[#allocation2 + $0x15] sm:$0xff]
      %v509 = vld [vmem:[#allocation2 + $0x1d] sm:$0xff]
      %v510 = vld [vmem:[#allocation2 + $0x25] sm:$0xff]
      %v511 = vld [vmem:[#allocation2 + $0x2d] sm:$0xff]
      %v512 = vld [vmem:[#allocation2 + $0x35] sm:$0xff]
      %v513 = vld [vmem:[#allocation2 + $0x3d] sm:$0xff]
      %v514 = vld [vmem:[#allocation2 + $0x45] sm:$0xff]
      %v515 = vld [vmem:[#allocation2 + $0x4d] sm:$0xff]
      %v516 = vld [vmem:[#allocation2 + $0x55] sm:$0xff]
      %v517 = vld [vmem:[#allocation2 + $0x5d] sm:$0xff]
      %v518 = vld [vmem:[#allocation2 + $0x65] sm:$0xf]
      %v519 = vpack.c.bf16 %v507, %v506
      %v520 = vpack.c.bf16 %v509, %v508
      %v521 = vpack.c.bf16 %v511, %v510
      %v522 = vpack.c.bf16 %v513, %v512
      %v523 = vpack.c.bf16 %v515, %v514
      %v524 = vpack.c.bf16 %v517, %v516
      %v525 = vpack.c.bf16 %v518, %v518
      %v526 = vld [vmem:[#allocation2 + $0x6] sm:$0xff]
      %v527 = vld [vmem:[#allocation2 + $0xe] sm:$0xff]
      %v528 = vld [vmem:[#allocation2 + $0x16] sm:$0xff]
      %v529 = vld [vmem:[#allocation2 + $0x1e] sm:$0xff]
      %v530 = vld [vmem:[#allocation2 + $0x26] sm:$0xff]
      %v531 = vld [vmem:[#allocation2 + $0x2e] sm:$0xff]
      %v532 = vld [vmem:[#allocation2 + $0x36] sm:$0xff]
      %v533 = vld [vmem:[#allocation2 + $0x3e] sm:$0xff]
      %v534 = vld [vmem:[#allocation2 + $0x46] sm:$0xff]
      %v535 = vld [vmem:[#allocation2 + $0x4e] sm:$0xff]
      %v536 = vld [vmem:[#allocation2 + $0x56] sm:$0xff]
      %v537 = vld [vmem:[#allocation2 + $0x5e] sm:$0xff]
      %v538 = vld [vmem:[#allocation2 + $0x66] sm:$0xf]
      %v539 = vpack.c.bf16 %v527, %v526
      %v540 = vpack.c.bf16 %v529, %v528
      %v541 = vpack.c.bf16 %v531, %v530
      %v542 = vpack.c.bf16 %v533, %v532
      %v543 = vpack.c.bf16 %v535, %v534
      %v544 = vpack.c.bf16 %v537, %v536
      %v545 = vpack.c.bf16 %v538, %v538
      %v546 = vld [vmem:[#allocation2 + $0x7] sm:$0xff]
      %v547 = vld [vmem:[#allocation2 + $0xf] sm:$0xff]
      %v548 = vld [vmem:[#allocation2 + $0x17] sm:$0xff]
      %v549 = vld [vmem:[#allocation2 + $0x1f] sm:$0xff]
      %v550 = vld [vmem:[#allocation2 + $0x27] sm:$0xff]
      %v551 = vld [vmem:[#allocation2 + $0x2f] sm:$0xff]
      %v552 = vld [vmem:[#allocation2 + $0x37] sm:$0xff]
      %v553 = vld [vmem:[#allocation2 + $0x3f] sm:$0xff]
      %v554 = vld [vmem:[#allocation2 + $0x47] sm:$0xff]
      %v555 = vld [vmem:[#allocation2 + $0x4f] sm:$0xff]
      %v556 = vld [vmem:[#allocation2 + $0x57] sm:$0xff]
      %v557 = vld [vmem:[#allocation2 + $0x5f] sm:$0xff]
      %v558 = vld [vmem:[#allocation2 + $0x67] sm:$0xf]
      %v559 = vpack.c.bf16 %v547, %v546
      %v560 = vpack.c.bf16 %v549, %v548
      %v561 = vpack.c.bf16 %v551, %v550
      %v562 = vpack.c.bf16 %v553, %v552
      %v563 = vpack.c.bf16 %v555, %v554
      %v564 = vpack.c.bf16 %v557, %v556
      %v565 = vpack.c.bf16 %v558, %v558
      %v566 = vld [vmem:[#allocation2 + $0x67] sm:$0xff]
      %v567 = vld [vmem:[#allocation2 + $0x6f] sm:$0xf]
      %v568 = vpack.c.bf16 %v548, %v547
      %v569 = vpack.c.bf16 %v550, %v549
      %v570 = vpack.c.bf16 %v552, %v551
      %v571 = vpack.c.bf16 %v554, %v553
      %v572 = vpack.c.bf16 %v556, %v555
      %v573 = vpack.c.bf16 %v566, %v557
      %v574 = vpack.c.bf16 %v567, %v567
      %v575 = vld [vmem:[#allocation2 + $0x10] sm:$0xff]
      %v576 = vld [vmem:[#allocation2 + $0x18] sm:$0xff]
      %v577 = vld [vmem:[#allocation2 + $0x20] sm:$0xff]
      %v578 = vld [vmem:[#allocation2 + $0x28] sm:$0xff]
      %v579 = vld [vmem:[#allocation2 + $0x30] sm:$0xff]
      %v580 = vld [vmem:[#allocation2 + $0x38] sm:$0xff]
      %v581 = vld [vmem:[#allocation2 + $0x40] sm:$0xff]
      %v582 = vld [vmem:[#allocation2 + $0x48] sm:$0xff]
      %v583 = vld [vmem:[#allocation2 + $0x50] sm:$0xff]
      %v584 = vld [vmem:[#allocation2 + $0x58] sm:$0xff]
      %v585 = vld [vmem:[#allocation2 + $0x60] sm:$0xff]
      %v586 = vld [vmem:[#allocation2 + $0x68] sm:$0xff]
      %v587 = vld [vmem:[#allocation2 + $0x70] sm:$0xf]
      %v588 = vpack.c.bf16 %v576, %v575
      %v589 = vpack.c.bf16 %v578, %v577
      %v590 = vpack.c.bf16 %v580, %v579
      %v591 = vpack.c.bf16 %v582, %v581
      %v592 = vpack.c.bf16 %v584, %v583
      %v593 = vpack.c.bf16 %v586, %v585
      %v594 = vpack.c.bf16 %v587, %v587
      %v595 = vld [vmem:[#allocation2 + $0x11] sm:$0xff]
      %v596 = vld [vmem:[#allocation2 + $0x19] sm:$0xff]
      %v597 = vld [vmem:[#allocation2 + $0x21] sm:$0xff]
      %v598 = vld [vmem:[#allocation2 + $0x29] sm:$0xff]
      %v599 = vld [vmem:[#allocation2 + $0x31] sm:$0xff]
      %v600 = vld [vmem:[#allocation2 + $0x39] sm:$0xff]
      %v601 = vld [vmem:[#allocation2 + $0x41] sm:$0xff]
      %v602 = vld [vmem:[#allocation2 + $0x49] sm:$0xff]
      %v603 = vld [vmem:[#allocation2 + $0x51] sm:$0xff]
      %v604 = vld [vmem:[#allocation2 + $0x59] sm:$0xff]
      %v605 = vld [vmem:[#allocation2 + $0x61] sm:$0xff]
      %v606 = vld [vmem:[#allocation2 + $0x69] sm:$0xff]
      %v607 = vld [vmem:[#allocation2 + $0x71] sm:$0xf]
      %v608 = vpack.c.bf16 %v596, %v595
      %v609 = vpack.c.bf16 %v598, %v597
      %v610 = vpack.c.bf16 %v600, %v599
      %v611 = vpack.c.bf16 %v602, %v601
      %v612 = vpack.c.bf16 %v604, %v603
      %v613 = vpack.c.bf16 %v606, %v605
      %v614 = vpack.c.bf16 %v607, %v607
      %v615 = vld [vmem:[#allocation2 + $0x71] sm:$0xff]
      %v616 = vld [vmem:[#allocation2 + $0x79] sm:$0xf]
      %v617 = vpack.c.bf16 %v597, %v596
      %v618 = vpack.c.bf16 %v599, %v598
      %v619 = vpack.c.bf16 %v601, %v600
      %v620 = vpack.c.bf16 %v603, %v602
      %v621 = vpack.c.bf16 %v605, %v604
      %v622 = vpack.c.bf16 %v615, %v606
      %v623 = vpack.c.bf16 %v616, %v616
      %v624 = vld [vmem:[#allocation2 + $0x1a] sm:$0xff]
      %v625 = vld [vmem:[#allocation2 + $0x22] sm:$0xff]
      %v626 = vld [vmem:[#allocation2 + $0x2a] sm:$0xff]
      %v627 = vld [vmem:[#allocation2 + $0x32] sm:$0xff]
      %v628 = vld [vmem:[#allocation2 + $0x3a] sm:$0xff]
      %v629 = vld [vmem:[#allocation2 + $0x42] sm:$0xff]
      %v630 = vld [vmem:[#allocation2 + $0x4a] sm:$0xff]
      %v631 = vld [vmem:[#allocation2 + $0x52] sm:$0xff]
      %v632 = vld [vmem:[#allocation2 + $0x5a] sm:$0xff]
      %v633 = vld [vmem:[#allocation2 + $0x62] sm:$0xff]
      %v634 = vld [vmem:[#allocation2 + $0x6a] sm:$0xff]
      %v635 = vld [vmem:[#allocation2 + $0x72] sm:$0xff]
      %v636 = vld [vmem:[#allocation2 + $0x7a] sm:$0xf]
      %v637 = vpack.c.bf16 %v625, %v624
      %v638 = vpack.c.bf16 %v627, %v626
      %v639 = vpack.c.bf16 %v629, %v628
      %v640 = vpack.c.bf16 %v631, %v630
      %v641 = vpack.c.bf16 %v633, %v632
      %v642 = vpack.c.bf16 %v635, %v634
      %v643 = vpack.c.bf16 %v636, %v636
      %v644 = vld [vmem:[#allocation2 + $0x1b] sm:$0xff]
      %v645 = vld [vmem:[#allocation2 + $0x23] sm:$0xff]
      %v646 = vld [vmem:[#allocation2 + $0x2b] sm:$0xff]
      %v647 = vld [vmem:[#allocation2 + $0x33] sm:$0xff]
      %v648 = vld [vmem:[#allocation2 + $0x3b] sm:$0xff]
      %v649 = vld [vmem:[#allocation2 + $0x43] sm:$0xff]
      %v650 = vld [vmem:[#allocation2 + $0x4b] sm:$0xff]
      %v651 = vld [vmem:[#allocation2 + $0x53] sm:$0xff]
      %v652 = vld [vmem:[#allocation2 + $0x5b] sm:$0xff]
      %v653 = vld [vmem:[#allocation2 + $0x63] sm:$0xff]
      %v654 = vld [vmem:[#allocation2 + $0x6b] sm:$0xff]
      %v655 = vld [vmem:[#allocation2 + $0x73] sm:$0xff]
      %v656 = vld [vmem:[#allocation2 + $0x7b] sm:$0xf]
      %v657 = vpack.c.bf16 %v645, %v644
      %v658 = vpack.c.bf16 %v647, %v646
      %v659 = vpack.c.bf16 %v649, %v648
      %v660 = vpack.c.bf16 %v651, %v650
      %v661 = vpack.c.bf16 %v653, %v652
      %v662 = vpack.c.bf16 %v655, %v654
      %v663 = vpack.c.bf16 %v656, %v656
      %671 = vrot.lane.b32.xlu0 %v539, 64
      %v672 = vpop.permute.xlu0 %671
      %673 = vrot.lane.b32.xlu0 %v540, 64
      %v674 = vpop.permute.xlu0 %673
      %675 = vrot.lane.b32.xlu0 %v541, 64
      %v676 = vpop.permute.xlu0 %675
      %677 = vrot.lane.b32.xlu0 %v542, 64
      %v678 = vpop.permute.xlu0 %677
      %679 = vrot.lane.b32.xlu0 %v543, 64
      %v680 = vpop.permute.xlu0 %679
      %681 = vrot.lane.b32.xlu0 %v544, 64
      %v682 = vpop.permute.xlu0 %681
      %683 = vrot.lane.b32.xlu0 %v545, 64
      %v684 = vpop.permute.xlu0 %683
      %692 = vrot.lane.b32.xlu0 %v568, 64
      %v693 = vpop.permute.xlu0 %692
      %694 = vrot.lane.b32.xlu0 %v569, 64
      %v695 = vpop.permute.xlu0 %694
      %696 = vrot.lane.b32.xlu0 %v570, 64
      %v697 = vpop.permute.xlu0 %696
      %698 = vrot.lane.b32.xlu0 %v571, 64
      %v699 = vpop.permute.xlu0 %698
      %700 = vrot.lane.b32.xlu0 %v572, 64
      %v701 = vpop.permute.xlu0 %700
      %702 = vrot.lane.b32.xlu0 %v573, 64
      %v703 = vpop.permute.xlu0 %702
      %704 = vrot.lane.b32.xlu0 %v574, 64
      %v705 = vpop.permute.xlu0 %704
      %713 = vrot.lane.b32.xlu0 %v608, 64
      %v714 = vpop.permute.xlu0 %713
      %715 = vrot.lane.b32.xlu0 %v609, 64
      %v716 = vpop.permute.xlu0 %715
      %717 = vrot.lane.b32.xlu0 %v610, 64
      %v718 = vpop.permute.xlu0 %717
      %719 = vrot.lane.b32.xlu0 %v611, 64
      %v720 = vpop.permute.xlu0 %719
      %721 = vrot.lane.b32.xlu0 %v612, 64
      %v722 = vpop.permute.xlu0 %721
      %723 = vrot.lane.b32.xlu0 %v613, 64
      %v724 = vpop.permute.xlu0 %723
      %725 = vrot.lane.b32.xlu0 %v614, 64
      %v726 = vpop.permute.xlu0 %725
      %734 = vrot.lane.b32.xlu0 %v637, 64
      %v735 = vpop.permute.xlu0 %734
      %736 = vrot.lane.b32.xlu0 %v638, 64
      %v737 = vpop.permute.xlu0 %736
      %738 = vrot.lane.b32.xlu0 %v639, 64
      %v739 = vpop.permute.xlu0 %738
      %740 = vrot.lane.b32.xlu0 %v640, 64
      %v741 = vpop.permute.xlu0 %740
      %742 = vrot.lane.b32.xlu0 %v641, 64
      %v743 = vpop.permute.xlu0 %742
      %744 = vrot.lane.b32.xlu0 %v642, 64
      %v745 = vpop.permute.xlu0 %744
      %746 = vrot.lane.b32.xlu0 %v643, 64
      %v747 = vpop.permute.xlu0 %746
      %v750 = vsel %vm361, %v519, %v672
      %v754 = vsel %vm361, %v520, %v674
      %v758 = vsel %vm361, %v521, %v676
      %v762 = vsel %vm361, %v522, %v678
      %v766 = vsel %vm361, %v523, %v680
      %v770 = vsel %vm361, %v524, %v682
      %v774 = vsel %vm361, %v525, %v684
      %v778 = vsel %vm361, %v559, %v693
      %v782 = vsel %vm361, %v560, %v695
      %v786 = vsel %vm361, %v561, %v697
      %v790 = vsel %vm361, %v562, %v699
      %v794 = vsel %vm361, %v563, %v701
      %v798 = vsel %vm361, %v564, %v703
      %v802 = vsel %vm361, %v565, %v705
      %v806 = vsel %vm361, %v588, %v714
      %v810 = vsel %vm361, %v589, %v716
      %v814 = vsel %vm361, %v590, %v718
      %v818 = vsel %vm361, %v591, %v720
      %v822 = vsel %vm361, %v592, %v722
      %v826 = vsel %vm361, %v593, %v724
      %v830 = vsel %vm361, %v594, %v726
      %v834 = vsel %vm361, %v617, %v735
      %v838 = vsel %vm361, %v618, %v737
      %v842 = vsel %vm361, %v619, %v739
      %v846 = vsel %vm361, %v620, %v741
      %v850 = vsel %vm361, %v621, %v743
      %v854 = vsel %vm361, %v622, %v745
      %v858 = vsel %vm361, %v623, %v747
      %v861 = vlaneseq
      %v862 = vshrl.u32 %v861, 7
      %v863 = vsub.s32 0, %v862
      %v864 = vrot.slane %v491, %v863
      %v938 = vunpack.c.l.b16 %v419
      %v939 = vunpack.c.l.b16 %v420
      %v940 = vunpack.c.l.b16 %v421
      %v941 = vunpack.c.l.b16 %v422
      %v942 = vunpack.c.l.b16 %v423
      %v943 = vunpack.c.l.b16 %v424
      %v944 = vunpack.c.l.b16 %v425
      %v945 = vunpack.c.l.b16 %v426
      %v946 = vunpack.c.l.b16 %v427
      %v947 = vunpack.c.l.b16 %v428
      %v948 = vunpack.c.l.b16 %v429
      %v949 = vunpack.c.l.b16 %v430
      %v950 = vunpack.c.l.b16 %v431
      %v951 = vunpack.c.l.b16 %v432
      %v952 = vunpack.c.l.b16 %v433
      %v953 = vunpack.c.l.b16 %v434
      %v954 = vunpack.c.l.b16 %v435
      %v955 = vunpack.c.l.b16 %v436
      %v956 = vunpack.c.l.b16 %v437
      %v957 = vunpack.c.l.b16 %v438
      %v958 = vunpack.c.l.b16 %v439
      %v959 = vunpack.c.l.b16 %v440
      %v960 = vunpack.c.l.b16 %v441
      %v961 = vunpack.c.l.b16 %v442
      %v962 = vunpack.c.l.b16 %v443
      %v963 = vunpack.c.l.b16 %v444
      %v964 = vunpack.c.l.b16 %v445
      %v965 = vunpack.c.l.b16 %v446
      %v966 = vunpack.c.l.b16 %v447
      %v967 = vunpack.c.l.b16 %v448
      %v968 = vunpack.c.l.b16 %v449
      %v969 = vunpack.c.l.b16 %v450
      %v970 = vunpack.c.l.b16 %v451
      %v971 = vunpack.c.l.b16 %v452
      %v972 = vunpack.c.l.b16 %v453
      %v973 = vunpack.c.l.b16 %v454
      %v974 = vunpack.c.l.b16 %v455
      %v975 = vunpack.c.l.b16 %v456
      %v976 = vunpack.c.l.b16 %v457
      %v977 = vunpack.c.l.b16 %v458
      %v978 = vunpack.c.l.b16 %v459
      %v979 = vunpack.c.l.b16 %v460
      %v980 = vunpack.c.l.b16 %v461
      %v981 = vunpack.c.l.b16 %v462
      %v982 = vunpack.c.l.b16 %v463
      %v983 = vunpack.c.l.b16 %v464
      %v984 = vunpack.c.l.b16 %v465
      %v985 = vunpack.c.l.b16 %v466
      %v986 = vunpack.c.l.b16 %v467
      %v987 = vunpack.c.l.b16 %v468
      %v988 = vunpack.c.l.b16 %v469
      %v989 = vunpack.c.l.b16 %v470
      %v990 = vunpack.c.l.b16 %v471
      %v991 = vunpack.c.l.b16 %v472
      %v992 = vunpack.c.l.b16 %v473
      %v993 = vunpack.c.l.b16 %v474
      %v994 = vunpack.c.l.b16 %v475
      %v995 = vunpack.c.l.b16 %v476
      %v996 = vunpack.c.l.b16 %v477
      %v997 = vunpack.c.l.b16 %v478
      %v998 = vunpack.c.l.b16 %v479
      %v999 = vunpack.c.l.b16 %v480
      %v1000 = vunpack.c.l.b16 %v481
      %v1001 = vunpack.c.l.b16 %v482
      %v1002 = vunpack.c.l.b16 %v483
      %v1003 = vunpack.c.l.b16 %v484
      %v1004 = vunpack.c.l.b16 %v485
      %v1005 = vunpack.c.l.b16 %v486
      %v1006 = vunpack.c.l.b16 %v487
      %v1007 = vunpack.c.l.b16 %v488
      %v1008 = vunpack.c.l.b16 %v489
      %v1009 = vunpack.c.l.b16 %v490
      %v1010 = vpack.c.b16 %v939, %v938
      %v1011 = vpack.c.b16 %v941, %v940
      %v1012 = vpack.c.b16 %v943, %v942
      %v1013 = vpack.c.b16 %v945, %v944
      %v1014 = vpack.c.b16 %v947, %v946
      %v1015 = vpack.c.b16 %v949, %v948
      %v1016 = vpack.c.b16 %v951, %v950
      %v1017 = vpack.c.b16 %v953, %v952
      %v1018 = vpack.c.b16 %v955, %v954
      %v1019 = vpack.c.b16 %v957, %v956
      %v1020 = vpack.c.b16 %v959, %v958
      %v1021 = vpack.c.b16 %v961, %v960
      %v1022 = vpack.c.b16 %v963, %v962
      %v1023 = vpack.c.b16 %v965, %v964
      %v1024 = vpack.c.b16 %v967, %v966
      %v1025 = vpack.c.b16 %v969, %v968
      %v1026 = vpack.c.b16 %v971, %v970
      %v1027 = vpack.c.b16 %v973, %v972
      %v1028 = vpack.c.b16 %v975, %v974
      %v1029 = vpack.c.b16 %v977, %v976
      %v1030 = vpack.c.b16 %v979, %v978
      %v1031 = vpack.c.b16 %v981, %v980
      %v1032 = vpack.c.b16 %v983, %v982
      %v1033 = vpack.c.b16 %v985, %v984
      %v1034 = vpack.c.b16 %v987, %v986
      %v1035 = vpack.c.b16 %v989, %v988
      %v1036 = vpack.c.b16 %v991, %v990
      %v1037 = vpack.c.b16 %v993, %v992
      %v1038 = vpack.c.b16 %v995, %v994
      %v1039 = vpack.c.b16 %v997, %v996
      %v1040 = vpack.c.b16 %v999, %v998
      %v1041 = vpack.c.b16 %v1001, %v1000
      %v1042 = vpack.c.b16 %v1003, %v1002
      %v1043 = vpack.c.b16 %v1005, %v1004
      %v1044 = vpack.c.b16 %v1007, %v1006
      %v1045 = vpack.c.b16 %v1009, %v1008
      %v1083 = vsel %vm361, %v657, 0
      %v1086 = vsel %vm361, %v658, 0
      %v1089 = vsel %vm361, %v659, 0
      %v1092 = vsel %vm361, %v660, 0
      %v1095 = vsel %vm361, %v661, 0
      %v1098 = vsel %vm361, %v662, 0
      %v1101 = vsel %vm361, %v663, 0
      %1103 = vmatprep.subr.bf16.mxu0 0
      %1104 = vmatpush1.bf16.msra.mxu0 %v1017
      %1105 = vmatprep.subr.bf16.mxu0 0
      %1106 = vmatpush1.bf16.msra.mxu0 %v1016
      %1107 = vmatprep.subr.bf16.mxu0 0
      %1108 = vmatpush1.bf16.msra.mxu0 %v1015
      %1109 = vmatprep.subr.bf16.mxu0 0
      %1110 = vmatpush1.bf16.msra.mxu0 %v1014
      %1111 = vmatprep.subr.bf16.mxu0 0
      %1112 = vmatpush1.bf16.msra.mxu0 %v1013
      %1113 = vmatprep.subr.bf16.mxu0 0
      %1114 = vmatpush1.bf16.msra.mxu0 %v1012
      %1115 = vmatprep.subr.bf16.mxu0 0
      %1116 = vmatpush1.bf16.msra.mxu0 %v1011
      %1117 = vmatprep.subr.bf16.mxu0 0
      %1118 = vmatpush1.bf16.msra.mxu0 %v1010
      %1119 = vmatprep.subr.bf16.mxu0 0
      %1120 = vmatpush2.bf16.msra.mxu0 %v1025
      %1121 = vmatprep.subr.bf16.mxu0 0
      %1122 = vmatpush2.bf16.msra.mxu0 %v1024
      %1123 = vmatprep.subr.bf16.mxu0 0
      %1124 = vmatpush2.bf16.msra.mxu0 %v1023
      %1125 = vmatprep.subr.bf16.mxu0 0
      %1126 = vmatpush2.bf16.msra.mxu0 %v1022
      %1127 = vmatprep.subr.bf16.mxu0 0
      %1128 = vmatpush2.bf16.msra.mxu0 %v1021
      %1129 = vmatprep.subr.bf16.mxu0 0
      %1130 = vmatpush2.bf16.msra.mxu0 %v1020
      %1131 = vmatprep.subr.bf16.mxu0 0
      %1132 = vmatpush2.bf16.msra.mxu0 %v1019
      %1133 = vmatprep.subr.bf16.mxu0 0
      %1134 = vmatpush2.bf16.msra.mxu0 %v1018
      %1135 = vmatprep.mubr.bf16.mxu0 %v778
      %1136 = vmatmul.mubr.bf16.gmra.mxu0 %v750
      %v1137 = vpop.f32.mrf.mxu0
      %v1138 = vadd.f32 %v864, %v1137
      %v1139 = vpop.f32.mrf.mxu0
      %v1140 = vpop.f32.mrf.mxu0
      %v1141 = vadd.f32 %v864, %v1140
      %v1142 = vpop.f32.mrf.mxu0
      %1143 = vmatprep.mubr.bf16.mxu0 %v782
      %1144 = vmatmul.mubr.bf16.gmra.mxu0 %v754
      %v1145 = vpop.f32.mrf.mxu0
      %v1146 = vadd.f32 %v864, %v1145
      %v1147 = vpop.f32.mrf.mxu0
      %v1148 = vpop.f32.mrf.mxu0
      %v1149 = vadd.f32 %v864, %v1148
      %v1150 = vpop.f32.mrf.mxu0
      %1151 = vmatprep.mubr.bf16.mxu0 %v786
      %1152 = vmatmul.mubr.bf16.gmra.mxu0 %v758
      %v1153 = vpop.f32.mrf.mxu0
      %v1154 = vadd.f32 %v864, %v1153
      %v1155 = vpop.f32.mrf.mxu0
      %v1156 = vpop.f32.mrf.mxu0
      %v1157 = vadd.f32 %v864, %v1156
      %v1158 = vpop.f32.mrf.mxu0
      %1159 = vmatprep.mubr.bf16.mxu0 %v790
      %1160 = vmatmul.mubr.bf16.gmra.mxu0 %v762
      %v1161 = vpop.f32.mrf.mxu0
      %v1162 = vadd.f32 %v864, %v1161
      %v1163 = vpop.f32.mrf.mxu0
      %v1164 = vpop.f32.mrf.mxu0
      %v1165 = vadd.f32 %v864, %v1164
      %v1166 = vpop.f32.mrf.mxu0
      %1167 = vmatprep.mubr.bf16.mxu0 %v794
      %1168 = vmatmul.mubr.bf16.gmra.mxu0 %v766
      %v1169 = vpop.f32.mrf.mxu0
      %v1170 = vadd.f32 %v864, %v1169
      %v1171 = vpop.f32.mrf.mxu0
      %v1172 = vpop.f32.mrf.mxu0
      %v1173 = vadd.f32 %v864, %v1172
      %v1174 = vpop.f32.mrf.mxu0
      %1175 = vmatprep.mubr.bf16.mxu0 %v798
      %1176 = vmatmul.mubr.bf16.gmra.mxu0 %v770
      %v1177 = vpop.f32.mrf.mxu0
      %v1178 = vadd.f32 %v864, %v1177
      %v1179 = vpop.f32.mrf.mxu0
      %v1180 = vpop.f32.mrf.mxu0
      %v1181 = vadd.f32 %v864, %v1180
      %v1182 = vpop.f32.mrf.mxu0
      %1183 = vmatprep.mubr.bf16.mxu0 %v802
      %1184 = vmatmul.mubr.bf16.gmra.mxu0 %v774
      %v1185 = vpop.f32.mrf.mxu0
      %v1186 = vadd.f32 %v864, %v1185
      %v1187 = vpop.f32.mrf.mxu0
      %v1188 = vpop.f32.mrf.mxu0
      %v1189 = vpop.f32.mrf.mxu0
      %1190 = vdwg.mxu0
      %1191 = vmatprep.subr.bf16.mxu0 0
      %1192 = vmatpush1.bf16.msra.mxu0 %v1033
      %1193 = vmatprep.subr.bf16.mxu0 0
      %1194 = vmatpush1.bf16.msra.mxu0 %v1032
      %1195 = vmatprep.subr.bf16.mxu0 0
      %1196 = vmatpush1.bf16.msra.mxu0 %v1031
      %1197 = vmatprep.subr.bf16.mxu0 0
      %1198 = vmatpush1.bf16.msra.mxu0 %v1030
      %1199 = vmatprep.subr.bf16.mxu0 0
      %1200 = vmatpush1.bf16.msra.mxu0 %v1029
      %1201 = vmatprep.subr.bf16.mxu0 0
      %1202 = vmatpush1.bf16.msra.mxu0 %v1028
      %1203 = vmatprep.subr.bf16.mxu0 0
      %1204 = vmatpush1.bf16.msra.mxu0 %v1027
      %1205 = vmatprep.subr.bf16.mxu0 0
      %1206 = vmatpush1.bf16.msra.mxu0 %v1026
      %1207 = vmatprep.subr.bf16.mxu0 0
      %1208 = vmatpush2.bf16.msra.mxu0 %v1041
      %1209 = vmatprep.subr.bf16.mxu0 0
      %1210 = vmatpush2.bf16.msra.mxu0 %v1040
      %1211 = vmatprep.subr.bf16.mxu0 0
      %1212 = vmatpush2.bf16.msra.mxu0 %v1039
      %1213 = vmatprep.subr.bf16.mxu0 0
      %1214 = vmatpush2.bf16.msra.mxu0 %v1038
      %1215 = vmatprep.subr.bf16.mxu0 0
      %1216 = vmatpush2.bf16.msra.mxu0 %v1037
      %1217 = vmatprep.subr.bf16.mxu0 0
      %1218 = vmatpush2.bf16.msra.mxu0 %v1036
      %1219 = vmatprep.subr.bf16.mxu0 0
      %1220 = vmatpush2.bf16.msra.mxu0 %v1035
      %1221 = vmatprep.subr.bf16.mxu0 0
      %1222 = vmatpush2.bf16.msra.mxu0 %v1034
      %1223 = vmatprep.mubr.bf16.mxu0 %v834
      %1224 = vmatmul.mubr.bf16.gmra.mxu0 %v806
      %v1225 = vpop.f32.mrf.mxu0
      %v1226 = vadd.f32 %v1138, %v1225
      %v1227 = vpop.f32.mrf.mxu0
      %v1228 = vpop.f32.mrf.mxu0
      %v1229 = vadd.f32 %v1141, %v1228
      %v1230 = vpop.f32.mrf.mxu0
      %1231 = vmatprep.mubr.bf16.mxu0 %v838
      %1232 = vmatmul.mubr.bf16.gmra.mxu0 %v810
      %v1233 = vpop.f32.mrf.mxu0
      %v1234 = vadd.f32 %v1146, %v1233
      %v1235 = vpop.f32.mrf.mxu0
      %v1236 = vpop.f32.mrf.mxu0
      %v1237 = vadd.f32 %v1149, %v1236
      %v1238 = vpop.f32.mrf.mxu0
      %1239 = vmatprep.mubr.bf16.mxu0 %v842
      %1240 = vmatmul.mubr.bf16.gmra.mxu0 %v814
      %v1241 = vpop.f32.mrf.mxu0
      %v1242 = vadd.f32 %v1154, %v1241
      %v1243 = vpop.f32.mrf.mxu0
      %v1244 = vpop.f32.mrf.mxu0
      %v1245 = vadd.f32 %v1157, %v1244
      %v1246 = vpop.f32.mrf.mxu0
      %1247 = vmatprep.mubr.bf16.mxu0 %v846
      %1248 = vmatmul.mubr.bf16.gmra.mxu0 %v818
      %v1249 = vpop.f32.mrf.mxu0
      %v1250 = vadd.f32 %v1162, %v1249
      %v1251 = vpop.f32.mrf.mxu0
      %v1252 = vpop.f32.mrf.mxu0
      %v1253 = vadd.f32 %v1165, %v1252
      %v1254 = vpop.f32.mrf.mxu0
      %1255 = vmatprep.mubr.bf16.mxu0 %v850
      %1256 = vmatmul.mubr.bf16.gmra.mxu0 %v822
      %v1257 = vpop.f32.mrf.mxu0
      %v1258 = vadd.f32 %v1170, %v1257
      %v1259 = vpop.f32.mrf.mxu0
      %v1260 = vpop.f32.mrf.mxu0
      %v1261 = vadd.f32 %v1173, %v1260
      %v1262 = vpop.f32.mrf.mxu0
      %1263 = vmatprep.mubr.bf16.mxu0 %v854
      %1264 = vmatmul.mubr.bf16.gmra.mxu0 %v826
      %v1265 = vpop.f32.mrf.mxu0
      %v1266 = vadd.f32 %v1178, %v1265
      %v1267 = vpop.f32.mrf.mxu0
      %v1268 = vpop.f32.mrf.mxu0
      %v1269 = vadd.f32 %v1181, %v1268
      %v1270 = vpop.f32.mrf.mxu0
      %1271 = vmatprep.mubr.bf16.mxu0 %v858
      %1272 = vmatmul.mubr.bf16.gmra.mxu0 %v830
      %v1273 = vpop.f32.mrf.mxu0
      %v1274 = vadd.f32 %v1186, %v1273
      %v1275 = vpop.f32.mrf.mxu0
      %v1276 = vpop.f32.mrf.mxu0
      %v1277 = vpop.f32.mrf.mxu0
      %1278 = vdwg.mxu0
      %1279 = vmatprep.subr.bf16.mxu0 0
      %1280 = vmatpush1.bf16.msra.mxu0 0
      %1281 = vmatprep.subr.bf16.mxu0 0
      %1282 = vmatpush1.bf16.msra.mxu0 0
      %1283 = vmatprep.subr.bf16.mxu0 0
      %1284 = vmatpush1.bf16.msra.mxu0 0
      %1285 = vmatprep.subr.bf16.mxu0 0
      %1286 = vmatpush1.bf16.msra.mxu0 0
      %1287 = vmatprep.subr.bf16.mxu0 0
      %1288 = vmatpush1.bf16.msra.mxu0 %v1045
      %1289 = vmatprep.subr.bf16.mxu0 0
      %1290 = vmatpush1.bf16.msra.mxu0 %v1044
      %1291 = vmatprep.subr.bf16.mxu0 0
      %1292 = vmatpush1.bf16.msra.mxu0 %v1043
      %1293 = vmatprep.subr.bf16.mxu0 0
      %1294 = vmatpush1.bf16.msra.mxu0 %v1042
      %1295 = vmatprep.subr.bf16.mxu0 0
      %1296 = vmatpush2.bf16.msra.mxu0 0
      %1297 = vmatprep.subr.bf16.mxu0 0
      %1298 = vmatpush2.bf16.msra.mxu0 0
      %1299 = vmatprep.subr.bf16.mxu0 0
      %1300 = vmatpush2.bf16.msra.mxu0 0
      %1301 = vmatprep.subr.bf16.mxu0 0
      %1302 = vmatpush2.bf16.msra.mxu0 0
      %1303 = vmatprep.subr.bf16.mxu0 0
      %1304 = vmatpush2.bf16.msra.mxu0 0
      %1305 = vmatprep.subr.bf16.mxu0 0
      %1306 = vmatpush2.bf16.msra.mxu0 0
      %1307 = vmatprep.subr.bf16.mxu0 0
      %1308 = vmatpush2.bf16.msra.mxu0 0
      %1309 = vmatprep.subr.bf16.mxu0 0
      %1310 = vmatpush2.bf16.msra.mxu0 0
      %1311 = vmatprep.mubr.bf16.mxu0 0
      %1312 = vmatmul.mubr.bf16.gmra.mxu0 %v1083
      %v1313 = vpop.f32.mrf.mxu0
      %v1314 = vadd.f32 %v1226, %v1313
      %v1315 = vpop.f32.mrf.mxu0
      %v1316 = vpop.f32.mrf.mxu0
      %v1317 = vadd.f32 %v1229, %v1316
      %v1318 = vpop.f32.mrf.mxu0
      %1319 = vmatprep.mubr.bf16.mxu0 0
      %1320 = vmatmul.mubr.bf16.gmra.mxu0 %v1086
      %v1321 = vpop.f32.mrf.mxu0
      %v1322 = vadd.f32 %v1234, %v1321
      %v1323 = vpop.f32.mrf.mxu0
      %v1324 = vpop.f32.mrf.mxu0
      %v1325 = vadd.f32 %v1237, %v1324
      %v1326 = vpop.f32.mrf.mxu0
      %1327 = vmatprep.mubr.bf16.mxu0 0
      %1328 = vmatmul.mubr.bf16.gmra.mxu0 %v1089
      %v1329 = vpop.f32.mrf.mxu0
      %v1330 = vadd.f32 %v1242, %v1329
      %v1331 = vpop.f32.mrf.mxu0
      %v1332 = vpop.f32.mrf.mxu0
      %v1333 = vadd.f32 %v1245, %v1332
      %v1334 = vpop.f32.mrf.mxu0
      %1335 = vmatprep.mubr.bf16.mxu0 0
      %1336 = vmatmul.mubr.bf16.gmra.mxu0 %v1092
      %v1337 = vpop.f32.mrf.mxu0
      %v1338 = vadd.f32 %v1250, %v1337
      %v1339 = vpop.f32.mrf.mxu0
      %v1340 = vpop.f32.mrf.mxu0
      %v1341 = vadd.f32 %v1253, %v1340
      %v1342 = vpop.f32.mrf.mxu0
      %1343 = vmatprep.mubr.bf16.mxu0 0
      %1344 = vmatmul.mubr.bf16.gmra.mxu0 %v1095
      %v1345 = vpop.f32.mrf.mxu0
      %v1346 = vadd.f32 %v1258, %v1345
      %v1347 = vpop.f32.mrf.mxu0
      %v1348 = vpop.f32.mrf.mxu0
      %v1349 = vadd.f32 %v1261, %v1348
      %v1350 = vpop.f32.mrf.mxu0
      %1351 = vmatprep.mubr.bf16.mxu0 0
      %1352 = vmatmul.mubr.bf16.gmra.mxu0 %v1098
      %v1353 = vpop.f32.mrf.mxu0
      %v1354 = vadd.f32 %v1266, %v1353
      %v1355 = vpop.f32.mrf.mxu0
      %v1356 = vpop.f32.mrf.mxu0
      %v1357 = vadd.f32 %v1269, %v1356
      %v1358 = vpop.f32.mrf.mxu0
      %1359 = vmatprep.mubr.bf16.mxu0 0
      %1360 = vmatmul.mubr.bf16.gmra.mxu0 %v1101
      %v1361 = vpop.f32.mrf.mxu0
      %v1362 = vadd.f32 %v1274, %v1361
      %v1363 = vpop.f32.mrf.mxu0
      %v1364 = vpop.f32.mrf.mxu0
      %v1365 = vpop.f32.mrf.mxu0
      %1366 = vdwg.mxu0
      %1368 = vset.pattern.permute.xlu0 0
      %1369 = vperm.xlu0 %1368, %v406
      %v1370 = vpop.permute.xlu0 %1369
      %1373 = vset.pattern.permute.xlu0 0
      %1374 = vperm.xlu0 %1373, %v407
      %v1375 = vpop.permute.xlu0 %1374
      %1378 = vset.pattern.permute.xlu0 0
      %1379 = vperm.xlu0 %1378, %v408
      %v1380 = vpop.permute.xlu0 %1379
      %1383 = vset.pattern.permute.xlu0 0
      %1384 = vperm.xlu0 %1383, %v409
      %v1385 = vpop.permute.xlu0 %1384
      %1388 = vset.pattern.permute.xlu0 0
      %1389 = vperm.xlu0 %1388, %v410
      %v1390 = vpop.permute.xlu0 %1389
      %1393 = vset.pattern.permute.xlu0 0
      %1394 = vperm.xlu0 %1393, %v411
      %v1395 = vpop.permute.xlu0 %1394
      %1398 = vset.pattern.permute.xlu0 0
      %1399 = vperm.xlu0 %1398, %v412
      %v1400 = vpop.permute.xlu0 %1399
      %1403 = vset.pattern.permute.xlu0 0
      %1404 = vperm.xlu0 %1403, %v413
      %v1405 = vpop.permute.xlu0 %1404
      %1408 = vset.pattern.permute.xlu0 0
      %1409 = vperm.xlu0 %1408, %v414
      %v1410 = vpop.permute.xlu0 %1409
      %1413 = vset.pattern.permute.xlu0 0
      %1414 = vperm.xlu0 %1413, %v415
      %v1415 = vpop.permute.xlu0 %1414
      %1418 = vset.pattern.permute.xlu0 0
      %1419 = vperm.xlu0 %1418, %v416
      %v1420 = vpop.permute.xlu0 %1419
      %1423 = vset.pattern.permute.xlu0 0
      %1424 = vperm.xlu0 %1423, %v417
      %v1425 = vpop.permute.xlu0 %1424
      %1428 = vset.pattern.permute.xlu0 0
      %1429 = vperm.xlu0 %1428, %v418
      %v1430 = vpop.permute.xlu0 %1429
      %v1432 = vmul.f32 %v1314, %v1370
      %v1433 = vmul.f32 %v1317, %v1375
      %v1434 = vmul.f32 %v1322, %v1380
      %v1435 = vmul.f32 %v1325, %v1385
      %v1436 = vmul.f32 %v1330, %v1390
      %v1437 = vmul.f32 %v1333, %v1395
      %v1438 = vmul.f32 %v1338, %v1400
      %v1439 = vmul.f32 %v1341, %v1405
      %v1440 = vmul.f32 %v1346, %v1410
      %v1441 = vmul.f32 %v1349, %v1415
      %v1442 = vmul.f32 %v1354, %v1420
      %v1443 = vmul.f32 %v1357, %v1425
      %v1444 = vmul.f32 %v1362, %v1430
      %v1445 = vsel %vm361, %v1432, 0.0
      %v1446 = vsel %vm361, %v1433, 0.0
      %v1447 = vadd.f32 %v1445, %v1446
      %v1448 = vsel %vm361, %v1434, 0.0
      %v1449 = vadd.f32 %v1447, %v1448
      %v1450 = vsel %vm361, %v1435, 0.0
      %v1451 = vadd.f32 %v1449, %v1450
      %v1452 = vsel %vm361, %v1436, 0.0
      %v1453 = vadd.f32 %v1451, %v1452
      %v1454 = vsel %vm361, %v1437, 0.0
      %v1455 = vadd.f32 %v1453, %v1454
      %v1456 = vsel %vm361, %v1438, 0.0
      %v1457 = vadd.f32 %v1455, %v1456
      %v1458 = vsel %vm361, %v1439, 0.0
      %v1459 = vadd.f32 %v1457, %v1458
      %v1460 = vsel %vm361, %v1440, 0.0
      %v1461 = vadd.f32 %v1459, %v1460
      %v1462 = vsel %vm361, %v1441, 0.0
      %v1463 = vadd.f32 %v1461, %v1462
      %v1464 = vsel %vm361, %v1442, 0.0
      %v1465 = vadd.f32 %v1463, %v1464
      %v1466 = vsel %vm361, %v1443, 0.0
      %v1467 = vadd.f32 %v1465, %v1466
      %v1468 = vsel %vm378, %v1444, 0.0
      %v1469 = vadd.f32 %v1467, %v1468
      %v1470 = vrot.slane %v1469, 4
      %v1471 = vadd.f32 %v1469, %v1470
      %v1472 = vrot.slane %v1471, 2
      %v1473 = vadd.f32 %v1471, %v1472
      %v1474 = vrot.slane %v1473, 1
      %v1475 = vadd.f32 %v1473, %v1474
      %v1477 = vsel %vm361, %v1475, 0
      %1479 = vmatprep.subr.mxu0 0.0
      %1480 = vmatpush1.msra.mxu0 0.0
      %1481 = vmatprep.subr.mxu0 0.0
      %1482 = vmatpush1.msra.mxu0 0.0
      %1483 = vmatprep.subr.mxu0 0.0
      %1484 = vmatpush1.msra.mxu0 0.0
      %1485 = vmatprep.subr.mxu0 0.0
      %1486 = vmatpush1.msra.mxu0 0.0
      %1487 = vmatprep.subr.mxu0 0.0
      %1488 = vmatpush1.msra.mxu0 0.0
      %1489 = vmatprep.subr.mxu0 0.0
      %1490 = vmatpush1.msra.mxu0 0.0
      %1491 = vmatprep.subr.mxu0 0.0
      %1492 = vmatpush1.msra.mxu0 0.0
      %1493 = vmatprep.subr.mxu0 0.0
      %1494 = vmatpush1.msra.mxu0 0.0
      %1495 = vmatprep.subr.mxu0 0.0
      %1496 = vmatpush1.msra.mxu0 %v501
      %1497 = vmatprep.subr.mxu0 0.0
      %1498 = vmatpush1.msra.mxu0 %v500
      %1499 = vmatprep.subr.mxu0 0.0
      %1500 = vmatpush1.msra.mxu0 %v499
      %1501 = vmatprep.subr.mxu0 0.0
      %1502 = vmatpush1.msra.mxu0 %v498
      %1503 = vmatprep.subr.mxu0 0.0
      %1504 = vmatpush1.msra.mxu0 %v497
      %1505 = vmatprep.subr.mxu0 0.0
      %1506 = vmatpush1.msra.mxu0 %v496
      %1507 = vmatprep.subr.mxu0 0.0
      %1508 = vmatpush1.msra.mxu0 %v495
      %1509 = vmatprep.subr.mxu0 0.0
      %1510 = vmatpush1.msra.mxu0 %v494
      %1511 = vmatprep.subr.mxu0 0.0
      %1512 = vmatpush2.msra.mxu0 0.0
      %1513 = vmatprep.subr.mxu0 0.0
      %1514 = vmatpush2.msra.mxu0 0.0
      %1515 = vmatprep.subr.mxu0 0.0
      %1516 = vmatpush2.msra.mxu0 0.0
      %1517 = vmatprep.subr.mxu0 0.0
      %1518 = vmatpush2.msra.mxu0 0.0
      %1519 = vmatprep.subr.mxu0 0.0
      %1520 = vmatpush2.msra.mxu0 0.0
      %1521 = vmatprep.subr.mxu0 0.0
      %1522 = vmatpush2.msra.mxu0 0.0
      %1523 = vmatprep.subr.mxu0 0.0
      %1524 = vmatpush2.msra.mxu0 0.0
      %1525 = vmatprep.subr.mxu0 0.0
      %1526 = vmatpush2.msra.mxu0 0.0
      %1527 = vmatprep.subr.mxu0 0.0
      %1528 = vmatpush2.msra.mxu0 0.0
      %1529 = vmatprep.subr.mxu0 0.0
      %1530 = vmatpush2.msra.mxu0 0.0
      %1531 = vmatprep.subr.mxu0 0.0
      %1532 = vmatpush2.msra.mxu0 0.0
      %1533 = vmatprep.subr.mxu0 0.0
      %1534 = vmatpush2.msra.mxu0 0.0
      %1535 = vmatprep.subr.mxu0 0.0
      %1536 = vmatpush2.msra.mxu0 0.0
      %1537 = vmatprep.subr.mxu0 0.0
      %1538 = vmatpush2.msra.mxu0 0.0
      %1539 = vmatprep.subr.mxu0 0.0
      %1540 = vmatpush2.msra.mxu0 0.0
      %1541 = vmatprep.subr.mxu0 0.0
      %1542 = vmatpush2.msra.mxu0 0.0
      %1543 = vmatprep.mubr.f32.mxu0 0.0
      %1544 = vmatmul.mubr.f32.gmra.mxu0 %v1477
      %v1545 = vpop.f32.mrf.mxu0
      %v1546 = vadd.f32 0.0, %v1545
      %v1547 = vpop.f32.mrf.mxu0
      %1548 = vdwg.mxu0
      %v1549 = vrcp.pop 128.0
      %v1550 = vmul.f32 %v1546, %v1549
      %vm1551 = vcmask 261120
      %v1553 = vsel %vm1551, %v1550, 0
      %1555 = vmatprep.subr.mxu0 0.0
      %1556 = vmatpush1.msra.mxu0 0.0
      %1557 = vmatprep.subr.mxu0 0.0
      %1558 = vmatpush1.msra.mxu0 0.0
      %1559 = vmatprep.subr.mxu0 0.0
      %1560 = vmatpush1.msra.mxu0 0.0
      %1561 = vmatprep.subr.mxu0 0.0
      %1562 = vmatpush1.msra.mxu0 0.0
      %1563 = vmatprep.subr.mxu0 0.0
      %1564 = vmatpush1.msra.mxu0 0.0
      %1565 = vmatprep.subr.mxu0 0.0
      %1566 = vmatpush1.msra.mxu0 0.0
      %1567 = vmatprep.subr.mxu0 0.0
      %1568 = vmatpush1.msra.mxu0 0.0
      %1569 = vmatprep.subr.mxu0 0.0
      %1570 = vmatpush1.msra.mxu0 0.0
      %1571 = vmatprep.subr.mxu0 0.0
      %1572 = vmatpush1.msra.mxu0 0.0
      %1573 = vmatprep.subr.mxu0 0.0
      %1574 = vmatpush1.msra.mxu0 0.0
      %1575 = vmatprep.subr.mxu0 0.0
      %1576 = vmatpush1.msra.mxu0 0.0
      %1577 = vmatprep.subr.mxu0 0.0
      %1578 = vmatpush1.msra.mxu0 0.0
      %1579 = vmatprep.subr.mxu0 0.0
      %1580 = vmatpush1.msra.mxu0 %v505
      %1581 = vmatprep.subr.mxu0 0.0
      %1582 = vmatpush1.msra.mxu0 %v504
      %1583 = vmatprep.subr.mxu0 0.0
      %1584 = vmatpush1.msra.mxu0 %v503
      %1585 = vmatprep.subr.mxu0 0.0
      %1586 = vmatpush1.msra.mxu0 %v502
      %1587 = vmatprep.subr.mxu0 0.0
      %1588 = vmatpush2.msra.mxu0 0.0
      %1589 = vmatprep.subr.mxu0 0.0
      %1590 = vmatpush2.msra.mxu0 0.0
      %1591 = vmatprep.subr.mxu0 0.0
      %1592 = vmatpush2.msra.mxu0 0.0
      %1593 = vmatprep.subr.mxu0 0.0
      %1594 = vmatpush2.msra.mxu0 0.0
      %1595 = vmatprep.subr.mxu0 0.0
      %1596 = vmatpush2.msra.mxu0 0.0
      %1597 = vmatprep.subr.mxu0 0.0
      %1598 = vmatpush2.msra.mxu0 0.0
      %1599 = vmatprep.subr.mxu0 0.0
      %1600 = vmatpush2.msra.mxu0 0.0
      %1601 = vmatprep.subr.mxu0 0.0
      %1602 = vmatpush2.msra.mxu0 0.0
      %1603 = vmatprep.subr.mxu0 0.0
      %1604 = vmatpush2.msra.mxu0 0.0
      %1605 = vmatprep.subr.mxu0 0.0
      %1606 = vmatpush2.msra.mxu0 0.0
      %1607 = vmatprep.subr.mxu0 0.0
      %1608 = vmatpush2.msra.mxu0 0.0
      %1609 = vmatprep.subr.mxu0 0.0
      %1610 = vmatpush2.msra.mxu0 0.0
      %1611 = vmatprep.subr.mxu0 0.0
      %1612 = vmatpush2.msra.mxu0 0.0
      %1613 = vmatprep.subr.mxu0 0.0
      %1614 = vmatpush2.msra.mxu0 0.0
      %1615 = vmatprep.subr.mxu0 0.0
      %1616 = vmatpush2.msra.mxu0 0.0
      %1617 = vmatprep.subr.mxu0 0.0
      %1618 = vmatpush2.msra.mxu0 0.0
      %1619 = vmatprep.mubr.f32.mxu0 0.0
      %1620 = vmatmul.mubr.f32.gmra.mxu0 %v1553
      %v1621 = vpop.f32.mrf.mxu0
      %v1622 = vadd.f32 0.0, %v1621
      %v1623 = vpop.f32.mrf.mxu0
      %1624 = vdwg.mxu0
      %v1625 = vlaneseq
      %v1626 = vshrl.u32 %v1625, 7
      %v1627 = vsub.s32 0, %v1626
      %v1628 = vrot.slane %v1622, %v1627
      %v1629 = vsub.f32 %v1432, %v1628
      %v1630 = vsub.f32 %v1433, %v1628
      %v1631 = vsub.f32 %v1434, %v1628
      %v1632 = vsub.f32 %v1435, %v1628
      %v1633 = vsub.f32 %v1436, %v1628
      %v1634 = vsub.f32 %v1437, %v1628
      %v1635 = vsub.f32 %v1438, %v1628
      %v1636 = vsub.f32 %v1439, %v1628
      %v1637 = vsub.f32 %v1440, %v1628
      %v1638 = vsub.f32 %v1441, %v1628
      %v1639 = vsub.f32 %v1442, %v1628
      %v1640 = vsub.f32 %v1443, %v1628
      %v1641 = vsub.f32 %v1444, %v1628
      %v1642 = vmul.f32 %v1629, %v1370
      %v1643 = vmul.f32 %v1630, %v1375
      %v1644 = vmul.f32 %v1631, %v1380
      %v1645 = vmul.f32 %v1632, %v1385
      %v1646 = vmul.f32 %v1633, %v1390
      %v1647 = vmul.f32 %v1634, %v1395
      %v1648 = vmul.f32 %v1635, %v1400
      %v1649 = vmul.f32 %v1636, %v1405
      %v1650 = vmul.f32 %v1637, %v1410
      %v1651 = vmul.f32 %v1638, %v1415
      %v1652 = vmul.f32 %v1639, %v1420
      %v1653 = vmul.f32 %v1640, %v1425
      %v1654 = vmul.f32 %v1641, %v1430
      %v1655 = vmul.f32 %v1642, %v1642
      %v1656 = vmul.f32 %v1643, %v1643
      %v1657 = vmul.f32 %v1644, %v1644
      %v1658 = vmul.f32 %v1645, %v1645
      %v1659 = vmul.f32 %v1646, %v1646
      %v1660 = vmul.f32 %v1647, %v1647
      %v1661 = vmul.f32 %v1648, %v1648
      %v1662 = vmul.f32 %v1649, %v1649
      %v1663 = vmul.f32 %v1650, %v1650
      %v1664 = vmul.f32 %v1651, %v1651
      %v1665 = vmul.f32 %v1652, %v1652
      %v1666 = vmul.f32 %v1653, %v1653
      %v1667 = vmul.f32 %v1654, %v1654
      %v1668 = vsel %vm361, %v1655, 0.0
      %v1669 = vsel %vm361, %v1656, 0.0
      %v1670 = vadd.f32 %v1668, %v1669
      %v1671 = vsel %vm361, %v1657, 0.0
      %v1672 = vadd.f32 %v1670, %v1671
      %v1673 = vsel %vm361, %v1658, 0.0
      %v1674 = vadd.f32 %v1672, %v1673
      %v1675 = vsel %vm361, %v1659, 0.0
      %v1676 = vadd.f32 %v1674, %v1675
      %v1677 = vsel %vm361, %v1660, 0.0
      %v1678 = vadd.f32 %v1676, %v1677
      %v1679 = vsel %vm361, %v1661, 0.0
      %v1680 = vadd.f32 %v1678, %v1679
      %v1681 = vsel %vm361, %v1662, 0.0
      %v1682 = vadd.f32 %v1680, %v1681
      %v1683 = vsel %vm361, %v1663, 0.0
      %v1684 = vadd.f32 %v1682, %v1683
      %v1685 = vsel %vm361, %v1664, 0.0
      %v1686 = vadd.f32 %v1684, %v1685
      %v1687 = vsel %vm361, %v1665, 0.0
      %v1688 = vadd.f32 %v1686, %v1687
      %v1689 = vsel %vm361, %v1666, 0.0
      %v1690 = vadd.f32 %v1688, %v1689
      %v1691 = vsel %vm378, %v1667, 0.0
      %v1692 = vadd.f32 %v1690, %v1691
      %v1693 = vrot.slane %v1692, 4
      %v1694 = vadd.f32 %v1692, %v1693
      %v1695 = vrot.slane %v1694, 2
      %v1696 = vadd.f32 %v1694, %v1695
      %v1697 = vrot.slane %v1696, 1
      %v1698 = vadd.f32 %v1696, %v1697
      %v1700 = vsel %vm361, %v1698, 0
      %1702 = vmatprep.subr.mxu0 0.0
      %1703 = vmatpush1.msra.mxu0 0.0
      %1704 = vmatprep.subr.mxu0 0.0
      %1705 = vmatpush1.msra.mxu0 0.0
      %1706 = vmatprep.subr.mxu0 0.0
      %1707 = vmatpush1.msra.mxu0 0.0
      %1708 = vmatprep.subr.mxu0 0.0
      %1709 = vmatpush1.msra.mxu0 0.0
      %1710 = vmatprep.subr.mxu0 0.0
      %1711 = vmatpush1.msra.mxu0 0.0
      %1712 = vmatprep.subr.mxu0 0.0
      %1713 = vmatpush1.msra.mxu0 0.0
      %1714 = vmatprep.subr.mxu0 0.0
      %1715 = vmatpush1.msra.mxu0 0.0
      %1716 = vmatprep.subr.mxu0 0.0
      %1717 = vmatpush1.msra.mxu0 0.0
      %1718 = vmatprep.subr.mxu0 0.0
      %1719 = vmatpush1.msra.mxu0 %v501
      %1720 = vmatprep.subr.mxu0 0.0
      %1721 = vmatpush1.msra.mxu0 %v500
      %1722 = vmatprep.subr.mxu0 0.0
      %1723 = vmatpush1.msra.mxu0 %v499
      %1724 = vmatprep.subr.mxu0 0.0
      %1725 = vmatpush1.msra.mxu0 %v498
      %1726 = vmatprep.subr.mxu0 0.0
      %1727 = vmatpush1.msra.mxu0 %v497
      %1728 = vmatprep.subr.mxu0 0.0
      %1729 = vmatpush1.msra.mxu0 %v496
      %1730 = vmatprep.subr.mxu0 0.0
      %1731 = vmatpush1.msra.mxu0 %v495
      %1732 = vmatprep.subr.mxu0 0.0
      %1733 = vmatpush1.msra.mxu0 %v494
      %1734 = vmatprep.subr.mxu0 0.0
      %1735 = vmatpush2.msra.mxu0 0.0
      %1736 = vmatprep.subr.mxu0 0.0
      %1737 = vmatpush2.msra.mxu0 0.0
      %1738 = vmatprep.subr.mxu0 0.0
      %1739 = vmatpush2.msra.mxu0 0.0
      %1740 = vmatprep.subr.mxu0 0.0
      %1741 = vmatpush2.msra.mxu0 0.0
      %1742 = vmatprep.subr.mxu0 0.0
      %1743 = vmatpush2.msra.mxu0 0.0
      %1744 = vmatprep.subr.mxu0 0.0
      %1745 = vmatpush2.msra.mxu0 0.0
      %1746 = vmatprep.subr.mxu0 0.0
      %1747 = vmatpush2.msra.mxu0 0.0
      %1748 = vmatprep.subr.mxu0 0.0
      %1749 = vmatpush2.msra.mxu0 0.0
      %1750 = vmatprep.subr.mxu0 0.0
      %1751 = vmatpush2.msra.mxu0 0.0
      %1752 = vmatprep.subr.mxu0 0.0
      %1753 = vmatpush2.msra.mxu0 0.0
      %1754 = vmatprep.subr.mxu0 0.0
      %1755 = vmatpush2.msra.mxu0 0.0
      %1756 = vmatprep.subr.mxu0 0.0
      %1757 = vmatpush2.msra.mxu0 0.0
      %1758 = vmatprep.subr.mxu0 0.0
      %1759 = vmatpush2.msra.mxu0 0.0
      %1760 = vmatprep.subr.mxu0 0.0
      %1761 = vmatpush2.msra.mxu0 0.0
      %1762 = vmatprep.subr.mxu0 0.0
      %1763 = vmatpush2.msra.mxu0 0.0
      %1764 = vmatprep.subr.mxu0 0.0
      %1765 = vmatpush2.msra.mxu0 0.0
      %1766 = vmatprep.mubr.f32.mxu0 0.0
      %1767 = vmatmul.mubr.f32.gmra.mxu0 %v1700
      %v1768 = vpop.f32.mrf.mxu0
      %v1769 = vadd.f32 0.0, %v1768
      %v1770 = vpop.f32.mrf.mxu0
      %1771 = vdwg.mxu0
      %v1772 = vmul.f32 %v1769, %v1549
      %v1774 = vsel %vm1551, %v1772, 0
      %1776 = vmatprep.subr.mxu0 0.0
      %1777 = vmatpush1.msra.mxu0 0.0
      %1778 = vmatprep.subr.mxu0 0.0
      %1779 = vmatpush1.msra.mxu0 0.0
      %1780 = vmatprep.subr.mxu0 0.0
      %1781 = vmatpush1.msra.mxu0 0.0
      %1782 = vmatprep.subr.mxu0 0.0
      %1783 = vmatpush1.msra.mxu0 0.0
      %1784 = vmatprep.subr.mxu0 0.0
      %1785 = vmatpush1.msra.mxu0 0.0
      %1786 = vmatprep.subr.mxu0 0.0
      %1787 = vmatpush1.msra.mxu0 0.0
      %1788 = vmatprep.subr.mxu0 0.0
      %1789 = vmatpush1.msra.mxu0 0.0
      %1790 = vmatprep.subr.mxu0 0.0
      %1791 = vmatpush1.msra.mxu0 0.0
      %1792 = vmatprep.subr.mxu0 0.0
      %1793 = vmatpush1.msra.mxu0 0.0
      %1794 = vmatprep.subr.mxu0 0.0
      %1795 = vmatpush1.msra.mxu0 0.0
      %1796 = vmatprep.subr.mxu0 0.0
      %1797 = vmatpush1.msra.mxu0 0.0
      %1798 = vmatprep.subr.mxu0 0.0
      %1799 = vmatpush1.msra.mxu0 0.0
      %1800 = vmatprep.subr.mxu0 0.0
      %1801 = vmatpush1.msra.mxu0 %v505
      %1802 = vmatprep.subr.mxu0 0.0
      %1803 = vmatpush1.msra.mxu0 %v504
      %1804 = vmatprep.subr.mxu0 0.0
      %1805 = vmatpush1.msra.mxu0 %v503
      %1806 = vmatprep.subr.mxu0 0.0
      %1807 = vmatpush1.msra.mxu0 %v502
      %1808 = vmatprep.subr.mxu0 0.0
      %1809 = vmatpush2.msra.mxu0 0.0
      %1810 = vmatprep.subr.mxu0 0.0
      %1811 = vmatpush2.msra.mxu0 0.0
      %1812 = vmatprep.subr.mxu0 0.0
      %1813 = vmatpush2.msra.mxu0 0.0
      %1814 = vmatprep.subr.mxu0 0.0
      %1815 = vmatpush2.msra.mxu0 0.0
      %1816 = vmatprep.subr.mxu0 0.0
      %1817 = vmatpush2.msra.mxu0 0.0
      %1818 = vmatprep.subr.mxu0 0.0
      %1819 = vmatpush2.msra.mxu0 0.0
      %1820 = vmatprep.subr.mxu0 0.0
      %1821 = vmatpush2.msra.mxu0 0.0
      %1822 = vmatprep.subr.mxu0 0.0
      %1823 = vmatpush2.msra.mxu0 0.0
      %1824 = vmatprep.subr.mxu0 0.0
      %1825 = vmatpush2.msra.mxu0 0.0
      %1826 = vmatprep.subr.mxu0 0.0
      %1827 = vmatpush2.msra.mxu0 0.0
      %1828 = vmatprep.subr.mxu0 0.0
      %1829 = vmatpush2.msra.mxu0 0.0
      %1830 = vmatprep.subr.mxu0 0.0
      %1831 = vmatpush2.msra.mxu0 0.0
      %1832 = vmatprep.subr.mxu0 0.0
      %1833 = vmatpush2.msra.mxu0 0.0
      %1834 = vmatprep.subr.mxu0 0.0
      %1835 = vmatpush2.msra.mxu0 0.0
      %1836 = vmatprep.subr.mxu0 0.0
      %1837 = vmatpush2.msra.mxu0 0.0
      %1838 = vmatprep.subr.mxu0 0.0
      %1839 = vmatpush2.msra.mxu0 0.0
      %1840 = vmatprep.mubr.f32.mxu0 0.0
      %1841 = vmatmul.mubr.f32.gmra.mxu0 %v1774
      %v1842 = vpop.f32.mrf.mxu0
      %v1843 = vadd.f32 1e-05, %v1842
      %v1844 = vpop.f32.mrf.mxu0
      %1845 = vdwg.mxu0
      %v1846 = vrsqrt.pop %v1843
      %v1847 = vlaneseq
      %v1848 = vshrl.u32 %v1847, 7
      %v1849 = vsub.s32 0, %v1848
      %v1850 = vrot.slane %v1846, %v1849
      %v1851 = vmul.f32 %v1642, %v1850
      %v1852 = vmul.f32 %v1643, %v1850
      %v1853 = vmul.f32 %v1644, %v1850
      %v1854 = vmul.f32 %v1645, %v1850
      %v1855 = vmul.f32 %v1646, %v1850
      %v1856 = vmul.f32 %v1647, %v1850
      %v1857 = vmul.f32 %v1648, %v1850
      %v1858 = vmul.f32 %v1649, %v1850
      %v1859 = vmul.f32 %v1650, %v1850
      %v1860 = vmul.f32 %v1651, %v1850
      %v1861 = vmul.f32 %v1652, %v1850
      %v1862 = vmul.f32 %v1653, %v1850
      %v1863 = vmul.f32 %v1654, %v1850
      %v1865 = vlaneseq
      %v1866 = vshrl.u32 %v1865, 7
      %v1867 = vsub.s32 0, %v1866
      %v1868 = vrot.slane %v492, %v1867
      %v1870 = vmul.f32 %v1851, %v1868
      %v1871 = vmul.f32 %v1852, %v1868
      %v1872 = vmul.f32 %v1853, %v1868
      %v1873 = vmul.f32 %v1854, %v1868
      %v1874 = vmul.f32 %v1855, %v1868
      %v1875 = vmul.f32 %v1856, %v1868
      %v1876 = vmul.f32 %v1857, %v1868
      %v1877 = vmul.f32 %v1858, %v1868
      %v1878 = vmul.f32 %v1859, %v1868
      %v1879 = vmul.f32 %v1860, %v1868
      %v1880 = vmul.f32 %v1861, %v1868
      %v1881 = vmul.f32 %v1862, %v1868
      %v1882 = vmul.f32 %v1863, %v1868
      %v1884 = vlaneseq
      %v1885 = vshrl.u32 %v1884, 7
      %v1886 = vsub.s32 0, %v1885
      %v1887 = vrot.slane %v493, %v1886
      %v1889 = vadd.f32 %v1870, %v1887
      %v1890 = vadd.f32 %v1871, %v1887
      %v1891 = vadd.f32 %v1872, %v1887
      %v1892 = vadd.f32 %v1873, %v1887
      %v1893 = vadd.f32 %v1874, %v1887
      %v1894 = vadd.f32 %v1875, %v1887
      %v1895 = vadd.f32 %v1876, %v1887
      %v1896 = vadd.f32 %v1877, %v1887
      %v1897 = vadd.f32 %v1878, %v1887
      %v1898 = vadd.f32 %v1879, %v1887
      %v1899 = vadd.f32 %v1880, %v1887
      %v1900 = vadd.f32 %v1881, %v1887
      %v1901 = vadd.f32 %v1882, %v1887
      %v1902 = vmax.f32 %v1889, 0.0
      %v1903 = vmax.f32 %v1890, 0.0
      %v1904 = vmax.f32 %v1891, 0.0
      %v1905 = vmax.f32 %v1892, 0.0
      %v1906 = vmax.f32 %v1893, 0.0
      %v1907 = vmax.f32 %v1894, 0.0
      %v1908 = vmax.f32 %v1895, 0.0
      %v1909 = vmax.f32 %v1896, 0.0
      %v1910 = vmax.f32 %v1897, 0.0
      %v1911 = vmax.f32 %v1898, 0.0
      %v1912 = vmax.f32 %v1899, 0.0
      %v1913 = vmax.f32 %v1900, 0.0
      %v1914 = vmax.f32 %v1901, 0.0
      %v1915 = vmul.f32 %v1902, %v1370
      %v1916 = vmul.f32 %v1903, %v1375
      %v1917 = vmul.f32 %v1904, %v1380
      %v1918 = vmul.f32 %v1905, %v1385
      %v1919 = vmul.f32 %v1906, %v1390
      %v1920 = vmul.f32 %v1907, %v1395
      %v1921 = vmul.f32 %v1908, %v1400
      %v1922 = vmul.f32 %v1909, %v1405
      %v1923 = vmul.f32 %v1910, %v1410
      %v1924 = vmul.f32 %v1911, %v1415
      %v1925 = vmul.f32 %v1912, %v1420
      %v1926 = vmul.f32 %v1913, %v1425
      %v1927 = vmul.f32 %v1914, %v1430
      %1928 = vst.msk [vmem:[#allocation2 + $0x10] sm:$0xff] %vm361, %v1915
      %1929 = vst.msk [vmem:[#allocation2 + $0x18] sm:$0xff] %vm361, %v1916
      %1930 = vst.msk [vmem:[#allocation2 + $0x20] sm:$0xff] %vm361, %v1917
      %1931 = vst.msk [vmem:[#allocation2 + $0x28] sm:$0xff] %vm361, %v1918
      %1932 = vst.msk [vmem:[#allocation2 + $0x30] sm:$0xff] %vm361, %v1919
      %1933 = vst.msk [vmem:[#allocation2 + $0x38] sm:$0xff] %vm361, %v1920
      %1934 = vst.msk [vmem:[#allocation2 + $0x40] sm:$0xff] %vm361, %v1921
      %1935 = vst.msk [vmem:[#allocation2 + $0x48] sm:$0xff] %vm361, %v1922
      %1936 = vst.msk [vmem:[#allocation2 + $0x50] sm:$0xff] %vm361, %v1923
      %1937 = vst.msk [vmem:[#allocation2 + $0x58] sm:$0xff] %vm361, %v1924
      %1938 = vst.msk [vmem:[#allocation2 + $0x60] sm:$0xff] %vm361, %v1925
      %1939 = vst.msk [vmem:[#allocation2 + $0x68] sm:$0xff] %vm361, %v1926
      %1940 = vst.msk [vmem:[#allocation2 + $0x70] sm:$0xf] %vm378, %v1927
      %v1941 = vld [vmem:[#allocation2 + $0x5] sm:$0xff]
      %v1942 = vld [vmem:[#allocation2 + $0xd] sm:$0xff]
      %v1943 = vld [vmem:[#allocation2 + $0x15] sm:$0xff]
      %v1944 = vld [vmem:[#allocation2 + $0x1d] sm:$0xff]
      %v1945 = vld [vmem:[#allocation2 + $0x25] sm:$0xff]
      %v1946 = vld [vmem:[#allocation2 + $0x2d] sm:$0xff]
      %v1947 = vld [vmem:[#allocation2 + $0x35] sm:$0xff]
      %v1948 = vld [vmem:[#allocation2 + $0x3d] sm:$0xff]
      %v1949 = vld [vmem:[#allocation2 + $0x45] sm:$0xff]
      %v1950 = vld [vmem:[#allocation2 + $0x4d] sm:$0xff]
      %v1951 = vld [vmem:[#allocation2 + $0x55] sm:$0xff]
      %v1952 = vld [vmem:[#allocation2 + $0x5d] sm:$0xff]
      %v1953 = vld [vmem:[#allocation2 + $0x65] sm:$0xf]
      %v1954 = vpack.c.bf16 %v1942, %v1941
      %v1955 = vpack.c.bf16 %v1944, %v1943
      %v1956 = vpack.c.bf16 %v1946, %v1945
      %v1957 = vpack.c.bf16 %v1948, %v1947
      %v1958 = vpack.c.bf16 %v1950, %v1949
      %v1959 = vpack.c.bf16 %v1952, %v1951
      %v1960 = vpack.c.bf16 %v1953, %v1953
      %v1961 = vld [vmem:[#allocation2 + $0x6] sm:$0xff]
      %v1962 = vld [vmem:[#allocation2 + $0xe] sm:$0xff]
      %v1963 = vld [vmem:[#allocation2 + $0x16] sm:$0xff]
      %v1964 = vld [vmem:[#allocation2 + $0x1e] sm:$0xff]
      %v1965 = vld [vmem:[#allocation2 + $0x26] sm:$0xff]
      %v1966 = vld [vmem:[#allocation2 + $0x2e] sm:$0xff]
      %v1967 = vld [vmem:[#allocation2 + $0x36] sm:$0xff]
      %v1968 = vld [vmem:[#allocation2 + $0x3e] sm:$0xff]
      %v1969 = vld [vmem:[#allocation2 + $0x46] sm:$0xff]
      %v1970 = vld [vmem:[#allocation2 + $0x4e] sm:$0xff]
      %v1971 = vld [vmem:[#allocation2 + $0x56] sm:$0xff]
      %v1972 = vld [vmem:[#allocation2 + $0x5e] sm:$0xff]
      %v1973 = vld [vmem:[#allocation2 + $0x66] sm:$0xf]
      %v1974 = vpack.c.bf16 %v1962, %v1961
      %v1975 = vpack.c.bf16 %v1964, %v1963
      %v1976 = vpack.c.bf16 %v1966, %v1965
      %v1977 = vpack.c.bf16 %v1968, %v1967
      %v1978 = vpack.c.bf16 %v1970, %v1969
      %v1979 = vpack.c.bf16 %v1972, %v1971
      %v1980 = vpack.c.bf16 %v1973, %v1973
      %v1981 = vld [vmem:[#allocation2 + $0x7] sm:$0xff]
      %v1982 = vld [vmem:[#allocation2 + $0xf] sm:$0xff]
      %v1983 = vld [vmem:[#allocation2 + $0x17] sm:$0xff]
      %v1984 = vld [vmem:[#allocation2 + $0x1f] sm:$0xff]
      %v1985 = vld [vmem:[#allocation2 + $0x27] sm:$0xff]
      %v1986 = vld [vmem:[#allocation2 + $0x2f] sm:$0xff]
      %v1987 = vld [vmem:[#allocation2 + $0x37] sm:$0xff]
      %v1988 = vld [vmem:[#allocation2 + $0x3f] sm:$0xff]
      %v1989 = vld [vmem:[#allocation2 + $0x47] sm:$0xff]
      %v1990 = vld [vmem:[#allocation2 + $0x4f] sm:$0xff]
      %v1991 = vld [vmem:[#allocation2 + $0x57] sm:$0xff]
      %v1992 = vld [vmem:[#allocation2 + $0x5f] sm:$0xff]
      %v1993 = vld [vmem:[#allocation2 + $0x67] sm:$0xf]
      %v1994 = vpack.c.bf16 %v1982, %v1981
      %v1995 = vpack.c.bf16 %v1984, %v1983
      %v1996 = vpack.c.bf16 %v1986, %v1985
      %v1997 = vpack.c.bf16 %v1988, %v1987
      %v1998 = vpack.c.bf16 %v1990, %v1989
      %v1999 = vpack.c.bf16 %v1992, %v1991
      %v2000 = vpack.c.bf16 %v1993, %v1993
      %v2001 = vld [vmem:[#allocation2 + $0x67] sm:$0xff]
      %v2002 = vld [vmem:[#allocation2 + $0x6f] sm:$0xf]
      %v2003 = vpack.c.bf16 %v1983, %v1982
      %v2004 = vpack.c.bf16 %v1985, %v1984
      %v2005 = vpack.c.bf16 %v1987, %v1986
      %v2006 = vpack.c.bf16 %v1989, %v1988
      %v2007 = vpack.c.bf16 %v1991, %v1990
      %v2008 = vpack.c.bf16 %v2001, %v1992
      %v2009 = vpack.c.bf16 %v2002, %v2002
      %v2010 = vld [vmem:[#allocation2 + $0x10] sm:$0xff]
      %v2011 = vld [vmem:[#allocation2 + $0x18] sm:$0xff]
      %v2012 = vld [vmem:[#allocation2 + $0x20] sm:$0xff]
      %v2013 = vld [vmem:[#allocation2 + $0x28] sm:$0xff]
      %v2014 = vld [vmem:[#allocation2 + $0x30] sm:$0xff]
      %v2015 = vld [vmem:[#allocation2 + $0x38] sm:$0xff]
      %v2016 = vld [vmem:[#allocation2 + $0x40] sm:$0xff]
      %v2017 = vld [vmem:[#allocation2 + $0x48] sm:$0xff]
      %v2018 = vld [vmem:[#allocation2 + $0x50] sm:$0xff]
      %v2019 = vld [vmem:[#allocation2 + $0x58] sm:$0xff]
      %v2020 = vld [vmem:[#allocation2 + $0x60] sm:$0xff]
      %v2021 = vld [vmem:[#allocation2 + $0x68] sm:$0xff]
      %v2022 = vld [vmem:[#allocation2 + $0x70] sm:$0xf]
      %v2023 = vpack.c.bf16 %v2011, %v2010
      %v2024 = vpack.c.bf16 %v2013, %v2012
      %v2025 = vpack.c.bf16 %v2015, %v2014
      %v2026 = vpack.c.bf16 %v2017, %v2016
      %v2027 = vpack.c.bf16 %v2019, %v2018
      %v2028 = vpack.c.bf16 %v2021, %v2020
      %v2029 = vpack.c.bf16 %v2022, %v2022
      %v2030 = vld [vmem:[#allocation2 + $0x11] sm:$0xff]
      %v2031 = vld [vmem:[#allocation2 + $0x19] sm:$0xff]
      %v2032 = vld [vmem:[#allocation2 + $0x21] sm:$0xff]
      %v2033 = vld [vmem:[#allocation2 + $0x29] sm:$0xff]
      %v2034 = vld [vmem:[#allocation2 + $0x31] sm:$0xff]
      %v2035 = vld [vmem:[#allocation2 + $0x39] sm:$0xff]
      %v2036 = vld [vmem:[#allocation2 + $0x41] sm:$0xff]
      %v2037 = vld [vmem:[#allocation2 + $0x49] sm:$0xff]
      %v2038 = vld [vmem:[#allocation2 + $0x51] sm:$0xff]
      %v2039 = vld [vmem:[#allocation2 + $0x59] sm:$0xff]
      %v2040 = vld [vmem:[#allocation2 + $0x61] sm:$0xff]
      %v2041 = vld [vmem:[#allocation2 + $0x69] sm:$0xff]
      %v2042 = vld [vmem:[#allocation2 + $0x71] sm:$0xf]
      %v2043 = vpack.c.bf16 %v2031, %v2030
      %v2044 = vpack.c.bf16 %v2033, %v2032
      %v2045 = vpack.c.bf16 %v2035, %v2034
      %v2046 = vpack.c.bf16 %v2037, %v2036
      %v2047 = vpack.c.bf16 %v2039, %v2038
      %v2048 = vpack.c.bf16 %v2041, %v2040
      %v2049 = vpack.c.bf16 %v2042, %v2042
      %v2050 = vld [vmem:[#allocation2 + $0x71] sm:$0xff]
      %v2051 = vld [vmem:[#allocation2 + $0x79] sm:$0xf]
      %v2052 = vpack.c.bf16 %v2032, %v2031
      %v2053 = vpack.c.bf16 %v2034, %v2033
      %v2054 = vpack.c.bf16 %v2036, %v2035
      %v2055 = vpack.c.bf16 %v2038, %v2037
      %v2056 = vpack.c.bf16 %v2040, %v2039
      %v2057 = vpack.c.bf16 %v2050, %v2041
      %v2058 = vpack.c.bf16 %v2051, %v2051
      %v2059 = vld [vmem:[#allocation2 + $0x1a] sm:$0xff]
      %v2060 = vld [vmem:[#allocation2 + $0x22] sm:$0xff]
      %v2061 = vld [vmem:[#allocation2 + $0x2a] sm:$0xff]
      %v2062 = vld [vmem:[#allocation2 + $0x32] sm:$0xff]
      %v2063 = vld [vmem:[#allocation2 + $0x3a] sm:$0xff]
      %v2064 = vld [vmem:[#allocation2 + $0x42] sm:$0xff]
      %v2065 = vld [vmem:[#allocation2 + $0x4a] sm:$0xff]
      %v2066 = vld [vmem:[#allocation2 + $0x52] sm:$0xff]
      %v2067 = vld [vmem:[#allocation2 + $0x5a] sm:$0xff]
      %v2068 = vld [vmem:[#allocation2 + $0x62] sm:$0xff]
      %v2069 = vld [vmem:[#allocation2 + $0x6a] sm:$0xff]
      %v2070 = vld [vmem:[#allocation2 + $0x72] sm:$0xff]
      %v2071 = vld [vmem:[#allocation2 + $0x7a] sm:$0xf]
      %v2072 = vpack.c.bf16 %v2060, %v2059
      %v2073 = vpack.c.bf16 %v2062, %v2061
      %v2074 = vpack.c.bf16 %v2064, %v2063
      %v2075 = vpack.c.bf16 %v2066, %v2065
      %v2076 = vpack.c.bf16 %v2068, %v2067
      %v2077 = vpack.c.bf16 %v2070, %v2069
      %v2078 = vpack.c.bf16 %v2071, %v2071
      %v2079 = vld [vmem:[#allocation2 + $0x1b] sm:$0xff]
      %v2080 = vld [vmem:[#allocation2 + $0x23] sm:$0xff]
      %v2081 = vld [vmem:[#allocation2 + $0x2b] sm:$0xff]
      %v2082 = vld [vmem:[#allocation2 + $0x33] sm:$0xff]
      %v2083 = vld [vmem:[#allocation2 + $0x3b] sm:$0xff]
      %v2084 = vld [vmem:[#allocation2 + $0x43] sm:$0xff]
      %v2085 = vld [vmem:[#allocation2 + $0x4b] sm:$0xff]
      %v2086 = vld [vmem:[#allocation2 + $0x53] sm:$0xff]
      %v2087 = vld [vmem:[#allocation2 + $0x5b] sm:$0xff]
      %v2088 = vld [vmem:[#allocation2 + $0x63] sm:$0xff]
      %v2089 = vld [vmem:[#allocation2 + $0x6b] sm:$0xff]
      %v2090 = vld [vmem:[#allocation2 + $0x73] sm:$0xff]
      %v2091 = vld [vmem:[#allocation2 + $0x7b] sm:$0xf]
      %v2092 = vpack.c.bf16 %v2080, %v2079
      %v2093 = vpack.c.bf16 %v2082, %v2081
      %v2094 = vpack.c.bf16 %v2084, %v2083
      %v2095 = vpack.c.bf16 %v2086, %v2085
      %v2096 = vpack.c.bf16 %v2088, %v2087
      %v2097 = vpack.c.bf16 %v2090, %v2089
      %v2098 = vpack.c.bf16 %v2091, %v2091
      %2106 = vrot.lane.b32.xlu0 %v1974, 64
      %v2107 = vpop.permute.xlu0 %2106
      %2108 = vrot.lane.b32.xlu0 %v1975, 64
      %v2109 = vpop.permute.xlu0 %2108
      %2110 = vrot.lane.b32.xlu0 %v1976, 64
      %v2111 = vpop.permute.xlu0 %2110
      %2112 = vrot.lane.b32.xlu0 %v1977, 64
      %v2113 = vpop.permute.xlu0 %2112
      %2114 = vrot.lane.b32.xlu0 %v1978, 64
      %v2115 = vpop.permute.xlu0 %2114
      %2116 = vrot.lane.b32.xlu0 %v1979, 64
      %v2117 = vpop.permute.xlu0 %2116
      %2118 = vrot.lane.b32.xlu0 %v1980, 64
      %v2119 = vpop.permute.xlu0 %2118
      %2127 = vrot.lane.b32.xlu0 %v2003, 64
      %v2128 = vpop.permute.xlu0 %2127
      %2129 = vrot.lane.b32.xlu0 %v2004, 64
      %v2130 = vpop.permute.xlu0 %2129
      %2131 = vrot.lane.b32.xlu0 %v2005, 64
      %v2132 = vpop.permute.xlu0 %2131
      %2133 = vrot.lane.b32.xlu0 %v2006, 64
      %v2134 = vpop.permute.xlu0 %2133
      %2135 = vrot.lane.b32.xlu0 %v2007, 64
      %v2136 = vpop.permute.xlu0 %2135
      %2137 = vrot.lane.b32.xlu0 %v2008, 64
      %v2138 = vpop.permute.xlu0 %2137
      %2139 = vrot.lane.b32.xlu0 %v2009, 64
      %v2140 = vpop.permute.xlu0 %2139
      %2148 = vrot.lane.b32.xlu0 %v2043, 64
      %v2149 = vpop.permute.xlu0 %2148
      %2150 = vrot.lane.b32.xlu0 %v2044, 64
      %v2151 = vpop.permute.xlu0 %2150
      %2152 = vrot.lane.b32.xlu0 %v2045, 64
      %v2153 = vpop.permute.xlu0 %2152
      %2154 = vrot.lane.b32.xlu0 %v2046, 64
      %v2155 = vpop.permute.xlu0 %2154
      %2156 = vrot.lane.b32.xlu0 %v2047, 64
      %v2157 = vpop.permute.xlu0 %2156
      %2158 = vrot.lane.b32.xlu0 %v2048, 64
      %v2159 = vpop.permute.xlu0 %2158
      %2160 = vrot.lane.b32.xlu0 %v2049, 64
      %v2161 = vpop.permute.xlu0 %2160
      %2169 = vrot.lane.b32.xlu0 %v2072, 64
      %v2170 = vpop.permute.xlu0 %2169
      %2171 = vrot.lane.b32.xlu0 %v2073, 64
      %v2172 = vpop.permute.xlu0 %2171
      %2173 = vrot.lane.b32.xlu0 %v2074, 64
      %v2174 = vpop.permute.xlu0 %2173
      %2175 = vrot.lane.b32.xlu0 %v2075, 64
      %v2176 = vpop.permute.xlu0 %2175
      %2177 = vrot.lane.b32.xlu0 %v2076, 64
      %v2178 = vpop.permute.xlu0 %2177
      %2179 = vrot.lane.b32.xlu0 %v2077, 64
      %v2180 = vpop.permute.xlu0 %2179
      %2181 = vrot.lane.b32.xlu0 %v2078, 64
      %v2182 = vpop.permute.xlu0 %2181
      %v2185 = vsel %vm361, %v1954, %v2107
      %v2189 = vsel %vm361, %v1955, %v2109
      %v2193 = vsel %vm361, %v1956, %v2111
      %v2197 = vsel %vm361, %v1957, %v2113
      %v2201 = vsel %vm361, %v1958, %v2115
      %v2205 = vsel %vm361, %v1959, %v2117
      %v2209 = vsel %vm361, %v1960, %v2119
      %v2213 = vsel %vm361, %v1994, %v2128
      %v2217 = vsel %vm361, %v1995, %v2130
      %v2221 = vsel %vm361, %v1996, %v2132
      %v2225 = vsel %vm361, %v1997, %v2134
      %v2229 = vsel %vm361, %v1998, %v2136
      %v2233 = vsel %vm361, %v1999, %v2138
      %v2237 = vsel %vm361, %v2000, %v2140
      %v2241 = vsel %vm361, %v2023, %v2149
      %v2245 = vsel %vm361, %v2024, %v2151
      %v2249 = vsel %vm361, %v2025, %v2153
      %v2253 = vsel %vm361, %v2026, %v2155
      %v2257 = vsel %vm361, %v2027, %v2157
      %v2261 = vsel %vm361, %v2028, %v2159
      %v2265 = vsel %vm361, %v2029, %v2161
      %v2269 = vsel %vm361, %v2052, %v2170
      %v2273 = vsel %vm361, %v2053, %v2172
      %v2277 = vsel %vm361, %v2054, %v2174
      %v2281 = vsel %vm361, %v2055, %v2176
      %v2285 = vsel %vm361, %v2056, %v2178
      %v2289 = vsel %vm361, %v2057, %v2180
      %v2293 = vsel %vm361, %v2058, %v2182
      %v2296 = vsel %vm361, %v2092, 0
      %v2299 = vsel %vm361, %v2093, 0
      %v2302 = vsel %vm361, %v2094, 0
      %v2305 = vsel %vm361, %v2095, 0
      %v2308 = vsel %vm361, %v2096, 0
      %v2311 = vsel %vm361, %v2097, 0
      %v2314 = vsel %vm361, %v2098, 0
      %2316 = vmatprep.subr.bf16.mxu0 0
      %2317 = vmatpush1.bf16.msra.mxu0 %v1017
      %2318 = vmatprep.subr.bf16.mxu0 0
      %2319 = vmatpush1.bf16.msra.mxu0 %v1016
      %2320 = vmatprep.subr.bf16.mxu0 0
      %2321 = vmatpush1.bf16.msra.mxu0 %v1015
      %2322 = vmatprep.subr.bf16.mxu0 0
      %2323 = vmatpush1.bf16.msra.mxu0 %v1014
      %2324 = vmatprep.subr.bf16.mxu0 0
      %2325 = vmatpush1.bf16.msra.mxu0 %v1013
      %2326 = vmatprep.subr.bf16.mxu0 0
      %2327 = vmatpush1.bf16.msra.mxu0 %v1012
      %2328 = vmatprep.subr.bf16.mxu0 0
      %2329 = vmatpush1.bf16.msra.mxu0 %v1011
      %2330 = vmatprep.subr.bf16.mxu0 0
      %2331 = vmatpush1.bf16.msra.mxu0 %v1010
      %2332 = vmatprep.subr.bf16.mxu0 0
      %2333 = vmatpush2.bf16.msra.mxu0 %v1025
      %2334 = vmatprep.subr.bf16.mxu0 0
      %2335 = vmatpush2.bf16.msra.mxu0 %v1024
      %2336 = vmatprep.subr.bf16.mxu0 0
      %2337 = vmatpush2.bf16.msra.mxu0 %v1023
      %2338 = vmatprep.subr.bf16.mxu0 0
      %2339 = vmatpush2.bf16.msra.mxu0 %v1022
      %2340 = vmatprep.subr.bf16.mxu0 0
      %2341 = vmatpush2.bf16.msra.mxu0 %v1021
      %2342 = vmatprep.subr.bf16.mxu0 0
      %2343 = vmatpush2.bf16.msra.mxu0 %v1020
      %2344 = vmatprep.subr.bf16.mxu0 0
      %2345 = vmatpush2.bf16.msra.mxu0 %v1019
      %2346 = vmatprep.subr.bf16.mxu0 0
      %2347 = vmatpush2.bf16.msra.mxu0 %v1018
      %2348 = vmatprep.mubr.bf16.mxu0 %v2213
      %2349 = vmatmul.mubr.bf16.gmra.mxu0 %v2185
      %v2350 = vpop.f32.mrf.mxu0
      %v2351 = vadd.f32 %v864, %v2350
      %v2352 = vpop.f32.mrf.mxu0
      %v2353 = vpop.f32.mrf.mxu0
      %v2354 = vadd.f32 %v864, %v2353
      %v2355 = vpop.f32.mrf.mxu0
      %2356 = vmatprep.mubr.bf16.mxu0 %v2217
      %2357 = vmatmul.mubr.bf16.gmra.mxu0 %v2189
      %v2358 = vpop.f32.mrf.mxu0
      %v2359 = vadd.f32 %v864, %v2358
      %v2360 = vpop.f32.mrf.mxu0
      %v2361 = vpop.f32.mrf.mxu0
      %v2362 = vadd.f32 %v864, %v2361
      %v2363 = vpop.f32.mrf.mxu0
      %2364 = vmatprep.mubr.bf16.mxu0 %v2221
      %2365 = vmatmul.mubr.bf16.gmra.mxu0 %v2193
      %v2366 = vpop.f32.mrf.mxu0
      %v2367 = vadd.f32 %v864, %v2366
      %v2368 = vpop.f32.mrf.mxu0
      %v2369 = vpop.f32.mrf.mxu0
      %v2370 = vadd.f32 %v864, %v2369
      %v2371 = vpop.f32.mrf.mxu0
      %2372 = vmatprep.mubr.bf16.mxu0 %v2225
      %2373 = vmatmul.mubr.bf16.gmra.mxu0 %v2197
      %v2374 = vpop.f32.mrf.mxu0
      %v2375 = vadd.f32 %v864, %v2374
      %v2376 = vpop.f32.mrf.mxu0
      %v2377 = vpop.f32.mrf.mxu0
      %v2378 = vadd.f32 %v864, %v2377
      %v2379 = vpop.f32.mrf.mxu0
      %2380 = vmatprep.mubr.bf16.mxu0 %v2229
      %2381 = vmatmul.mubr.bf16.gmra.mxu0 %v2201
      %v2382 = vpop.f32.mrf.mxu0
      %v2383 = vadd.f32 %v864, %v2382
      %v2384 = vpop.f32.mrf.mxu0
      %v2385 = vpop.f32.mrf.mxu0
      %v2386 = vadd.f32 %v864, %v2385
      %v2387 = vpop.f32.mrf.mxu0
      %2388 = vmatprep.mubr.bf16.mxu0 %v2233
      %2389 = vmatmul.mubr.bf16.gmra.mxu0 %v2205
      %v2390 = vpop.f32.mrf.mxu0
      %v2391 = vadd.f32 %v864, %v2390
      %v2392 = vpop.f32.mrf.mxu0
      %v2393 = vpop.f32.mrf.mxu0
      %v2394 = vadd.f32 %v864, %v2393
      %v2395 = vpop.f32.mrf.mxu0
      %2396 = vmatprep.mubr.bf16.mxu0 %v2237
      %2397 = vmatmul.mubr.bf16.gmra.mxu0 %v2209
      %v2398 = vpop.f32.mrf.mxu0
      %v2399 = vadd.f32 %v864, %v2398
      %v2400 = vpop.f32.mrf.mxu0
      %v2401 = vpop.f32.mrf.mxu0
      %v2402 = vpop.f32.mrf.mxu0
      %2403 = vdwg.mxu0
      %2404 = vmatprep.subr.bf16.mxu0 0
      %2405 = vmatpush1.bf16.msra.mxu0 %v1033
      %2406 = vmatprep.subr.bf16.mxu0 0
      %2407 = vmatpush1.bf16.msra.mxu0 %v1032
      %2408 = vmatprep.subr.bf16.mxu0 0
      %2409 = vmatpush1.bf16.msra.mxu0 %v1031
      %2410 = vmatprep.subr.bf16.mxu0 0
      %2411 = vmatpush1.bf16.msra.mxu0 %v1030
      %2412 = vmatprep.subr.bf16.mxu0 0
      %2413 = vmatpush1.bf16.msra.mxu0 %v1029
      %2414 = vmatprep.subr.bf16.mxu0 0
      %2415 = vmatpush1.bf16.msra.mxu0 %v1028
      %2416 = vmatprep.subr.bf16.mxu0 0
      %2417 = vmatpush1.bf16.msra.mxu0 %v1027
      %2418 = vmatprep.subr.bf16.mxu0 0
      %2419 = vmatpush1.bf16.msra.mxu0 %v1026
      %2420 = vmatprep.subr.bf16.mxu0 0
      %2421 = vmatpush2.bf16.msra.mxu0 %v1041
      %2422 = vmatprep.subr.bf16.mxu0 0
      %2423 = vmatpush2.bf16.msra.mxu0 %v1040
      %2424 = vmatprep.subr.bf16.mxu0 0
      %2425 = vmatpush2.bf16.msra.mxu0 %v1039
      %2426 = vmatprep.subr.bf16.mxu0 0
      %2427 = vmatpush2.bf16.msra.mxu0 %v1038
      %2428 = vmatprep.subr.bf16.mxu0 0
      %2429 = vmatpush2.bf16.msra.mxu0 %v1037
      %2430 = vmatprep.subr.bf16.mxu0 0
      %2431 = vmatpush2.bf16.msra.mxu0 %v1036
      %2432 = vmatprep.subr.bf16.mxu0 0
      %2433 = vmatpush2.bf16.msra.mxu0 %v1035
      %2434 = vmatprep.subr.bf16.mxu0 0
      %2435 = vmatpush2.bf16.msra.mxu0 %v1034
      %2436 = vmatprep.mubr.bf16.mxu0 %v2269
      %2437 = vmatmul.mubr.bf16.gmra.mxu0 %v2241
      %v2438 = vpop.f32.mrf.mxu0
      %v2439 = vadd.f32 %v2351, %v2438
      %v2440 = vpop.f32.mrf.mxu0
      %v2441 = vpop.f32.mrf.mxu0
      %v2442 = vadd.f32 %v2354, %v2441
      %v2443 = vpop.f32.mrf.mxu0
      %2444 = vmatprep.mubr.bf16.mxu0 %v2273
      %2445 = vmatmul.mubr.bf16.gmra.mxu0 %v2245
      %v2446 = vpop.f32.mrf.mxu0
      %v2447 = vadd.f32 %v2359, %v2446
      %v2448 = vpop.f32.mrf.mxu0
      %v2449 = vpop.f32.mrf.mxu0
      %v2450 = vadd.f32 %v2362, %v2449
      %v2451 = vpop.f32.mrf.mxu0
      %2452 = vmatprep.mubr.bf16.mxu0 %v2277
      %2453 = vmatmul.mubr.bf16.gmra.mxu0 %v2249
      %v2454 = vpop.f32.mrf.mxu0
      %v2455 = vadd.f32 %v2367, %v2454
      %v2456 = vpop.f32.mrf.mxu0
      %v2457 = vpop.f32.mrf.mxu0
      %v2458 = vadd.f32 %v2370, %v2457
      %v2459 = vpop.f32.mrf.mxu0
      %2460 = vmatprep.mubr.bf16.mxu0 %v2281
      %2461 = vmatmul.mubr.bf16.gmra.mxu0 %v2253
      %v2462 = vpop.f32.mrf.mxu0
      %v2463 = vadd.f32 %v2375, %v2462
      %v2464 = vpop.f32.mrf.mxu0
      %v2465 = vpop.f32.mrf.mxu0
      %v2466 = vadd.f32 %v2378, %v2465
      %v2467 = vpop.f32.mrf.mxu0
      %2468 = vmatprep.mubr.bf16.mxu0 %v2285
      %2469 = vmatmul.mubr.bf16.gmra.mxu0 %v2257
      %v2470 = vpop.f32.mrf.mxu0
      %v2471 = vadd.f32 %v2383, %v2470
      %v2472 = vpop.f32.mrf.mxu0
      %v2473 = vpop.f32.mrf.mxu0
      %v2474 = vadd.f32 %v2386, %v2473
      %v2475 = vpop.f32.mrf.mxu0
      %2476 = vmatprep.mubr.bf16.mxu0 %v2289
      %2477 = vmatmul.mubr.bf16.gmra.mxu0 %v2261
      %v2478 = vpop.f32.mrf.mxu0
      %v2479 = vadd.f32 %v2391, %v2478
      %v2480 = vpop.f32.mrf.mxu0
      %v2481 = vpop.f32.mrf.mxu0
      %v2482 = vadd.f32 %v2394, %v2481
      %v2483 = vpop.f32.mrf.mxu0
      %2484 = vmatprep.mubr.bf16.mxu0 %v2293
      %2485 = vmatmul.mubr.bf16.gmra.mxu0 %v2265
      %v2486 = vpop.f32.mrf.mxu0
      %v2487 = vadd.f32 %v2399, %v2486
      %v2488 = vpop.f32.mrf.mxu0
      %v2489 = vpop.f32.mrf.mxu0
      %v2490 = vpop.f32.mrf.mxu0
      %2491 = vdwg.mxu0
      %2492 = vmatprep.subr.bf16.mxu0 0
      %2493 = vmatpush1.bf16.msra.mxu0 0
      %2494 = vmatprep.subr.bf16.mxu0 0
      %2495 = vmatpush1.bf16.msra.mxu0 0
      %2496 = vmatprep.subr.bf16.mxu0 0
      %2497 = vmatpush1.bf16.msra.mxu0 0
      %2498 = vmatprep.subr.bf16.mxu0 0
      %2499 = vmatpush1.bf16.msra.mxu0 0
      %2500 = vmatprep.subr.bf16.mxu0 0
      %2501 = vmatpush1.bf16.msra.mxu0 %v1045
      %2502 = vmatprep.subr.bf16.mxu0 0
      %2503 = vmatpush1.bf16.msra.mxu0 %v1044
      %2504 = vmatprep.subr.bf16.mxu0 0
      %2505 = vmatpush1.bf16.msra.mxu0 %v1043
      %2506 = vmatprep.subr.bf16.mxu0 0
      %2507 = vmatpush1.bf16.msra.mxu0 %v1042
      %2508 = vmatprep.subr.bf16.mxu0 0
      %2509 = vmatpush2.bf16.msra.mxu0 0
      %2510 = vmatprep.subr.bf16.mxu0 0
      %2511 = vmatpush2.bf16.msra.mxu0 0
      %2512 = vmatprep.subr.bf16.mxu0 0
      %2513 = vmatpush2.bf16.msra.mxu0 0
      %2514 = vmatprep.subr.bf16.mxu0 0
      %2515 = vmatpush2.bf16.msra.mxu0 0
      %2516 = vmatprep.subr.bf16.mxu0 0
      %2517 = vmatpush2.bf16.msra.mxu0 0
      %2518 = vmatprep.subr.bf16.mxu0 0
      %2519 = vmatpush2.bf16.msra.mxu0 0
      %2520 = vmatprep.subr.bf16.mxu0 0
      %2521 = vmatpush2.bf16.msra.mxu0 0
      %2522 = vmatprep.subr.bf16.mxu0 0
      %2523 = vmatpush2.bf16.msra.mxu0 0
      %2524 = vmatprep.mubr.bf16.mxu0 0
      %2525 = vmatmul.mubr.bf16.gmra.mxu0 %v2296
      %v2526 = vpop.f32.mrf.mxu0
      %v2527 = vadd.f32 %v2439, %v2526
      %v2528 = vpop.f32.mrf.mxu0
      %v2529 = vpop.f32.mrf.mxu0
      %v2530 = vadd.f32 %v2442, %v2529
      %v2531 = vpop.f32.mrf.mxu0
      %2532 = vmatprep.mubr.bf16.mxu0 0
      %2533 = vmatmul.mubr.bf16.gmra.mxu0 %v2299
      %v2534 = vpop.f32.mrf.mxu0
      %v2535 = vadd.f32 %v2447, %v2534
      %v2536 = vpop.f32.mrf.mxu0
      %v2537 = vpop.f32.mrf.mxu0
      %v2538 = vadd.f32 %v2450, %v2537
      %v2539 = vpop.f32.mrf.mxu0
      %2540 = vmatprep.mubr.bf16.mxu0 0
      %2541 = vmatmul.mubr.bf16.gmra.mxu0 %v2302
      %v2542 = vpop.f32.mrf.mxu0
      %v2543 = vadd.f32 %v2455, %v2542
      %v2544 = vpop.f32.mrf.mxu0
      %v2545 = vpop.f32.mrf.mxu0
      %v2546 = vadd.f32 %v2458, %v2545
      %v2547 = vpop.f32.mrf.mxu0
      %2548 = vmatprep.mubr.bf16.mxu0 0
      %2549 = vmatmul.mubr.bf16.gmra.mxu0 %v2305
      %v2550 = vpop.f32.mrf.mxu0
      %v2551 = vadd.f32 %v2463, %v2550
      %v2552 = vpop.f32.mrf.mxu0
      %v2553 = vpop.f32.mrf.mxu0
      %v2554 = vadd.f32 %v2466, %v2553
      %v2555 = vpop.f32.mrf.mxu0
      %2556 = vmatprep.mubr.bf16.mxu0 0
      %2557 = vmatmul.mubr.bf16.gmra.mxu0 %v2308
      %v2558 = vpop.f32.mrf.mxu0
      %v2559 = vadd.f32 %v2471, %v2558
      %v2560 = vpop.f32.mrf.mxu0
      %v2561 = vpop.f32.mrf.mxu0
      %v2562 = vadd.f32 %v2474, %v2561
      %v2563 = vpop.f32.mrf.mxu0
      %2564 = vmatprep.mubr.bf16.mxu0 0
      %2565 = vmatmul.mubr.bf16.gmra.mxu0 %v2311
      %v2566 = vpop.f32.mrf.mxu0
      %v2567 = vadd.f32 %v2479, %v2566
      %v2568 = vpop.f32.mrf.mxu0
      %v2569 = vpop.f32.mrf.mxu0
      %v2570 = vadd.f32 %v2482, %v2569
      %v2571 = vpop.f32.mrf.mxu0
      %2572 = vmatprep.mubr.bf16.mxu0 0
      %2573 = vmatmul.mubr.bf16.gmra.mxu0 %v2314
      %v2574 = vpop.f32.mrf.mxu0
      %v2575 = vadd.f32 %v2487, %v2574
      %v2576 = vpop.f32.mrf.mxu0
      %v2577 = vpop.f32.mrf.mxu0
      %v2578 = vpop.f32.mrf.mxu0
      %2579 = vdwg.mxu0
      %v2580 = vmul.f32 %v2527, %v1370
      %v2581 = vmul.f32 %v2530, %v1375
      %v2582 = vmul.f32 %v2535, %v1380
      %v2583 = vmul.f32 %v2538, %v1385
      %v2584 = vmul.f32 %v2543, %v1390
      %v2585 = vmul.f32 %v2546, %v1395
      %v2586 = vmul.f32 %v2551, %v1400
      %v2587 = vmul.f32 %v2554, %v1405
      %v2588 = vmul.f32 %v2559, %v1410
      %v2589 = vmul.f32 %v2562, %v1415
      %v2590 = vmul.f32 %v2567, %v1420
      %v2591 = vmul.f32 %v2570, %v1425
      %v2592 = vmul.f32 %v2575, %v1430
      %v2593 = vsel %vm361, %v2580, 0.0
      %v2594 = vsel %vm361, %v2581, 0.0
      %v2595 = vadd.f32 %v2593, %v2594
      %v2596 = vsel %vm361, %v2582, 0.0
      %v2597 = vadd.f32 %v2595, %v2596
      %v2598 = vsel %vm361, %v2583, 0.0
      %v2599 = vadd.f32 %v2597, %v2598
      %v2600 = vsel %vm361, %v2584, 0.0
      %v2601 = vadd.f32 %v2599, %v2600
      %v2602 = vsel %vm361, %v2585, 0.0
      %v2603 = vadd.f32 %v2601, %v2602
      %v2604 = vsel %vm361, %v2586, 0.0
      %v2605 = vadd.f32 %v2603, %v2604
      %v2606 = vsel %vm361, %v2587, 0.0
      %v2607 = vadd.f32 %v2605, %v2606
      %v2608 = vsel %vm361, %v2588, 0.0
      %v2609 = vadd.f32 %v2607, %v2608
      %v2610 = vsel %vm361, %v2589, 0.0
      %v2611 = vadd.f32 %v2609, %v2610
      %v2612 = vsel %vm361, %v2590, 0.0
      %v2613 = vadd.f32 %v2611, %v2612
      %v2614 = vsel %vm361, %v2591, 0.0
      %v2615 = vadd.f32 %v2613, %v2614
      %v2616 = vsel %vm378, %v2592, 0.0
      %v2617 = vadd.f32 %v2615, %v2616
      %v2618 = vrot.slane %v2617, 4
      %v2619 = vadd.f32 %v2617, %v2618
      %v2620 = vrot.slane %v2619, 2
      %v2621 = vadd.f32 %v2619, %v2620
      %v2622 = vrot.slane %v2621, 1
      %v2623 = vadd.f32 %v2621, %v2622
      %v2625 = vsel %vm361, %v2623, 0
      %2627 = vmatprep.subr.mxu0 0.0
      %2628 = vmatpush1.msra.mxu0 0.0
      %2629 = vmatprep.subr.mxu0 0.0
      %2630 = vmatpush1.msra.mxu0 0.0
      %2631 = vmatprep.subr.mxu0 0.0
      %2632 = vmatpush1.msra.mxu0 0.0
      %2633 = vmatprep.subr.mxu0 0.0
      %2634 = vmatpush1.msra.mxu0 0.0
      %2635 = vmatprep.subr.mxu0 0.0
      %2636 = vmatpush1.msra.mxu0 0.0
      %2637 = vmatprep.subr.mxu0 0.0
      %2638 = vmatpush1.msra.mxu0 0.0
      %2639 = vmatprep.subr.mxu0 0.0
      %2640 = vmatpush1.msra.mxu0 0.0
      %2641 = vmatprep.subr.mxu0 0.0
      %2642 = vmatpush1.msra.mxu0 0.0
      %2643 = vmatprep.subr.mxu0 0.0
      %2644 = vmatpush1.msra.mxu0 %v501
      %2645 = vmatprep.subr.mxu0 0.0
      %2646 = vmatpush1.msra.mxu0 %v500
      %2647 = vmatprep.subr.mxu0 0.0
      %2648 = vmatpush1.msra.mxu0 %v499
      %2649 = vmatprep.subr.mxu0 0.0
      %2650 = vmatpush1.msra.mxu0 %v498
      %2651 = vmatprep.subr.mxu0 0.0
      %2652 = vmatpush1.msra.mxu0 %v497
      %2653 = vmatprep.subr.mxu0 0.0
      %2654 = vmatpush1.msra.mxu0 %v496
      %2655 = vmatprep.subr.mxu0 0.0
      %2656 = vmatpush1.msra.mxu0 %v495
      %2657 = vmatprep.subr.mxu0 0.0
      %2658 = vmatpush1.msra.mxu0 %v494
      %2659 = vmatprep.subr.mxu0 0.0
      %2660 = vmatpush2.msra.mxu0 0.0
      %2661 = vmatprep.subr.mxu0 0.0
      %2662 = vmatpush2.msra.mxu0 0.0
      %2663 = vmatprep.subr.mxu0 0.0
      %2664 = vmatpush2.msra.mxu0 0.0
      %2665 = vmatprep.subr.mxu0 0.0
      %2666 = vmatpush2.msra.mxu0 0.0
      %2667 = vmatprep.subr.mxu0 0.0
      %2668 = vmatpush2.msra.mxu0 0.0
      %2669 = vmatprep.subr.mxu0 0.0
      %2670 = vmatpush2.msra.mxu0 0.0
      %2671 = vmatprep.subr.mxu0 0.0
      %2672 = vmatpush2.msra.mxu0 0.0
      %2673 = vmatprep.subr.mxu0 0.0
      %2674 = vmatpush2.msra.mxu0 0.0
      %2675 = vmatprep.subr.mxu0 0.0
      %2676 = vmatpush2.msra.mxu0 0.0
      %2677 = vmatprep.subr.mxu0 0.0
      %2678 = vmatpush2.msra.mxu0 0.0
      %2679 = vmatprep.subr.mxu0 0.0
      %2680 = vmatpush2.msra.mxu0 0.0
      %2681 = vmatprep.subr.mxu0 0.0
      %2682 = vmatpush2.msra.mxu0 0.0
      %2683 = vmatprep.subr.mxu0 0.0
      %2684 = vmatpush2.msra.mxu0 0.0
      %2685 = vmatprep.subr.mxu0 0.0
      %2686 = vmatpush2.msra.mxu0 0.0
      %2687 = vmatprep.subr.mxu0 0.0
      %2688 = vmatpush2.msra.mxu0 0.0
      %2689 = vmatprep.subr.mxu0 0.0
      %2690 = vmatpush2.msra.mxu0 0.0
      %2691 = vmatprep.mubr.f32.mxu0 0.0
      %2692 = vmatmul.mubr.f32.gmra.mxu0 %v2625
      %v2693 = vpop.f32.mrf.mxu0
      %v2694 = vadd.f32 0.0, %v2693
      %v2695 = vpop.f32.mrf.mxu0
      %2696 = vdwg.mxu0
      %v2697 = vmul.f32 %v2694, %v1549
      %v2699 = vsel %vm1551, %v2697, 0
      %2701 = vmatprep.subr.mxu0 0.0
      %2702 = vmatpush1.msra.mxu0 0.0
      %2703 = vmatprep.subr.mxu0 0.0
      %2704 = vmatpush1.msra.mxu0 0.0
      %2705 = vmatprep.subr.mxu0 0.0
      %2706 = vmatpush1.msra.mxu0 0.0
      %2707 = vmatprep.subr.mxu0 0.0
      %2708 = vmatpush1.msra.mxu0 0.0
      %2709 = vmatprep.subr.mxu0 0.0
      %2710 = vmatpush1.msra.mxu0 0.0
      %2711 = vmatprep.subr.mxu0 0.0
      %2712 = vmatpush1.msra.mxu0 0.0
      %2713 = vmatprep.subr.mxu0 0.0
      %2714 = vmatpush1.msra.mxu0 0.0
      %2715 = vmatprep.subr.mxu0 0.0
      %2716 = vmatpush1.msra.mxu0 0.0
      %2717 = vmatprep.subr.mxu0 0.0
      %2718 = vmatpush1.msra.mxu0 0.0
      %2719 = vmatprep.subr.mxu0 0.0
      %2720 = vmatpush1.msra.mxu0 0.0
      %2721 = vmatprep.subr.mxu0 0.0
      %2722 = vmatpush1.msra.mxu0 0.0
      %2723 = vmatprep.subr.mxu0 0.0
      %2724 = vmatpush1.msra.mxu0 0.0
      %2725 = vmatprep.subr.mxu0 0.0
      %2726 = vmatpush1.msra.mxu0 %v505
      %2727 = vmatprep.subr.mxu0 0.0
      %2728 = vmatpush1.msra.mxu0 %v504
      %2729 = vmatprep.subr.mxu0 0.0
      %2730 = vmatpush1.msra.mxu0 %v503
      %2731 = vmatprep.subr.mxu0 0.0
      %2732 = vmatpush1.msra.mxu0 %v502
      %2733 = vmatprep.subr.mxu0 0.0
      %2734 = vmatpush2.msra.mxu0 0.0
      %2735 = vmatprep.subr.mxu0 0.0
      %2736 = vmatpush2.msra.mxu0 0.0
      %2737 = vmatprep.subr.mxu0 0.0
      %2738 = vmatpush2.msra.mxu0 0.0
      %2739 = vmatprep.subr.mxu0 0.0
      %2740 = vmatpush2.msra.mxu0 0.0
      %2741 = vmatprep.subr.mxu0 0.0
      %2742 = vmatpush2.msra.mxu0 0.0
      %2743 = vmatprep.subr.mxu0 0.0
      %2744 = vmatpush2.msra.mxu0 0.0
      %2745 = vmatprep.subr.mxu0 0.0
      %2746 = vmatpush2.msra.mxu0 0.0
      %2747 = vmatprep.subr.mxu0 0.0
      %2748 = vmatpush2.msra.mxu0 0.0
      %2749 = vmatprep.subr.mxu0 0.0
      %2750 = vmatpush2.msra.mxu0 0.0
      %2751 = vmatprep.subr.mxu0 0.0
      %2752 = vmatpush2.msra.mxu0 0.0
      %2753 = vmatprep.subr.mxu0 0.0
      %2754 = vmatpush2.msra.mxu0 0.0
      %2755 = vmatprep.subr.mxu0 0.0
      %2756 = vmatpush2.msra.mxu0 0.0
      %2757 = vmatprep.subr.mxu0 0.0
      %2758 = vmatpush2.msra.mxu0 0.0
      %2759 = vmatprep.subr.mxu0 0.0
      %2760 = vmatpush2.msra.mxu0 0.0
      %2761 = vmatprep.subr.mxu0 0.0
      %2762 = vmatpush2.msra.mxu0 0.0
      %2763 = vmatprep.subr.mxu0 0.0
      %2764 = vmatpush2.msra.mxu0 0.0
      %2765 = vmatprep.mubr.f32.mxu0 0.0
      %2766 = vmatmul.mubr.f32.gmra.mxu0 %v2699
      %v2767 = vpop.f32.mrf.mxu0
      %v2768 = vadd.f32 0.0, %v2767
      %v2769 = vpop.f32.mrf.mxu0
      %2770 = vdwg.mxu0
      %v2771 = vlaneseq
      %v2772 = vshrl.u32 %v2771, 7
      %v2773 = vsub.s32 0, %v2772
      %v2774 = vrot.slane %v2768, %v2773
      %v2775 = vsub.f32 %v2580, %v2774
      %v2776 = vsub.f32 %v2581, %v2774
      %v2777 = vsub.f32 %v2582, %v2774
      %v2778 = vsub.f32 %v2583, %v2774
      %v2779 = vsub.f32 %v2584, %v2774
      %v2780 = vsub.f32 %v2585, %v2774
      %v2781 = vsub.f32 %v2586, %v2774
      %v2782 = vsub.f32 %v2587, %v2774
      %v2783 = vsub.f32 %v2588, %v2774
      %v2784 = vsub.f32 %v2589, %v2774
      %v2785 = vsub.f32 %v2590, %v2774
      %v2786 = vsub.f32 %v2591, %v2774
      %v2787 = vsub.f32 %v2592, %v2774
      %v2788 = vmul.f32 %v2775, %v1370
      %v2789 = vmul.f32 %v2776, %v1375
      %v2790 = vmul.f32 %v2777, %v1380
      %v2791 = vmul.f32 %v2778, %v1385
      %v2792 = vmul.f32 %v2779, %v1390
      %v2793 = vmul.f32 %v2780, %v1395
      %v2794 = vmul.f32 %v2781, %v1400
      %v2795 = vmul.f32 %v2782, %v1405
      %v2796 = vmul.f32 %v2783, %v1410
      %v2797 = vmul.f32 %v2784, %v1415
      %v2798 = vmul.f32 %v2785, %v1420
      %v2799 = vmul.f32 %v2786, %v1425
      %v2800 = vmul.f32 %v2787, %v1430
      %v2801 = vmul.f32 %v2788, %v2788
      %v2802 = vmul.f32 %v2789, %v2789
      %v2803 = vmul.f32 %v2790, %v2790
      %v2804 = vmul.f32 %v2791, %v2791
      %v2805 = vmul.f32 %v2792, %v2792
      %v2806 = vmul.f32 %v2793, %v2793
      %v2807 = vmul.f32 %v2794, %v2794
      %v2808 = vmul.f32 %v2795, %v2795
      %v2809 = vmul.f32 %v2796, %v2796
      %v2810 = vmul.f32 %v2797, %v2797
      %v2811 = vmul.f32 %v2798, %v2798
      %v2812 = vmul.f32 %v2799, %v2799
      %v2813 = vmul.f32 %v2800, %v2800
      %v2814 = vsel %vm361, %v2801, 0.0
      %v2815 = vsel %vm361, %v2802, 0.0
      %v2816 = vadd.f32 %v2814, %v2815
      %v2817 = vsel %vm361, %v2803, 0.0
      %v2818 = vadd.f32 %v2816, %v2817
      %v2819 = vsel %vm361, %v2804, 0.0
      %v2820 = vadd.f32 %v2818, %v2819
      %v2821 = vsel %vm361, %v2805, 0.0
      %v2822 = vadd.f32 %v2820, %v2821
      %v2823 = vsel %vm361, %v2806, 0.0
      %v2824 = vadd.f32 %v2822, %v2823
      %v2825 = vsel %vm361, %v2807, 0.0
      %v2826 = vadd.f32 %v2824, %v2825
      %v2827 = vsel %vm361, %v2808, 0.0
      %v2828 = vadd.f32 %v2826, %v2827
      %v2829 = vsel %vm361, %v2809, 0.0
      %v2830 = vadd.f32 %v2828, %v2829
      %v2831 = vsel %vm361, %v2810, 0.0
      %v2832 = vadd.f32 %v2830, %v2831
      %v2833 = vsel %vm361, %v2811, 0.0
      %v2834 = vadd.f32 %v2832, %v2833
      %v2835 = vsel %vm361, %v2812, 0.0
      %v2836 = vadd.f32 %v2834, %v2835
      %v2837 = vsel %vm378, %v2813, 0.0
      %v2838 = vadd.f32 %v2836, %v2837
      %v2839 = vrot.slane %v2838, 4
      %v2840 = vadd.f32 %v2838, %v2839
      %v2841 = vrot.slane %v2840, 2
      %v2842 = vadd.f32 %v2840, %v2841
      %v2843 = vrot.slane %v2842, 1
      %v2844 = vadd.f32 %v2842, %v2843
      %v2846 = vsel %vm361, %v2844, 0
      %2848 = vmatprep.subr.mxu0 0.0
      %2849 = vmatpush1.msra.mxu0 0.0
      %2850 = vmatprep.subr.mxu0 0.0
      %2851 = vmatpush1.msra.mxu0 0.0
      %2852 = vmatprep.subr.mxu0 0.0
      %2853 = vmatpush1.msra.mxu0 0.0
      %2854 = vmatprep.subr.mxu0 0.0
      %2855 = vmatpush1.msra.mxu0 0.0
      %2856 = vmatprep.subr.mxu0 0.0
      %2857 = vmatpush1.msra.mxu0 0.0
      %2858 = vmatprep.subr.mxu0 0.0
      %2859 = vmatpush1.msra.mxu0 0.0
      %2860 = vmatprep.subr.mxu0 0.0
      %2861 = vmatpush1.msra.mxu0 0.0
      %2862 = vmatprep.subr.mxu0 0.0
      %2863 = vmatpush1.msra.mxu0 0.0
      %2864 = vmatprep.subr.mxu0 0.0
      %2865 = vmatpush1.msra.mxu0 %v501
      %2866 = vmatprep.subr.mxu0 0.0
      %2867 = vmatpush1.msra.mxu0 %v500
      %2868 = vmatprep.subr.mxu0 0.0
      %2869 = vmatpush1.msra.mxu0 %v499
      %2870 = vmatprep.subr.mxu0 0.0
      %2871 = vmatpush1.msra.mxu0 %v498
      %2872 = vmatprep.subr.mxu0 0.0
      %2873 = vmatpush1.msra.mxu0 %v497
      %2874 = vmatprep.subr.mxu0 0.0
      %2875 = vmatpush1.msra.mxu0 %v496
      %2876 = vmatprep.subr.mxu0 0.0
      %2877 = vmatpush1.msra.mxu0 %v495
      %2878 = vmatprep.subr.mxu0 0.0
      %2879 = vmatpush1.msra.mxu0 %v494
      %2880 = vmatprep.subr.mxu0 0.0
      %2881 = vmatpush2.msra.mxu0 0.0
      %2882 = vmatprep.subr.mxu0 0.0
      %2883 = vmatpush2.msra.mxu0 0.0
      %2884 = vmatprep.subr.mxu0 0.0
      %2885 = vmatpush2.msra.mxu0 0.0
      %2886 = vmatprep.subr.mxu0 0.0
      %2887 = vmatpush2.msra.mxu0 0.0
      %2888 = vmatprep.subr.mxu0 0.0
      %2889 = vmatpush2.msra.mxu0 0.0
      %2890 = vmatprep.subr.mxu0 0.0
      %2891 = vmatpush2.msra.mxu0 0.0
      %2892 = vmatprep.subr.mxu0 0.0
      %2893 = vmatpush2.msra.mxu0 0.0
      %2894 = vmatprep.subr.mxu0 0.0
      %2895 = vmatpush2.msra.mxu0 0.0
      %2896 = vmatprep.subr.mxu0 0.0
      %2897 = vmatpush2.msra.mxu0 0.0
      %2898 = vmatprep.subr.mxu0 0.0
      %2899 = vmatpush2.msra.mxu0 0.0
      %2900 = vmatprep.subr.mxu0 0.0
      %2901 = vmatpush2.msra.mxu0 0.0
      %2902 = vmatprep.subr.mxu0 0.0
      %2903 = vmatpush2.msra.mxu0 0.0
      %2904 = vmatprep.subr.mxu0 0.0
      %2905 = vmatpush2.msra.mxu0 0.0
      %2906 = vmatprep.subr.mxu0 0.0
      %2907 = vmatpush2.msra.mxu0 0.0
      %2908 = vmatprep.subr.mxu0 0.0
      %2909 = vmatpush2.msra.mxu0 0.0
      %2910 = vmatprep.subr.mxu0 0.0
      %2911 = vmatpush2.msra.mxu0 0.0
      %2912 = vmatprep.mubr.f32.mxu0 0.0
      %2913 = vmatmul.mubr.f32.gmra.mxu0 %v2846
      %v2914 = vpop.f32.mrf.mxu0
      %v2915 = vadd.f32 0.0, %v2914
      %v2916 = vpop.f32.mrf.mxu0
      %2917 = vdwg.mxu0
      %v2918 = vmul.f32 %v2915, %v1549
      %v2920 = vsel %vm1551, %v2918, 0
      %2922 = vmatprep.subr.mxu0 0.0
      %2923 = vmatpush1.msra.mxu0 0.0
      %2924 = vmatprep.subr.mxu0 0.0
      %2925 = vmatpush1.msra.mxu0 0.0
      %2926 = vmatprep.subr.mxu0 0.0
      %2927 = vmatpush1.msra.mxu0 0.0
      %2928 = vmatprep.subr.mxu0 0.0
      %2929 = vmatpush1.msra.mxu0 0.0
      %2930 = vmatprep.subr.mxu0 0.0
      %2931 = vmatpush1.msra.mxu0 0.0
      %2932 = vmatprep.subr.mxu0 0.0
      %2933 = vmatpush1.msra.mxu0 0.0
      %2934 = vmatprep.subr.mxu0 0.0
      %2935 = vmatpush1.msra.mxu0 0.0
      %2936 = vmatprep.subr.mxu0 0.0
      %2937 = vmatpush1.msra.mxu0 0.0
      %2938 = vmatprep.subr.mxu0 0.0
      %2939 = vmatpush1.msra.mxu0 0.0
      %2940 = vmatprep.subr.mxu0 0.0
      %2941 = vmatpush1.msra.mxu0 0.0
      %2942 = vmatprep.subr.mxu0 0.0
      %2943 = vmatpush1.msra.mxu0 0.0
      %2944 = vmatprep.subr.mxu0 0.0
      %2945 = vmatpush1.msra.mxu0 0.0
      %2946 = vmatprep.subr.mxu0 0.0
      %2947 = vmatpush1.msra.mxu0 %v505
      %2948 = vmatprep.subr.mxu0 0.0
      %2949 = vmatpush1.msra.mxu0 %v504
      %2950 = vmatprep.subr.mxu0 0.0
      %2951 = vmatpush1.msra.mxu0 %v503
      %2952 = vmatprep.subr.mxu0 0.0
      %2953 = vmatpush1.msra.mxu0 %v502
      %2954 = vmatprep.subr.mxu0 0.0
      %2955 = vmatpush2.msra.mxu0 0.0
      %2956 = vmatprep.subr.mxu0 0.0
      %2957 = vmatpush2.msra.mxu0 0.0
      %2958 = vmatprep.subr.mxu0 0.0
      %2959 = vmatpush2.msra.mxu0 0.0
      %2960 = vmatprep.subr.mxu0 0.0
      %2961 = vmatpush2.msra.mxu0 0.0
      %2962 = vmatprep.subr.mxu0 0.0
      %2963 = vmatpush2.msra.mxu0 0.0
      %2964 = vmatprep.subr.mxu0 0.0
      %2965 = vmatpush2.msra.mxu0 0.0
      %2966 = vmatprep.subr.mxu0 0.0
      %2967 = vmatpush2.msra.mxu0 0.0
      %2968 = vmatprep.subr.mxu0 0.0
      %2969 = vmatpush2.msra.mxu0 0.0
      %2970 = vmatprep.subr.mxu0 0.0
      %2971 = vmatpush2.msra.mxu0 0.0
      %2972 = vmatprep.subr.mxu0 0.0
      %2973 = vmatpush2.msra.mxu0 0.0
      %2974 = vmatprep.subr.mxu0 0.0
      %2975 = vmatpush2.msra.mxu0 0.0
      %2976 = vmatprep.subr.mxu0 0.0
      %2977 = vmatpush2.msra.mxu0 0.0
      %2978 = vmatprep.subr.mxu0 0.0
      %2979 = vmatpush2.msra.mxu0 0.0
      %2980 = vmatprep.subr.mxu0 0.0
      %2981 = vmatpush2.msra.mxu0 0.0
      %2982 = vmatprep.subr.mxu0 0.0
      %2983 = vmatpush2.msra.mxu0 0.0
      %2984 = vmatprep.subr.mxu0 0.0
      %2985 = vmatpush2.msra.mxu0 0.0
      %2986 = vmatprep.mubr.f32.mxu0 0.0
      %2987 = vmatmul.mubr.f32.gmra.mxu0 %v2920
      %v2988 = vpop.f32.mrf.mxu0
      %v2989 = vadd.f32 1e-05, %v2988
      %v2990 = vpop.f32.mrf.mxu0
      %2991 = vdwg.mxu0
      %v2992 = vrsqrt.pop %v2989
      %v2993 = vlaneseq
      %v2994 = vshrl.u32 %v2993, 7
      %v2995 = vsub.s32 0, %v2994
      %v2996 = vrot.slane %v2992, %v2995
      %v2997 = vmul.f32 %v2788, %v2996
      %v2998 = vmul.f32 %v2789, %v2996
      %v2999 = vmul.f32 %v2790, %v2996
      %v3000 = vmul.f32 %v2791, %v2996
      %v3001 = vmul.f32 %v2792, %v2996
      %v3002 = vmul.f32 %v2793, %v2996
      %v3003 = vmul.f32 %v2794, %v2996
      %v3004 = vmul.f32 %v2795, %v2996
      %v3005 = vmul.f32 %v2796, %v2996
      %v3006 = vmul.f32 %v2797, %v2996
      %v3007 = vmul.f32 %v2798, %v2996
      %v3008 = vmul.f32 %v2799, %v2996
      %v3009 = vmul.f32 %v2800, %v2996
      %v3010 = vmul.f32 %v2997, %v1868
      %v3011 = vmul.f32 %v2998, %v1868
      %v3012 = vmul.f32 %v2999, %v1868
      %v3013 = vmul.f32 %v3000, %v1868
      %v3014 = vmul.f32 %v3001, %v1868
      %v3015 = vmul.f32 %v3002, %v1868
      %v3016 = vmul.f32 %v3003, %v1868
      %v3017 = vmul.f32 %v3004, %v1868
      %v3018 = vmul.f32 %v3005, %v1868
      %v3019 = vmul.f32 %v3006, %v1868
      %v3020 = vmul.f32 %v3007, %v1868
      %v3021 = vmul.f32 %v3008, %v1868
      %v3022 = vmul.f32 %v3009, %v1868
      %v3023 = vadd.f32 %v3010, %v1887
      %v3024 = vadd.f32 %v3011, %v1887
      %v3025 = vadd.f32 %v3012, %v1887
      %v3026 = vadd.f32 %v3013, %v1887
      %v3027 = vadd.f32 %v3014, %v1887
      %v3028 = vadd.f32 %v3015, %v1887
      %v3029 = vadd.f32 %v3016, %v1887
      %v3030 = vadd.f32 %v3017, %v1887
      %v3031 = vadd.f32 %v3018, %v1887
      %v3032 = vadd.f32 %v3019, %v1887
      %v3033 = vadd.f32 %v3020, %v1887
      %v3034 = vadd.f32 %v3021, %v1887
      %v3035 = vadd.f32 %v3022, %v1887
      %v3036 = vmax.f32 %v3023, 0.0
      %v3037 = vmax.f32 %v3024, 0.0
      %v3038 = vmax.f32 %v3025, 0.0
      %v3039 = vmax.f32 %v3026, 0.0
      %v3040 = vmax.f32 %v3027, 0.0
      %v3041 = vmax.f32 %v3028, 0.0
      %v3042 = vmax.f32 %v3029, 0.0
      %v3043 = vmax.f32 %v3030, 0.0
      %v3044 = vmax.f32 %v3031, 0.0
      %v3045 = vmax.f32 %v3032, 0.0
      %v3046 = vmax.f32 %v3033, 0.0
      %v3047 = vmax.f32 %v3034, 0.0
      %v3048 = vmax.f32 %v3035, 0.0
      %v3049 = vmul.f32 %v3036, %v1370
      %v3050 = vmul.f32 %v3037, %v1375
      %v3051 = vmul.f32 %v3038, %v1380
      %v3052 = vmul.f32 %v3039, %v1385
      %v3053 = vmul.f32 %v3040, %v1390
      %v3054 = vmul.f32 %v3041, %v1395
      %v3055 = vmul.f32 %v3042, %v1400
      %v3056 = vmul.f32 %v3043, %v1405
      %v3057 = vmul.f32 %v3044, %v1410
      %v3058 = vmul.f32 %v3045, %v1415
      %v3059 = vmul.f32 %v3046, %v1420
      %v3060 = vmul.f32 %v3047, %v1425
      %v3061 = vmul.f32 %v3048, %v1430
      %3062 = vst.msk [vmem:[#allocation2 + $0x10] sm:$0xff] %vm361, %v3049
      %3063 = vst.msk [vmem:[#allocation2 + $0x18] sm:$0xff] %vm361, %v3050
      %3064 = vst.msk [vmem:[#allocation2 + $0x20] sm:$0xff] %vm361, %v3051
      %3065 = vst.msk [vmem:[#allocation2 + $0x28] sm:$0xff] %vm361, %v3052
      %3066 = vst.msk [vmem:[#allocation2 + $0x30] sm:$0xff] %vm361, %v3053
      %3067 = vst.msk [vmem:[#allocation2 + $0x38] sm:$0xff] %vm361, %v3054
      %3068 = vst.msk [vmem:[#allocation2 + $0x40] sm:$0xff] %vm361, %v3055
      %3069 = vst.msk [vmem:[#allocation2 + $0x48] sm:$0xff] %vm361, %v3056
      %3070 = vst.msk [vmem:[#allocation2 + $0x50] sm:$0xff] %vm361, %v3057
      %3071 = vst.msk [vmem:[#allocation2 + $0x58] sm:$0xff] %vm361, %v3058
      %3072 = vst.msk [vmem:[#allocation2 + $0x60] sm:$0xff] %vm361, %v3059
      %3073 = vst.msk [vmem:[#allocation2 + $0x68] sm:$0xff] %vm361, %v3060
      %3074 = vst.msk [vmem:[#allocation2 + $0x70] sm:$0xf] %vm378, %v3061
      %v3075 = vld [vmem:[#allocation2 + $0x5] sm:$0xff]
      %v3076 = vld [vmem:[#allocation2 + $0xd] sm:$0xff]
      %v3077 = vld [vmem:[#allocation2 + $0x15] sm:$0xff]
      %v3078 = vld [vmem:[#allocation2 + $0x1d] sm:$0xff]
      %v3079 = vld [vmem:[#allocation2 + $0x25] sm:$0xff]
      %v3080 = vld [vmem:[#allocation2 + $0x2d] sm:$0xff]
      %v3081 = vld [vmem:[#allocation2 + $0x35] sm:$0xff]
      %v3082 = vld [vmem:[#allocation2 + $0x3d] sm:$0xff]
      %v3083 = vld [vmem:[#allocation2 + $0x45] sm:$0xff]
      %v3084 = vld [vmem:[#allocation2 + $0x4d] sm:$0xff]
      %v3085 = vld [vmem:[#allocation2 + $0x55] sm:$0xff]
      %v3086 = vld [vmem:[#allocation2 + $0x5d] sm:$0xff]
      %v3087 = vld [vmem:[#allocation2 + $0x65] sm:$0xf]
      %v3088 = vpack.c.bf16 %v3076, %v3075
      %v3089 = vpack.c.bf16 %v3078, %v3077
      %v3090 = vpack.c.bf16 %v3080, %v3079
      %v3091 = vpack.c.bf16 %v3082, %v3081
      %v3092 = vpack.c.bf16 %v3084, %v3083
      %v3093 = vpack.c.bf16 %v3086, %v3085
      %v3094 = vpack.c.bf16 %v3087, %v3087
      %v3095 = vld [vmem:[#allocation2 + $0x6] sm:$0xff]
      %v3096 = vld [vmem:[#allocation2 + $0xe] sm:$0xff]
      %v3097 = vld [vmem:[#allocation2 + $0x16] sm:$0xff]
      %v3098 = vld [vmem:[#allocation2 + $0x1e] sm:$0xff]
      %v3099 = vld [vmem:[#allocation2 + $0x26] sm:$0xff]
      %v3100 = vld [vmem:[#allocation2 + $0x2e] sm:$0xff]
      %v3101 = vld [vmem:[#allocation2 + $0x36] sm:$0xff]
      %v3102 = vld [vmem:[#allocation2 + $0x3e] sm:$0xff]
      %v3103 = vld [vmem:[#allocation2 + $0x46] sm:$0xff]
      %v3104 = vld [vmem:[#allocation2 + $0x4e] sm:$0xff]
      %v3105 = vld [vmem:[#allocation2 + $0x56] sm:$0xff]
      %v3106 = vld [vmem:[#allocation2 + $0x5e] sm:$0xff]
      %v3107 = vld [vmem:[#allocation2 + $0x66] sm:$0xf]
      %v3108 = vpack.c.bf16 %v3096, %v3095
      %v3109 = vpack.c.bf16 %v3098, %v3097
      %v3110 = vpack.c.bf16 %v3100, %v3099
      %v3111 = vpack.c.bf16 %v3102, %v3101
      %v3112 = vpack.c.bf16 %v3104, %v3103
      %v3113 = vpack.c.bf16 %v3106, %v3105
      %v3114 = vpack.c.bf16 %v3107, %v3107
      %v3115 = vld [vmem:[#allocation2 + $0x7] sm:$0xff]
      %v3116 = vld [vmem:[#allocation2 + $0xf] sm:$0xff]
      %v3117 = vld [vmem:[#allocation2 + $0x17] sm:$0xff]
      %v3118 = vld [vmem:[#allocation2 + $0x1f] sm:$0xff]
      %v3119 = vld [vmem:[#allocation2 + $0x27] sm:$0xff]
      %v3120 = vld [vmem:[#allocation2 + $0x2f] sm:$0xff]
      %v3121 = vld [vmem:[#allocation2 + $0x37] sm:$0xff]
      %v3122 = vld [vmem:[#allocation2 + $0x3f] sm:$0xff]
      %v3123 = vld [vmem:[#allocation2 + $0x47] sm:$0xff]
      %v3124 = vld [vmem:[#allocation2 + $0x4f] sm:$0xff]
      %v3125 = vld [vmem:[#allocation2 + $0x57] sm:$0xff]
      %v3126 = vld [vmem:[#allocation2 + $0x5f] sm:$0xff]
      %v3127 = vld [vmem:[#allocation2 + $0x67] sm:$0xf]
      %v3128 = vpack.c.bf16 %v3116, %v3115
      %v3129 = vpack.c.bf16 %v3118, %v3117
      %v3130 = vpack.c.bf16 %v3120, %v3119
      %v3131 = vpack.c.bf16 %v3122, %v3121
      %v3132 = vpack.c.bf16 %v3124, %v3123
      %v3133 = vpack.c.bf16 %v3126, %v3125
      %v3134 = vpack.c.bf16 %v3127, %v3127
      %v3135 = vld [vmem:[#allocation2 + $0x67] sm:$0xff]
      %v3136 = vld [vmem:[#allocation2 + $0x6f] sm:$0xf]
      %v3137 = vpack.c.bf16 %v3117, %v3116
      %v3138 = vpack.c.bf16 %v3119, %v3118
      %v3139 = vpack.c.bf16 %v3121, %v3120
      %v3140 = vpack.c.bf16 %v3123, %v3122
      %v3141 = vpack.c.bf16 %v3125, %v3124
      %v3142 = vpack.c.bf16 %v3135, %v3126
      %v3143 = vpack.c.bf16 %v3136, %v3136
      %v3144 = vld [vmem:[#allocation2 + $0x10] sm:$0xff]
      %v3145 = vld [vmem:[#allocation2 + $0x18] sm:$0xff]
      %v3146 = vld [vmem:[#allocation2 + $0x20] sm:$0xff]
      %v3147 = vld [vmem:[#allocation2 + $0x28] sm:$0xff]
      %v3148 = vld [vmem:[#allocation2 + $0x30] sm:$0xff]
      %v3149 = vld [vmem:[#allocation2 + $0x38] sm:$0xff]
      %v3150 = vld [vmem:[#allocation2 + $0x40] sm:$0xff]
      %v3151 = vld [vmem:[#allocation2 + $0x48] sm:$0xff]
      %v3152 = vld [vmem:[#allocation2 + $0x50] sm:$0xff]
      %v3153 = vld [vmem:[#allocation2 + $0x58] sm:$0xff]
      %v3154 = vld [vmem:[#allocation2 + $0x60] sm:$0xff]
      %v3155 = vld [vmem:[#allocation2 + $0x68] sm:$0xff]
      %v3156 = vld [vmem:[#allocation2 + $0x70] sm:$0xf]
      %v3157 = vpack.c.bf16 %v3145, %v3144
      %v3158 = vpack.c.bf16 %v3147, %v3146
      %v3159 = vpack.c.bf16 %v3149, %v3148
      %v3160 = vpack.c.bf16 %v3151, %v3150
      %v3161 = vpack.c.bf16 %v3153, %v3152
      %v3162 = vpack.c.bf16 %v3155, %v3154
      %v3163 = vpack.c.bf16 %v3156, %v3156
      %v3164 = vld [vmem:[#allocation2 + $0x11] sm:$0xff]
      %v3165 = vld [vmem:[#allocation2 + $0x19] sm:$0xff]
      %v3166 = vld [vmem:[#allocation2 + $0x21] sm:$0xff]
      %v3167 = vld [vmem:[#allocation2 + $0x29] sm:$0xff]
      %v3168 = vld [vmem:[#allocation2 + $0x31] sm:$0xff]
      %v3169 = vld [vmem:[#allocation2 + $0x39] sm:$0xff]
      %v3170 = vld [vmem:[#allocation2 + $0x41] sm:$0xff]
      %v3171 = vld [vmem:[#allocation2 + $0x49] sm:$0xff]
      %v3172 = vld [vmem:[#allocation2 + $0x51] sm:$0xff]
      %v3173 = vld [vmem:[#allocation2 + $0x59] sm:$0xff]
      %v3174 = vld [vmem:[#allocation2 + $0x61] sm:$0xff]
      %v3175 = vld [vmem:[#allocation2 + $0x69] sm:$0xff]
      %v3176 = vld [vmem:[#allocation2 + $0x71] sm:$0xf]
      %v3177 = vpack.c.bf16 %v3165, %v3164
      %v3178 = vpack.c.bf16 %v3167, %v3166
      %v3179 = vpack.c.bf16 %v3169, %v3168
      %v3180 = vpack.c.bf16 %v3171, %v3170
      %v3181 = vpack.c.bf16 %v3173, %v3172
      %v3182 = vpack.c.bf16 %v3175, %v3174
      %v3183 = vpack.c.bf16 %v3176, %v3176
      %v3184 = vld [vmem:[#allocation2 + $0x71] sm:$0xff]
      %v3185 = vld [vmem:[#allocation2 + $0x79] sm:$0xf]
      %v3186 = vpack.c.bf16 %v3166, %v3165
      %v3187 = vpack.c.bf16 %v3168, %v3167
      %v3188 = vpack.c.bf16 %v3170, %v3169
      %v3189 = vpack.c.bf16 %v3172, %v3171
      %v3190 = vpack.c.bf16 %v3174, %v3173
      %v3191 = vpack.c.bf16 %v3184, %v3175
      %v3192 = vpack.c.bf16 %v3185, %v3185
      %v3193 = vld [vmem:[#allocation2 + $0x1a] sm:$0xff]
      %v3194 = vld [vmem:[#allocation2 + $0x22] sm:$0xff]
      %v3195 = vld [vmem:[#allocation2 + $0x2a] sm:$0xff]
      %v3196 = vld [vmem:[#allocation2 + $0x32] sm:$0xff]
      %v3197 = vld [vmem:[#allocation2 + $0x3a] sm:$0xff]
      %v3198 = vld [vmem:[#allocation2 + $0x42] sm:$0xff]
      %v3199 = vld [vmem:[#allocation2 + $0x4a] sm:$0xff]
      %v3200 = vld [vmem:[#allocation2 + $0x52] sm:$0xff]
      %v3201 = vld [vmem:[#allocation2 + $0x5a] sm:$0xff]
      %v3202 = vld [vmem:[#allocation2 + $0x62] sm:$0xff]
      %v3203 = vld [vmem:[#allocation2 + $0x6a] sm:$0xff]
      %v3204 = vld [vmem:[#allocation2 + $0x72] sm:$0xff]
      %v3205 = vld [vmem:[#allocation2 + $0x7a] sm:$0xf]
      %v3206 = vpack.c.bf16 %v3194, %v3193
      %v3207 = vpack.c.bf16 %v3196, %v3195
      %v3208 = vpack.c.bf16 %v3198, %v3197
      %v3209 = vpack.c.bf16 %v3200, %v3199
      %v3210 = vpack.c.bf16 %v3202, %v3201
      %v3211 = vpack.c.bf16 %v3204, %v3203
      %v3212 = vpack.c.bf16 %v3205, %v3205
      %v3213 = vld [vmem:[#allocation2 + $0x1b] sm:$0xff]
      %v3214 = vld [vmem:[#allocation2 + $0x23] sm:$0xff]
      %v3215 = vld [vmem:[#allocation2 + $0x2b] sm:$0xff]
      %v3216 = vld [vmem:[#allocation2 + $0x33] sm:$0xff]
      %v3217 = vld [vmem:[#allocation2 + $0x3b] sm:$0xff]
      %v3218 = vld [vmem:[#allocation2 + $0x43] sm:$0xff]
      %v3219 = vld [vmem:[#allocation2 + $0x4b] sm:$0xff]
      %v3220 = vld [vmem:[#allocation2 + $0x53] sm:$0xff]
      %v3221 = vld [vmem:[#allocation2 + $0x5b] sm:$0xff]
      %v3222 = vld [vmem:[#allocation2 + $0x63] sm:$0xff]
      %v3223 = vld [vmem:[#allocation2 + $0x6b] sm:$0xff]
      %v3224 = vld [vmem:[#allocation2 + $0x73] sm:$0xff]
      %v3225 = vld [vmem:[#allocation2 + $0x7b] sm:$0xf]
      %v3226 = vpack.c.bf16 %v3214, %v3213
      %v3227 = vpack.c.bf16 %v3216, %v3215
      %v3228 = vpack.c.bf16 %v3218, %v3217
      %v3229 = vpack.c.bf16 %v3220, %v3219
      %v3230 = vpack.c.bf16 %v3222, %v3221
      %v3231 = vpack.c.bf16 %v3224, %v3223
      %v3232 = vpack.c.bf16 %v3225, %v3225
      %3240 = vrot.lane.b32.xlu0 %v3108, 64
      %v3241 = vpop.permute.xlu0 %3240
      %3242 = vrot.lane.b32.xlu0 %v3109, 64
      %v3243 = vpop.permute.xlu0 %3242
      %3244 = vrot.lane.b32.xlu0 %v3110, 64
      %v3245 = vpop.permute.xlu0 %3244
      %3246 = vrot.lane.b32.xlu0 %v3111, 64
      %v3247 = vpop.permute.xlu0 %3246
      %3248 = vrot.lane.b32.xlu0 %v3112, 64
      %v3249 = vpop.permute.xlu0 %3248
      %3250 = vrot.lane.b32.xlu0 %v3113, 64
      %v3251 = vpop.permute.xlu0 %3250
      %3252 = vrot.lane.b32.xlu0 %v3114, 64
      %v3253 = vpop.permute.xlu0 %3252
      %3261 = vrot.lane.b32.xlu0 %v3137, 64
      %v3262 = vpop.permute.xlu0 %3261
      %3263 = vrot.lane.b32.xlu0 %v3138, 64
      %v3264 = vpop.permute.xlu0 %3263
      %3265 = vrot.lane.b32.xlu0 %v3139, 64
      %v3266 = vpop.permute.xlu0 %3265
      %3267 = vrot.lane.b32.xlu0 %v3140, 64
      %v3268 = vpop.permute.xlu0 %3267
      %3269 = vrot.lane.b32.xlu0 %v3141, 64
      %v3270 = vpop.permute.xlu0 %3269
      %3271 = vrot.lane.b32.xlu0 %v3142, 64
      %v3272 = vpop.permute.xlu0 %3271
      %3273 = vrot.lane.b32.xlu0 %v3143, 64
      %v3274 = vpop.permute.xlu0 %3273
      %3282 = vrot.lane.b32.xlu0 %v3177, 64
      %v3283 = vpop.permute.xlu0 %3282
      %3284 = vrot.lane.b32.xlu0 %v3178, 64
      %v3285 = vpop.permute.xlu0 %3284
      %3286 = vrot.lane.b32.xlu0 %v3179, 64
      %v3287 = vpop.permute.xlu0 %3286
      %3288 = vrot.lane.b32.xlu0 %v3180, 64
      %v3289 = vpop.permute.xlu0 %3288
      %3290 = vrot.lane.b32.xlu0 %v3181, 64
      %v3291 = vpop.permute.xlu0 %3290
      %3292 = vrot.lane.b32.xlu0 %v3182, 64
      %v3293 = vpop.permute.xlu0 %3292
      %3294 = vrot.lane.b32.xlu0 %v3183, 64
      %v3295 = vpop.permute.xlu0 %3294
      %3303 = vrot.lane.b32.xlu0 %v3206, 64
      %v3304 = vpop.permute.xlu0 %3303
      %3305 = vrot.lane.b32.xlu0 %v3207, 64
      %v3306 = vpop.permute.xlu0 %3305
      %3307 = vrot.lane.b32.xlu0 %v3208, 64
      %v3308 = vpop.permute.xlu0 %3307
      %3309 = vrot.lane.b32.xlu0 %v3209, 64
      %v3310 = vpop.permute.xlu0 %3309
      %3311 = vrot.lane.b32.xlu0 %v3210, 64
      %v3312 = vpop.permute.xlu0 %3311
      %3313 = vrot.lane.b32.xlu0 %v3211, 64
      %v3314 = vpop.permute.xlu0 %3313
      %3315 = vrot.lane.b32.xlu0 %v3212, 64
      %v3316 = vpop.permute.xlu0 %3315
      %v3319 = vsel %vm361, %v3088, %v3241
      %v3323 = vsel %vm361, %v3089, %v3243
      %v3327 = vsel %vm361, %v3090, %v3245
      %v3331 = vsel %vm361, %v3091, %v3247
      %v3335 = vsel %vm361, %v3092, %v3249
      %v3339 = vsel %vm361, %v3093, %v3251
      %v3343 = vsel %vm361, %v3094, %v3253
      %v3347 = vsel %vm361, %v3128, %v3262
      %v3351 = vsel %vm361, %v3129, %v3264
      %v3355 = vsel %vm361, %v3130, %v3266
      %v3359 = vsel %vm361, %v3131, %v3268
      %v3363 = vsel %vm361, %v3132, %v3270
      %v3367 = vsel %vm361, %v3133, %v3272
      %v3371 = vsel %vm361, %v3134, %v3274
      %v3375 = vsel %vm361, %v3157, %v3283
      %v3379 = vsel %vm361, %v3158, %v3285
      %v3383 = vsel %vm361, %v3159, %v3287
      %v3387 = vsel %vm361, %v3160, %v3289
      %v3391 = vsel %vm361, %v3161, %v3291
      %v3395 = vsel %vm361, %v3162, %v3293
      %v3399 = vsel %vm361, %v3163, %v3295
      %v3403 = vsel %vm361, %v3186, %v3304
      %v3407 = vsel %vm361, %v3187, %v3306
      %v3411 = vsel %vm361, %v3188, %v3308
      %v3415 = vsel %vm361, %v3189, %v3310
      %v3419 = vsel %vm361, %v3190, %v3312
      %v3423 = vsel %vm361, %v3191, %v3314
      %v3427 = vsel %vm361, %v3192, %v3316
      %v3430 = vsel %vm361, %v3226, 0
      %v3433 = vsel %vm361, %v3227, 0
      %v3436 = vsel %vm361, %v3228, 0
      %v3439 = vsel %vm361, %v3229, 0
      %v3442 = vsel %vm361, %v3230, 0
      %v3445 = vsel %vm361, %v3231, 0
      %v3448 = vsel %vm361, %v3232, 0
      %3450 = vmatprep.subr.bf16.mxu0 0
      %3451 = vmatpush1.bf16.msra.mxu0 %v1017
      %3452 = vmatprep.subr.bf16.mxu0 0
      %3453 = vmatpush1.bf16.msra.mxu0 %v1016
      %3454 = vmatprep.subr.bf16.mxu0 0
      %3455 = vmatpush1.bf16.msra.mxu0 %v1015
      %3456 = vmatprep.subr.bf16.mxu0 0
      %3457 = vmatpush1.bf16.msra.mxu0 %v1014
      %3458 = vmatprep.subr.bf16.mxu0 0
      %3459 = vmatpush1.bf16.msra.mxu0 %v1013
      %3460 = vmatprep.subr.bf16.mxu0 0
      %3461 = vmatpush1.bf16.msra.mxu0 %v1012
      %3462 = vmatprep.subr.bf16.mxu0 0
      %3463 = vmatpush1.bf16.msra.mxu0 %v1011
      %3464 = vmatprep.subr.bf16.mxu0 0
      %3465 = vmatpush1.bf16.msra.mxu0 %v1010
      %3466 = vmatprep.subr.bf16.mxu0 0
      %3467 = vmatpush2.bf16.msra.mxu0 %v1025
      %3468 = vmatprep.subr.bf16.mxu0 0
      %3469 = vmatpush2.bf16.msra.mxu0 %v1024
      %3470 = vmatprep.subr.bf16.mxu0 0
      %3471 = vmatpush2.bf16.msra.mxu0 %v1023
      %3472 = vmatprep.subr.bf16.mxu0 0
      %3473 = vmatpush2.bf16.msra.mxu0 %v1022
      %3474 = vmatprep.subr.bf16.mxu0 0
      %3475 = vmatpush2.bf16.msra.mxu0 %v1021
      %3476 = vmatprep.subr.bf16.mxu0 0
      %3477 = vmatpush2.bf16.msra.mxu0 %v1020
      %3478 = vmatprep.subr.bf16.mxu0 0
      %3479 = vmatpush2.bf16.msra.mxu0 %v1019
      %3480 = vmatprep.subr.bf16.mxu0 0
      %3481 = vmatpush2.bf16.msra.mxu0 %v1018
      %3482 = vmatprep.mubr.bf16.mxu0 %v3347
      %3483 = vmatmul.mubr.bf16.gmra.mxu0 %v3319
      %v3484 = vpop.f32.mrf.mxu0
      %v3485 = vadd.f32 %v864, %v3484
      %v3486 = vpop.f32.mrf.mxu0
      %v3487 = vpop.f32.mrf.mxu0
      %v3488 = vadd.f32 %v864, %v3487
      %v3489 = vpop.f32.mrf.mxu0
      %3490 = vmatprep.mubr.bf16.mxu0 %v3351
      %3491 = vmatmul.mubr.bf16.gmra.mxu0 %v3323
      %v3492 = vpop.f32.mrf.mxu0
      %v3493 = vadd.f32 %v864, %v3492
      %v3494 = vpop.f32.mrf.mxu0
      %v3495 = vpop.f32.mrf.mxu0
      %v3496 = vadd.f32 %v864, %v3495
      %v3497 = vpop.f32.mrf.mxu0
      %3498 = vmatprep.mubr.bf16.mxu0 %v3355
      %3499 = vmatmul.mubr.bf16.gmra.mxu0 %v3327
      %v3500 = vpop.f32.mrf.mxu0
      %v3501 = vadd.f32 %v864, %v3500
      %v3502 = vpop.f32.mrf.mxu0
      %v3503 = vpop.f32.mrf.mxu0
      %v3504 = vadd.f32 %v864, %v3503
      %v3505 = vpop.f32.mrf.mxu0
      %3506 = vmatprep.mubr.bf16.mxu0 %v3359
      %3507 = vmatmul.mubr.bf16.gmra.mxu0 %v3331
      %v3508 = vpop.f32.mrf.mxu0
      %v3509 = vadd.f32 %v864, %v3508
      %v3510 = vpop.f32.mrf.mxu0
      %v3511 = vpop.f32.mrf.mxu0
      %v3512 = vadd.f32 %v864, %v3511
      %v3513 = vpop.f32.mrf.mxu0
      %3514 = vmatprep.mubr.bf16.mxu0 %v3363
      %3515 = vmatmul.mubr.bf16.gmra.mxu0 %v3335
      %v3516 = vpop.f32.mrf.mxu0
      %v3517 = vadd.f32 %v864, %v3516
      %v3518 = vpop.f32.mrf.mxu0
      %v3519 = vpop.f32.mrf.mxu0
      %v3520 = vadd.f32 %v864, %v3519
      %v3521 = vpop.f32.mrf.mxu0
      %3522 = vmatprep.mubr.bf16.mxu0 %v3367
      %3523 = vmatmul.mubr.bf16.gmra.mxu0 %v3339
      %v3524 = vpop.f32.mrf.mxu0
      %v3525 = vadd.f32 %v864, %v3524
      %v3526 = vpop.f32.mrf.mxu0
      %v3527 = vpop.f32.mrf.mxu0
      %v3528 = vadd.f32 %v864, %v3527
      %v3529 = vpop.f32.mrf.mxu0
      %3530 = vmatprep.mubr.bf16.mxu0 %v3371
      %3531 = vmatmul.mubr.bf16.gmra.mxu0 %v3343
      %v3532 = vpop.f32.mrf.mxu0
      %v3533 = vadd.f32 %v864, %v3532
      %v3534 = vpop.f32.mrf.mxu0
      %v3535 = vpop.f32.mrf.mxu0
      %v3536 = vpop.f32.mrf.mxu0
      %3537 = vdwg.mxu0
      %3538 = vmatprep.subr.bf16.mxu0 0
      %3539 = vmatpush1.bf16.msra.mxu0 %v1033
      %3540 = vmatprep.subr.bf16.mxu0 0
      %3541 = vmatpush1.bf16.msra.mxu0 %v1032
      %3542 = vmatprep.subr.bf16.mxu0 0
      %3543 = vmatpush1.bf16.msra.mxu0 %v1031
      %3544 = vmatprep.subr.bf16.mxu0 0
      %3545 = vmatpush1.bf16.msra.mxu0 %v1030
      %3546 = vmatprep.subr.bf16.mxu0 0
      %3547 = vmatpush1.bf16.msra.mxu0 %v1029
      %3548 = vmatprep.subr.bf16.mxu0 0
      %3549 = vmatpush1.bf16.msra.mxu0 %v1028
      %3550 = vmatprep.subr.bf16.mxu0 0
      %3551 = vmatpush1.bf16.msra.mxu0 %v1027
      %3552 = vmatprep.subr.bf16.mxu0 0
      %3553 = vmatpush1.bf16.msra.mxu0 %v1026
      %3554 = vmatprep.subr.bf16.mxu0 0
      %3555 = vmatpush2.bf16.msra.mxu0 %v1041
      %3556 = vmatprep.subr.bf16.mxu0 0
      %3557 = vmatpush2.bf16.msra.mxu0 %v1040
      %3558 = vmatprep.subr.bf16.mxu0 0
      %3559 = vmatpush2.bf16.msra.mxu0 %v1039
      %3560 = vmatprep.subr.bf16.mxu0 0
      %3561 = vmatpush2.bf16.msra.mxu0 %v1038
      %3562 = vmatprep.subr.bf16.mxu0 0
      %3563 = vmatpush2.bf16.msra.mxu0 %v1037
      %3564 = vmatprep.subr.bf16.mxu0 0
      %3565 = vmatpush2.bf16.msra.mxu0 %v1036
      %3566 = vmatprep.subr.bf16.mxu0 0
      %3567 = vmatpush2.bf16.msra.mxu0 %v1035
      %3568 = vmatprep.subr.bf16.mxu0 0
      %3569 = vmatpush2.bf16.msra.mxu0 %v1034
      %3570 = vmatprep.mubr.bf16.mxu0 %v3403
      %3571 = vmatmul.mubr.bf16.gmra.mxu0 %v3375
      %v3572 = vpop.f32.mrf.mxu0
      %v3573 = vadd.f32 %v3485, %v3572
      %v3574 = vpop.f32.mrf.mxu0
      %v3575 = vpop.f32.mrf.mxu0
      %v3576 = vadd.f32 %v3488, %v3575
      %v3577 = vpop.f32.mrf.mxu0
      %3578 = vmatprep.mubr.bf16.mxu0 %v3407
      %3579 = vmatmul.mubr.bf16.gmra.mxu0 %v3379
      %v3580 = vpop.f32.mrf.mxu0
      %v3581 = vadd.f32 %v3493, %v3580
      %v3582 = vpop.f32.mrf.mxu0
      %v3583 = vpop.f32.mrf.mxu0
      %v3584 = vadd.f32 %v3496, %v3583
      %v3585 = vpop.f32.mrf.mxu0
      %3586 = vmatprep.mubr.bf16.mxu0 %v3411
      %3587 = vmatmul.mubr.bf16.gmra.mxu0 %v3383
      %v3588 = vpop.f32.mrf.mxu0
      %v3589 = vadd.f32 %v3501, %v3588
      %v3590 = vpop.f32.mrf.mxu0
      %v3591 = vpop.f32.mrf.mxu0
      %v3592 = vadd.f32 %v3504, %v3591
      %v3593 = vpop.f32.mrf.mxu0
      %3594 = vmatprep.mubr.bf16.mxu0 %v3415
      %3595 = vmatmul.mubr.bf16.gmra.mxu0 %v3387
      %v3596 = vpop.f32.mrf.mxu0
      %v3597 = vadd.f32 %v3509, %v3596
      %v3598 = vpop.f32.mrf.mxu0
      %v3599 = vpop.f32.mrf.mxu0
      %v3600 = vadd.f32 %v3512, %v3599
      %v3601 = vpop.f32.mrf.mxu0
      %3602 = vmatprep.mubr.bf16.mxu0 %v3419
      %3603 = vmatmul.mubr.bf16.gmra.mxu0 %v3391
      %v3604 = vpop.f32.mrf.mxu0
      %v3605 = vadd.f32 %v3517, %v3604
      %v3606 = vpop.f32.mrf.mxu0
      %v3607 = vpop.f32.mrf.mxu0
      %v3608 = vadd.f32 %v3520, %v3607
      %v3609 = vpop.f32.mrf.mxu0
      %3610 = vmatprep.mubr.bf16.mxu0 %v3423
      %3611 = vmatmul.mubr.bf16.gmra.mxu0 %v3395
      %v3612 = vpop.f32.mrf.mxu0
      %v3613 = vadd.f32 %v3525, %v3612
      %v3614 = vpop.f32.mrf.mxu0
      %v3615 = vpop.f32.mrf.mxu0
      %v3616 = vadd.f32 %v3528, %v3615
      %v3617 = vpop.f32.mrf.mxu0
      %3618 = vmatprep.mubr.bf16.mxu0 %v3427
      %3619 = vmatmul.mubr.bf16.gmra.mxu0 %v3399
      %v3620 = vpop.f32.mrf.mxu0
      %v3621 = vadd.f32 %v3533, %v3620
      %v3622 = vpop.f32.mrf.mxu0
      %v3623 = vpop.f32.mrf.mxu0
      %v3624 = vpop.f32.mrf.mxu0
      %3625 = vdwg.mxu0
      %3626 = vmatprep.subr.bf16.mxu0 0
      %3627 = vmatpush1.bf16.msra.mxu0 0
      %3628 = vmatprep.subr.bf16.mxu0 0
      %3629 = vmatpush1.bf16.msra.mxu0 0
      %3630 = vmatprep.subr.bf16.mxu0 0
      %3631 = vmatpush1.bf16.msra.mxu0 0
      %3632 = vmatprep.subr.bf16.mxu0 0
      %3633 = vmatpush1.bf16.msra.mxu0 0
      %3634 = vmatprep.subr.bf16.mxu0 0
      %3635 = vmatpush1.bf16.msra.mxu0 %v1045
      %3636 = vmatprep.subr.bf16.mxu0 0
      %3637 = vmatpush1.bf16.msra.mxu0 %v1044
      %3638 = vmatprep.subr.bf16.mxu0 0
      %3639 = vmatpush1.bf16.msra.mxu0 %v1043
      %3640 = vmatprep.subr.bf16.mxu0 0
      %3641 = vmatpush1.bf16.msra.mxu0 %v1042
      %3642 = vmatprep.subr.bf16.mxu0 0
      %3643 = vmatpush2.bf16.msra.mxu0 0
      %3644 = vmatprep.subr.bf16.mxu0 0
      %3645 = vmatpush2.bf16.msra.mxu0 0
      %3646 = vmatprep.subr.bf16.mxu0 0
      %3647 = vmatpush2.bf16.msra.mxu0 0
      %3648 = vmatprep.subr.bf16.mxu0 0
      %3649 = vmatpush2.bf16.msra.mxu0 0
      %3650 = vmatprep.subr.bf16.mxu0 0
      %3651 = vmatpush2.bf16.msra.mxu0 0
      %3652 = vmatprep.subr.bf16.mxu0 0
      %3653 = vmatpush2.bf16.msra.mxu0 0
      %3654 = vmatprep.subr.bf16.mxu0 0
      %3655 = vmatpush2.bf16.msra.mxu0 0
      %3656 = vmatprep.subr.bf16.mxu0 0
      %3657 = vmatpush2.bf16.msra.mxu0 0
      %3658 = vmatprep.mubr.bf16.mxu0 0
      %3659 = vmatmul.mubr.bf16.gmra.mxu0 %v3430
      %v3660 = vpop.f32.mrf.mxu0
      %v3661 = vadd.f32 %v3573, %v3660
      %v3662 = vpop.f32.mrf.mxu0
      %v3663 = vpop.f32.mrf.mxu0
      %v3664 = vadd.f32 %v3576, %v3663
      %v3665 = vpop.f32.mrf.mxu0
      %3666 = vmatprep.mubr.bf16.mxu0 0
      %3667 = vmatmul.mubr.bf16.gmra.mxu0 %v3433
      %v3668 = vpop.f32.mrf.mxu0
      %v3669 = vadd.f32 %v3581, %v3668
      %v3670 = vpop.f32.mrf.mxu0
      %v3671 = vpop.f32.mrf.mxu0
      %v3672 = vadd.f32 %v3584, %v3671
      %v3673 = vpop.f32.mrf.mxu0
      %3674 = vmatprep.mubr.bf16.mxu0 0
      %3675 = vmatmul.mubr.bf16.gmra.mxu0 %v3436
      %v3676 = vpop.f32.mrf.mxu0
      %v3677 = vadd.f32 %v3589, %v3676
      %v3678 = vpop.f32.mrf.mxu0
      %v3679 = vpop.f32.mrf.mxu0
      %v3680 = vadd.f32 %v3592, %v3679
      %v3681 = vpop.f32.mrf.mxu0
      %3682 = vmatprep.mubr.bf16.mxu0 0
      %3683 = vmatmul.mubr.bf16.gmra.mxu0 %v3439
      %v3684 = vpop.f32.mrf.mxu0
      %v3685 = vadd.f32 %v3597, %v3684
      %v3686 = vpop.f32.mrf.mxu0
      %v3687 = vpop.f32.mrf.mxu0
      %v3688 = vadd.f32 %v3600, %v3687
      %v3689 = vpop.f32.mrf.mxu0
      %3690 = vmatprep.mubr.bf16.mxu0 0
      %3691 = vmatmul.mubr.bf16.gmra.mxu0 %v3442
      %v3692 = vpop.f32.mrf.mxu0
      %v3693 = vadd.f32 %v3605, %v3692
      %v3694 = vpop.f32.mrf.mxu0
      %v3695 = vpop.f32.mrf.mxu0
      %v3696 = vadd.f32 %v3608, %v3695
      %v3697 = vpop.f32.mrf.mxu0
      %3698 = vmatprep.mubr.bf16.mxu0 0
      %3699 = vmatmul.mubr.bf16.gmra.mxu0 %v3445
      %v3700 = vpop.f32.mrf.mxu0
      %v3701 = vadd.f32 %v3613, %v3700
      %v3702 = vpop.f32.mrf.mxu0
      %v3703 = vpop.f32.mrf.mxu0
      %v3704 = vadd.f32 %v3616, %v3703
      %v3705 = vpop.f32.mrf.mxu0
      %3706 = vmatprep.mubr.bf16.mxu0 0
      %3707 = vmatmul.mubr.bf16.gmra.mxu0 %v3448
      %v3708 = vpop.f32.mrf.mxu0
      %v3709 = vadd.f32 %v3621, %v3708
      %v3710 = vpop.f32.mrf.mxu0
      %v3711 = vpop.f32.mrf.mxu0
      %v3712 = vpop.f32.mrf.mxu0
      %3713 = vdwg.mxu0
      %v3714 = vmul.f32 %v3661, %v1370
      %v3715 = vmul.f32 %v3664, %v1375
      %v3716 = vmul.f32 %v3669, %v1380
      %v3717 = vmul.f32 %v3672, %v1385
      %v3718 = vmul.f32 %v3677, %v1390
      %v3719 = vmul.f32 %v3680, %v1395
      %v3720 = vmul.f32 %v3685, %v1400
      %v3721 = vmul.f32 %v3688, %v1405
      %v3722 = vmul.f32 %v3693, %v1410
      %v3723 = vmul.f32 %v3696, %v1415
      %v3724 = vmul.f32 %v3701, %v1420
      %v3725 = vmul.f32 %v3704, %v1425
      %v3726 = vmul.f32 %v3709, %v1430
      %v3727 = vsel %vm361, %v3714, 0.0
      %v3728 = vsel %vm361, %v3715, 0.0
      %v3729 = vadd.f32 %v3727, %v3728
      %v3730 = vsel %vm361, %v3716, 0.0
      %v3731 = vadd.f32 %v3729, %v3730
      %v3732 = vsel %vm361, %v3717, 0.0
      %v3733 = vadd.f32 %v3731, %v3732
      %v3734 = vsel %vm361, %v3718, 0.0
      %v3735 = vadd.f32 %v3733, %v3734
      %v3736 = vsel %vm361, %v3719, 0.0
      %v3737 = vadd.f32 %v3735, %v3736
      %v3738 = vsel %vm361, %v3720, 0.0
      %v3739 = vadd.f32 %v3737, %v3738
      %v3740 = vsel %vm361, %v3721, 0.0
      %v3741 = vadd.f32 %v3739, %v3740
      %v3742 = vsel %vm361, %v3722, 0.0
      %v3743 = vadd.f32 %v3741, %v3742
      %v3744 = vsel %vm361, %v3723, 0.0
      %v3745 = vadd.f32 %v3743, %v3744
      %v3746 = vsel %vm361, %v3724, 0.0
      %v3747 = vadd.f32 %v3745, %v3746
      %v3748 = vsel %vm361, %v3725, 0.0
      %v3749 = vadd.f32 %v3747, %v3748
      %v3750 = vsel %vm378, %v3726, 0.0
      %v3751 = vadd.f32 %v3749, %v3750
      %v3752 = vrot.slane %v3751, 4
      %v3753 = vadd.f32 %v3751, %v3752
      %v3754 = vrot.slane %v3753, 2
      %v3755 = vadd.f32 %v3753, %v3754
      %v3756 = vrot.slane %v3755, 1
      %v3757 = vadd.f32 %v3755, %v3756
      %v3759 = vsel %vm361, %v3757, 0
      %3761 = vmatprep.subr.mxu0 0.0
      %3762 = vmatpush1.msra.mxu0 0.0
      %3763 = vmatprep.subr.mxu0 0.0
      %3764 = vmatpush1.msra.mxu0 0.0
      %3765 = vmatprep.subr.mxu0 0.0
      %3766 = vmatpush1.msra.mxu0 0.0
      %3767 = vmatprep.subr.mxu0 0.0
      %3768 = vmatpush1.msra.mxu0 0.0
      %3769 = vmatprep.subr.mxu0 0.0
      %3770 = vmatpush1.msra.mxu0 0.0
      %3771 = vmatprep.subr.mxu0 0.0
      %3772 = vmatpush1.msra.mxu0 0.0
      %3773 = vmatprep.subr.mxu0 0.0
      %3774 = vmatpush1.msra.mxu0 0.0
      %3775 = vmatprep.subr.mxu0 0.0
      %3776 = vmatpush1.msra.mxu0 0.0
      %3777 = vmatprep.subr.mxu0 0.0
      %3778 = vmatpush1.msra.mxu0 %v501
      %3779 = vmatprep.subr.mxu0 0.0
      %3780 = vmatpush1.msra.mxu0 %v500
      %3781 = vmatprep.subr.mxu0 0.0
      %3782 = vmatpush1.msra.mxu0 %v499
      %3783 = vmatprep.subr.mxu0 0.0
      %3784 = vmatpush1.msra.mxu0 %v498
      %3785 = vmatprep.subr.mxu0 0.0
      %3786 = vmatpush1.msra.mxu0 %v497
      %3787 = vmatprep.subr.mxu0 0.0
      %3788 = vmatpush1.msra.mxu0 %v496
      %3789 = vmatprep.subr.mxu0 0.0
      %3790 = vmatpush1.msra.mxu0 %v495
      %3791 = vmatprep.subr.mxu0 0.0
      %3792 = vmatpush1.msra.mxu0 %v494
      %3793 = vmatprep.subr.mxu0 0.0
      %3794 = vmatpush2.msra.mxu0 0.0
      %3795 = vmatprep.subr.mxu0 0.0
      %3796 = vmatpush2.msra.mxu0 0.0
      %3797 = vmatprep.subr.mxu0 0.0
      %3798 = vmatpush2.msra.mxu0 0.0
      %3799 = vmatprep.subr.mxu0 0.0
      %3800 = vmatpush2.msra.mxu0 0.0
      %3801 = vmatprep.subr.mxu0 0.0
      %3802 = vmatpush2.msra.mxu0 0.0
      %3803 = vmatprep.subr.mxu0 0.0
      %3804 = vmatpush2.msra.mxu0 0.0
      %3805 = vmatprep.subr.mxu0 0.0
      %3806 = vmatpush2.msra.mxu0 0.0
      %3807 = vmatprep.subr.mxu0 0.0
      %3808 = vmatpush2.msra.mxu0 0.0
      %3809 = vmatprep.subr.mxu0 0.0
      %3810 = vmatpush2.msra.mxu0 0.0
      %3811 = vmatprep.subr.mxu0 0.0
      %3812 = vmatpush2.msra.mxu0 0.0
      %3813 = vmatprep.subr.mxu0 0.0
      %3814 = vmatpush2.msra.mxu0 0.0
      %3815 = vmatprep.subr.mxu0 0.0
      %3816 = vmatpush2.msra.mxu0 0.0
      %3817 = vmatprep.subr.mxu0 0.0
      %3818 = vmatpush2.msra.mxu0 0.0
      %3819 = vmatprep.subr.mxu0 0.0
      %3820 = vmatpush2.msra.mxu0 0.0
      %3821 = vmatprep.subr.mxu0 0.0
      %3822 = vmatpush2.msra.mxu0 0.0
      %3823 = vmatprep.subr.mxu0 0.0
      %3824 = vmatpush2.msra.mxu0 0.0
      %3825 = vmatprep.mubr.f32.mxu0 0.0
      %3826 = vmatmul.mubr.f32.gmra.mxu0 %v3759
      %v3827 = vpop.f32.mrf.mxu0
      %v3828 = vadd.f32 0.0, %v3827
      %v3829 = vpop.f32.mrf.mxu0
      %3830 = vdwg.mxu0
      %v3831 = vmul.f32 %v3828, %v1549
      %v3833 = vsel %vm1551, %v3831, 0
      %3835 = vmatprep.subr.mxu0 0.0
      %3836 = vmatpush1.msra.mxu0 0.0
      %3837 = vmatprep.subr.mxu0 0.0
      %3838 = vmatpush1.msra.mxu0 0.0
      %3839 = vmatprep.subr.mxu0 0.0
      %3840 = vmatpush1.msra.mxu0 0.0
      %3841 = vmatprep.subr.mxu0 0.0
      %3842 = vmatpush1.msra.mxu0 0.0
      %3843 = vmatprep.subr.mxu0 0.0
      %3844 = vmatpush1.msra.mxu0 0.0
      %3845 = vmatprep.subr.mxu0 0.0
      %3846 = vmatpush1.msra.mxu0 0.0
      %3847 = vmatprep.subr.mxu0 0.0
      %3848 = vmatpush1.msra.mxu0 0.0
      %3849 = vmatprep.subr.mxu0 0.0
      %3850 = vmatpush1.msra.mxu0 0.0
      %3851 = vmatprep.subr.mxu0 0.0
      %3852 = vmatpush1.msra.mxu0 0.0
      %3853 = vmatprep.subr.mxu0 0.0
      %3854 = vmatpush1.msra.mxu0 0.0
      %3855 = vmatprep.subr.mxu0 0.0
      %3856 = vmatpush1.msra.mxu0 0.0
      %3857 = vmatprep.subr.mxu0 0.0
      %3858 = vmatpush1.msra.mxu0 0.0
      %3859 = vmatprep.subr.mxu0 0.0
      %3860 = vmatpush1.msra.mxu0 %v505
      %3861 = vmatprep.subr.mxu0 0.0
      %3862 = vmatpush1.msra.mxu0 %v504
      %3863 = vmatprep.subr.mxu0 0.0
      %3864 = vmatpush1.msra.mxu0 %v503
      %3865 = vmatprep.subr.mxu0 0.0
      %3866 = vmatpush1.msra.mxu0 %v502
      %3867 = vmatprep.subr.mxu0 0.0
      %3868 = vmatpush2.msra.mxu0 0.0
      %3869 = vmatprep.subr.mxu0 0.0
      %3870 = vmatpush2.msra.mxu0 0.0
      %3871 = vmatprep.subr.mxu0 0.0
      %3872 = vmatpush2.msra.mxu0 0.0
      %3873 = vmatprep.subr.mxu0 0.0
      %3874 = vmatpush2.msra.mxu0 0.0
      %3875 = vmatprep.subr.mxu0 0.0
      %3876 = vmatpush2.msra.mxu0 0.0
      %3877 = vmatprep.subr.mxu0 0.0
      %3878 = vmatpush2.msra.mxu0 0.0
      %3879 = vmatprep.subr.mxu0 0.0
      %3880 = vmatpush2.msra.mxu0 0.0
      %3881 = vmatprep.subr.mxu0 0.0
      %3882 = vmatpush2.msra.mxu0 0.0
      %3883 = vmatprep.subr.mxu0 0.0
      %3884 = vmatpush2.msra.mxu0 0.0
      %3885 = vmatprep.subr.mxu0 0.0
      %3886 = vmatpush2.msra.mxu0 0.0
      %3887 = vmatprep.subr.mxu0 0.0
      %3888 = vmatpush2.msra.mxu0 0.0
      %3889 = vmatprep.subr.mxu0 0.0
      %3890 = vmatpush2.msra.mxu0 0.0
      %3891 = vmatprep.subr.mxu0 0.0
      %3892 = vmatpush2.msra.mxu0 0.0
      %3893 = vmatprep.subr.mxu0 0.0
      %3894 = vmatpush2.msra.mxu0 0.0
      %3895 = vmatprep.subr.mxu0 0.0
      %3896 = vmatpush2.msra.mxu0 0.0
      %3897 = vmatprep.subr.mxu0 0.0
      %3898 = vmatpush2.msra.mxu0 0.0
      %3899 = vmatprep.mubr.f32.mxu0 0.0
      %3900 = vmatmul.mubr.f32.gmra.mxu0 %v3833
      %v3901 = vpop.f32.mrf.mxu0
      %v3902 = vadd.f32 0.0, %v3901
      %v3903 = vpop.f32.mrf.mxu0
      %3904 = vdwg.mxu0
      %v3905 = vlaneseq
      %v3906 = vshrl.u32 %v3905, 7
      %v3907 = vsub.s32 0, %v3906
      %v3908 = vrot.slane %v3902, %v3907
      %v3909 = vsub.f32 %v3714, %v3908
      %v3910 = vsub.f32 %v3715, %v3908
      %v3911 = vsub.f32 %v3716, %v3908
      %v3912 = vsub.f32 %v3717, %v3908
      %v3913 = vsub.f32 %v3718, %v3908
      %v3914 = vsub.f32 %v3719, %v3908
      %v3915 = vsub.f32 %v3720, %v3908
      %v3916 = vsub.f32 %v3721, %v3908
      %v3917 = vsub.f32 %v3722, %v3908
      %v3918 = vsub.f32 %v3723, %v3908
      %v3919 = vsub.f32 %v3724, %v3908
      %v3920 = vsub.f32 %v3725, %v3908
      %v3921 = vsub.f32 %v3726, %v3908
      %v3922 = vmul.f32 %v3909, %v1370
      %v3923 = vmul.f32 %v3910, %v1375
      %v3924 = vmul.f32 %v3911, %v1380
      %v3925 = vmul.f32 %v3912, %v1385
      %v3926 = vmul.f32 %v3913, %v1390
      %v3927 = vmul.f32 %v3914, %v1395
      %v3928 = vmul.f32 %v3915, %v1400
      %v3929 = vmul.f32 %v3916, %v1405
      %v3930 = vmul.f32 %v3917, %v1410
      %v3931 = vmul.f32 %v3918, %v1415
      %v3932 = vmul.f32 %v3919, %v1420
      %v3933 = vmul.f32 %v3920, %v1425
      %v3934 = vmul.f32 %v3921, %v1430
      %v3935 = vmul.f32 %v3922, %v3922
      %v3936 = vmul.f32 %v3923, %v3923
      %v3937 = vmul.f32 %v3924, %v3924
      %v3938 = vmul.f32 %v3925, %v3925
      %v3939 = vmul.f32 %v3926, %v3926
      %v3940 = vmul.f32 %v3927, %v3927
      %v3941 = vmul.f32 %v3928, %v3928
      %v3942 = vmul.f32 %v3929, %v3929
      %v3943 = vmul.f32 %v3930, %v3930
      %v3944 = vmul.f32 %v3931, %v3931
      %v3945 = vmul.f32 %v3932, %v3932
      %v3946 = vmul.f32 %v3933, %v3933
      %v3947 = vmul.f32 %v3934, %v3934
      %v3948 = vsel %vm361, %v3935, 0.0
      %v3949 = vsel %vm361, %v3936, 0.0
      %v3950 = vadd.f32 %v3948, %v3949
      %v3951 = vsel %vm361, %v3937, 0.0
      %v3952 = vadd.f32 %v3950, %v3951
      %v3953 = vsel %vm361, %v3938, 0.0
      %v3954 = vadd.f32 %v3952, %v3953
      %v3955 = vsel %vm361, %v3939, 0.0
      %v3956 = vadd.f32 %v3954, %v3955
      %v3957 = vsel %vm361, %v3940, 0.0
      %v3958 = vadd.f32 %v3956, %v3957
      %v3959 = vsel %vm361, %v3941, 0.0
      %v3960 = vadd.f32 %v3958, %v3959
      %v3961 = vsel %vm361, %v3942, 0.0
      %v3962 = vadd.f32 %v3960, %v3961
      %v3963 = vsel %vm361, %v3943, 0.0
      %v3964 = vadd.f32 %v3962, %v3963
      %v3965 = vsel %vm361, %v3944, 0.0
      %v3966 = vadd.f32 %v3964, %v3965
      %v3967 = vsel %vm361, %v3945, 0.0
      %v3968 = vadd.f32 %v3966, %v3967
      %v3969 = vsel %vm361, %v3946, 0.0
      %v3970 = vadd.f32 %v3968, %v3969
      %v3971 = vsel %vm378, %v3947, 0.0
      %v3972 = vadd.f32 %v3970, %v3971
      %v3973 = vrot.slane %v3972, 4
      %v3974 = vadd.f32 %v3972, %v3973
      %v3975 = vrot.slane %v3974, 2
      %v3976 = vadd.f32 %v3974, %v3975
      %v3977 = vrot.slane %v3976, 1
      %v3978 = vadd.f32 %v3976, %v3977
      %v3980 = vsel %vm361, %v3978, 0
      %3982 = vmatprep.subr.mxu0 0.0
      %3983 = vmatpush1.msra.mxu0 0.0
      %3984 = vmatprep.subr.mxu0 0.0
      %3985 = vmatpush1.msra.mxu0 0.0
      %3986 = vmatprep.subr.mxu0 0.0
      %3987 = vmatpush1.msra.mxu0 0.0
      %3988 = vmatprep.subr.mxu0 0.0
      %3989 = vmatpush1.msra.mxu0 0.0
      %3990 = vmatprep.subr.mxu0 0.0
      %3991 = vmatpush1.msra.mxu0 0.0
      %3992 = vmatprep.subr.mxu0 0.0
      %3993 = vmatpush1.msra.mxu0 0.0
      %3994 = vmatprep.subr.mxu0 0.0
      %3995 = vmatpush1.msra.mxu0 0.0
      %3996 = vmatprep.subr.mxu0 0.0
      %3997 = vmatpush1.msra.mxu0 0.0
      %3998 = vmatprep.subr.mxu0 0.0
      %3999 = vmatpush1.msra.mxu0 %v501
      %4000 = vmatprep.subr.mxu0 0.0
      %4001 = vmatpush1.msra.mxu0 %v500
      %4002 = vmatprep.subr.mxu0 0.0
      %4003 = vmatpush1.msra.mxu0 %v499
      %4004 = vmatprep.subr.mxu0 0.0
      %4005 = vmatpush1.msra.mxu0 %v498
      %4006 = vmatprep.subr.mxu0 0.0
      %4007 = vmatpush1.msra.mxu0 %v497
      %4008 = vmatprep.subr.mxu0 0.0
      %4009 = vmatpush1.msra.mxu0 %v496
      %4010 = vmatprep.subr.mxu0 0.0
      %4011 = vmatpush1.msra.mxu0 %v495
      %4012 = vmatprep.subr.mxu0 0.0
      %4013 = vmatpush1.msra.mxu0 %v494
      %4014 = vmatprep.subr.mxu0 0.0
      %4015 = vmatpush2.msra.mxu0 0.0
      %4016 = vmatprep.subr.mxu0 0.0
      %4017 = vmatpush2.msra.mxu0 0.0
      %4018 = vmatprep.subr.mxu0 0.0
      %4019 = vmatpush2.msra.mxu0 0.0
      %4020 = vmatprep.subr.mxu0 0.0
      %4021 = vmatpush2.msra.mxu0 0.0
      %4022 = vmatprep.subr.mxu0 0.0
      %4023 = vmatpush2.msra.mxu0 0.0
      %4024 = vmatprep.subr.mxu0 0.0
      %4025 = vmatpush2.msra.mxu0 0.0
      %4026 = vmatprep.subr.mxu0 0.0
      %4027 = vmatpush2.msra.mxu0 0.0
      %4028 = vmatprep.subr.mxu0 0.0
      %4029 = vmatpush2.msra.mxu0 0.0
      %4030 = vmatprep.subr.mxu0 0.0
      %4031 = vmatpush2.msra.mxu0 0.0
      %4032 = vmatprep.subr.mxu0 0.0
      %4033 = vmatpush2.msra.mxu0 0.0
      %4034 = vmatprep.subr.mxu0 0.0
      %4035 = vmatpush2.msra.mxu0 0.0
      %4036 = vmatprep.subr.mxu0 0.0
      %4037 = vmatpush2.msra.mxu0 0.0
      %4038 = vmatprep.subr.mxu0 0.0
      %4039 = vmatpush2.msra.mxu0 0.0
      %4040 = vmatprep.subr.mxu0 0.0
      %4041 = vmatpush2.msra.mxu0 0.0
      %4042 = vmatprep.subr.mxu0 0.0
      %4043 = vmatpush2.msra.mxu0 0.0
      %4044 = vmatprep.subr.mxu0 0.0
      %4045 = vmatpush2.msra.mxu0 0.0
      %4046 = vmatprep.mubr.f32.mxu0 0.0
      %4047 = vmatmul.mubr.f32.gmra.mxu0 %v3980
      %v4048 = vpop.f32.mrf.mxu0
      %v4049 = vadd.f32 0.0, %v4048
      %v4050 = vpop.f32.mrf.mxu0
      %4051 = vdwg.mxu0
      %v4052 = vmul.f32 %v4049, %v1549
      %v4054 = vsel %vm1551, %v4052, 0
      %4056 = vmatprep.subr.mxu0 0.0
      %4057 = vmatpush1.msra.mxu0 0.0
      %4058 = vmatprep.subr.mxu0 0.0
      %4059 = vmatpush1.msra.mxu0 0.0
      %4060 = vmatprep.subr.mxu0 0.0
      %4061 = vmatpush1.msra.mxu0 0.0
      %4062 = vmatprep.subr.mxu0 0.0
      %4063 = vmatpush1.msra.mxu0 0.0
      %4064 = vmatprep.subr.mxu0 0.0
      %4065 = vmatpush1.msra.mxu0 0.0
      %4066 = vmatprep.subr.mxu0 0.0
      %4067 = vmatpush1.msra.mxu0 0.0
      %4068 = vmatprep.subr.mxu0 0.0
      %4069 = vmatpush1.msra.mxu0 0.0
      %4070 = vmatprep.subr.mxu0 0.0
      %4071 = vmatpush1.msra.mxu0 0.0
      %4072 = vmatprep.subr.mxu0 0.0
      %4073 = vmatpush1.msra.mxu0 0.0
      %4074 = vmatprep.subr.mxu0 0.0
      %4075 = vmatpush1.msra.mxu0 0.0
      %4076 = vmatprep.subr.mxu0 0.0
      %4077 = vmatpush1.msra.mxu0 0.0
      %4078 = vmatprep.subr.mxu0 0.0
      %4079 = vmatpush1.msra.mxu0 0.0
      %4080 = vmatprep.subr.mxu0 0.0
      %4081 = vmatpush1.msra.mxu0 %v505
      %4082 = vmatprep.subr.mxu0 0.0
      %4083 = vmatpush1.msra.mxu0 %v504
      %4084 = vmatprep.subr.mxu0 0.0
      %4085 = vmatpush1.msra.mxu0 %v503
      %4086 = vmatprep.subr.mxu0 0.0
      %4087 = vmatpush1.msra.mxu0 %v502
      %4088 = vmatprep.subr.mxu0 0.0
      %4089 = vmatpush2.msra.mxu0 0.0
      %4090 = vmatprep.subr.mxu0 0.0
      %4091 = vmatpush2.msra.mxu0 0.0
      %4092 = vmatprep.subr.mxu0 0.0
      %4093 = vmatpush2.msra.mxu0 0.0
      %4094 = vmatprep.subr.mxu0 0.0
      %4095 = vmatpush2.msra.mxu0 0.0
      %4096 = vmatprep.subr.mxu0 0.0
      %4097 = vmatpush2.msra.mxu0 0.0
      %4098 = vmatprep.subr.mxu0 0.0
      %4099 = vmatpush2.msra.mxu0 0.0
      %4100 = vmatprep.subr.mxu0 0.0
      %4101 = vmatpush2.msra.mxu0 0.0
      %4102 = vmatprep.subr.mxu0 0.0
      %4103 = vmatpush2.msra.mxu0 0.0
      %4104 = vmatprep.subr.mxu0 0.0
      %4105 = vmatpush2.msra.mxu0 0.0
      %4106 = vmatprep.subr.mxu0 0.0
      %4107 = vmatpush2.msra.mxu0 0.0
      %4108 = vmatprep.subr.mxu0 0.0
      %4109 = vmatpush2.msra.mxu0 0.0
      %4110 = vmatprep.subr.mxu0 0.0
      %4111 = vmatpush2.msra.mxu0 0.0
      %4112 = vmatprep.subr.mxu0 0.0
      %4113 = vmatpush2.msra.mxu0 0.0
      %4114 = vmatprep.subr.mxu0 0.0
      %4115 = vmatpush2.msra.mxu0 0.0
      %4116 = vmatprep.subr.mxu0 0.0
      %4117 = vmatpush2.msra.mxu0 0.0
      %4118 = vmatprep.subr.mxu0 0.0
      %4119 = vmatpush2.msra.mxu0 0.0
      %4120 = vmatprep.mubr.f32.mxu0 0.0
      %4121 = vmatmul.mubr.f32.gmra.mxu0 %v4054
      %v4122 = vpop.f32.mrf.mxu0
      %v4123 = vadd.f32 1e-05, %v4122
      %v4124 = vpop.f32.mrf.mxu0
      %4125 = vdwg.mxu0
      %v4126 = vrsqrt.pop %v4123
      %v4127 = vlaneseq
      %v4128 = vshrl.u32 %v4127, 7
      %v4129 = vsub.s32 0, %v4128
      %v4130 = vrot.slane %v4126, %v4129
      %v4131 = vmul.f32 %v3922, %v4130
      %v4132 = vmul.f32 %v3923, %v4130
      %v4133 = vmul.f32 %v3924, %v4130
      %v4134 = vmul.f32 %v3925, %v4130
      %v4135 = vmul.f32 %v3926, %v4130
      %v4136 = vmul.f32 %v3927, %v4130
      %v4137 = vmul.f32 %v3928, %v4130
      %v4138 = vmul.f32 %v3929, %v4130
      %v4139 = vmul.f32 %v3930, %v4130
      %v4140 = vmul.f32 %v3931, %v4130
      %v4141 = vmul.f32 %v3932, %v4130
      %v4142 = vmul.f32 %v3933, %v4130
      %v4143 = vmul.f32 %v3934, %v4130
      %v4144 = vmul.f32 %v4131, %v1868
      %v4145 = vmul.f32 %v4132, %v1868
      %v4146 = vmul.f32 %v4133, %v1868
      %v4147 = vmul.f32 %v4134, %v1868
      %v4148 = vmul.f32 %v4135, %v1868
      %v4149 = vmul.f32 %v4136, %v1868
      %v4150 = vmul.f32 %v4137, %v1868
      %v4151 = vmul.f32 %v4138, %v1868
      %v4152 = vmul.f32 %v4139, %v1868
      %v4153 = vmul.f32 %v4140, %v1868
      %v4154 = vmul.f32 %v4141, %v1868
      %v4155 = vmul.f32 %v4142, %v1868
      %v4156 = vmul.f32 %v4143, %v1868
      %v4157 = vadd.f32 %v4144, %v1887
      %v4158 = vadd.f32 %v4145, %v1887
      %v4159 = vadd.f32 %v4146, %v1887
      %v4160 = vadd.f32 %v4147, %v1887
      %v4161 = vadd.f32 %v4148, %v1887
      %v4162 = vadd.f32 %v4149, %v1887
      %v4163 = vadd.f32 %v4150, %v1887
      %v4164 = vadd.f32 %v4151, %v1887
      %v4165 = vadd.f32 %v4152, %v1887
      %v4166 = vadd.f32 %v4153, %v1887
      %v4167 = vadd.f32 %v4154, %v1887
      %v4168 = vadd.f32 %v4155, %v1887
      %v4169 = vadd.f32 %v4156, %v1887
      %v4170 = vmax.f32 %v4157, 0.0
      %v4171 = vmax.f32 %v4158, 0.0
      %v4172 = vmax.f32 %v4159, 0.0
      %v4173 = vmax.f32 %v4160, 0.0
      %v4174 = vmax.f32 %v4161, 0.0
      %v4175 = vmax.f32 %v4162, 0.0
      %v4176 = vmax.f32 %v4163, 0.0
      %v4177 = vmax.f32 %v4164, 0.0
      %v4178 = vmax.f32 %v4165, 0.0
      %v4179 = vmax.f32 %v4166, 0.0
      %v4180 = vmax.f32 %v4167, 0.0
      %v4181 = vmax.f32 %v4168, 0.0
      %v4182 = vmax.f32 %v4169, 0.0
      %v4183 = vmul.f32 %v4170, %v1370
      %v4184 = vmul.f32 %v4171, %v1375
      %v4185 = vmul.f32 %v4172, %v1380
      %v4186 = vmul.f32 %v4173, %v1385
      %v4187 = vmul.f32 %v4174, %v1390
      %v4188 = vmul.f32 %v4175, %v1395
      %v4189 = vmul.f32 %v4176, %v1400
      %v4190 = vmul.f32 %v4177, %v1405
      %v4191 = vmul.f32 %v4178, %v1410
      %v4192 = vmul.f32 %v4179, %v1415
      %v4193 = vmul.f32 %v4180, %v1420
      %v4194 = vmul.f32 %v4181, %v1425
      %v4195 = vmul.f32 %v4182, %v1430
      %4196 = vst.msk [vmem:[#allocation2 + $0x10] sm:$0xff] %vm361, %v4183
      %4197 = vst.msk [vmem:[#allocation2 + $0x18] sm:$0xff] %vm361, %v4184
      %4198 = vst.msk [vmem:[#allocation2 + $0x20] sm:$0xff] %vm361, %v4185
      %4199 = vst.msk [vmem:[#allocation2 + $0x28] sm:$0xff] %vm361, %v4186
      %4200 = vst.msk [vmem:[#allocation2 + $0x30] sm:$0xff] %vm361, %v4187
      %4201 = vst.msk [vmem:[#allocation2 + $0x38] sm:$0xff] %vm361, %v4188
      %4202 = vst.msk [vmem:[#allocation2 + $0x40] sm:$0xff] %vm361, %v4189
      %4203 = vst.msk [vmem:[#allocation2 + $0x48] sm:$0xff] %vm361, %v4190
      %4204 = vst.msk [vmem:[#allocation2 + $0x50] sm:$0xff] %vm361, %v4191
      %4205 = vst.msk [vmem:[#allocation2 + $0x58] sm:$0xff] %vm361, %v4192
      %4206 = vst.msk [vmem:[#allocation2 + $0x60] sm:$0xff] %vm361, %v4193
      %4207 = vst.msk [vmem:[#allocation2 + $0x68] sm:$0xff] %vm361, %v4194
      %4208 = vst.msk [vmem:[#allocation2 + $0x70] sm:$0xf] %vm378, %v4195
      %v4209 = vld [vmem:[#allocation2 + $0x5] sm:$0xff]
      %v4210 = vld [vmem:[#allocation2 + $0xd] sm:$0xff]
      %v4211 = vld [vmem:[#allocation2 + $0x15] sm:$0xff]
      %v4212 = vld [vmem:[#allocation2 + $0x1d] sm:$0xff]
      %v4213 = vld [vmem:[#allocation2 + $0x25] sm:$0xff]
      %v4214 = vld [vmem:[#allocation2 + $0x2d] sm:$0xff]
      %v4215 = vld [vmem:[#allocation2 + $0x35] sm:$0xff]
      %v4216 = vld [vmem:[#allocation2 + $0x3d] sm:$0xff]
      %v4217 = vld [vmem:[#allocation2 + $0x45] sm:$0xff]
      %v4218 = vld [vmem:[#allocation2 + $0x4d] sm:$0xff]
      %v4219 = vld [vmem:[#allocation2 + $0x55] sm:$0xff]
      %v4220 = vld [vmem:[#allocation2 + $0x5d] sm:$0xff]
      %v4221 = vld [vmem:[#allocation2 + $0x65] sm:$0xf]
      %v4222 = vpack.c.bf16 %v4210, %v4209
      %v4223 = vpack.c.bf16 %v4212, %v4211
      %v4224 = vpack.c.bf16 %v4214, %v4213
      %v4225 = vpack.c.bf16 %v4216, %v4215
      %v4226 = vpack.c.bf16 %v4218, %v4217
      %v4227 = vpack.c.bf16 %v4220, %v4219
      %v4228 = vpack.c.bf16 %v4221, %v4221
      %v4229 = vld [vmem:[#allocation2 + $0x6] sm:$0xff]
      %v4230 = vld [vmem:[#allocation2 + $0xe] sm:$0xff]
      %v4231 = vld [vmem:[#allocation2 + $0x16] sm:$0xff]
      %v4232 = vld [vmem:[#allocation2 + $0x1e] sm:$0xff]
      %v4233 = vld [vmem:[#allocation2 + $0x26] sm:$0xff]
      %v4234 = vld [vmem:[#allocation2 + $0x2e] sm:$0xff]
      %v4235 = vld [vmem:[#allocation2 + $0x36] sm:$0xff]
      %v4236 = vld [vmem:[#allocation2 + $0x3e] sm:$0xff]
      %v4237 = vld [vmem:[#allocation2 + $0x46] sm:$0xff]
      %v4238 = vld [vmem:[#allocation2 + $0x4e] sm:$0xff]
      %v4239 = vld [vmem:[#allocation2 + $0x56] sm:$0xff]
      %v4240 = vld [vmem:[#allocation2 + $0x5e] sm:$0xff]
      %v4241 = vld [vmem:[#allocation2 + $0x66] sm:$0xf]
      %v4242 = vpack.c.bf16 %v4230, %v4229
      %v4243 = vpack.c.bf16 %v4232, %v4231
      %v4244 = vpack.c.bf16 %v4234, %v4233
      %v4245 = vpack.c.bf16 %v4236, %v4235
      %v4246 = vpack.c.bf16 %v4238, %v4237
      %v4247 = vpack.c.bf16 %v4240, %v4239
      %v4248 = vpack.c.bf16 %v4241, %v4241
      %v4249 = vld [vmem:[#allocation2 + $0x7] sm:$0xff]
      %v4250 = vld [vmem:[#allocation2 + $0xf] sm:$0xff]
      %v4251 = vld [vmem:[#allocation2 + $0x17] sm:$0xff]
      %v4252 = vld [vmem:[#allocation2 + $0x1f] sm:$0xff]
      %v4253 = vld [vmem:[#allocation2 + $0x27] sm:$0xff]
      %v4254 = vld [vmem:[#allocation2 + $0x2f] sm:$0xff]
      %v4255 = vld [vmem:[#allocation2 + $0x37] sm:$0xff]
      %v4256 = vld [vmem:[#allocation2 + $0x3f] sm:$0xff]
      %v4257 = vld [vmem:[#allocation2 + $0x47] sm:$0xff]
      %v4258 = vld [vmem:[#allocation2 + $0x4f] sm:$0xff]
      %v4259 = vld [vmem:[#allocation2 + $0x57] sm:$0xff]
      %v4260 = vld [vmem:[#allocation2 + $0x5f] sm:$0xff]
      %v4261 = vld [vmem:[#allocation2 + $0x67] sm:$0xf]
      %v4262 = vpack.c.bf16 %v4250, %v4249
      %v4263 = vpack.c.bf16 %v4252, %v4251
      %v4264 = vpack.c.bf16 %v4254, %v4253
      %v4265 = vpack.c.bf16 %v4256, %v4255
      %v4266 = vpack.c.bf16 %v4258, %v4257
      %v4267 = vpack.c.bf16 %v4260, %v4259
      %v4268 = vpack.c.bf16 %v4261, %v4261
      %v4269 = vld [vmem:[#allocation2 + $0x67] sm:$0xff]
      %v4270 = vld [vmem:[#allocation2 + $0x6f] sm:$0xf]
      %v4271 = vpack.c.bf16 %v4251, %v4250
      %v4272 = vpack.c.bf16 %v4253, %v4252
      %v4273 = vpack.c.bf16 %v4255, %v4254
      %v4274 = vpack.c.bf16 %v4257, %v4256
      %v4275 = vpack.c.bf16 %v4259, %v4258
      %v4276 = vpack.c.bf16 %v4269, %v4260
      %v4277 = vpack.c.bf16 %v4270, %v4270
      %v4278 = vld [vmem:[#allocation2 + $0x10] sm:$0xff]
      %v4279 = vld [vmem:[#allocation2 + $0x18] sm:$0xff]
      %v4280 = vld [vmem:[#allocation2 + $0x20] sm:$0xff]
      %v4281 = vld [vmem:[#allocation2 + $0x28] sm:$0xff]
      %v4282 = vld [vmem:[#allocation2 + $0x30] sm:$0xff]
      %v4283 = vld [vmem:[#allocation2 + $0x38] sm:$0xff]
      %v4284 = vld [vmem:[#allocation2 + $0x40] sm:$0xff]
      %v4285 = vld [vmem:[#allocation2 + $0x48] sm:$0xff]
      %v4286 = vld [vmem:[#allocation2 + $0x50] sm:$0xff]
      %v4287 = vld [vmem:[#allocation2 + $0x58] sm:$0xff]
      %v4288 = vld [vmem:[#allocation2 + $0x60] sm:$0xff]
      %v4289 = vld [vmem:[#allocation2 + $0x68] sm:$0xff]
      %v4290 = vld [vmem:[#allocation2 + $0x70] sm:$0xf]
      %v4291 = vpack.c.bf16 %v4279, %v4278
      %v4292 = vpack.c.bf16 %v4281, %v4280
      %v4293 = vpack.c.bf16 %v4283, %v4282
      %v4294 = vpack.c.bf16 %v4285, %v4284
      %v4295 = vpack.c.bf16 %v4287, %v4286
      %v4296 = vpack.c.bf16 %v4289, %v4288
      %v4297 = vpack.c.bf16 %v4290, %v4290
      %v4298 = vld [vmem:[#allocation2 + $0x11] sm:$0xff]
      %v4299 = vld [vmem:[#allocation2 + $0x19] sm:$0xff]
      %v4300 = vld [vmem:[#allocation2 + $0x21] sm:$0xff]
      %v4301 = vld [vmem:[#allocation2 + $0x29] sm:$0xff]
      %v4302 = vld [vmem:[#allocation2 + $0x31] sm:$0xff]
      %v4303 = vld [vmem:[#allocation2 + $0x39] sm:$0xff]
      %v4304 = vld [vmem:[#allocation2 + $0x41] sm:$0xff]
      %v4305 = vld [vmem:[#allocation2 + $0x49] sm:$0xff]
      %v4306 = vld [vmem:[#allocation2 + $0x51] sm:$0xff]
      %v4307 = vld [vmem:[#allocation2 + $0x59] sm:$0xff]
      %v4308 = vld [vmem:[#allocation2 + $0x61] sm:$0xff]
      %v4309 = vld [vmem:[#allocation2 + $0x69] sm:$0xff]
      %v4310 = vld [vmem:[#allocation2 + $0x71] sm:$0xf]
      %v4311 = vpack.c.bf16 %v4299, %v4298
      %v4312 = vpack.c.bf16 %v4301, %v4300
      %v4313 = vpack.c.bf16 %v4303, %v4302
      %v4314 = vpack.c.bf16 %v4305, %v4304
      %v4315 = vpack.c.bf16 %v4307, %v4306
      %v4316 = vpack.c.bf16 %v4309, %v4308
      %v4317 = vpack.c.bf16 %v4310, %v4310
      %v4318 = vld [vmem:[#allocation2 + $0x71] sm:$0xff]
      %v4319 = vld [vmem:[#allocation2 + $0x79] sm:$0xf]
      %v4320 = vpack.c.bf16 %v4300, %v4299
      %v4321 = vpack.c.bf16 %v4302, %v4301
      %v4322 = vpack.c.bf16 %v4304, %v4303
      %v4323 = vpack.c.bf16 %v4306, %v4305
      %v4324 = vpack.c.bf16 %v4308, %v4307
      %v4325 = vpack.c.bf16 %v4318, %v4309
      %v4326 = vpack.c.bf16 %v4319, %v4319
      %v4327 = vld [vmem:[#allocation2 + $0x1a] sm:$0xff]
      %v4328 = vld [vmem:[#allocation2 + $0x22] sm:$0xff]
      %v4329 = vld [vmem:[#allocation2 + $0x2a] sm:$0xff]
      %v4330 = vld [vmem:[#allocation2 + $0x32] sm:$0xff]
      %v4331 = vld [vmem:[#allocation2 + $0x3a] sm:$0xff]
      %v4332 = vld [vmem:[#allocation2 + $0x42] sm:$0xff]
      %v4333 = vld [vmem:[#allocation2 + $0x4a] sm:$0xff]
      %v4334 = vld [vmem:[#allocation2 + $0x52] sm:$0xff]
      %v4335 = vld [vmem:[#allocation2 + $0x5a] sm:$0xff]
      %v4336 = vld [vmem:[#allocation2 + $0x62] sm:$0xff]
      %v4337 = vld [vmem:[#allocation2 + $0x6a] sm:$0xff]
      %v4338 = vld [vmem:[#allocation2 + $0x72] sm:$0xff]
      %v4339 = vld [vmem:[#allocation2 + $0x7a] sm:$0xf]
      %v4340 = vpack.c.bf16 %v4328, %v4327
      %v4341 = vpack.c.bf16 %v4330, %v4329
      %v4342 = vpack.c.bf16 %v4332, %v4331
      %v4343 = vpack.c.bf16 %v4334, %v4333
      %v4344 = vpack.c.bf16 %v4336, %v4335
      %v4345 = vpack.c.bf16 %v4338, %v4337
      %v4346 = vpack.c.bf16 %v4339, %v4339
      %v4347 = vld [vmem:[#allocation2 + $0x1b] sm:$0xff]
      %v4348 = vld [vmem:[#allocation2 + $0x23] sm:$0xff]
      %v4349 = vld [vmem:[#allocation2 + $0x2b] sm:$0xff]
      %v4350 = vld [vmem:[#allocation2 + $0x33] sm:$0xff]
      %v4351 = vld [vmem:[#allocation2 + $0x3b] sm:$0xff]
      %v4352 = vld [vmem:[#allocation2 + $0x43] sm:$0xff]
      %v4353 = vld [vmem:[#allocation2 + $0x4b] sm:$0xff]
      %v4354 = vld [vmem:[#allocation2 + $0x53] sm:$0xff]
      %v4355 = vld [vmem:[#allocation2 + $0x5b] sm:$0xff]
      %v4356 = vld [vmem:[#allocation2 + $0x63] sm:$0xff]
      %v4357 = vld [vmem:[#allocation2 + $0x6b] sm:$0xff]
      %v4358 = vld [vmem:[#allocation2 + $0x73] sm:$0xff]
      %v4359 = vld [vmem:[#allocation2 + $0x7b] sm:$0xf]
      %v4360 = vpack.c.bf16 %v4348, %v4347
      %v4361 = vpack.c.bf16 %v4350, %v4349
      %v4362 = vpack.c.bf16 %v4352, %v4351
      %v4363 = vpack.c.bf16 %v4354, %v4353
      %v4364 = vpack.c.bf16 %v4356, %v4355
      %v4365 = vpack.c.bf16 %v4358, %v4357
      %v4366 = vpack.c.bf16 %v4359, %v4359
      %4374 = vrot.lane.b32.xlu0 %v4242, 64
      %v4375 = vpop.permute.xlu0 %4374
      %4376 = vrot.lane.b32.xlu0 %v4243, 64
      %v4377 = vpop.permute.xlu0 %4376
      %4378 = vrot.lane.b32.xlu0 %v4244, 64
      %v4379 = vpop.permute.xlu0 %4378
      %4380 = vrot.lane.b32.xlu0 %v4245, 64
      %v4381 = vpop.permute.xlu0 %4380
      %4382 = vrot.lane.b32.xlu0 %v4246, 64
      %v4383 = vpop.permute.xlu0 %4382
      %4384 = vrot.lane.b32.xlu0 %v4247, 64
      %v4385 = vpop.permute.xlu0 %4384
      %4386 = vrot.lane.b32.xlu0 %v4248, 64
      %v4387 = vpop.permute.xlu0 %4386
      %4395 = vrot.lane.b32.xlu0 %v4271, 64
      %v4396 = vpop.permute.xlu0 %4395
      %4397 = vrot.lane.b32.xlu0 %v4272, 64
      %v4398 = vpop.permute.xlu0 %4397
      %4399 = vrot.lane.b32.xlu0 %v4273, 64
      %v4400 = vpop.permute.xlu0 %4399
      %4401 = vrot.lane.b32.xlu0 %v4274, 64
      %v4402 = vpop.permute.xlu0 %4401
      %4403 = vrot.lane.b32.xlu0 %v4275, 64
      %v4404 = vpop.permute.xlu0 %4403
      %4405 = vrot.lane.b32.xlu0 %v4276, 64
      %v4406 = vpop.permute.xlu0 %4405
      %4407 = vrot.lane.b32.xlu0 %v4277, 64
      %v4408 = vpop.permute.xlu0 %4407
      %4416 = vrot.lane.b32.xlu0 %v4311, 64
      %v4417 = vpop.permute.xlu0 %4416
      %4418 = vrot.lane.b32.xlu0 %v4312, 64
      %v4419 = vpop.permute.xlu0 %4418
      %4420 = vrot.lane.b32.xlu0 %v4313, 64
      %v4421 = vpop.permute.xlu0 %4420
      %4422 = vrot.lane.b32.xlu0 %v4314, 64
      %v4423 = vpop.permute.xlu0 %4422
      %4424 = vrot.lane.b32.xlu0 %v4315, 64
      %v4425 = vpop.permute.xlu0 %4424
      %4426 = vrot.lane.b32.xlu0 %v4316, 64
      %v4427 = vpop.permute.xlu0 %4426
      %4428 = vrot.lane.b32.xlu0 %v4317, 64
      %v4429 = vpop.permute.xlu0 %4428
      %4437 = vrot.lane.b32.xlu0 %v4340, 64
      %v4438 = vpop.permute.xlu0 %4437
      %4439 = vrot.lane.b32.xlu0 %v4341, 64
      %v4440 = vpop.permute.xlu0 %4439
      %4441 = vrot.lane.b32.xlu0 %v4342, 64
      %v4442 = vpop.permute.xlu0 %4441
      %4443 = vrot.lane.b32.xlu0 %v4343, 64
      %v4444 = vpop.permute.xlu0 %4443
      %4445 = vrot.lane.b32.xlu0 %v4344, 64
      %v4446 = vpop.permute.xlu0 %4445
      %4447 = vrot.lane.b32.xlu0 %v4345, 64
      %v4448 = vpop.permute.xlu0 %4447
      %4449 = vrot.lane.b32.xlu0 %v4346, 64
      %v4450 = vpop.permute.xlu0 %4449
      %v4453 = vsel %vm361, %v4222, %v4375
      %v4457 = vsel %vm361, %v4223, %v4377
      %v4461 = vsel %vm361, %v4224, %v4379
      %v4465 = vsel %vm361, %v4225, %v4381
      %v4469 = vsel %vm361, %v4226, %v4383
      %v4473 = vsel %vm361, %v4227, %v4385
      %v4477 = vsel %vm361, %v4228, %v4387
      %v4481 = vsel %vm361, %v4262, %v4396
      %v4485 = vsel %vm361, %v4263, %v4398
      %v4489 = vsel %vm361, %v4264, %v4400
      %v4493 = vsel %vm361, %v4265, %v4402
      %v4497 = vsel %vm361, %v4266, %v4404
      %v4501 = vsel %vm361, %v4267, %v4406
      %v4505 = vsel %vm361, %v4268, %v4408
      %v4509 = vsel %vm361, %v4291, %v4417
      %v4513 = vsel %vm361, %v4292, %v4419
      %v4517 = vsel %vm361, %v4293, %v4421
      %v4521 = vsel %vm361, %v4294, %v4423
      %v4525 = vsel %vm361, %v4295, %v4425
      %v4529 = vsel %vm361, %v4296, %v4427
      %v4533 = vsel %vm361, %v4297, %v4429
      %v4537 = vsel %vm361, %v4320, %v4438
      %v4541 = vsel %vm361, %v4321, %v4440
      %v4545 = vsel %vm361, %v4322, %v4442
      %v4549 = vsel %vm361, %v4323, %v4444
      %v4553 = vsel %vm361, %v4324, %v4446
      %v4557 = vsel %vm361, %v4325, %v4448
      %v4561 = vsel %vm361, %v4326, %v4450
      %v4564 = vsel %vm361, %v4360, 0
      %v4567 = vsel %vm361, %v4361, 0
      %v4570 = vsel %vm361, %v4362, 0
      %v4573 = vsel %vm361, %v4363, 0
      %v4576 = vsel %vm361, %v4364, 0
      %v4579 = vsel %vm361, %v4365, 0
      %v4582 = vsel %vm361, %v4366, 0
      %4584 = vmatprep.subr.bf16.mxu0 0
      %4585 = vmatpush1.bf16.msra.mxu0 %v1017
      %4586 = vmatprep.subr.bf16.mxu0 0
      %4587 = vmatpush1.bf16.msra.mxu0 %v1016
      %4588 = vmatprep.subr.bf16.mxu0 0
      %4589 = vmatpush1.bf16.msra.mxu0 %v1015
      %4590 = vmatprep.subr.bf16.mxu0 0
      %4591 = vmatpush1.bf16.msra.mxu0 %v1014
      %4592 = vmatprep.subr.bf16.mxu0 0
      %4593 = vmatpush1.bf16.msra.mxu0 %v1013
      %4594 = vmatprep.subr.bf16.mxu0 0
      %4595 = vmatpush1.bf16.msra.mxu0 %v1012
      %4596 = vmatprep.subr.bf16.mxu0 0
      %4597 = vmatpush1.bf16.msra.mxu0 %v1011
      %4598 = vmatprep.subr.bf16.mxu0 0
      %4599 = vmatpush1.bf16.msra.mxu0 %v1010
      %4600 = vmatprep.subr.bf16.mxu0 0
      %4601 = vmatpush2.bf16.msra.mxu0 %v1025
      %4602 = vmatprep.subr.bf16.mxu0 0
      %4603 = vmatpush2.bf16.msra.mxu0 %v1024
      %4604 = vmatprep.subr.bf16.mxu0 0
      %4605 = vmatpush2.bf16.msra.mxu0 %v1023
      %4606 = vmatprep.subr.bf16.mxu0 0
      %4607 = vmatpush2.bf16.msra.mxu0 %v1022
      %4608 = vmatprep.subr.bf16.mxu0 0
      %4609 = vmatpush2.bf16.msra.mxu0 %v1021
      %4610 = vmatprep.subr.bf16.mxu0 0
      %4611 = vmatpush2.bf16.msra.mxu0 %v1020
      %4612 = vmatprep.subr.bf16.mxu0 0
      %4613 = vmatpush2.bf16.msra.mxu0 %v1019
      %4614 = vmatprep.subr.bf16.mxu0 0
      %4615 = vmatpush2.bf16.msra.mxu0 %v1018
      %4616 = vmatprep.mubr.bf16.mxu0 %v4481
      %4617 = vmatmul.mubr.bf16.gmra.mxu0 %v4453
      %v4618 = vpop.f32.mrf.mxu0
      %v4619 = vadd.f32 %v864, %v4618
      %v4620 = vpop.f32.mrf.mxu0
      %v4621 = vpop.f32.mrf.mxu0
      %v4622 = vadd.f32 %v864, %v4621
      %v4623 = vpop.f32.mrf.mxu0
      %4624 = vmatprep.mubr.bf16.mxu0 %v4485
      %4625 = vmatmul.mubr.bf16.gmra.mxu0 %v4457
      %v4626 = vpop.f32.mrf.mxu0
      %v4627 = vadd.f32 %v864, %v4626
      %v4628 = vpop.f32.mrf.mxu0
      %v4629 = vpop.f32.mrf.mxu0
      %v4630 = vadd.f32 %v864, %v4629
      %v4631 = vpop.f32.mrf.mxu0
      %4632 = vmatprep.mubr.bf16.mxu0 %v4489
      %4633 = vmatmul.mubr.bf16.gmra.mxu0 %v4461
      %v4634 = vpop.f32.mrf.mxu0
      %v4635 = vadd.f32 %v864, %v4634
      %v4636 = vpop.f32.mrf.mxu0
      %v4637 = vpop.f32.mrf.mxu0
      %v4638 = vadd.f32 %v864, %v4637
      %v4639 = vpop.f32.mrf.mxu0
      %4640 = vmatprep.mubr.bf16.mxu0 %v4493
      %4641 = vmatmul.mubr.bf16.gmra.mxu0 %v4465
      %v4642 = vpop.f32.mrf.mxu0
      %v4643 = vadd.f32 %v864, %v4642
      %v4644 = vpop.f32.mrf.mxu0
      %v4645 = vpop.f32.mrf.mxu0
      %v4646 = vadd.f32 %v864, %v4645
      %v4647 = vpop.f32.mrf.mxu0
      %4648 = vmatprep.mubr.bf16.mxu0 %v4497
      %4649 = vmatmul.mubr.bf16.gmra.mxu0 %v4469
      %v4650 = vpop.f32.mrf.mxu0
      %v4651 = vadd.f32 %v864, %v4650
      %v4652 = vpop.f32.mrf.mxu0
      %v4653 = vpop.f32.mrf.mxu0
      %v4654 = vadd.f32 %v864, %v4653
      %v4655 = vpop.f32.mrf.mxu0
      %4656 = vmatprep.mubr.bf16.mxu0 %v4501
      %4657 = vmatmul.mubr.bf16.gmra.mxu0 %v4473
      %v4658 = vpop.f32.mrf.mxu0
      %v4659 = vadd.f32 %v864, %v4658
      %v4660 = vpop.f32.mrf.mxu0
      %v4661 = vpop.f32.mrf.mxu0
      %v4662 = vadd.f32 %v864, %v4661
      %v4663 = vpop.f32.mrf.mxu0
      %4664 = vmatprep.mubr.bf16.mxu0 %v4505
      %4665 = vmatmul.mubr.bf16.gmra.mxu0 %v4477
      %v4666 = vpop.f32.mrf.mxu0
      %v4667 = vadd.f32 %v864, %v4666
      %v4668 = vpop.f32.mrf.mxu0
      %v4669 = vpop.f32.mrf.mxu0
      %v4670 = vpop.f32.mrf.mxu0
      %4671 = vdwg.mxu0
      %4672 = vmatprep.subr.bf16.mxu0 0
      %4673 = vmatpush1.bf16.msra.mxu0 %v1033
      %4674 = vmatprep.subr.bf16.mxu0 0
      %4675 = vmatpush1.bf16.msra.mxu0 %v1032
      %4676 = vmatprep.subr.bf16.mxu0 0
      %4677 = vmatpush1.bf16.msra.mxu0 %v1031
      %4678 = vmatprep.subr.bf16.mxu0 0
      %4679 = vmatpush1.bf16.msra.mxu0 %v1030
      %4680 = vmatprep.subr.bf16.mxu0 0
      %4681 = vmatpush1.bf16.msra.mxu0 %v1029
      %4682 = vmatprep.subr.bf16.mxu0 0
      %4683 = vmatpush1.bf16.msra.mxu0 %v1028
      %4684 = vmatprep.subr.bf16.mxu0 0
      %4685 = vmatpush1.bf16.msra.mxu0 %v1027
      %4686 = vmatprep.subr.bf16.mxu0 0
      %4687 = vmatpush1.bf16.msra.mxu0 %v1026
      %4688 = vmatprep.subr.bf16.mxu0 0
      %4689 = vmatpush2.bf16.msra.mxu0 %v1041
      %4690 = vmatprep.subr.bf16.mxu0 0
      %4691 = vmatpush2.bf16.msra.mxu0 %v1040
      %4692 = vmatprep.subr.bf16.mxu0 0
      %4693 = vmatpush2.bf16.msra.mxu0 %v1039
      %4694 = vmatprep.subr.bf16.mxu0 0
      %4695 = vmatpush2.bf16.msra.mxu0 %v1038
      %4696 = vmatprep.subr.bf16.mxu0 0
      %4697 = vmatpush2.bf16.msra.mxu0 %v1037
      %4698 = vmatprep.subr.bf16.mxu0 0
      %4699 = vmatpush2.bf16.msra.mxu0 %v1036
      %4700 = vmatprep.subr.bf16.mxu0 0
      %4701 = vmatpush2.bf16.msra.mxu0 %v1035
      %4702 = vmatprep.subr.bf16.mxu0 0
      %4703 = vmatpush2.bf16.msra.mxu0 %v1034
      %4704 = vmatprep.mubr.bf16.mxu0 %v4537
      %4705 = vmatmul.mubr.bf16.gmra.mxu0 %v4509
      %v4706 = vpop.f32.mrf.mxu0
      %v4707 = vadd.f32 %v4619, %v4706
      %v4708 = vpop.f32.mrf.mxu0
      %v4709 = vpop.f32.mrf.mxu0
      %v4710 = vadd.f32 %v4622, %v4709
      %v4711 = vpop.f32.mrf.mxu0
      %4712 = vmatprep.mubr.bf16.mxu0 %v4541
      %4713 = vmatmul.mubr.bf16.gmra.mxu0 %v4513
      %v4714 = vpop.f32.mrf.mxu0
      %v4715 = vadd.f32 %v4627, %v4714
      %v4716 = vpop.f32.mrf.mxu0
      %v4717 = vpop.f32.mrf.mxu0
      %v4718 = vadd.f32 %v4630, %v4717
      %v4719 = vpop.f32.mrf.mxu0
      %4720 = vmatprep.mubr.bf16.mxu0 %v4545
      %4721 = vmatmul.mubr.bf16.gmra.mxu0 %v4517
      %v4722 = vpop.f32.mrf.mxu0
      %v4723 = vadd.f32 %v4635, %v4722
      %v4724 = vpop.f32.mrf.mxu0
      %v4725 = vpop.f32.mrf.mxu0
      %v4726 = vadd.f32 %v4638, %v4725
      %v4727 = vpop.f32.mrf.mxu0
      %4728 = vmatprep.mubr.bf16.mxu0 %v4549
      %4729 = vmatmul.mubr.bf16.gmra.mxu0 %v4521
      %v4730 = vpop.f32.mrf.mxu0
      %v4731 = vadd.f32 %v4643, %v4730
      %v4732 = vpop.f32.mrf.mxu0
      %v4733 = vpop.f32.mrf.mxu0
      %v4734 = vadd.f32 %v4646, %v4733
      %v4735 = vpop.f32.mrf.mxu0
      %4736 = vmatprep.mubr.bf16.mxu0 %v4553
      %4737 = vmatmul.mubr.bf16.gmra.mxu0 %v4525
      %v4738 = vpop.f32.mrf.mxu0
      %v4739 = vadd.f32 %v4651, %v4738
      %v4740 = vpop.f32.mrf.mxu0
      %v4741 = vpop.f32.mrf.mxu0
      %v4742 = vadd.f32 %v4654, %v4741
      %v4743 = vpop.f32.mrf.mxu0
      %4744 = vmatprep.mubr.bf16.mxu0 %v4557
      %4745 = vmatmul.mubr.bf16.gmra.mxu0 %v4529
      %v4746 = vpop.f32.mrf.mxu0
      %v4747 = vadd.f32 %v4659, %v4746
      %v4748 = vpop.f32.mrf.mxu0
      %v4749 = vpop.f32.mrf.mxu0
      %v4750 = vadd.f32 %v4662, %v4749
      %v4751 = vpop.f32.mrf.mxu0
      %4752 = vmatprep.mubr.bf16.mxu0 %v4561
      %4753 = vmatmul.mubr.bf16.gmra.mxu0 %v4533
      %v4754 = vpop.f32.mrf.mxu0
      %v4755 = vadd.f32 %v4667, %v4754
      %v4756 = vpop.f32.mrf.mxu0
      %v4757 = vpop.f32.mrf.mxu0
      %v4758 = vpop.f32.mrf.mxu0
      %4759 = vdwg.mxu0
      %4760 = vmatprep.subr.bf16.mxu0 0
      %4761 = vmatpush1.bf16.msra.mxu0 0
      %4762 = vmatprep.subr.bf16.mxu0 0
      %4763 = vmatpush1.bf16.msra.mxu0 0
      %4764 = vmatprep.subr.bf16.mxu0 0
      %4765 = vmatpush1.bf16.msra.mxu0 0
      %4766 = vmatprep.subr.bf16.mxu0 0
      %4767 = vmatpush1.bf16.msra.mxu0 0
      %4768 = vmatprep.subr.bf16.mxu0 0
      %4769 = vmatpush1.bf16.msra.mxu0 %v1045
      %4770 = vmatprep.subr.bf16.mxu0 0
      %4771 = vmatpush1.bf16.msra.mxu0 %v1044
      %4772 = vmatprep.subr.bf16.mxu0 0
      %4773 = vmatpush1.bf16.msra.mxu0 %v1043
      %4774 = vmatprep.subr.bf16.mxu0 0
      %4775 = vmatpush1.bf16.msra.mxu0 %v1042
      %4776 = vmatprep.subr.bf16.mxu0 0
      %4777 = vmatpush2.bf16.msra.mxu0 0
      %4778 = vmatprep.subr.bf16.mxu0 0
      %4779 = vmatpush2.bf16.msra.mxu0 0
      %4780 = vmatprep.subr.bf16.mxu0 0
      %4781 = vmatpush2.bf16.msra.mxu0 0
      %4782 = vmatprep.subr.bf16.mxu0 0
      %4783 = vmatpush2.bf16.msra.mxu0 0
      %4784 = vmatprep.subr.bf16.mxu0 0
      %4785 = vmatpush2.bf16.msra.mxu0 0
      %4786 = vmatprep.subr.bf16.mxu0 0
      %4787 = vmatpush2.bf16.msra.mxu0 0
      %4788 = vmatprep.subr.bf16.mxu0 0
      %4789 = vmatpush2.bf16.msra.mxu0 0
      %4790 = vmatprep.subr.bf16.mxu0 0
      %4791 = vmatpush2.bf16.msra.mxu0 0
      %4792 = vmatprep.mubr.bf16.mxu0 0
      %4793 = vmatmul.mubr.bf16.gmra.mxu0 %v4564
      %v4794 = vpop.f32.mrf.mxu0
      %v4795 = vadd.f32 %v4707, %v4794
      %v4796 = vpop.f32.mrf.mxu0
      %v4797 = vpop.f32.mrf.mxu0
      %v4798 = vadd.f32 %v4710, %v4797
      %v4799 = vpop.f32.mrf.mxu0
      %4800 = vmatprep.mubr.bf16.mxu0 0
      %4801 = vmatmul.mubr.bf16.gmra.mxu0 %v4567
      %v4802 = vpop.f32.mrf.mxu0
      %v4803 = vadd.f32 %v4715, %v4802
      %v4804 = vpop.f32.mrf.mxu0
      %v4805 = vpop.f32.mrf.mxu0
      %v4806 = vadd.f32 %v4718, %v4805
      %v4807 = vpop.f32.mrf.mxu0
      %4808 = vmatprep.mubr.bf16.mxu0 0
      %4809 = vmatmul.mubr.bf16.gmra.mxu0 %v4570
      %v4810 = vpop.f32.mrf.mxu0
      %v4811 = vadd.f32 %v4723, %v4810
      %v4812 = vpop.f32.mrf.mxu0
      %v4813 = vpop.f32.mrf.mxu0
      %v4814 = vadd.f32 %v4726, %v4813
      %v4815 = vpop.f32.mrf.mxu0
      %4816 = vmatprep.mubr.bf16.mxu0 0
      %4817 = vmatmul.mubr.bf16.gmra.mxu0 %v4573
      %v4818 = vpop.f32.mrf.mxu0
      %v4819 = vadd.f32 %v4731, %v4818
      %v4820 = vpop.f32.mrf.mxu0
      %v4821 = vpop.f32.mrf.mxu0
      %v4822 = vadd.f32 %v4734, %v4821
      %v4823 = vpop.f32.mrf.mxu0
      %4824 = vmatprep.mubr.bf16.mxu0 0
      %4825 = vmatmul.mubr.bf16.gmra.mxu0 %v4576
      %v4826 = vpop.f32.mrf.mxu0
      %v4827 = vadd.f32 %v4739, %v4826
      %v4828 = vpop.f32.mrf.mxu0
      %v4829 = vpop.f32.mrf.mxu0
      %v4830 = vadd.f32 %v4742, %v4829
      %v4831 = vpop.f32.mrf.mxu0
      %4832 = vmatprep.mubr.bf16.mxu0 0
      %4833 = vmatmul.mubr.bf16.gmra.mxu0 %v4579
      %v4834 = vpop.f32.mrf.mxu0
      %v4835 = vadd.f32 %v4747, %v4834
      %v4836 = vpop.f32.mrf.mxu0
      %v4837 = vpop.f32.mrf.mxu0
      %v4838 = vadd.f32 %v4750, %v4837
      %v4839 = vpop.f32.mrf.mxu0
      %4840 = vmatprep.mubr.bf16.mxu0 0
      %4841 = vmatmul.mubr.bf16.gmra.mxu0 %v4582
      %v4842 = vpop.f32.mrf.mxu0
      %v4843 = vadd.f32 %v4755, %v4842
      %v4844 = vpop.f32.mrf.mxu0
      %v4845 = vpop.f32.mrf.mxu0
      %v4846 = vpop.f32.mrf.mxu0
      %4847 = vdwg.mxu0
      %v4848 = vmul.f32 %v4795, %v1370
      %v4849 = vmul.f32 %v4798, %v1375
      %v4850 = vmul.f32 %v4803, %v1380
      %v4851 = vmul.f32 %v4806, %v1385
      %v4852 = vmul.f32 %v4811, %v1390
      %v4853 = vmul.f32 %v4814, %v1395
      %v4854 = vmul.f32 %v4819, %v1400
      %v4855 = vmul.f32 %v4822, %v1405
      %v4856 = vmul.f32 %v4827, %v1410
      %v4857 = vmul.f32 %v4830, %v1415
      %v4858 = vmul.f32 %v4835, %v1420
      %v4859 = vmul.f32 %v4838, %v1425
      %v4860 = vmul.f32 %v4843, %v1430
      %v4861 = vsel %vm361, %v4848, 0.0
      %v4862 = vsel %vm361, %v4849, 0.0
      %v4863 = vadd.f32 %v4861, %v4862
      %v4864 = vsel %vm361, %v4850, 0.0
      %v4865 = vadd.f32 %v4863, %v4864
      %v4866 = vsel %vm361, %v4851, 0.0
      %v4867 = vadd.f32 %v4865, %v4866
      %v4868 = vsel %vm361, %v4852, 0.0
      %v4869 = vadd.f32 %v4867, %v4868
      %v4870 = vsel %vm361, %v4853, 0.0
      %v4871 = vadd.f32 %v4869, %v4870
      %v4872 = vsel %vm361, %v4854, 0.0
      %v4873 = vadd.f32 %v4871, %v4872
      %v4874 = vsel %vm361, %v4855, 0.0
      %v4875 = vadd.f32 %v4873, %v4874
      %v4876 = vsel %vm361, %v4856, 0.0
      %v4877 = vadd.f32 %v4875, %v4876
      %v4878 = vsel %vm361, %v4857, 0.0
      %v4879 = vadd.f32 %v4877, %v4878
      %v4880 = vsel %vm361, %v4858, 0.0
      %v4881 = vadd.f32 %v4879, %v4880
      %v4882 = vsel %vm361, %v4859, 0.0
      %v4883 = vadd.f32 %v4881, %v4882
      %v4884 = vsel %vm378, %v4860, 0.0
      %v4885 = vadd.f32 %v4883, %v4884
      %v4886 = vrot.slane %v4885, 4
      %v4887 = vadd.f32 %v4885, %v4886
      %v4888 = vrot.slane %v4887, 2
      %v4889 = vadd.f32 %v4887, %v4888
      %v4890 = vrot.slane %v4889, 1
      %v4891 = vadd.f32 %v4889, %v4890
      %v4893 = vsel %vm361, %v4891, 0
      %4895 = vmatprep.subr.mxu0 0.0
      %4896 = vmatpush1.msra.mxu0 0.0
      %4897 = vmatprep.subr.mxu0 0.0
      %4898 = vmatpush1.msra.mxu0 0.0
      %4899 = vmatprep.subr.mxu0 0.0
      %4900 = vmatpush1.msra.mxu0 0.0
      %4901 = vmatprep.subr.mxu0 0.0
      %4902 = vmatpush1.msra.mxu0 0.0
      %4903 = vmatprep.subr.mxu0 0.0
      %4904 = vmatpush1.msra.mxu0 0.0
      %4905 = vmatprep.subr.mxu0 0.0
      %4906 = vmatpush1.msra.mxu0 0.0
      %4907 = vmatprep.subr.mxu0 0.0
      %4908 = vmatpush1.msra.mxu0 0.0
      %4909 = vmatprep.subr.mxu0 0.0
      %4910 = vmatpush1.msra.mxu0 0.0
      %4911 = vmatprep.subr.mxu0 0.0
      %4912 = vmatpush1.msra.mxu0 %v501
      %4913 = vmatprep.subr.mxu0 0.0
      %4914 = vmatpush1.msra.mxu0 %v500
      %4915 = vmatprep.subr.mxu0 0.0
      %4916 = vmatpush1.msra.mxu0 %v499
      %4917 = vmatprep.subr.mxu0 0.0
      %4918 = vmatpush1.msra.mxu0 %v498
      %4919 = vmatprep.subr.mxu0 0.0
      %4920 = vmatpush1.msra.mxu0 %v497
      %4921 = vmatprep.subr.mxu0 0.0
      %4922 = vmatpush1.msra.mxu0 %v496
      %4923 = vmatprep.subr.mxu0 0.0
      %4924 = vmatpush1.msra.mxu0 %v495
      %4925 = vmatprep.subr.mxu0 0.0
      %4926 = vmatpush1.msra.mxu0 %v494
      %4927 = vmatprep.subr.mxu0 0.0
      %4928 = vmatpush2.msra.mxu0 0.0
      %4929 = vmatprep.subr.mxu0 0.0
      %4930 = vmatpush2.msra.mxu0 0.0
      %4931 = vmatprep.subr.mxu0 0.0
      %4932 = vmatpush2.msra.mxu0 0.0
      %4933 = vmatprep.subr.mxu0 0.0
      %4934 = vmatpush2.msra.mxu0 0.0
      %4935 = vmatprep.subr.mxu0 0.0
      %4936 = vmatpush2.msra.mxu0 0.0
      %4937 = vmatprep.subr.mxu0 0.0
      %4938 = vmatpush2.msra.mxu0 0.0
      %4939 = vmatprep.subr.mxu0 0.0
      %4940 = vmatpush2.msra.mxu0 0.0
      %4941 = vmatprep.subr.mxu0 0.0
      %4942 = vmatpush2.msra.mxu0 0.0
      %4943 = vmatprep.subr.mxu0 0.0
      %4944 = vmatpush2.msra.mxu0 0.0
      %4945 = vmatprep.subr.mxu0 0.0
      %4946 = vmatpush2.msra.mxu0 0.0
      %4947 = vmatprep.subr.mxu0 0.0
      %4948 = vmatpush2.msra.mxu0 0.0
      %4949 = vmatprep.subr.mxu0 0.0
      %4950 = vmatpush2.msra.mxu0 0.0
      %4951 = vmatprep.subr.mxu0 0.0
      %4952 = vmatpush2.msra.mxu0 0.0
      %4953 = vmatprep.subr.mxu0 0.0
      %4954 = vmatpush2.msra.mxu0 0.0
      %4955 = vmatprep.subr.mxu0 0.0
      %4956 = vmatpush2.msra.mxu0 0.0
      %4957 = vmatprep.subr.mxu0 0.0
      %4958 = vmatpush2.msra.mxu0 0.0
      %4959 = vmatprep.mubr.f32.mxu0 0.0
      %4960 = vmatmul.mubr.f32.gmra.mxu0 %v4893
      %v4961 = vpop.f32.mrf.mxu0
      %v4962 = vadd.f32 0.0, %v4961
      %v4963 = vpop.f32.mrf.mxu0
      %4964 = vdwg.mxu0
      %v4965 = vmul.f32 %v4962, %v1549
      %v4967 = vsel %vm1551, %v4965, 0
      %4969 = vmatprep.subr.mxu0 0.0
      %4970 = vmatpush1.msra.mxu0 0.0
      %4971 = vmatprep.subr.mxu0 0.0
      %4972 = vmatpush1.msra.mxu0 0.0
      %4973 = vmatprep.subr.mxu0 0.0
      %4974 = vmatpush1.msra.mxu0 0.0
      %4975 = vmatprep.subr.mxu0 0.0
      %4976 = vmatpush1.msra.mxu0 0.0
      %4977 = vmatprep.subr.mxu0 0.0
      %4978 = vmatpush1.msra.mxu0 0.0
      %4979 = vmatprep.subr.mxu0 0.0
      %4980 = vmatpush1.msra.mxu0 0.0
      %4981 = vmatprep.subr.mxu0 0.0
      %4982 = vmatpush1.msra.mxu0 0.0
      %4983 = vmatprep.subr.mxu0 0.0
      %4984 = vmatpush1.msra.mxu0 0.0
      %4985 = vmatprep.subr.mxu0 0.0
      %4986 = vmatpush1.msra.mxu0 0.0
      %4987 = vmatprep.subr.mxu0 0.0
      %4988 = vmatpush1.msra.mxu0 0.0
      %4989 = vmatprep.subr.mxu0 0.0
      %4990 = vmatpush1.msra.mxu0 0.0
      %4991 = vmatprep.subr.mxu0 0.0
      %4992 = vmatpush1.msra.mxu0 0.0
      %4993 = vmatprep.subr.mxu0 0.0
      %4994 = vmatpush1.msra.mxu0 %v505
      %4995 = vmatprep.subr.mxu0 0.0
      %4996 = vmatpush1.msra.mxu0 %v504
      %4997 = vmatprep.subr.mxu0 0.0
      %4998 = vmatpush1.msra.mxu0 %v503
      %4999 = vmatprep.subr.mxu0 0.0
      %5000 = vmatpush1.msra.mxu0 %v502
      %5001 = vmatprep.subr.mxu0 0.0
      %5002 = vmatpush2.msra.mxu0 0.0
      %5003 = vmatprep.subr.mxu0 0.0
      %5004 = vmatpush2.msra.mxu0 0.0
      %5005 = vmatprep.subr.mxu0 0.0
      %5006 = vmatpush2.msra.mxu0 0.0
      %5007 = vmatprep.subr.mxu0 0.0
      %5008 = vmatpush2.msra.mxu0 0.0
      %5009 = vmatprep.subr.mxu0 0.0
      %5010 = vmatpush2.msra.mxu0 0.0
      %5011 = vmatprep.subr.mxu0 0.0
      %5012 = vmatpush2.msra.mxu0 0.0
      %5013 = vmatprep.subr.mxu0 0.0
      %5014 = vmatpush2.msra.mxu0 0.0
      %5015 = vmatprep.subr.mxu0 0.0
      %5016 = vmatpush2.msra.mxu0 0.0
      %5017 = vmatprep.subr.mxu0 0.0
      %5018 = vmatpush2.msra.mxu0 0.0
      %5019 = vmatprep.subr.mxu0 0.0
      %5020 = vmatpush2.msra.mxu0 0.0
      %5021 = vmatprep.subr.mxu0 0.0
      %5022 = vmatpush2.msra.mxu0 0.0
      %5023 = vmatprep.subr.mxu0 0.0
      %5024 = vmatpush2.msra.mxu0 0.0
      %5025 = vmatprep.subr.mxu0 0.0
      %5026 = vmatpush2.msra.mxu0 0.0
      %5027 = vmatprep.subr.mxu0 0.0
      %5028 = vmatpush2.msra.mxu0 0.0
      %5029 = vmatprep.subr.mxu0 0.0
      %5030 = vmatpush2.msra.mxu0 0.0
      %5031 = vmatprep.subr.mxu0 0.0
      %5032 = vmatpush2.msra.mxu0 0.0
      %5033 = vmatprep.mubr.f32.mxu0 0.0
      %5034 = vmatmul.mubr.f32.gmra.mxu0 %v4967
      %v5035 = vpop.f32.mrf.mxu0
      %v5036 = vadd.f32 0.0, %v5035
      %v5037 = vpop.f32.mrf.mxu0
      %5038 = vdwg.mxu0
      %v5039 = vlaneseq
      %v5040 = vshrl.u32 %v5039, 7
      %v5041 = vsub.s32 0, %v5040
      %v5042 = vrot.slane %v5036, %v5041
      %v5043 = vsub.f32 %v4848, %v5042
      %v5044 = vsub.f32 %v4849, %v5042
      %v5045 = vsub.f32 %v4850, %v5042
      %v5046 = vsub.f32 %v4851, %v5042
      %v5047 = vsub.f32 %v4852, %v5042
      %v5048 = vsub.f32 %v4853, %v5042
      %v5049 = vsub.f32 %v4854, %v5042
      %v5050 = vsub.f32 %v4855, %v5042
      %v5051 = vsub.f32 %v4856, %v5042
      %v5052 = vsub.f32 %v4857, %v5042
      %v5053 = vsub.f32 %v4858, %v5042
      %v5054 = vsub.f32 %v4859, %v5042
      %v5055 = vsub.f32 %v4860, %v5042
      %v5056 = vmul.f32 %v5043, %v1370
      %v5057 = vmul.f32 %v5044, %v1375
      %v5058 = vmul.f32 %v5045, %v1380
      %v5059 = vmul.f32 %v5046, %v1385
      %v5060 = vmul.f32 %v5047, %v1390
      %v5061 = vmul.f32 %v5048, %v1395
      %v5062 = vmul.f32 %v5049, %v1400
      %v5063 = vmul.f32 %v5050, %v1405
      %v5064 = vmul.f32 %v5051, %v1410
      %v5065 = vmul.f32 %v5052, %v1415
      %v5066 = vmul.f32 %v5053, %v1420
      %v5067 = vmul.f32 %v5054, %v1425
      %v5068 = vmul.f32 %v5055, %v1430
      %v5069 = vmul.f32 %v5056, %v5056
      %v5070 = vmul.f32 %v5057, %v5057
      %v5071 = vmul.f32 %v5058, %v5058
      %v5072 = vmul.f32 %v5059, %v5059
      %v5073 = vmul.f32 %v5060, %v5060
      %v5074 = vmul.f32 %v5061, %v5061
      %v5075 = vmul.f32 %v5062, %v5062
      %v5076 = vmul.f32 %v5063, %v5063
      %v5077 = vmul.f32 %v5064, %v5064
      %v5078 = vmul.f32 %v5065, %v5065
      %v5079 = vmul.f32 %v5066, %v5066
      %v5080 = vmul.f32 %v5067, %v5067
      %v5081 = vmul.f32 %v5068, %v5068
      %v5082 = vsel %vm361, %v5069, 0.0
      %v5083 = vsel %vm361, %v5070, 0.0
      %v5084 = vadd.f32 %v5082, %v5083
      %v5085 = vsel %vm361, %v5071, 0.0
      %v5086 = vadd.f32 %v5084, %v5085
      %v5087 = vsel %vm361, %v5072, 0.0
      %v5088 = vadd.f32 %v5086, %v5087
      %v5089 = vsel %vm361, %v5073, 0.0
      %v5090 = vadd.f32 %v5088, %v5089
      %v5091 = vsel %vm361, %v5074, 0.0
      %v5092 = vadd.f32 %v5090, %v5091
      %v5093 = vsel %vm361, %v5075, 0.0
      %v5094 = vadd.f32 %v5092, %v5093
      %v5095 = vsel %vm361, %v5076, 0.0
      %v5096 = vadd.f32 %v5094, %v5095
      %v5097 = vsel %vm361, %v5077, 0.0
      %v5098 = vadd.f32 %v5096, %v5097
      %v5099 = vsel %vm361, %v5078, 0.0
      %v5100 = vadd.f32 %v5098, %v5099
      %v5101 = vsel %vm361, %v5079, 0.0
      %v5102 = vadd.f32 %v5100, %v5101
      %v5103 = vsel %vm361, %v5080, 0.0
      %v5104 = vadd.f32 %v5102, %v5103
      %v5105 = vsel %vm378, %v5081, 0.0
      %v5106 = vadd.f32 %v5104, %v5105
      %v5107 = vrot.slane %v5106, 4
      %v5108 = vadd.f32 %v5106, %v5107
      %v5109 = vrot.slane %v5108, 2
      %v5110 = vadd.f32 %v5108, %v5109
      %v5111 = vrot.slane %v5110, 1
      %v5112 = vadd.f32 %v5110, %v5111
      %v5114 = vsel %vm361, %v5112, 0
      %5116 = vmatprep.subr.mxu0 0.0
      %5117 = vmatpush1.msra.mxu0 0.0
      %5118 = vmatprep.subr.mxu0 0.0
      %5119 = vmatpush1.msra.mxu0 0.0
      %5120 = vmatprep.subr.mxu0 0.0
      %5121 = vmatpush1.msra.mxu0 0.0
      %5122 = vmatprep.subr.mxu0 0.0
      %5123 = vmatpush1.msra.mxu0 0.0
      %5124 = vmatprep.subr.mxu0 0.0
      %5125 = vmatpush1.msra.mxu0 0.0
      %5126 = vmatprep.subr.mxu0 0.0
      %5127 = vmatpush1.msra.mxu0 0.0
      %5128 = vmatprep.subr.mxu0 0.0
      %5129 = vmatpush1.msra.mxu0 0.0
      %5130 = vmatprep.subr.mxu0 0.0
      %5131 = vmatpush1.msra.mxu0 0.0
      %5132 = vmatprep.subr.mxu0 0.0
      %5133 = vmatpush1.msra.mxu0 %v501
      %5134 = vmatprep.subr.mxu0 0.0
      %5135 = vmatpush1.msra.mxu0 %v500
      %5136 = vmatprep.subr.mxu0 0.0
      %5137 = vmatpush1.msra.mxu0 %v499
      %5138 = vmatprep.subr.mxu0 0.0
      %5139 = vmatpush1.msra.mxu0 %v498
      %5140 = vmatprep.subr.mxu0 0.0
      %5141 = vmatpush1.msra.mxu0 %v497
      %5142 = vmatprep.subr.mxu0 0.0
      %5143 = vmatpush1.msra.mxu0 %v496
      %5144 = vmatprep.subr.mxu0 0.0
      %5145 = vmatpush1.msra.mxu0 %v495
      %5146 = vmatprep.subr.mxu0 0.0
      %5147 = vmatpush1.msra.mxu0 %v494
      %5148 = vmatprep.subr.mxu0 0.0
      %5149 = vmatpush2.msra.mxu0 0.0
      %5150 = vmatprep.subr.mxu0 0.0
      %5151 = vmatpush2.msra.mxu0 0.0
      %5152 = vmatprep.subr.mxu0 0.0
      %5153 = vmatpush2.msra.mxu0 0.0
      %5154 = vmatprep.subr.mxu0 0.0
      %5155 = vmatpush2.msra.mxu0 0.0
      %5156 = vmatprep.subr.mxu0 0.0
      %5157 = vmatpush2.msra.mxu0 0.0
      %5158 = vmatprep.subr.mxu0 0.0
      %5159 = vmatpush2.msra.mxu0 0.0
      %5160 = vmatprep.subr.mxu0 0.0
      %5161 = vmatpush2.msra.mxu0 0.0
      %5162 = vmatprep.subr.mxu0 0.0
      %5163 = vmatpush2.msra.mxu0 0.0
      %5164 = vmatprep.subr.mxu0 0.0
      %5165 = vmatpush2.msra.mxu0 0.0
      %5166 = vmatprep.subr.mxu0 0.0
      %5167 = vmatpush2.msra.mxu0 0.0
      %5168 = vmatprep.subr.mxu0 0.0
      %5169 = vmatpush2.msra.mxu0 0.0
      %5170 = vmatprep.subr.mxu0 0.0
      %5171 = vmatpush2.msra.mxu0 0.0
      %5172 = vmatprep.subr.mxu0 0.0
      %5173 = vmatpush2.msra.mxu0 0.0
      %5174 = vmatprep.subr.mxu0 0.0
      %5175 = vmatpush2.msra.mxu0 0.0
      %5176 = vmatprep.subr.mxu0 0.0
      %5177 = vmatpush2.msra.mxu0 0.0
      %5178 = vmatprep.subr.mxu0 0.0
      %5179 = vmatpush2.msra.mxu0 0.0
      %5180 = vmatprep.mubr.f32.mxu0 0.0
      %5181 = vmatmul.mubr.f32.gmra.mxu0 %v5114
      %v5182 = vpop.f32.mrf.mxu0
      %v5183 = vadd.f32 0.0, %v5182
      %v5184 = vpop.f32.mrf.mxu0
      %5185 = vdwg.mxu0
      %v5186 = vmul.f32 %v5183, %v1549
      %v5188 = vsel %vm1551, %v5186, 0
      %5190 = vmatprep.subr.mxu0 0.0
      %5191 = vmatpush1.msra.mxu0 0.0
      %5192 = vmatprep.subr.mxu0 0.0
      %5193 = vmatpush1.msra.mxu0 0.0
      %5194 = vmatprep.subr.mxu0 0.0
      %5195 = vmatpush1.msra.mxu0 0.0
      %5196 = vmatprep.subr.mxu0 0.0
      %5197 = vmatpush1.msra.mxu0 0.0
      %5198 = vmatprep.subr.mxu0 0.0
      %5199 = vmatpush1.msra.mxu0 0.0
      %5200 = vmatprep.subr.mxu0 0.0
      %5201 = vmatpush1.msra.mxu0 0.0
      %5202 = vmatprep.subr.mxu0 0.0
      %5203 = vmatpush1.msra.mxu0 0.0
      %5204 = vmatprep.subr.mxu0 0.0
      %5205 = vmatpush1.msra.mxu0 0.0
      %5206 = vmatprep.subr.mxu0 0.0
      %5207 = vmatpush1.msra.mxu0 0.0
      %5208 = vmatprep.subr.mxu0 0.0
      %5209 = vmatpush1.msra.mxu0 0.0
      %5210 = vmatprep.subr.mxu0 0.0
      %5211 = vmatpush1.msra.mxu0 0.0
      %5212 = vmatprep.subr.mxu0 0.0
      %5213 = vmatpush1.msra.mxu0 0.0
      %5214 = vmatprep.subr.mxu0 0.0
      %5215 = vmatpush1.msra.mxu0 %v505
      %5216 = vmatprep.subr.mxu0 0.0
      %5217 = vmatpush1.msra.mxu0 %v504
      %5218 = vmatprep.subr.mxu0 0.0
      %5219 = vmatpush1.msra.mxu0 %v503
      %5220 = vmatprep.subr.mxu0 0.0
      %5221 = vmatpush1.msra.mxu0 %v502
      %5222 = vmatprep.subr.mxu0 0.0
      %5223 = vmatpush2.msra.mxu0 0.0
      %5224 = vmatprep.subr.mxu0 0.0
      %5225 = vmatpush2.msra.mxu0 0.0
      %5226 = vmatprep.subr.mxu0 0.0
      %5227 = vmatpush2.msra.mxu0 0.0
      %5228 = vmatprep.subr.mxu0 0.0
      %5229 = vmatpush2.msra.mxu0 0.0
      %5230 = vmatprep.subr.mxu0 0.0
      %5231 = vmatpush2.msra.mxu0 0.0
      %5232 = vmatprep.subr.mxu0 0.0
      %5233 = vmatpush2.msra.mxu0 0.0
      %5234 = vmatprep.subr.mxu0 0.0
      %5235 = vmatpush2.msra.mxu0 0.0
      %5236 = vmatprep.subr.mxu0 0.0
      %5237 = vmatpush2.msra.mxu0 0.0
      %5238 = vmatprep.subr.mxu0 0.0
      %5239 = vmatpush2.msra.mxu0 0.0
      %5240 = vmatprep.subr.mxu0 0.0
      %5241 = vmatpush2.msra.mxu0 0.0
      %5242 = vmatprep.subr.mxu0 0.0
      %5243 = vmatpush2.msra.mxu0 0.0
      %5244 = vmatprep.subr.mxu0 0.0
      %5245 = vmatpush2.msra.mxu0 0.0
      %5246 = vmatprep.subr.mxu0 0.0
      %5247 = vmatpush2.msra.mxu0 0.0
      %5248 = vmatprep.subr.mxu0 0.0
      %5249 = vmatpush2.msra.mxu0 0.0
      %5250 = vmatprep.subr.mxu0 0.0
      %5251 = vmatpush2.msra.mxu0 0.0
      %5252 = vmatprep.subr.mxu0 0.0
      %5253 = vmatpush2.msra.mxu0 0.0
      %5254 = vmatprep.mubr.f32.mxu0 0.0
      %5255 = vmatmul.mubr.f32.gmra.mxu0 %v5188
      %v5256 = vpop.f32.mrf.mxu0
      %v5257 = vadd.f32 1e-05, %v5256
      %v5258 = vpop.f32.mrf.mxu0
      %5259 = vdwg.mxu0
      %v5260 = vrsqrt.pop %v5257
      %v5261 = vlaneseq
      %v5262 = vshrl.u32 %v5261, 7
      %v5263 = vsub.s32 0, %v5262
      %v5264 = vrot.slane %v5260, %v5263
      %v5265 = vmul.f32 %v5056, %v5264
      %v5266 = vmul.f32 %v5057, %v5264
      %v5267 = vmul.f32 %v5058, %v5264
      %v5268 = vmul.f32 %v5059, %v5264
      %v5269 = vmul.f32 %v5060, %v5264
      %v5270 = vmul.f32 %v5061, %v5264
      %v5271 = vmul.f32 %v5062, %v5264
      %v5272 = vmul.f32 %v5063, %v5264
      %v5273 = vmul.f32 %v5064, %v5264
      %v5274 = vmul.f32 %v5065, %v5264
      %v5275 = vmul.f32 %v5066, %v5264
      %v5276 = vmul.f32 %v5067, %v5264
      %v5277 = vmul.f32 %v5068, %v5264
      %v5278 = vmul.f32 %v5265, %v1868
      %v5279 = vmul.f32 %v5266, %v1868
      %v5280 = vmul.f32 %v5267, %v1868
      %v5281 = vmul.f32 %v5268, %v1868
      %v5282 = vmul.f32 %v5269, %v1868
      %v5283 = vmul.f32 %v5270, %v1868
      %v5284 = vmul.f32 %v5271, %v1868
      %v5285 = vmul.f32 %v5272, %v1868
      %v5286 = vmul.f32 %v5273, %v1868
      %v5287 = vmul.f32 %v5274, %v1868
      %v5288 = vmul.f32 %v5275, %v1868
      %v5289 = vmul.f32 %v5276, %v1868
      %v5290 = vmul.f32 %v5277, %v1868
      %v5291 = vadd.f32 %v5278, %v1887
      %v5292 = vadd.f32 %v5279, %v1887
      %v5293 = vadd.f32 %v5280, %v1887
      %v5294 = vadd.f32 %v5281, %v1887
      %v5295 = vadd.f32 %v5282, %v1887
      %v5296 = vadd.f32 %v5283, %v1887
      %v5297 = vadd.f32 %v5284, %v1887
      %v5298 = vadd.f32 %v5285, %v1887
      %v5299 = vadd.f32 %v5286, %v1887
      %v5300 = vadd.f32 %v5287, %v1887
      %v5301 = vadd.f32 %v5288, %v1887
      %v5302 = vadd.f32 %v5289, %v1887
      %v5303 = vadd.f32 %v5290, %v1887
      %v5304 = vmax.f32 %v5291, 0.0
      %v5305 = vmax.f32 %v5292, 0.0
      %v5306 = vmax.f32 %v5293, 0.0
      %v5307 = vmax.f32 %v5294, 0.0
      %v5308 = vmax.f32 %v5295, 0.0
      %v5309 = vmax.f32 %v5296, 0.0
      %v5310 = vmax.f32 %v5297, 0.0
      %v5311 = vmax.f32 %v5298, 0.0
      %v5312 = vmax.f32 %v5299, 0.0
      %v5313 = vmax.f32 %v5300, 0.0
      %v5314 = vmax.f32 %v5301, 0.0
      %v5315 = vmax.f32 %v5302, 0.0
      %v5316 = vmax.f32 %v5303, 0.0
      %v5317 = vmul.f32 %v5304, %v1370
      %v5318 = vmul.f32 %v5305, %v1375
      %v5319 = vmul.f32 %v5306, %v1380
      %v5320 = vmul.f32 %v5307, %v1385
      %v5321 = vmul.f32 %v5308, %v1390
      %v5322 = vmul.f32 %v5309, %v1395
      %v5323 = vmul.f32 %v5310, %v1400
      %v5324 = vmul.f32 %v5311, %v1405
      %v5325 = vmul.f32 %v5312, %v1410
      %v5326 = vmul.f32 %v5313, %v1415
      %v5327 = vmul.f32 %v5314, %v1420
      %v5328 = vmul.f32 %v5315, %v1425
      %v5329 = vmul.f32 %v5316, %v1430
      %5330 = vst.msk [vmem:[#allocation2 + $0x10] sm:$0xff] %vm361, %v5317
      %5331 = vst.msk [vmem:[#allocation2 + $0x18] sm:$0xff] %vm361, %v5318
      %5332 = vst.msk [vmem:[#allocation2 + $0x20] sm:$0xff] %vm361, %v5319
      %5333 = vst.msk [vmem:[#allocation2 + $0x28] sm:$0xff] %vm361, %v5320
      %5334 = vst.msk [vmem:[#allocation2 + $0x30] sm:$0xff] %vm361, %v5321
      %5335 = vst.msk [vmem:[#allocation2 + $0x38] sm:$0xff] %vm361, %v5322
      %5336 = vst.msk [vmem:[#allocation2 + $0x40] sm:$0xff] %vm361, %v5323
      %5337 = vst.msk [vmem:[#allocation2 + $0x48] sm:$0xff] %vm361, %v5324
      %5338 = vst.msk [vmem:[#allocation2 + $0x50] sm:$0xff] %vm361, %v5325
      %5339 = vst.msk [vmem:[#allocation2 + $0x58] sm:$0xff] %vm361, %v5326
      %5340 = vst.msk [vmem:[#allocation2 + $0x60] sm:$0xff] %vm361, %v5327
      %5341 = vst.msk [vmem:[#allocation2 + $0x68] sm:$0xff] %vm361, %v5328
      %5342 = vst.msk [vmem:[#allocation2 + $0x70] sm:$0xf] %vm378, %v5329
      %v5343 = vld [vmem:[#allocation2 + $0x5] sm:$0xff]
      %v5344 = vld [vmem:[#allocation2 + $0xd] sm:$0xff]
      %v5345 = vld [vmem:[#allocation2 + $0x15] sm:$0xff]
      %v5346 = vld [vmem:[#allocation2 + $0x1d] sm:$0xff]
      %v5347 = vld [vmem:[#allocation2 + $0x25] sm:$0xff]
      %v5348 = vld [vmem:[#allocation2 + $0x2d] sm:$0xff]
      %v5349 = vld [vmem:[#allocation2 + $0x35] sm:$0xff]
      %v5350 = vld [vmem:[#allocation2 + $0x3d] sm:$0xff]
      %v5351 = vld [vmem:[#allocation2 + $0x45] sm:$0xff]
      %v5352 = vld [vmem:[#allocation2 + $0x4d] sm:$0xff]
      %v5353 = vld [vmem:[#allocation2 + $0x55] sm:$0xff]
      %v5354 = vld [vmem:[#allocation2 + $0x5d] sm:$0xff]
      %v5355 = vld [vmem:[#allocation2 + $0x65] sm:$0xf]
      %v5356 = vpack.c.bf16 %v5344, %v5343
      %v5357 = vpack.c.bf16 %v5346, %v5345
      %v5358 = vpack.c.bf16 %v5348, %v5347
      %v5359 = vpack.c.bf16 %v5350, %v5349
      %v5360 = vpack.c.bf16 %v5352, %v5351
      %v5361 = vpack.c.bf16 %v5354, %v5353
      %v5362 = vpack.c.bf16 %v5355, %v5355
      %v5363 = vld [vmem:[#allocation2 + $0x6] sm:$0xff]
      %v5364 = vld [vmem:[#allocation2 + $0xe] sm:$0xff]
      %v5365 = vld [vmem:[#allocation2 + $0x16] sm:$0xff]
      %v5366 = vld [vmem:[#allocation2 + $0x1e] sm:$0xff]
      %v5367 = vld [vmem:[#allocation2 + $0x26] sm:$0xff]
      %v5368 = vld [vmem:[#allocation2 + $0x2e] sm:$0xff]
      %v5369 = vld [vmem:[#allocation2 + $0x36] sm:$0xff]
      %v5370 = vld [vmem:[#allocation2 + $0x3e] sm:$0xff]
      %v5371 = vld [vmem:[#allocation2 + $0x46] sm:$0xff]
      %v5372 = vld [vmem:[#allocation2 + $0x4e] sm:$0xff]
      %v5373 = vld [vmem:[#allocation2 + $0x56] sm:$0xff]
      %v5374 = vld [vmem:[#allocation2 + $0x5e] sm:$0xff]
      %v5375 = vld [vmem:[#allocation2 + $0x66] sm:$0xf]
      %v5376 = vpack.c.bf16 %v5364, %v5363
      %v5377 = vpack.c.bf16 %v5366, %v5365
      %v5378 = vpack.c.bf16 %v5368, %v5367
      %v5379 = vpack.c.bf16 %v5370, %v5369
      %v5380 = vpack.c.bf16 %v5372, %v5371
      %v5381 = vpack.c.bf16 %v5374, %v5373
      %v5382 = vpack.c.bf16 %v5375, %v5375
      %v5383 = vld [vmem:[#allocation2 + $0x7] sm:$0xff]
      %v5384 = vld [vmem:[#allocation2 + $0xf] sm:$0xff]
      %v5385 = vld [vmem:[#allocation2 + $0x17] sm:$0xff]
      %v5386 = vld [vmem:[#allocation2 + $0x1f] sm:$0xff]
      %v5387 = vld [vmem:[#allocation2 + $0x27] sm:$0xff]
      %v5388 = vld [vmem:[#allocation2 + $0x2f] sm:$0xff]
      %v5389 = vld [vmem:[#allocation2 + $0x37] sm:$0xff]
      %v5390 = vld [vmem:[#allocation2 + $0x3f] sm:$0xff]
      %v5391 = vld [vmem:[#allocation2 + $0x47] sm:$0xff]
      %v5392 = vld [vmem:[#allocation2 + $0x4f] sm:$0xff]
      %v5393 = vld [vmem:[#allocation2 + $0x57] sm:$0xff]
      %v5394 = vld [vmem:[#allocation2 + $0x5f] sm:$0xff]
      %v5395 = vld [vmem:[#allocation2 + $0x67] sm:$0xf]
      %v5396 = vpack.c.bf16 %v5384, %v5383
      %v5397 = vpack.c.bf16 %v5386, %v5385
      %v5398 = vpack.c.bf16 %v5388, %v5387
      %v5399 = vpack.c.bf16 %v5390, %v5389
      %v5400 = vpack.c.bf16 %v5392, %v5391
      %v5401 = vpack.c.bf16 %v5394, %v5393
      %v5402 = vpack.c.bf16 %v5395, %v5395
      %v5403 = vld [vmem:[#allocation2 + $0x67] sm:$0xff]
      %v5404 = vld [vmem:[#allocation2 + $0x6f] sm:$0xf]
      %v5405 = vpack.c.bf16 %v5385, %v5384
      %v5406 = vpack.c.bf16 %v5387, %v5386
      %v5407 = vpack.c.bf16 %v5389, %v5388
      %v5408 = vpack.c.bf16 %v5391, %v5390
      %v5409 = vpack.c.bf16 %v5393, %v5392
      %v5410 = vpack.c.bf16 %v5403, %v5394
      %v5411 = vpack.c.bf16 %v5404, %v5404
      %v5412 = vld [vmem:[#allocation2 + $0x10] sm:$0xff]
      %v5413 = vld [vmem:[#allocation2 + $0x18] sm:$0xff]
      %v5414 = vld [vmem:[#allocation2 + $0x20] sm:$0xff]
      %v5415 = vld [vmem:[#allocation2 + $0x28] sm:$0xff]
      %v5416 = vld [vmem:[#allocation2 + $0x30] sm:$0xff]
      %v5417 = vld [vmem:[#allocation2 + $0x38] sm:$0xff]
      %v5418 = vld [vmem:[#allocation2 + $0x40] sm:$0xff]
      %v5419 = vld [vmem:[#allocation2 + $0x48] sm:$0xff]
      %v5420 = vld [vmem:[#allocation2 + $0x50] sm:$0xff]
      %v5421 = vld [vmem:[#allocation2 + $0x58] sm:$0xff]
      %v5422 = vld [vmem:[#allocation2 + $0x60] sm:$0xff]
      %v5423 = vld [vmem:[#allocation2 + $0x68] sm:$0xff]
      %v5424 = vld [vmem:[#allocation2 + $0x70] sm:$0xf]
      %v5425 = vpack.c.bf16 %v5413, %v5412
      %v5426 = vpack.c.bf16 %v5415, %v5414
      %v5427 = vpack.c.bf16 %v5417, %v5416
      %v5428 = vpack.c.bf16 %v5419, %v5418
      %v5429 = vpack.c.bf16 %v5421, %v5420
      %v5430 = vpack.c.bf16 %v5423, %v5422
      %v5431 = vpack.c.bf16 %v5424, %v5424
      %v5432 = vld [vmem:[#allocation2 + $0x11] sm:$0xff]
      %v5433 = vld [vmem:[#allocation2 + $0x19] sm:$0xff]
      %v5434 = vld [vmem:[#allocation2 + $0x21] sm:$0xff]
      %v5435 = vld [vmem:[#allocation2 + $0x29] sm:$0xff]
      %v5436 = vld [vmem:[#allocation2 + $0x31] sm:$0xff]
      %v5437 = vld [vmem:[#allocation2 + $0x39] sm:$0xff]
      %v5438 = vld [vmem:[#allocation2 + $0x41] sm:$0xff]
      %v5439 = vld [vmem:[#allocation2 + $0x49] sm:$0xff]
      %v5440 = vld [vmem:[#allocation2 + $0x51] sm:$0xff]
      %v5441 = vld [vmem:[#allocation2 + $0x59] sm:$0xff]
      %v5442 = vld [vmem:[#allocation2 + $0x61] sm:$0xff]
      %v5443 = vld [vmem:[#allocation2 + $0x69] sm:$0xff]
      %v5444 = vld [vmem:[#allocation2 + $0x71] sm:$0xf]
      %v5445 = vpack.c.bf16 %v5433, %v5432
      %v5446 = vpack.c.bf16 %v5435, %v5434
      %v5447 = vpack.c.bf16 %v5437, %v5436
      %v5448 = vpack.c.bf16 %v5439, %v5438
      %v5449 = vpack.c.bf16 %v5441, %v5440
      %v5450 = vpack.c.bf16 %v5443, %v5442
      %v5451 = vpack.c.bf16 %v5444, %v5444
      %v5452 = vld [vmem:[#allocation2 + $0x71] sm:$0xff]
      %v5453 = vld [vmem:[#allocation2 + $0x79] sm:$0xf]
      %v5454 = vpack.c.bf16 %v5434, %v5433
      %v5455 = vpack.c.bf16 %v5436, %v5435
      %v5456 = vpack.c.bf16 %v5438, %v5437
      %v5457 = vpack.c.bf16 %v5440, %v5439
      %v5458 = vpack.c.bf16 %v5442, %v5441
      %v5459 = vpack.c.bf16 %v5452, %v5443
      %v5460 = vpack.c.bf16 %v5453, %v5453
      %v5461 = vld [vmem:[#allocation2 + $0x1a] sm:$0xff]
      %v5462 = vld [vmem:[#allocation2 + $0x22] sm:$0xff]
      %v5463 = vld [vmem:[#allocation2 + $0x2a] sm:$0xff]
      %v5464 = vld [vmem:[#allocation2 + $0x32] sm:$0xff]
      %v5465 = vld [vmem:[#allocation2 + $0x3a] sm:$0xff]
      %v5466 = vld [vmem:[#allocation2 + $0x42] sm:$0xff]
      %v5467 = vld [vmem:[#allocation2 + $0x4a] sm:$0xff]
      %v5468 = vld [vmem:[#allocation2 + $0x52] sm:$0xff]
      %v5469 = vld [vmem:[#allocation2 + $0x5a] sm:$0xff]
      %v5470 = vld [vmem:[#allocation2 + $0x62] sm:$0xff]
      %v5471 = vld [vmem:[#allocation2 + $0x6a] sm:$0xff]
      %v5472 = vld [vmem:[#allocation2 + $0x72] sm:$0xff]
      %v5473 = vld [vmem:[#allocation2 + $0x7a] sm:$0xf]
      %v5474 = vpack.c.bf16 %v5462, %v5461
      %v5475 = vpack.c.bf16 %v5464, %v5463
      %v5476 = vpack.c.bf16 %v5466, %v5465
      %v5477 = vpack.c.bf16 %v5468, %v5467
      %v5478 = vpack.c.bf16 %v5470, %v5469
      %v5479 = vpack.c.bf16 %v5472, %v5471
      %v5480 = vpack.c.bf16 %v5473, %v5473
      %v5481 = vld [vmem:[#allocation2 + $0x1b] sm:$0xff]
      %v5482 = vld [vmem:[#allocation2 + $0x23] sm:$0xff]
      %v5483 = vld [vmem:[#allocation2 + $0x2b] sm:$0xff]
      %v5484 = vld [vmem:[#allocation2 + $0x33] sm:$0xff]
      %v5485 = vld [vmem:[#allocation2 + $0x3b] sm:$0xff]
      %v5486 = vld [vmem:[#allocation2 + $0x43] sm:$0xff]
      %v5487 = vld [vmem:[#allocation2 + $0x4b] sm:$0xff]
      %v5488 = vld [vmem:[#allocation2 + $0x53] sm:$0xff]
      %v5489 = vld [vmem:[#allocation2 + $0x5b] sm:$0xff]
      %v5490 = vld [vmem:[#allocation2 + $0x63] sm:$0xff]
      %v5491 = vld [vmem:[#allocation2 + $0x6b] sm:$0xff]
      %v5492 = vld [vmem:[#allocation2 + $0x73] sm:$0xff]
      %v5493 = vld [vmem:[#allocation2 + $0x7b] sm:$0xf]
      %v5494 = vpack.c.bf16 %v5482, %v5481
      %v5495 = vpack.c.bf16 %v5484, %v5483
      %v5496 = vpack.c.bf16 %v5486, %v5485
      %v5497 = vpack.c.bf16 %v5488, %v5487
      %v5498 = vpack.c.bf16 %v5490, %v5489
      %v5499 = vpack.c.bf16 %v5492, %v5491
      %v5500 = vpack.c.bf16 %v5493, %v5493
      %5508 = vrot.lane.b32.xlu0 %v5376, 64
      %v5509 = vpop.permute.xlu0 %5508
      %5510 = vrot.lane.b32.xlu0 %v5377, 64
      %v5511 = vpop.permute.xlu0 %5510
      %5512 = vrot.lane.b32.xlu0 %v5378, 64
      %v5513 = vpop.permute.xlu0 %5512
      %5514 = vrot.lane.b32.xlu0 %v5379, 64
      %v5515 = vpop.permute.xlu0 %5514
      %5516 = vrot.lane.b32.xlu0 %v5380, 64
      %v5517 = vpop.permute.xlu0 %5516
      %5518 = vrot.lane.b32.xlu0 %v5381, 64
      %v5519 = vpop.permute.xlu0 %5518
      %5520 = vrot.lane.b32.xlu0 %v5382, 64
      %v5521 = vpop.permute.xlu0 %5520
      %5529 = vrot.lane.b32.xlu0 %v5405, 64
      %v5530 = vpop.permute.xlu0 %5529
      %5531 = vrot.lane.b32.xlu0 %v5406, 64
      %v5532 = vpop.permute.xlu0 %5531
      %5533 = vrot.lane.b32.xlu0 %v5407, 64
      %v5534 = vpop.permute.xlu0 %5533
      %5535 = vrot.lane.b32.xlu0 %v5408, 64
      %v5536 = vpop.permute.xlu0 %5535
      %5537 = vrot.lane.b32.xlu0 %v5409, 64
      %v5538 = vpop.permute.xlu0 %5537
      %5539 = vrot.lane.b32.xlu0 %v5410, 64
      %v5540 = vpop.permute.xlu0 %5539
      %5541 = vrot.lane.b32.xlu0 %v5411, 64
      %v5542 = vpop.permute.xlu0 %5541
      %5550 = vrot.lane.b32.xlu0 %v5445, 64
      %v5551 = vpop.permute.xlu0 %5550
      %5552 = vrot.lane.b32.xlu0 %v5446, 64
      %v5553 = vpop.permute.xlu0 %5552
      %5554 = vrot.lane.b32.xlu0 %v5447, 64
      %v5555 = vpop.permute.xlu0 %5554
      %5556 = vrot.lane.b32.xlu0 %v5448, 64
      %v5557 = vpop.permute.xlu0 %5556
      %5558 = vrot.lane.b32.xlu0 %v5449, 64
      %v5559 = vpop.permute.xlu0 %5558
      %5560 = vrot.lane.b32.xlu0 %v5450, 64
      %v5561 = vpop.permute.xlu0 %5560
      %5562 = vrot.lane.b32.xlu0 %v5451, 64
      %v5563 = vpop.permute.xlu0 %5562
      %5571 = vrot.lane.b32.xlu0 %v5474, 64
      %v5572 = vpop.permute.xlu0 %5571
      %5573 = vrot.lane.b32.xlu0 %v5475, 64
      %v5574 = vpop.permute.xlu0 %5573
      %5575 = vrot.lane.b32.xlu0 %v5476, 64
      %v5576 = vpop.permute.xlu0 %5575
      %5577 = vrot.lane.b32.xlu0 %v5477, 64
      %v5578 = vpop.permute.xlu0 %5577
      %5579 = vrot.lane.b32.xlu0 %v5478, 64
      %v5580 = vpop.permute.xlu0 %5579
      %5581 = vrot.lane.b32.xlu0 %v5479, 64
      %v5582 = vpop.permute.xlu0 %5581
      %5583 = vrot.lane.b32.xlu0 %v5480, 64
      %v5584 = vpop.permute.xlu0 %5583
      %v5587 = vsel %vm361, %v5356, %v5509
      %v5591 = vsel %vm361, %v5357, %v5511
      %v5595 = vsel %vm361, %v5358, %v5513
      %v5599 = vsel %vm361, %v5359, %v5515
      %v5603 = vsel %vm361, %v5360, %v5517
      %v5607 = vsel %vm361, %v5361, %v5519
      %v5611 = vsel %vm361, %v5362, %v5521
      %v5615 = vsel %vm361, %v5396, %v5530
      %v5619 = vsel %vm361, %v5397, %v5532
      %v5623 = vsel %vm361, %v5398, %v5534
      %v5627 = vsel %vm361, %v5399, %v5536
      %v5631 = vsel %vm361, %v5400, %v5538
      %v5635 = vsel %vm361, %v5401, %v5540
      %v5639 = vsel %vm361, %v5402, %v5542
      %v5643 = vsel %vm361, %v5425, %v5551
      %v5647 = vsel %vm361, %v5426, %v5553
      %v5651 = vsel %vm361, %v5427, %v5555
      %v5655 = vsel %vm361, %v5428, %v5557
      %v5659 = vsel %vm361, %v5429, %v5559
      %v5663 = vsel %vm361, %v5430, %v5561
      %v5667 = vsel %vm361, %v5431, %v5563
      %v5671 = vsel %vm361, %v5454, %v5572
      %v5675 = vsel %vm361, %v5455, %v5574
      %v5679 = vsel %vm361, %v5456, %v5576
      %v5683 = vsel %vm361, %v5457, %v5578
      %v5687 = vsel %vm361, %v5458, %v5580
      %v5691 = vsel %vm361, %v5459, %v5582
      %v5695 = vsel %vm361, %v5460, %v5584
      %v5697 = vld [vmem:[%s8] sm:$0xf]
      %v5698 = vld [vmem:[%s8 + $0x4] sm:$0xf]
      %v5699 = vld [vmem:[%s8 + $0x8] sm:$0xf]
      %v5700 = vld [vmem:[%s8 + $0xc] sm:$0xf]
      %v5701 = vld [vmem:[%s8 + $0x10] sm:$0xf]
      %v5702 = vld [vmem:[%s8 + $0x14] sm:$0xf]
      %v5703 = vld [vmem:[%s8 + $0x18] sm:$0xf]
      %v5704 = vld [vmem:[%s8 + $0x1c] sm:$0xf]
      %v5705 = vld [vmem:[%s8 + $0x20] sm:$0xf]
      %v5706 = vld [vmem:[%s8 + $0x24] sm:$0xf]
      %v5707 = vld [vmem:[%s8 + $0x28] sm:$0xf]
      %v5708 = vld [vmem:[%s8 + $0x2c] sm:$0xf]
      %v5709 = vld [vmem:[%s8 + $0x30] sm:$0xf]
      %v5710 = vld [vmem:[%s8 + $0x34] sm:$0xf]
      %v5711 = vld [vmem:[%s8 + $0x38] sm:$0xf]
      %v5712 = vld [vmem:[%s8 + $0x3c] sm:$0xf]
      %v5713 = vld [vmem:[%s8 + $0x40] sm:$0xf]
      %v5714 = vld [vmem:[%s8 + $0x44] sm:$0xf]
      %v5715 = vld [vmem:[%s8 + $0x48] sm:$0xf]
      %v5716 = vld [vmem:[%s8 + $0x4c] sm:$0xf]
      %v5717 = vld [vmem:[%s8 + $0x50] sm:$0xf]
      %v5718 = vld [vmem:[%s8 + $0x54] sm:$0xf]
      %v5719 = vld [vmem:[%s8 + $0x58] sm:$0xf]
      %v5720 = vld [vmem:[%s8 + $0x5c] sm:$0xf]
      %v5721 = vld [vmem:[%s8 + $0x60] sm:$0xf]
      %v5722 = vld [vmem:[%s8 + $0x64] sm:$0xf]
      %v5723 = vld [vmem:[%s8 + $0x68] sm:$0xf]
      %v5724 = vld [vmem:[%s8 + $0x6c] sm:$0xf]
      %v5725 = vld [vmem:[%s8 + $0x70] sm:$0xf]
      %v5726 = vld [vmem:[%s8 + $0x74] sm:$0xf]
      %v5727 = vld [vmem:[%s8 + $0x78] sm:$0xf]
      %v5728 = vld [vmem:[%s8 + $0x7c] sm:$0xf]
      %v5729 = vld [vmem:[%s8 + $0x80] sm:$0xf]
      %v5730 = vld [vmem:[%s8 + $0x84] sm:$0xf]
      %v5731 = vld [vmem:[%s8 + $0x88] sm:$0xf]
      %v5732 = vld [vmem:[%s8 + $0x8c] sm:$0xf]
      %v5733 = vld [vmem:[%s8 + $0x90] sm:$0xf]
      %v5734 = vld [vmem:[%s8 + $0x94] sm:$0xf]
      %v5735 = vld [vmem:[%s8 + $0x98] sm:$0xf]
      %v5736 = vld [vmem:[%s8 + $0x9c] sm:$0xf]
      %v5737 = vld [vmem:[%s8 + $0xa0] sm:$0xf]
      %v5738 = vld [vmem:[%s8 + $0xa4] sm:$0xf]
      %v5739 = vld [vmem:[%s8 + $0xa8] sm:$0xf]
      %v5740 = vld [vmem:[%s8 + $0xac] sm:$0xf]
      %v5741 = vld [vmem:[%s8 + $0xb0] sm:$0xf]
      %v5742 = vld [vmem:[%s8 + $0xb4] sm:$0xf]
      %v5743 = vld [vmem:[%s8 + $0xb8] sm:$0xf]
      %v5744 = vld [vmem:[%s8 + $0xbc] sm:$0xf]
      %v5745 = vld [vmem:[%s8 + $0xc0] sm:$0xf]
      %v5746 = vld [vmem:[%s8 + $0xc4] sm:$0xf]
      %v5747 = vld [vmem:[%s8 + $0xc8] sm:$0xf]
      %v5748 = vld [vmem:[%s8 + $0xcc] sm:$0xf]
      %v5749 = vld [vmem:[%s8 + $0xd0] sm:$0xf]
      %v5750 = vld [vmem:[%s8 + $0xd4] sm:$0xf]
      %v5751 = vld [vmem:[%s8 + $0xd8] sm:$0xf]
      %v5752 = vld [vmem:[%s8 + $0xdc] sm:$0xf]
      %v5753 = vld [vmem:[%s8 + $0xe0] sm:$0xf]
      %v5754 = vld [vmem:[%s8 + $0xe4] sm:$0xf]
      %v5755 = vld [vmem:[%s8 + $0xe8] sm:$0xf]
      %v5756 = vld [vmem:[%s8 + $0xec] sm:$0xf]
      %v5757 = vld [vmem:[%s8 + $0xf0] sm:$0xf]
      %v5758 = vld [vmem:[%s8 + $0xf4] sm:$0xf]
      %v5759 = vld [vmem:[%s8 + $0xf8] sm:$0xf]
      %v5760 = vld [vmem:[%s8 + $0xfc] sm:$0xf]
      %v5761 = vld [vmem:[%s8 + $0x100] sm:$0xf]
      %v5762 = vld [vmem:[%s8 + $0x104] sm:$0xf]
      %v5763 = vld [vmem:[%s8 + $0x108] sm:$0xf]
      %v5764 = vld [vmem:[%s8 + $0x10c] sm:$0xf]
      %v5765 = vld [vmem:[%s8 + $0x110] sm:$0xf]
      %v5766 = vld [vmem:[%s8 + $0x114] sm:$0xf]
      %v5767 = vld [vmem:[%s8 + $0x118] sm:$0xf]
      %v5768 = vld [vmem:[%s8 + $0x11c] sm:$0xf]
      %v5769 = vld [vmem:[%s9] sm:$0x1]
      %v5771 = vlaneseq
      %v5772 = vshrl.u32 %v5771, 7
      %v5773 = vsub.s32 0, %v5772
      %v5774 = vrot.slane %v5769, %v5773
      %v5848 = vunpack.c.l.b16 %v5697
      %v5849 = vunpack.c.l.b16 %v5698
      %v5850 = vunpack.c.l.b16 %v5699
      %v5851 = vunpack.c.l.b16 %v5700
      %v5852 = vunpack.c.l.b16 %v5701
      %v5853 = vunpack.c.l.b16 %v5702
      %v5854 = vunpack.c.l.b16 %v5703
      %v5855 = vunpack.c.l.b16 %v5704
      %v5856 = vunpack.c.l.b16 %v5705
      %v5857 = vunpack.c.l.b16 %v5706
      %v5858 = vunpack.c.l.b16 %v5707
      %v5859 = vunpack.c.l.b16 %v5708
      %v5860 = vunpack.c.l.b16 %v5709
      %v5861 = vunpack.c.l.b16 %v5710
      %v5862 = vunpack.c.l.b16 %v5711
      %v5863 = vunpack.c.l.b16 %v5712
      %v5864 = vunpack.c.l.b16 %v5713
      %v5865 = vunpack.c.l.b16 %v5714
      %v5866 = vunpack.c.l.b16 %v5715
      %v5867 = vunpack.c.l.b16 %v5716
      %v5868 = vunpack.c.l.b16 %v5717
      %v5869 = vunpack.c.l.b16 %v5718
      %v5870 = vunpack.c.l.b16 %v5719
      %v5871 = vunpack.c.l.b16 %v5720
      %v5872 = vunpack.c.l.b16 %v5721
      %v5873 = vunpack.c.l.b16 %v5722
      %v5874 = vunpack.c.l.b16 %v5723
      %v5875 = vunpack.c.l.b16 %v5724
      %v5876 = vunpack.c.l.b16 %v5725
      %v5877 = vunpack.c.l.b16 %v5726
      %v5878 = vunpack.c.l.b16 %v5727
      %v5879 = vunpack.c.l.b16 %v5728
      %v5880 = vunpack.c.l.b16 %v5729
      %v5881 = vunpack.c.l.b16 %v5730
      %v5882 = vunpack.c.l.b16 %v5731
      %v5883 = vunpack.c.l.b16 %v5732
      %v5884 = vunpack.c.l.b16 %v5733
      %v5885 = vunpack.c.l.b16 %v5734
      %v5886 = vunpack.c.l.b16 %v5735
      %v5887 = vunpack.c.l.b16 %v5736
      %v5888 = vunpack.c.l.b16 %v5737
      %v5889 = vunpack.c.l.b16 %v5738
      %v5890 = vunpack.c.l.b16 %v5739
      %v5891 = vunpack.c.l.b16 %v5740
      %v5892 = vunpack.c.l.b16 %v5741
      %v5893 = vunpack.c.l.b16 %v5742
      %v5894 = vunpack.c.l.b16 %v5743
      %v5895 = vunpack.c.l.b16 %v5744
      %v5896 = vunpack.c.l.b16 %v5745
      %v5897 = vunpack.c.l.b16 %v5746
      %v5898 = vunpack.c.l.b16 %v5747
      %v5899 = vunpack.c.l.b16 %v5748
      %v5900 = vunpack.c.l.b16 %v5749
      %v5901 = vunpack.c.l.b16 %v5750
      %v5902 = vunpack.c.l.b16 %v5751
      %v5903 = vunpack.c.l.b16 %v5752
      %v5904 = vunpack.c.l.b16 %v5753
      %v5905 = vunpack.c.l.b16 %v5754
      %v5906 = vunpack.c.l.b16 %v5755
      %v5907 = vunpack.c.l.b16 %v5756
      %v5908 = vunpack.c.l.b16 %v5757
      %v5909 = vunpack.c.l.b16 %v5758
      %v5910 = vunpack.c.l.b16 %v5759
      %v5911 = vunpack.c.l.b16 %v5760
      %v5912 = vunpack.c.l.b16 %v5761
      %v5913 = vunpack.c.l.b16 %v5762
      %v5914 = vunpack.c.l.b16 %v5763
      %v5915 = vunpack.c.l.b16 %v5764
      %v5916 = vunpack.c.l.b16 %v5765
      %v5917 = vunpack.c.l.b16 %v5766
      %v5918 = vunpack.c.l.b16 %v5767
      %v5919 = vunpack.c.l.b16 %v5768
      %v5920 = vpack.c.b16 %v5849, %v5848
      %v5921 = vpack.c.b16 %v5851, %v5850
      %v5922 = vpack.c.b16 %v5853, %v5852
      %v5923 = vpack.c.b16 %v5855, %v5854
      %v5924 = vpack.c.b16 %v5857, %v5856
      %v5925 = vpack.c.b16 %v5859, %v5858
      %v5926 = vpack.c.b16 %v5861, %v5860
      %v5927 = vpack.c.b16 %v5863, %v5862
      %v5928 = vpack.c.b16 %v5865, %v5864
      %v5929 = vpack.c.b16 %v5867, %v5866
      %v5930 = vpack.c.b16 %v5869, %v5868
      %v5931 = vpack.c.b16 %v5871, %v5870
      %v5932 = vpack.c.b16 %v5873, %v5872
      %v5933 = vpack.c.b16 %v5875, %v5874
      %v5934 = vpack.c.b16 %v5877, %v5876
      %v5935 = vpack.c.b16 %v5879, %v5878
      %v5936 = vpack.c.b16 %v5881, %v5880
      %v5937 = vpack.c.b16 %v5883, %v5882
      %v5938 = vpack.c.b16 %v5885, %v5884
      %v5939 = vpack.c.b16 %v5887, %v5886
      %v5940 = vpack.c.b16 %v5889, %v5888
      %v5941 = vpack.c.b16 %v5891, %v5890
      %v5942 = vpack.c.b16 %v5893, %v5892
      %v5943 = vpack.c.b16 %v5895, %v5894
      %v5944 = vpack.c.b16 %v5897, %v5896
      %v5945 = vpack.c.b16 %v5899, %v5898
      %v5946 = vpack.c.b16 %v5901, %v5900
      %v5947 = vpack.c.b16 %v5903, %v5902
      %v5948 = vpack.c.b16 %v5905, %v5904
      %v5949 = vpack.c.b16 %v5907, %v5906
      %v5950 = vpack.c.b16 %v5909, %v5908
      %v5951 = vpack.c.b16 %v5911, %v5910
      %v5952 = vpack.c.b16 %v5913, %v5912
      %v5953 = vpack.c.b16 %v5915, %v5914
      %v5954 = vpack.c.b16 %v5917, %v5916
      %v5955 = vpack.c.b16 %v5919, %v5918
      %v5993 = vsel %vm361, %v5494, 0
      %v5996 = vsel %vm361, %v5495, 0
      %v5999 = vsel %vm361, %v5496, 0
      %v6002 = vsel %vm361, %v5497, 0
      %v6005 = vsel %vm361, %v5498, 0
      %v6008 = vsel %vm361, %v5499, 0
      %v6011 = vsel %vm361, %v5500, 0
      %6013 = vmatprep.subr.bf16.mxu0 0
      %6014 = vmatpush1.bf16.msra.mxu0 %v5927
      %6015 = vmatprep.subr.bf16.mxu0 0
      %6016 = vmatpush1.bf16.msra.mxu0 %v5926
      %6017 = vmatprep.subr.bf16.mxu0 0
      %6018 = vmatpush1.bf16.msra.mxu0 %v5925
      %6019 = vmatprep.subr.bf16.mxu0 0
      %6020 = vmatpush1.bf16.msra.mxu0 %v5924
      %6021 = vmatprep.subr.bf16.mxu0 0
      %6022 = vmatpush1.bf16.msra.mxu0 %v5923
      %6023 = vmatprep.subr.bf16.mxu0 0
      %6024 = vmatpush1.bf16.msra.mxu0 %v5922
      %6025 = vmatprep.subr.bf16.mxu0 0
      %6026 = vmatpush1.bf16.msra.mxu0 %v5921
      %6027 = vmatprep.subr.bf16.mxu0 0
      %6028 = vmatpush1.bf16.msra.mxu0 %v5920
      %6029 = vmatprep.subr.bf16.mxu0 0
      %6030 = vmatpush2.bf16.msra.mxu0 %v5935
      %6031 = vmatprep.subr.bf16.mxu0 0
      %6032 = vmatpush2.bf16.msra.mxu0 %v5934
      %6033 = vmatprep.subr.bf16.mxu0 0
      %6034 = vmatpush2.bf16.msra.mxu0 %v5933
      %6035 = vmatprep.subr.bf16.mxu0 0
      %6036 = vmatpush2.bf16.msra.mxu0 %v5932
      %6037 = vmatprep.subr.bf16.mxu0 0
      %6038 = vmatpush2.bf16.msra.mxu0 %v5931
      %6039 = vmatprep.subr.bf16.mxu0 0
      %6040 = vmatpush2.bf16.msra.mxu0 %v5930
      %6041 = vmatprep.subr.bf16.mxu0 0
      %6042 = vmatpush2.bf16.msra.mxu0 %v5929
      %6043 = vmatprep.subr.bf16.mxu0 0
      %6044 = vmatpush2.bf16.msra.mxu0 %v5928
      %6045 = vmatprep.mubr.bf16.mxu0 %v5615
      %6046 = vmatmul.mubr.bf16.gmra.mxu0 %v5587
      %v6047 = vpop.f32.mrf.mxu0
      %v6048 = vadd.f32 %v5774, %v6047
      %v6049 = vpop.f32.mrf.mxu0
      %v6050 = vpop.f32.mrf.mxu0
      %v6051 = vadd.f32 %v5774, %v6050
      %v6052 = vpop.f32.mrf.mxu0
      %6053 = vmatprep.mubr.bf16.mxu0 %v5619
      %6054 = vmatmul.mubr.bf16.gmra.mxu0 %v5591
      %v6055 = vpop.f32.mrf.mxu0
      %v6056 = vadd.f32 %v5774, %v6055
      %v6057 = vpop.f32.mrf.mxu0
      %v6058 = vpop.f32.mrf.mxu0
      %v6059 = vadd.f32 %v5774, %v6058
      %v6060 = vpop.f32.mrf.mxu0
      %6061 = vmatprep.mubr.bf16.mxu0 %v5623
      %6062 = vmatmul.mubr.bf16.gmra.mxu0 %v5595
      %v6063 = vpop.f32.mrf.mxu0
      %v6064 = vadd.f32 %v5774, %v6063
      %v6065 = vpop.f32.mrf.mxu0
      %v6066 = vpop.f32.mrf.mxu0
      %v6067 = vadd.f32 %v5774, %v6066
      %v6068 = vpop.f32.mrf.mxu0
      %6069 = vmatprep.mubr.bf16.mxu0 %v5627
      %6070 = vmatmul.mubr.bf16.gmra.mxu0 %v5599
      %v6071 = vpop.f32.mrf.mxu0
      %v6072 = vadd.f32 %v5774, %v6071
      %v6073 = vpop.f32.mrf.mxu0
      %v6074 = vpop.f32.mrf.mxu0
      %v6075 = vadd.f32 %v5774, %v6074
      %v6076 = vpop.f32.mrf.mxu0
      %6077 = vmatprep.mubr.bf16.mxu0 %v5631
      %6078 = vmatmul.mubr.bf16.gmra.mxu0 %v5603
      %v6079 = vpop.f32.mrf.mxu0
      %v6080 = vadd.f32 %v5774, %v6079
      %v6081 = vpop.f32.mrf.mxu0
      %v6082 = vpop.f32.mrf.mxu0
      %v6083 = vadd.f32 %v5774, %v6082
      %v6084 = vpop.f32.mrf.mxu0
      %6085 = vmatprep.mubr.bf16.mxu0 %v5635
      %6086 = vmatmul.mubr.bf16.gmra.mxu0 %v5607
      %v6087 = vpop.f32.mrf.mxu0
      %v6088 = vadd.f32 %v5774, %v6087
      %v6089 = vpop.f32.mrf.mxu0
      %v6090 = vpop.f32.mrf.mxu0
      %v6091 = vadd.f32 %v5774, %v6090
      %v6092 = vpop.f32.mrf.mxu0
      %6093 = vmatprep.mubr.bf16.mxu0 %v5639
      %6094 = vmatmul.mubr.bf16.gmra.mxu0 %v5611
      %v6095 = vpop.f32.mrf.mxu0
      %v6096 = vadd.f32 %v5774, %v6095
      %v6097 = vpop.f32.mrf.mxu0
      %v6098 = vpop.f32.mrf.mxu0
      %v6099 = vpop.f32.mrf.mxu0
      %6100 = vdwg.mxu0
      %6101 = vmatprep.subr.bf16.mxu0 0
      %6102 = vmatpush1.bf16.msra.mxu0 %v5943
      %6103 = vmatprep.subr.bf16.mxu0 0
      %6104 = vmatpush1.bf16.msra.mxu0 %v5942
      %6105 = vmatprep.subr.bf16.mxu0 0
      %6106 = vmatpush1.bf16.msra.mxu0 %v5941
      %6107 = vmatprep.subr.bf16.mxu0 0
      %6108 = vmatpush1.bf16.msra.mxu0 %v5940
      %6109 = vmatprep.subr.bf16.mxu0 0
      %6110 = vmatpush1.bf16.msra.mxu0 %v5939
      %6111 = vmatprep.subr.bf16.mxu0 0
      %6112 = vmatpush1.bf16.msra.mxu0 %v5938
      %6113 = vmatprep.subr.bf16.mxu0 0
      %6114 = vmatpush1.bf16.msra.mxu0 %v5937
      %6115 = vmatprep.subr.bf16.mxu0 0
      %6116 = vmatpush1.bf16.msra.mxu0 %v5936
      %6117 = vmatprep.subr.bf16.mxu0 0
      %6118 = vmatpush2.bf16.msra.mxu0 %v5951
      %6119 = vmatprep.subr.bf16.mxu0 0
      %6120 = vmatpush2.bf16.msra.mxu0 %v5950
      %6121 = vmatprep.subr.bf16.mxu0 0
      %6122 = vmatpush2.bf16.msra.mxu0 %v5949
      %6123 = vmatprep.subr.bf16.mxu0 0
      %6124 = vmatpush2.bf16.msra.mxu0 %v5948
      %6125 = vmatprep.subr.bf16.mxu0 0
      %6126 = vmatpush2.bf16.msra.mxu0 %v5947
      %6127 = vmatprep.subr.bf16.mxu0 0
      %6128 = vmatpush2.bf16.msra.mxu0 %v5946
      %6129 = vmatprep.subr.bf16.mxu0 0
      %6130 = vmatpush2.bf16.msra.mxu0 %v5945
      %6131 = vmatprep.subr.bf16.mxu0 0
      %6132 = vmatpush2.bf16.msra.mxu0 %v5944
      %6133 = vmatprep.mubr.bf16.mxu0 %v5671
      %6134 = vmatmul.mubr.bf16.gmra.mxu0 %v5643
      %v6135 = vpop.f32.mrf.mxu0
      %v6136 = vadd.f32 %v6048, %v6135
      %v6137 = vpop.f32.mrf.mxu0
      %v6138 = vpop.f32.mrf.mxu0
      %v6139 = vadd.f32 %v6051, %v6138
      %v6140 = vpop.f32.mrf.mxu0
      %6141 = vmatprep.mubr.bf16.mxu0 %v5675
      %6142 = vmatmul.mubr.bf16.gmra.mxu0 %v5647
      %v6143 = vpop.f32.mrf.mxu0
      %v6144 = vadd.f32 %v6056, %v6143
      %v6145 = vpop.f32.mrf.mxu0
      %v6146 = vpop.f32.mrf.mxu0
      %v6147 = vadd.f32 %v6059, %v6146
      %v6148 = vpop.f32.mrf.mxu0
      %6149 = vmatprep.mubr.bf16.mxu0 %v5679
      %6150 = vmatmul.mubr.bf16.gmra.mxu0 %v5651
      %v6151 = vpop.f32.mrf.mxu0
      %v6152 = vadd.f32 %v6064, %v6151
      %v6153 = vpop.f32.mrf.mxu0
      %v6154 = vpop.f32.mrf.mxu0
      %v6155 = vadd.f32 %v6067, %v6154
      %v6156 = vpop.f32.mrf.mxu0
      %6157 = vmatprep.mubr.bf16.mxu0 %v5683
      %6158 = vmatmul.mubr.bf16.gmra.mxu0 %v5655
      %v6159 = vpop.f32.mrf.mxu0
      %v6160 = vadd.f32 %v6072, %v6159
      %v6161 = vpop.f32.mrf.mxu0
      %v6162 = vpop.f32.mrf.mxu0
      %v6163 = vadd.f32 %v6075, %v6162
      %v6164 = vpop.f32.mrf.mxu0
      %6165 = vmatprep.mubr.bf16.mxu0 %v5687
      %6166 = vmatmul.mubr.bf16.gmra.mxu0 %v5659
      %v6167 = vpop.f32.mrf.mxu0
      %v6168 = vadd.f32 %v6080, %v6167
      %v6169 = vpop.f32.mrf.mxu0
      %v6170 = vpop.f32.mrf.mxu0
      %v6171 = vadd.f32 %v6083, %v6170
      %v6172 = vpop.f32.mrf.mxu0
      %6173 = vmatprep.mubr.bf16.mxu0 %v5691
      %6174 = vmatmul.mubr.bf16.gmra.mxu0 %v5663
      %v6175 = vpop.f32.mrf.mxu0
      %v6176 = vadd.f32 %v6088, %v6175
      %v6177 = vpop.f32.mrf.mxu0
      %v6178 = vpop.f32.mrf.mxu0
      %v6179 = vadd.f32 %v6091, %v6178
      %v6180 = vpop.f32.mrf.mxu0
      %6181 = vmatprep.mubr.bf16.mxu0 %v5695
      %6182 = vmatmul.mubr.bf16.gmra.mxu0 %v5667
      %v6183 = vpop.f32.mrf.mxu0
      %v6184 = vadd.f32 %v6096, %v6183
      %v6185 = vpop.f32.mrf.mxu0
      %v6186 = vpop.f32.mrf.mxu0
      %v6187 = vpop.f32.mrf.mxu0
      %6188 = vdwg.mxu0
      %6189 = vmatprep.subr.bf16.mxu0 0
      %6190 = vmatpush1.bf16.msra.mxu0 0
      %6191 = vmatprep.subr.bf16.mxu0 0
      %6192 = vmatpush1.bf16.msra.mxu0 0
      %6193 = vmatprep.subr.bf16.mxu0 0
      %6194 = vmatpush1.bf16.msra.mxu0 0
      %6195 = vmatprep.subr.bf16.mxu0 0
      %6196 = vmatpush1.bf16.msra.mxu0 0
      %6197 = vmatprep.subr.bf16.mxu0 0
      %6198 = vmatpush1.bf16.msra.mxu0 %v5955
      %6199 = vmatprep.subr.bf16.mxu0 0
      %6200 = vmatpush1.bf16.msra.mxu0 %v5954
      %6201 = vmatprep.subr.bf16.mxu0 0
      %6202 = vmatpush1.bf16.msra.mxu0 %v5953
      %6203 = vmatprep.subr.bf16.mxu0 0
      %6204 = vmatpush1.bf16.msra.mxu0 %v5952
      %6205 = vmatprep.subr.bf16.mxu0 0
      %6206 = vmatpush2.bf16.msra.mxu0 0
      %6207 = vmatprep.subr.bf16.mxu0 0
      %6208 = vmatpush2.bf16.msra.mxu0 0
      %6209 = vmatprep.subr.bf16.mxu0 0
      %6210 = vmatpush2.bf16.msra.mxu0 0
      %6211 = vmatprep.subr.bf16.mxu0 0
      %6212 = vmatpush2.bf16.msra.mxu0 0
      %6213 = vmatprep.subr.bf16.mxu0 0
      %6214 = vmatpush2.bf16.msra.mxu0 0
      %6215 = vmatprep.subr.bf16.mxu0 0
      %6216 = vmatpush2.bf16.msra.mxu0 0
      %6217 = vmatprep.subr.bf16.mxu0 0
      %6218 = vmatpush2.bf16.msra.mxu0 0
      %6219 = vmatprep.subr.bf16.mxu0 0
      %6220 = vmatpush2.bf16.msra.mxu0 0
      %6221 = vmatprep.mubr.bf16.mxu0 0
      %6222 = vmatmul.mubr.bf16.gmra.mxu0 %v5993
      %v6223 = vpop.f32.mrf.mxu0
      %v6224 = vadd.f32 %v6136, %v6223
      %v6225 = vpop.f32.mrf.mxu0
      %v6226 = vpop.f32.mrf.mxu0
      %v6227 = vadd.f32 %v6139, %v6226
      %v6228 = vpop.f32.mrf.mxu0
      %6229 = vmatprep.mubr.bf16.mxu0 0
      %6230 = vmatmul.mubr.bf16.gmra.mxu0 %v5996
      %v6231 = vpop.f32.mrf.mxu0
      %v6232 = vadd.f32 %v6144, %v6231
      %v6233 = vpop.f32.mrf.mxu0
      %v6234 = vpop.f32.mrf.mxu0
      %v6235 = vadd.f32 %v6147, %v6234
      %v6236 = vpop.f32.mrf.mxu0
      %6237 = vmatprep.mubr.bf16.mxu0 0
      %6238 = vmatmul.mubr.bf16.gmra.mxu0 %v5999
      %v6239 = vpop.f32.mrf.mxu0
      %v6240 = vadd.f32 %v6152, %v6239
      %v6241 = vpop.f32.mrf.mxu0
      %v6242 = vpop.f32.mrf.mxu0
      %v6243 = vadd.f32 %v6155, %v6242
      %v6244 = vpop.f32.mrf.mxu0
      %6245 = vmatprep.mubr.bf16.mxu0 0
      %6246 = vmatmul.mubr.bf16.gmra.mxu0 %v6002
      %v6247 = vpop.f32.mrf.mxu0
      %v6248 = vadd.f32 %v6160, %v6247
      %v6249 = vpop.f32.mrf.mxu0
      %v6250 = vpop.f32.mrf.mxu0
      %v6251 = vadd.f32 %v6163, %v6250
      %v6252 = vpop.f32.mrf.mxu0
      %6253 = vmatprep.mubr.bf16.mxu0 0
      %6254 = vmatmul.mubr.bf16.gmra.mxu0 %v6005
      %v6255 = vpop.f32.mrf.mxu0
      %v6256 = vadd.f32 %v6168, %v6255
      %v6257 = vpop.f32.mrf.mxu0
      %v6258 = vpop.f32.mrf.mxu0
      %v6259 = vadd.f32 %v6171, %v6258
      %v6260 = vpop.f32.mrf.mxu0
      %6261 = vmatprep.mubr.bf16.mxu0 0
      %6262 = vmatmul.mubr.bf16.gmra.mxu0 %v6008
      %v6263 = vpop.f32.mrf.mxu0
      %v6264 = vadd.f32 %v6176, %v6263
      %v6265 = vpop.f32.mrf.mxu0
      %v6266 = vpop.f32.mrf.mxu0
      %v6267 = vadd.f32 %v6179, %v6266
      %v6268 = vpop.f32.mrf.mxu0
      %6269 = vmatprep.mubr.bf16.mxu0 0
      %6270 = vmatmul.mubr.bf16.gmra.mxu0 %v6011
      %v6271 = vpop.f32.mrf.mxu0
      %v6272 = vadd.f32 %v6184, %v6271
      %v6273 = vpop.f32.mrf.mxu0
      %v6274 = vpop.f32.mrf.mxu0
      %v6275 = vpop.f32.mrf.mxu0
      %6276 = vdwg.mxu0
      %v6277 = vlaneseq
      %v6278 = vand.u32 %v6277, 127
      %vm6279 = vcmp.ge.s32.totalorder %v6278, 3
      %vm6280 = vcmp.lt.s32.totalorder %v6278, 7
      %vm6281 = vmand %vm6279, %vm6280
      %v6282 = vmul.f32 %v6224, 1.442695
      %v6283 = vpow.pop %v6282
      %v6284 = vmul.f32 %v6227, 1.442695
      %v6285 = vpow.pop %v6284
      %v6286 = vmul.f32 %v6232, 1.442695
      %v6287 = vpow.pop %v6286
      %v6288 = vmul.f32 %v6235, 1.442695
      %v6289 = vpow.pop %v6288
      %v6290 = vmul.f32 %v6240, 1.442695
      %v6291 = vpow.pop %v6290
      %v6292 = vmul.f32 %v6243, 1.442695
      %v6293 = vpow.pop %v6292
      %v6294 = vmul.f32 %v6248, 1.442695
      %v6295 = vpow.pop %v6294
      %v6296 = vmul.f32 %v6251, 1.442695
      %v6297 = vpow.pop %v6296
      %v6298 = vmul.f32 %v6256, 1.442695
      %v6299 = vpow.pop %v6298
      %v6300 = vmul.f32 %v6259, 1.442695
      %v6301 = vpow.pop %v6300
      %v6302 = vmul.f32 %v6264, 1.442695
      %v6303 = vpow.pop %v6302
      %v6304 = vmul.f32 %v6267, 1.442695
      %v6305 = vpow.pop %v6304
      %v6306 = vmul.f32 %v6272, 1.442695
      %v6307 = vpow.pop %v6306
      %v6308 = vsel %vm6281, %v6283, %v6224
      %v6309 = vsel %vm6281, %v6285, %v6227
      %v6310 = vsel %vm6281, %v6287, %v6232
      %v6311 = vsel %vm6281, %v6289, %v6235
      %v6312 = vsel %vm6281, %v6291, %v6240
      %v6313 = vsel %vm6281, %v6293, %v6243
      %v6314 = vsel %vm6281, %v6295, %v6248
      %v6315 = vsel %vm6281, %v6297, %v6251
      %v6316 = vsel %vm6281, %v6299, %v6256
      %v6317 = vsel %vm6281, %v6301, %v6259
      %v6318 = vsel %vm6281, %v6303, %v6264
      %v6319 = vsel %vm6281, %v6305, %v6267
      %v6320 = vsel %vm6281, %v6307, %v6272
      %6321 = vst [vmem:[%s359] sm:$0xff] %v6308
      %6322 = vst [vmem:[%s359 + $0x8] sm:$0xff] %v6309
      %6323 = vst [vmem:[%s359 + $0x10] sm:$0xff] %v6310
      %6324 = vst [vmem:[%s359 + $0x18] sm:$0xff] %v6311
      %6325 = vst [vmem:[%s359 + $0x20] sm:$0xff] %v6312
      %6326 = vst [vmem:[%s359 + $0x28] sm:$0xff] %v6313
      %6327 = vst [vmem:[%s359 + $0x30] sm:$0xff] %v6314
      %6328 = vst [vmem:[%s359 + $0x38] sm:$0xff] %v6315
      %6329 = vst [vmem:[%s359 + $0x40] sm:$0xff] %v6316
      %6330 = vst [vmem:[%s359 + $0x48] sm:$0xff] %v6317
      %6331 = vst [vmem:[%s359 + $0x50] sm:$0xff] %v6318
      %6332 = vst [vmem:[%s359 + $0x58] sm:$0xff] %v6319
      %6333 = vst [vmem:[%s359 + $0x60] sm:$0xf] %v6320
      %p6334 = scmp.lt.s32.totalorder %s21, 1
      %s6335 = scalar_select %p6334, %s21, 1
      %s6336 = smul.addr %s6335, 13
      %s6337 = smul.addr %s6336, 8
      %s6338 = scalar_lea.vmem %s10, %s6337
      // Predicated region
      $region61: #{_lambda_.1} parent=59 // pred_check
        %p6339 = pneg %p254
      $region62: #{_lambda_.1} parent=59 // pred_check_branch
        %6341 = sbr.rel (%p6339) target = $region64
      $region63: #{_lambda_.1} parent=59 // pred_region
        _
      $region64: #{_lambda_.1} parent=59 // pred_fallthru
        _
    $region60: #{_lambda_.1} parent=5 // pred_fallthru
      _
    %p6342 = scmp.le.s32.totalorder 2, %s16
    // Predicated region
    $region65: #{_lambda_.1} parent=5 // pred_check
      %p6343 = pneg %p6342
    $region66: #{_lambda_.1} parent=5 // pred_check_branch
      %6345 = sbr.rel (%p6343) target = $region68
    $region67: #{_lambda_.1} parent=5 // pred_region
      %s6346 = ssub.s32 %s16, 2
      // Predicated region
      $region69: #{_lambda_.1} parent=67 // pred_check
        %p6347 = pneg %p260
      $region70: #{_lambda_.1} parent=67 // pred_check_branch
        %6349 = sbr.rel (%p6347) target = $region72
      $region71: #{_lambda_.1} parent=67 // pred_region
        %p6350 = scmp.lt.s32.totalorder %s22, 1
        %s6351 = scalar_select %p6350, %s22, 1
        %s6352 = smul.addr %s6351, 13
        %s6353 = smul.addr %s6352, 8
        %s6354 = scalar_lea.vmem %s10, %s6353
      $region72: #{_lambda_.1} parent=67 // pred_fallthru
        _
    $region68: #{_lambda_.1} parent=5 // pred_fallthru
      _
  $region6: #{_lambda_.1} parent=0 // loop_footer
    %s20 = sadd.s32 1, %s16
  $region7: #{_lambda_.1} parent=0 // loop_footer_branch
    %15 = sbr.rel target = $region3
  $region8: #{_lambda_.1} parent=0 // loop_exit
    _

</llo_original>
